<compile_context>
chip_gen: v7x
topology: tpu7x:2x2x1
jax: 0.10.0
libtpu: 0.0.40
codegen_flags: <defaults>
</compile_context>

<pallas_src>
import functools

import jax
import jax.numpy as jnp
from jax import lax
from jax.experimental import pallas as pl
from jax.experimental.pallas import tpu as pltpu


# --------------------------------------------------------------------------- #
# Fused kernel: GroupNorm+QKV -> cross attention (all heads) -> out-proj+residual
#               -> core block -> final channel concat.  One sample per grid step.
# --------------------------------------------------------------------------- #
def _fused_block_kernel(x1_ref, x2_ref,
                        wqkv_a_ref, bqkv_a_ref, wqkv_b_ref, bqkv_b_ref,
                        wop_a_ref, bop_a_ref, wop_b_ref, bop_b_ref,
                        wc1_ref, wc2_ref, bc_ref,
                        o_ref, *, n_head, c_out):
    x1 = x1_ref[0].astype(jnp.float32)                       # (C, L)
    x2 = x2_ref[0].astype(jnp.float32)                       # (C, L)
    C, L = x1.shape
    D = C // n_head
    inv_n = 1.0 / float(C * L)

    def gn_qkv(x, w_ref, b_ref):
        # GroupNorm(1, C) statistics in one pass; the affine (gamma, beta) and the
        # attention q-scale are pre-folded into w/b by the wrapper.
        s1 = jnp.sum(jnp.sum(x, axis=1, keepdims=True), axis=0, keepdims=True)
        s2 = jnp.sum(jnp.sum(x * x, axis=1, keepdims=True), axis=0, keepdims=True)
        mean = s1 * inv_n
        var = s2 * inv_n - mean * mean
        xn = (x - mean) * lax.rsqrt(var + 1e-5)
        return jnp.dot(w_ref[...], xn, preferred_element_type=jnp.float32) + b_ref[...]

    qkv_a = gn_qkv(x1, wqkv_a_ref, bqkv_a_ref)                # (3C, L)
    qkv_b = gn_qkv(x2, wqkv_b_ref, bqkv_b_ref)                # (3C, L)

    def attend(q_slab, k_slab, v_slab):
        # q/k/v slabs: (C, L); head h occupies rows [h*D, (h+1)*D) (PyTorch view(n,H,D,l)).
        outs = []
        for h in range(n_head):
            q = q_slab[h * D:(h + 1) * D, :]                  # (D, L), scale pre-folded
            k = k_slab[h * D:(h + 1) * D, :]                  # (D, L)
            v = v_slab[h * D:(h + 1) * D, :]                  # (D, L)
            # scores s[m, l] = sum_d k[d, m] * q[d, l]; softmax over m (sublane axis),
            # so the PV matmul below is a plain NN matmul and no (L, L) transpose exists.
            s = jnp.dot(k.T, q, preferred_element_type=jnp.float32)     # (L, L)
            mx = jnp.max(s, axis=0, keepdims=True)                      # (1, L)
            p = jnp.exp(s - mx)                                         # unnormalized
            denom = jnp.sum(p, axis=0, keepdims=True)                   # (1, L)
            o = jnp.dot(v, p, preferred_element_type=jnp.float32)       # (D, L)
            outs.append(o * pl.reciprocal(denom, approx=True))          # deferred softmax norm
        return jnp.concatenate(outs, axis=0)                  # (C, L)

    attn_a = attend(qkv_a[:C], qkv_b[C:2 * C], qkv_b[2 * C:])
    attn_b = attend(qkv_b[:C], qkv_a[C:2 * C], qkv_a[2 * C:])

    # Out-projection (1x1 conv) + residual.
    # TODO(synk): nn.Dropout is identity in inference mode; training-mode masking not done.
    out1 = (jnp.dot(wop_a_ref[...], attn_a, preferred_element_type=jnp.float32)
            + bop_a_ref[...] + x1)
    out2 = (jnp.dot(wop_b_ref[...], attn_b, preferred_element_type=jnp.float32)
            + bop_b_ref[...] + x2)

    # TODO(synk): main1 / main2 are injected nn.Sequential stacks; treated as identity here.

    # Core block: cat([out1, out2], channels) + Conv1d(2C -> c_out, k=1), computed with the
    # split weight halves so the channel concat is never materialized.
    core = (jnp.dot(wc1_ref[...], out1, preferred_element_type=jnp.float32)
            + jnp.dot(wc2_ref[...], out2, preferred_element_type=jnp.float32)
            + bc_ref[...])

    # Final concat [core, input1, input2] fused into the (lane-dense) output store.
    o_ref[0, 0:c_out, :] = core.astype(o_ref.dtype)
    o_ref[0, c_out:c_out + C, :] = x1.astype(o_ref.dtype)
    o_ref[0, c_out + C:c_out + 2 * C, :] = x2.astype(o_ref.dtype)


# --------------------------------------------------------------------------- #
# Parameter prep: fold GroupNorm affine + q-scale into the QKV 1x1-conv weights.
#   W (gamma*xn + beta) + b = (W*diag(gamma)) xn + (W beta + b); q rows scaled by D^-0.5.
# --------------------------------------------------------------------------- #
def _fold_qkv_params(w, b, gamma, beta, scale):
    C = gamma.shape[0]
    w = w.astype(jnp.float32)
    b = b.astype(jnp.float32)
    w_f = w * gamma[None, :].astype(jnp.float32)
    b_f = b + w @ beta.astype(jnp.float32)
    row_scale = jnp.concatenate(
        [jnp.full((C,), scale, jnp.float32), jnp.ones((2 * C,), jnp.float32)])
    return w_f * row_scale[:, None], (b_f * row_scale).reshape(3 * C, 1)


# --------------------------------------------------------------------------- #
# Full module forward (single pallas_call).
# --------------------------------------------------------------------------- #
def cross_attention_skip_block_y_forward(input1, input2, params, n_head):
    assert input1.shape == input2.shape
    B, C, L = input1.shape
    assert C % n_head == 0
    D = C // n_head
    scale = float(D) ** -0.5

    wqkv_a, bqkv_a = _fold_qkv_params(params["qkv_a_w"], params["qkv_a_b"],
                                      params["gn_a_g"], params["gn_a_b"], scale)
    wqkv_b, bqkv_b = _fold_qkv_params(params["qkv_b_w"], params["qkv_b_b"],
                                      params["gn_b_g"], params["gn_b_b"], scale)

    core_w = params["core_w"]
    c_out = core_w.shape[0]
    assert core_w.shape[1] == 2 * C
    out_c = c_out + 2 * C

    kern = functools.partial(_fused_block_kernel, n_head=n_head, c_out=c_out)

    xspec = pl.BlockSpec((1, C, L), lambda i: (i, 0, 0))

    def wspec(r, c):
        return pl.BlockSpec((r, c), lambda i: (0, 0))

    return pl.pallas_call(
        kern,
        out_shape=jax.ShapeDtypeStruct((B, out_c, L), input1.dtype),
        grid=(B,),
        in_specs=[
            xspec, xspec,
            wspec(3 * C, C), wspec(3 * C, 1),
            wspec(3 * C, C), wspec(3 * C, 1),
            wspec(C, C), wspec(C, 1),
            wspec(C, C), wspec(C, 1),
            wspec(c_out, C), wspec(c_out, C), wspec(c_out, 1),
        ],
        out_specs=pl.BlockSpec((1, out_c, L), lambda i: (i, 0, 0)),
        compiler_params=pltpu.CompilerParams(
            dimension_semantics=("parallel",),
            vmem_limit_bytes=32 * 1024 * 1024),
    )(input1, input2,
      wqkv_a, bqkv_a, wqkv_b, bqkv_b,
      params["op_a_w"], params["op_a_b"].reshape(C, 1),
      params["op_b_w"], params["op_b_b"].reshape(C, 1),
      core_w[:, :C], core_w[:, C:], params["core_b"].reshape(c_out, 1))


# --------------------------------------------------------------------------- #
# Pure-JAX reference (mirrors the PyTorch forward in NCL layout).
# --------------------------------------------------------------------------- #
def _reference_forward(input1, input2, params, n_head):
    B, C, L = input1.shape
    D = C // n_head
    scale = float(D) ** -0.5
    HI = jax.lax.Precision.HIGHEST

    def group_norm(x, g, b, eps=1e-5):
        mean = jnp.mean(x, axis=(1, 2), keepdims=True)
        var = jnp.mean(jnp.square(x - mean), axis=(1, 2), keepdims=True)
        return (x - mean) * lax.rsqrt(var + eps) * g[None, :, None] + b[None, :, None]

    def conv1x1(x, w, b):
        return jnp.einsum("oc,bcl->bol", w, x, precision=HI) + b[None, :, None]

    def split_heads(x):  # (B, C, L) -> (B, H, L, D)
        return x.reshape(B, n_head, D, L).transpose(0, 1, 3, 2)

    a_n = group_norm(input1, params["gn_a_g"], params["gn_a_b"])
    b_n = group_norm(input2, params["gn_b_g"], params["gn_b_b"])
    qkv_a = conv1x1(a_n, params["qkv_a_w"], params["qkv_a_b"])
    qkv_b = conv1x1(b_n, params["qkv_b_w"], params["qkv_b_b"])
    q_a, k_a, v_a = [split_heads(t) for t in jnp.split(qkv_a, 3, axis=1)]
    q_b, k_b, v_b = [split_heads(t) for t in jnp.split(qkv_b, 3, axis=1)]

    def attend(q, k, v):
        s = jnp.einsum("bhld,bhmd->bhlm", q, k, precision=HI) * scale
        p = jax.nn.softmax(s, axis=-1)
        o = jnp.einsum("bhlm,bhmd->bhld", p, v, precision=HI)
        return o.transpose(0, 1, 3, 2).reshape(B, C, L)

    out_a = conv1x1(attend(q_a, k_b, v_b), params["op_a_w"], params["op_a_b"]) + input1
    out_b = conv1x1(attend(q_b, k_a, v_a), params["op_b_w"], params["op_b_b"]) + input2
    x_cat = jnp.concatenate([out_a, out_b], axis=1)
    core = conv1x1(x_cat, params["core_w"], params["core_b"])
    return jnp.concatenate([core, input1, input2], axis=1)


if __name__ == "__main__":
    B, C, L, n_head = 2, 32, 256, 4
    C_in_core = 2 * C
    C_out_core = C_in_core // 2   # CoreBlock: Conv1d(c_in, c_in // 2, k=1)

    key = jax.random.PRNGKey(0)
    keys = jax.random.split(key, 16)

    def uniform(k, shape, fan_in):
        bound = 1.0 / (fan_in ** 0.5)
        return jax.random.uniform(k, shape, jnp.float32, minval=-bound, maxval=bound)

    input1 = jax.random.normal(keys[0], (B, C, L), dtype=jnp.float32)
    input2 = jax.random.normal(keys[1], (B, C, L), dtype=jnp.float32)

    params = {
        # GroupNorm affine params (perturbed from the PyTorch default 1/0 so the
        # affine path is actually exercised).
        "gn_a_g": 1.0 + 0.1 * jax.random.normal(keys[2], (C,), jnp.float32),
        "gn_a_b": 0.1 * jax.random.normal(keys[3], (C,), jnp.float32),
        "gn_b_g": 1.0 + 0.1 * jax.random.normal(keys[4], (C,), jnp.float32),
        "gn_b_b": 0.1 * jax.random.normal(keys[5], (C,), jnp.float32),
        # qkv / out projections (Conv1d k=1), PyTorch-style U(+-1/sqrt(fan_in)).
        "qkv_a_w": uniform(keys[6], (3 * C, C), C),
        "qkv_a_b": uniform(keys[7], (3 * C,), C),
        "qkv_b_w": uniform(keys[8], (3 * C, C), C),
        "qkv_b_b": uniform(keys[9], (3 * C,), C),
        "op_a_w": uniform(keys[10], (C, C), C),
        "op_a_b": uniform(keys[11], (C,), C),
        "op_b_w": uniform(keys[12], (C, C), C),
        "op_b_b": uniform(keys[13], (C,), C),
        # core block: Conv1d(2C -> C, k=1) applied to cat([out1, out2], dim=1).
        "core_w": uniform(keys[14], (C_out_core, C_in_core), C_in_core),
        "core_b": uniform(keys[15], (C_out_core,), C_in_core),
    }

    out = cross_attention_skip_block_y_forward(input1, input2, params, n_head)
    out = jax.block_until_ready(out)

    ref = _reference_forward(input1, input2, params, n_head)
    assert out.shape == (B, C_out_core + 2 * C, L), out.shape
    max_err = float(jnp.max(jnp.abs(out - ref)))
    assert jnp.allclose(out, ref, atol=1e-3, rtol=1e-3), max_err
    print("KERNEL_OK")
</pallas_src>

<mosaic_0001>
module attributes {stable_mosaic.version = 11 : i64} {
  func.func @_fused_block_kernel(%arg0: i32, %arg1: memref<1x32x256xf32, #tpu.memory_space<vmem>>, %arg2: memref<1x32x256xf32, #tpu.memory_space<vmem>>, %arg3: memref<96x32xf32, #tpu.memory_space<vmem>>, %arg4: memref<96x1xf32, #tpu.memory_space<vmem>>, %arg5: memref<96x32xf32, #tpu.memory_space<vmem>>, %arg6: memref<96x1xf32, #tpu.memory_space<vmem>>, %arg7: memref<32x32xf32, #tpu.memory_space<vmem>>, %arg8: memref<32x1xf32, #tpu.memory_space<vmem>>, %arg9: memref<32x32xf32, #tpu.memory_space<vmem>>, %arg10: memref<32x1xf32, #tpu.memory_space<vmem>>, %arg11: memref<32x32xf32, #tpu.memory_space<vmem>>, %arg12: memref<32x32xf32, #tpu.memory_space<vmem>>, %arg13: memref<32x1xf32, #tpu.memory_space<vmem>>, %arg14: memref<1x96x256xf32, #tpu.memory_space<vmem>>) attributes {dimension_semantics = [#tpu.dimension_semantics<parallel>], iteration_bounds = array<i64: 2>, scalar_prefetch = 0 : i64, scratch_operands = 0 : i64, tpu.core_type = #tpu.core_type<tc>, window_params = [{transform_indices = @transform_0, window_bounds = array<i64: 1, 32, 256>}, {transform_indices = @transform_1, window_bounds = array<i64: 1, 32, 256>}, {pipeline_mode = #tpu.pipeline_mode<synchronous>, transform_indices = @transform_2, window_bounds = array<i64: 96, 32>}, {pipeline_mode = #tpu.pipeline_mode<synchronous>, transform_indices = @transform_3, window_bounds = array<i64: 96, 1>}, {pipeline_mode = #tpu.pipeline_mode<synchronous>, transform_indices = @transform_4, window_bounds = array<i64: 96, 32>}, {pipeline_mode = #tpu.pipeline_mode<synchronous>, transform_indices = @transform_5, window_bounds = array<i64: 96, 1>}, {pipeline_mode = #tpu.pipeline_mode<synchronous>, transform_indices = @transform_6, window_bounds = array<i64: 32, 32>}, {pipeline_mode = #tpu.pipeline_mode<synchronous>, transform_indices = @transform_7, window_bounds = array<i64: 32, 1>}, {pipeline_mode = #tpu.pipeline_mode<synchronous>, transform_indices = @transform_8, window_bounds = array<i64: 32, 32>}, {pipeline_mode = #tpu.pipeline_mode<synchronous>, transform_indices = @transform_9, window_bounds = array<i64: 32, 1>}, {pipeline_mode = #tpu.pipeline_mode<synchronous>, transform_indices = @transform_10, window_bounds = array<i64: 32, 32>}, {pipeline_mode = #tpu.pipeline_mode<synchronous>, transform_indices = @transform_11, window_bounds = array<i64: 32, 32>}, {pipeline_mode = #tpu.pipeline_mode<synchronous>, transform_indices = @transform_12, window_bounds = array<i64: 32, 1>}, {transform_indices = @transform_13, window_bounds = array<i64: 1, 96, 256>}]} {
    %c0 = arith.constant 0 : index
    %c0_0 = arith.constant 0 : index
    %c0_1 = arith.constant 0 : index
    %0 = vector.load %arg1[%c0, %c0_0, %c0_1] : memref<1x32x256xf32, #tpu.memory_space<vmem>>, vector<1x32x256xf32>
    %1 = vector.shape_cast %0 : vector<1x32x256xf32> to vector<32x256xf32>
    %c0_2 = arith.constant 0 : index
    %c0_3 = arith.constant 0 : index
    %c0_4 = arith.constant 0 : index
    %2 = vector.load %arg2[%c0_2, %c0_3, %c0_4] : memref<1x32x256xf32, #tpu.memory_space<vmem>>, vector<1x32x256xf32>
    %3 = vector.shape_cast %2 : vector<1x32x256xf32> to vector<32x256xf32>
    %cst = arith.constant dense<0.000000e+00> : vector<32xf32>
    %4 = vector.multi_reduction <add>, %1, %cst [1] : vector<32x256xf32> to vector<32xf32>
    %5 = vector.shape_cast %4 : vector<32xf32> to vector<32x1xf32>
    %cst_5 = arith.constant dense<0.000000e+00> : vector<1xf32>
    %6 = vector.multi_reduction <add>, %5, %cst_5 [0] : vector<32x1xf32> to vector<1xf32>
    %7 = vector.shape_cast %6 : vector<1xf32> to vector<1x1xf32>
    %8 = arith.mulf %1, %1 : vector<32x256xf32>
    %cst_6 = arith.constant dense<0.000000e+00> : vector<32xf32>
    %9 = vector.multi_reduction <add>, %8, %cst_6 [1] : vector<32x256xf32> to vector<32xf32>
    %10 = vector.shape_cast %9 : vector<32xf32> to vector<32x1xf32>
    %cst_7 = arith.constant dense<0.000000e+00> : vector<1xf32>
    %11 = vector.multi_reduction <add>, %10, %cst_7 [0] : vector<32x1xf32> to vector<1xf32>
    %12 = vector.shape_cast %11 : vector<1xf32> to vector<1x1xf32>
    %cst_8 = arith.constant 1.22070313E-4 : f32
    %13 = vector.broadcast %cst_8 : f32 to vector<1x1xf32>
    %14 = arith.mulf %7, %13 : vector<1x1xf32>
    %cst_9 = arith.constant 1.22070313E-4 : f32
    %15 = vector.broadcast %cst_9 : f32 to vector<1x1xf32>
    %16 = arith.mulf %12, %15 : vector<1x1xf32>
    %17 = arith.mulf %14, %14 : vector<1x1xf32>
    %18 = arith.subf %16, %17 : vector<1x1xf32>
    %19 = vector.broadcast %14 : vector<1x1xf32> to vector<32x256xf32>
    %20 = arith.subf %1, %19 : vector<32x256xf32>
    %cst_10 = arith.constant 9.99999974E-6 : f32
    %21 = vector.broadcast %cst_10 : f32 to vector<1x1xf32>
    %22 = arith.addf %18, %21 : vector<1x1xf32>
    %23 = math.rsqrt %22 : vector<1x1xf32>
    %24 = vector.broadcast %23 : vector<1x1xf32> to vector<32x256xf32>
    %25 = arith.mulf %20, %24 : vector<32x256xf32>
    %c0_11 = arith.constant 0 : index
    %c0_12 = arith.constant 0 : index
    %26 = vector.load %arg3[%c0_11, %c0_12] : memref<96x32xf32, #tpu.memory_space<vmem>>, vector<96x32xf32>
    %cst_13 = arith.constant dense<0.000000e+00> : vector<96x256xf32>
    %27 = tpu.matmul %26, %25, %cst_13 {dimension_numbers = #tpu.dot_dimension_numbers<[1], [0], [0], [1], [0, 0, 1, 1], [], []>} : vector<96x32xf32>, vector<32x256xf32>, vector<96x256xf32> -> vector<96x256xf32>
    %c0_14 = arith.constant 0 : index
    %c0_15 = arith.constant 0 : index
    %28 = vector.load %arg4[%c0_14, %c0_15] : memref<96x1xf32, #tpu.memory_space<vmem>>, vector<96x1xf32>
    %29 = vector.broadcast %28 : vector<96x1xf32> to vector<96x256xf32>
    %30 = arith.addf %27, %29 : vector<96x256xf32>
    %cst_16 = arith.constant dense<0.000000e+00> : vector<32xf32>
    %31 = vector.multi_reduction <add>, %3, %cst_16 [1] : vector<32x256xf32> to vector<32xf32>
    %32 = vector.shape_cast %31 : vector<32xf32> to vector<32x1xf32>
    %cst_17 = arith.constant dense<0.000000e+00> : vector<1xf32>
    %33 = vector.multi_reduction <add>, %32, %cst_17 [0] : vector<32x1xf32> to vector<1xf32>
    %34 = vector.shape_cast %33 : vector<1xf32> to vector<1x1xf32>
    %35 = arith.mulf %3, %3 : vector<32x256xf32>
    %cst_18 = arith.constant dense<0.000000e+00> : vector<32xf32>
    %36 = vector.multi_reduction <add>, %35, %cst_18 [1] : vector<32x256xf32> to vector<32xf32>
    %37 = vector.shape_cast %36 : vector<32xf32> to vector<32x1xf32>
    %cst_19 = arith.constant dense<0.000000e+00> : vector<1xf32>
    %38 = vector.multi_reduction <add>, %37, %cst_19 [0] : vector<32x1xf32> to vector<1xf32>
    %39 = vector.shape_cast %38 : vector<1xf32> to vector<1x1xf32>
    %cst_20 = arith.constant 1.22070313E-4 : f32
    %40 = vector.broadcast %cst_20 : f32 to vector<1x1xf32>
    %41 = arith.mulf %34, %40 : vector<1x1xf32>
    %cst_21 = arith.constant 1.22070313E-4 : f32
    %42 = vector.broadcast %cst_21 : f32 to vector<1x1xf32>
    %43 = arith.mulf %39, %42 : vector<1x1xf32>
    %44 = arith.mulf %41, %41 : vector<1x1xf32>
    %45 = arith.subf %43, %44 : vector<1x1xf32>
    %46 = vector.broadcast %41 : vector<1x1xf32> to vector<32x256xf32>
    %47 = arith.subf %3, %46 : vector<32x256xf32>
    %cst_22 = arith.constant 9.99999974E-6 : f32
    %48 = vector.broadcast %cst_22 : f32 to vector<1x1xf32>
    %49 = arith.addf %45, %48 : vector<1x1xf32>
    %50 = math.rsqrt %49 : vector<1x1xf32>
    %51 = vector.broadcast %50 : vector<1x1xf32> to vector<32x256xf32>
    %52 = arith.mulf %47, %51 : vector<32x256xf32>
    %c0_23 = arith.constant 0 : index
    %c0_24 = arith.constant 0 : index
    %53 = vector.load %arg5[%c0_23, %c0_24] : memref<96x32xf32, #tpu.memory_space<vmem>>, vector<96x32xf32>
    %cst_25 = arith.constant dense<0.000000e+00> : vector<96x256xf32>
    %54 = tpu.matmul %53, %52, %cst_25 {dimension_numbers = #tpu.dot_dimension_numbers<[1], [0], [0], [1], [0, 0, 1, 1], [], []>} : vector<96x32xf32>, vector<32x256xf32>, vector<96x256xf32> -> vector<96x256xf32>
    %c0_26 = arith.constant 0 : index
    %c0_27 = arith.constant 0 : index
    %55 = vector.load %arg6[%c0_26, %c0_27] : memref<96x1xf32, #tpu.memory_space<vmem>>, vector<96x1xf32>
    %56 = vector.broadcast %55 : vector<96x1xf32> to vector<96x256xf32>
    %57 = arith.addf %54, %56 : vector<96x256xf32>
    %58 = vector.extract_strided_slice %30 {offsets = [0, 0], sizes = [32, 256], strides = [1, 1]} : vector<96x256xf32> to vector<32x256xf32>
    %59 = vector.extract_strided_slice %57 {offsets = [32, 0], sizes = [32, 256], strides = [1, 1]} : vector<96x256xf32> to vector<32x256xf32>
    %60 = vector.extract_strided_slice %57 {offsets = [64, 0], sizes = [32, 256], strides = [1, 1]} : vector<96x256xf32> to vector<32x256xf32>
    %61 = vector.extract_strided_slice %58 {offsets = [0, 0], sizes = [8, 256], strides = [1, 1]} : vector<32x256xf32> to vector<8x256xf32>
    %62 = vector.extract_strided_slice %59 {offsets = [0, 0], sizes = [8, 256], strides = [1, 1]} : vector<32x256xf32> to vector<8x256xf32>
    %63 = vector.extract_strided_slice %60 {offsets = [0, 0], sizes = [8, 256], strides = [1, 1]} : vector<32x256xf32> to vector<8x256xf32>
    %64 = tpu.transpose %62, [1, 0] : vector<8x256xf32> -> vector<256x8xf32>
    %cst_28 = arith.constant dense<0.000000e+00> : vector<256x256xf32>
    %65 = tpu.matmul %64, %61, %cst_28 {dimension_numbers = #tpu.dot_dimension_numbers<[1], [0], [0], [1], [0, 0, 1, 1], [], []>} : vector<256x8xf32>, vector<8x256xf32>, vector<256x256xf32> -> vector<256x256xf32>
    %cst_29 = arith.constant dense<0xFF800000> : vector<256xf32>
    %66 = vector.multi_reduction <maximumf>, %65, %cst_29 [0] : vector<256x256xf32> to vector<256xf32>
    %67 = vector.shape_cast %66 : vector<256xf32> to vector<1x256xf32>
    %68 = vector.broadcast %67 : vector<1x256xf32> to vector<256x256xf32>
    %69 = arith.subf %65, %68 : vector<256x256xf32>
    %70 = math.exp %69 : vector<256x256xf32>
    %cst_30 = arith.constant dense<0.000000e+00> : vector<256xf32>
    %71 = vector.multi_reduction <add>, %70, %cst_30 [0] : vector<256x256xf32> to vector<256xf32>
    %72 = vector.shape_cast %71 : vector<256xf32> to vector<1x256xf32>
    %cst_31 = arith.constant dense<0.000000e+00> : vector<8x256xf32>
    %73 = tpu.matmul %63, %70, %cst_31 {dimension_numbers = #tpu.dot_dimension_numbers<[1], [0], [0], [1], [0, 0, 1, 1], [], []>} : vector<8x256xf32>, vector<256x256xf32>, vector<8x256xf32> -> vector<8x256xf32>
    %74 = tpu.reciprocal %72 {approx = true} : vector<1x256xf32> -> vector<1x256xf32>
    %75 = vector.broadcast %74 : vector<1x256xf32> to vector<8x256xf32>
    %76 = arith.mulf %73, %75 : vector<8x256xf32>
    %77 = vector.extract_strided_slice %58 {offsets = [8, 0], sizes = [8, 256], strides = [1, 1]} : vector<32x256xf32> to vector<8x256xf32>
    %78 = vector.extract_strided_slice %59 {offsets = [8, 0], sizes = [8, 256], strides = [1, 1]} : vector<32x256xf32> to vector<8x256xf32>
    %79 = vector.extract_strided_slice %60 {offsets = [8, 0], sizes = [8, 256], strides = [1, 1]} : vector<32x256xf32> to vector<8x256xf32>
    %80 = tpu.transpose %78, [1, 0] : vector<8x256xf32> -> vector<256x8xf32>
    %cst_32 = arith.constant dense<0.000000e+00> : vector<256x256xf32>
    %81 = tpu.matmul %80, %77, %cst_32 {dimension_numbers = #tpu.dot_dimension_numbers<[1], [0], [0], [1], [0, 0, 1, 1], [], []>} : vector<256x8xf32>, vector<8x256xf32>, vector<256x256xf32> -> vector<256x256xf32>
    %cst_33 = arith.constant dense<0xFF800000> : vector<256xf32>
    %82 = vector.multi_reduction <maximumf>, %81, %cst_33 [0] : vector<256x256xf32> to vector<256xf32>
    %83 = vector.shape_cast %82 : vector<256xf32> to vector<1x256xf32>
    %84 = vector.broadcast %83 : vector<1x256xf32> to vector<256x256xf32>
    %85 = arith.subf %81, %84 : vector<256x256xf32>
    %86 = math.exp %85 : vector<256x256xf32>
    %cst_34 = arith.constant dense<0.000000e+00> : vector<256xf32>
    %87 = vector.multi_reduction <add>, %86, %cst_34 [0] : vector<256x256xf32> to vector<256xf32>
    %88 = vector.shape_cast %87 : vector<256xf32> to vector<1x256xf32>
    %cst_35 = arith.constant dense<0.000000e+00> : vector<8x256xf32>
    %89 = tpu.matmul %79, %86, %cst_35 {dimension_numbers = #tpu.dot_dimension_numbers<[1], [0], [0], [1], [0, 0, 1, 1], [], []>} : vector<8x256xf32>, vector<256x256xf32>, vector<8x256xf32> -> vector<8x256xf32>
    %90 = tpu.reciprocal %88 {approx = true} : vector<1x256xf32> -> vector<1x256xf32>
    %91 = vector.broadcast %90 : vector<1x256xf32> to vector<8x256xf32>
    %92 = arith.mulf %89, %91 : vector<8x256xf32>
    %93 = vector.extract_strided_slice %58 {offsets = [16, 0], sizes = [8, 256], strides = [1, 1]} : vector<32x256xf32> to vector<8x256xf32>
    %94 = vector.extract_strided_slice %59 {offsets = [16, 0], sizes = [8, 256], strides = [1, 1]} : vector<32x256xf32> to vector<8x256xf32>
    %95 = vector.extract_strided_slice %60 {offsets = [16, 0], sizes = [8, 256], strides = [1, 1]} : vector<32x256xf32> to vector<8x256xf32>
    %96 = tpu.transpose %94, [1, 0] : vector<8x256xf32> -> vector<256x8xf32>
    %cst_36 = arith.constant dense<0.000000e+00> : vector<256x256xf32>
    %97 = tpu.matmul %96, %93, %cst_36 {dimension_numbers = #tpu.dot_dimension_numbers<[1], [0], [0], [1], [0, 0, 1, 1], [], []>} : vector<256x8xf32>, vector<8x256xf32>, vector<256x256xf32> -> vector<256x256xf32>
    %cst_37 = arith.constant dense<0xFF800000> : vector<256xf32>
    %98 = vector.multi_reduction <maximumf>, %97, %cst_37 [0] : vector<256x256xf32> to vector<256xf32>
    %99 = vector.shape_cast %98 : vector<256xf32> to vector<1x256xf32>
    %100 = vector.broadcast %99 : vector<1x256xf32> to vector<256x256xf32>
    %101 = arith.subf %97, %100 : vector<256x256xf32>
    %102 = math.exp %101 : vector<256x256xf32>
    %cst_38 = arith.constant dense<0.000000e+00> : vector<256xf32>
    %103 = vector.multi_reduction <add>, %102, %cst_38 [0] : vector<256x256xf32> to vector<256xf32>
    %104 = vector.shape_cast %103 : vector<256xf32> to vector<1x256xf32>
    %cst_39 = arith.constant dense<0.000000e+00> : vector<8x256xf32>
    %105 = tpu.matmul %95, %102, %cst_39 {dimension_numbers = #tpu.dot_dimension_numbers<[1], [0], [0], [1], [0, 0, 1, 1], [], []>} : vector<8x256xf32>, vector<256x256xf32>, vector<8x256xf32> -> vector<8x256xf32>
    %106 = tpu.reciprocal %104 {approx = true} : vector<1x256xf32> -> vector<1x256xf32>
    %107 = vector.broadcast %106 : vector<1x256xf32> to vector<8x256xf32>
    %108 = arith.mulf %105, %107 : vector<8x256xf32>
    %109 = vector.extract_strided_slice %58 {offsets = [24, 0], sizes = [8, 256], strides = [1, 1]} : vector<32x256xf32> to vector<8x256xf32>
    %110 = vector.extract_strided_slice %59 {offsets = [24, 0], sizes = [8, 256], strides = [1, 1]} : vector<32x256xf32> to vector<8x256xf32>
    %111 = vector.extract_strided_slice %60 {offsets = [24, 0], sizes = [8, 256], strides = [1, 1]} : vector<32x256xf32> to vector<8x256xf32>
    %112 = tpu.transpose %110, [1, 0] : vector<8x256xf32> -> vector<256x8xf32>
    %cst_40 = arith.constant dense<0.000000e+00> : vector<256x256xf32>
    %113 = tpu.matmul %112, %109, %cst_40 {dimension_numbers = #tpu.dot_dimension_numbers<[1], [0], [0], [1], [0, 0, 1, 1], [], []>} : vector<256x8xf32>, vector<8x256xf32>, vector<256x256xf32> -> vector<256x256xf32>
    %cst_41 = arith.constant dense<0xFF800000> : vector<256xf32>
    %114 = vector.multi_reduction <maximumf>, %113, %cst_41 [0] : vector<256x256xf32> to vector<256xf32>
    %115 = vector.shape_cast %114 : vector<256xf32> to vector<1x256xf32>
    %116 = vector.broadcast %115 : vector<1x256xf32> to vector<256x256xf32>
    %117 = arith.subf %113, %116 : vector<256x256xf32>
    %118 = math.exp %117 : vector<256x256xf32>
    %cst_42 = arith.constant dense<0.000000e+00> : vector<256xf32>
    %119 = vector.multi_reduction <add>, %118, %cst_42 [0] : vector<256x256xf32> to vector<256xf32>
    %120 = vector.shape_cast %119 : vector<256xf32> to vector<1x256xf32>
    %cst_43 = arith.constant dense<0.000000e+00> : vector<8x256xf32>
    %121 = tpu.matmul %111, %118, %cst_43 {dimension_numbers = #tpu.dot_dimension_numbers<[1], [0], [0], [1], [0, 0, 1, 1], [], []>} : vector<8x256xf32>, vector<256x256xf32>, vector<8x256xf32> -> vector<8x256xf32>
    %122 = tpu.reciprocal %120 {approx = true} : vector<1x256xf32> -> vector<1x256xf32>
    %123 = vector.broadcast %122 : vector<1x256xf32> to vector<8x256xf32>
    %124 = arith.mulf %121, %123 : vector<8x256xf32>
    %125 = tpu.concatenate %76, %92, %108, %124 in 0 : vector<8x256xf32>, vector<8x256xf32>, vector<8x256xf32>, vector<8x256xf32> -> vector<32x256xf32>
    %126 = vector.extract_strided_slice %57 {offsets = [0, 0], sizes = [32, 256], strides = [1, 1]} : vector<96x256xf32> to vector<32x256xf32>
    %127 = vector.extract_strided_slice %30 {offsets = [32, 0], sizes = [32, 256], strides = [1, 1]} : vector<96x256xf32> to vector<32x256xf32>
    %128 = vector.extract_strided_slice %30 {offsets = [64, 0], sizes = [32, 256], strides = [1, 1]} : vector<96x256xf32> to vector<32x256xf32>
    %129 = vector.extract_strided_slice %126 {offsets = [0, 0], sizes = [8, 256], strides = [1, 1]} : vector<32x256xf32> to vector<8x256xf32>
    %130 = vector.extract_strided_slice %127 {offsets = [0, 0], sizes = [8, 256], strides = [1, 1]} : vector<32x256xf32> to vector<8x256xf32>
    %131 = vector.extract_strided_slice %128 {offsets = [0, 0], sizes = [8, 256], strides = [1, 1]} : vector<32x256xf32> to vector<8x256xf32>
    %132 = tpu.transpose %130, [1, 0] : vector<8x256xf32> -> vector<256x8xf32>
    %cst_44 = arith.constant dense<0.000000e+00> : vector<256x256xf32>
    %133 = tpu.matmul %132, %129, %cst_44 {dimension_numbers = #tpu.dot_dimension_numbers<[1], [0], [0], [1], [0, 0, 1, 1], [], []>} : vector<256x8xf32>, vector<8x256xf32>, vector<256x256xf32> -> vector<256x256xf32>
    %cst_45 = arith.constant dense<0xFF800000> : vector<256xf32>
    %134 = vector.multi_reduction <maximumf>, %133, %cst_45 [0] : vector<256x256xf32> to vector<256xf32>
    %135 = vector.shape_cast %134 : vector<256xf32> to vector<1x256xf32>
    %136 = vector.broadcast %135 : vector<1x256xf32> to vector<256x256xf32>
    %137 = arith.subf %133, %136 : vector<256x256xf32>
    %138 = math.exp %137 : vector<256x256xf32>
    %cst_46 = arith.constant dense<0.000000e+00> : vector<256xf32>
    %139 = vector.multi_reduction <add>, %138, %cst_46 [0] : vector<256x256xf32> to vector<256xf32>
    %140 = vector.shape_cast %139 : vector<256xf32> to vector<1x256xf32>
    %cst_47 = arith.constant dense<0.000000e+00> : vector<8x256xf32>
    %141 = tpu.matmul %131, %138, %cst_47 {dimension_numbers = #tpu.dot_dimension_numbers<[1], [0], [0], [1], [0, 0, 1, 1], [], []>} : vector<8x256xf32>, vector<256x256xf32>, vector<8x256xf32> -> vector<8x256xf32>
    %142 = tpu.reciprocal %140 {approx = true} : vector<1x256xf32> -> vector<1x256xf32>
    %143 = vector.broadcast %142 : vector<1x256xf32> to vector<8x256xf32>
    %144 = arith.mulf %141, %143 : vector<8x256xf32>
    %145 = vector.extract_strided_slice %126 {offsets = [8, 0], sizes = [8, 256], strides = [1, 1]} : vector<32x256xf32> to vector<8x256xf32>
    %146 = vector.extract_strided_slice %127 {offsets = [8, 0], sizes = [8, 256], strides = [1, 1]} : vector<32x256xf32> to vector<8x256xf32>
    %147 = vector.extract_strided_slice %128 {offsets = [8, 0], sizes = [8, 256], strides = [1, 1]} : vector<32x256xf32> to vector<8x256xf32>
    %148 = tpu.transpose %146, [1, 0] : vector<8x256xf32> -> vector<256x8xf32>
    %cst_48 = arith.constant dense<0.000000e+00> : vector<256x256xf32>
    %149 = tpu.matmul %148, %145, %cst_48 {dimension_numbers = #tpu.dot_dimension_numbers<[1], [0], [0], [1], [0, 0, 1, 1], [], []>} : vector<256x8xf32>, vector<8x256xf32>, vector<256x256xf32> -> vector<256x256xf32>
    %cst_49 = arith.constant dense<0xFF800000> : vector<256xf32>
    %150 = vector.multi_reduction <maximumf>, %149, %cst_49 [0] : vector<256x256xf32> to vector<256xf32>
    %151 = vector.shape_cast %150 : vector<256xf32> to vector<1x256xf32>
    %152 = vector.broadcast %151 : vector<1x256xf32> to vector<256x256xf32>
    %153 = arith.subf %149, %152 : vector<256x256xf32>
    %154 = math.exp %153 : vector<256x256xf32>
    %cst_50 = arith.constant dense<0.000000e+00> : vector<256xf32>
    %155 = vector.multi_reduction <add>, %154, %cst_50 [0] : vector<256x256xf32> to vector<256xf32>
    %156 = vector.shape_cast %155 : vector<256xf32> to vector<1x256xf32>
    %cst_51 = arith.constant dense<0.000000e+00> : vector<8x256xf32>
    %157 = tpu.matmul %147, %154, %cst_51 {dimension_numbers = #tpu.dot_dimension_numbers<[1], [0], [0], [1], [0, 0, 1, 1], [], []>} : vector<8x256xf32>, vector<256x256xf32>, vector<8x256xf32> -> vector<8x256xf32>
    %158 = tpu.reciprocal %156 {approx = true} : vector<1x256xf32> -> vector<1x256xf32>
    %159 = vector.broadcast %158 : vector<1x256xf32> to vector<8x256xf32>
    %160 = arith.mulf %157, %159 : vector<8x256xf32>
    %161 = vector.extract_strided_slice %126 {offsets = [16, 0], sizes = [8, 256], strides = [1, 1]} : vector<32x256xf32> to vector<8x256xf32>
    %162 = vector.extract_strided_slice %127 {offsets = [16, 0], sizes = [8, 256], strides = [1, 1]} : vector<32x256xf32> to vector<8x256xf32>
    %163 = vector.extract_strided_slice %128 {offsets = [16, 0], sizes = [8, 256], strides = [1, 1]} : vector<32x256xf32> to vector<8x256xf32>
    %164 = tpu.transpose %162, [1, 0] : vector<8x256xf32> -> vector<256x8xf32>
    %cst_52 = arith.constant dense<0.000000e+00> : vector<256x256xf32>
    %165 = tpu.matmul %164, %161, %cst_52 {dimension_numbers = #tpu.dot_dimension_numbers<[1], [0], [0], [1], [0, 0, 1, 1], [], []>} : vector<256x8xf32>, vector<8x256xf32>, vector<256x256xf32> -> vector<256x256xf32>
    %cst_53 = arith.constant dense<0xFF800000> : vector<256xf32>
    %166 = vector.multi_reduction <maximumf>, %165, %cst_53 [0] : vector<256x256xf32> to vector<256xf32>
    %167 = vector.shape_cast %166 : vector<256xf32> to vector<1x256xf32>
    %168 = vector.broadcast %167 : vector<1x256xf32> to vector<256x256xf32>
    %169 = arith.subf %165, %168 : vector<256x256xf32>
    %170 = math.exp %169 : vector<256x256xf32>
    %cst_54 = arith.constant dense<0.000000e+00> : vector<256xf32>
    %171 = vector.multi_reduction <add>, %170, %cst_54 [0] : vector<256x256xf32> to vector<256xf32>
    %172 = vector.shape_cast %171 : vector<256xf32> to vector<1x256xf32>
    %cst_55 = arith.constant dense<0.000000e+00> : vector<8x256xf32>
    %173 = tpu.matmul %163, %170, %cst_55 {dimension_numbers = #tpu.dot_dimension_numbers<[1], [0], [0], [1], [0, 0, 1, 1], [], []>} : vector<8x256xf32>, vector<256x256xf32>, vector<8x256xf32> -> vector<8x256xf32>
    %174 = tpu.reciprocal %172 {approx = true} : vector<1x256xf32> -> vector<1x256xf32>
    %175 = vector.broadcast %174 : vector<1x256xf32> to vector<8x256xf32>
    %176 = arith.mulf %173, %175 : vector<8x256xf32>
    %177 = vector.extract_strided_slice %126 {offsets = [24, 0], sizes = [8, 256], strides = [1, 1]} : vector<32x256xf32> to vector<8x256xf32>
    %178 = vector.extract_strided_slice %127 {offsets = [24, 0], sizes = [8, 256], strides = [1, 1]} : vector<32x256xf32> to vector<8x256xf32>
    %179 = vector.extract_strided_slice %128 {offsets = [24, 0], sizes = [8, 256], strides = [1, 1]} : vector<32x256xf32> to vector<8x256xf32>
    %180 = tpu.transpose %178, [1, 0] : vector<8x256xf32> -> vector<256x8xf32>
    %cst_56 = arith.constant dense<0.000000e+00> : vector<256x256xf32>
    %181 = tpu.matmul %180, %177, %cst_56 {dimension_numbers = #tpu.dot_dimension_numbers<[1], [0], [0], [1], [0, 0, 1, 1], [], []>} : vector<256x8xf32>, vector<8x256xf32>, vector<256x256xf32> -> vector<256x256xf32>
    %cst_57 = arith.constant dense<0xFF800000> : vector<256xf32>
    %182 = vector.multi_reduction <maximumf>, %181, %cst_57 [0] : vector<256x256xf32> to vector<256xf32>
    %183 = vector.shape_cast %182 : vector<256xf32> to vector<1x256xf32>
    %184 = vector.broadcast %183 : vector<1x256xf32> to vector<256x256xf32>
    %185 = arith.subf %181, %184 : vector<256x256xf32>
    %186 = math.exp %185 : vector<256x256xf32>
    %cst_58 = arith.constant dense<0.000000e+00> : vector<256xf32>
    %187 = vector.multi_reduction <add>, %186, %cst_58 [0] : vector<256x256xf32> to vector<256xf32>
    %188 = vector.shape_cast %187 : vector<256xf32> to vector<1x256xf32>
    %cst_59 = arith.constant dense<0.000000e+00> : vector<8x256xf32>
    %189 = tpu.matmul %179, %186, %cst_59 {dimension_numbers = #tpu.dot_dimension_numbers<[1], [0], [0], [1], [0, 0, 1, 1], [], []>} : vector<8x256xf32>, vector<256x256xf32>, vector<8x256xf32> -> vector<8x256xf32>
    %190 = tpu.reciprocal %188 {approx = true} : vector<1x256xf32> -> vector<1x256xf32>
    %191 = vector.broadcast %190 : vector<1x256xf32> to vector<8x256xf32>
    %192 = arith.mulf %189, %191 : vector<8x256xf32>
    %193 = tpu.concatenate %144, %160, %176, %192 in 0 : vector<8x256xf32>, vector<8x256xf32>, vector<8x256xf32>, vector<8x256xf32> -> vector<32x256xf32>
    %c0_60 = arith.constant 0 : index
    %c0_61 = arith.constant 0 : index
    %194 = vector.load %arg7[%c0_60, %c0_61] : memref<32x32xf32, #tpu.memory_space<vmem>>, vector<32x32xf32>
    %cst_62 = arith.constant dense<0.000000e+00> : vector<32x256xf32>
    %195 = tpu.matmul %194, %125, %cst_62 {dimension_numbers = #tpu.dot_dimension_numbers<[1], [0], [0], [1], [0, 0, 1, 1], [], []>} : vector<32x32xf32>, vector<32x256xf32>, vector<32x256xf32> -> vector<32x256xf32>
    %c0_63 = arith.constant 0 : index
    %c0_64 = arith.constant 0 : index
    %196 = vector.load %arg8[%c0_63, %c0_64] : memref<32x1xf32, #tpu.memory_space<vmem>>, vector<32x1xf32>
    %197 = vector.broadcast %196 : vector<32x1xf32> to vector<32x256xf32>
    %198 = arith.addf %195, %197 : vector<32x256xf32>
    %199 = arith.addf %198, %1 : vector<32x256xf32>
    %c0_65 = arith.constant 0 : index
    %c0_66 = arith.constant 0 : index
    %200 = vector.load %arg9[%c0_65, %c0_66] : memref<32x32xf32, #tpu.memory_space<vmem>>, vector<32x32xf32>
    %cst_67 = arith.constant dense<0.000000e+00> : vector<32x256xf32>
    %201 = tpu.matmul %200, %193, %cst_67 {dimension_numbers = #tpu.dot_dimension_numbers<[1], [0], [0], [1], [0, 0, 1, 1], [], []>} : vector<32x32xf32>, vector<32x256xf32>, vector<32x256xf32> -> vector<32x256xf32>
    %c0_68 = arith.constant 0 : index
    %c0_69 = arith.constant 0 : index
    %202 = vector.load %arg10[%c0_68, %c0_69] : memref<32x1xf32, #tpu.memory_space<vmem>>, vector<32x1xf32>
    %203 = vector.broadcast %202 : vector<32x1xf32> to vector<32x256xf32>
    %204 = arith.addf %201, %203 : vector<32x256xf32>
    %205 = arith.addf %204, %3 : vector<32x256xf32>
    %c0_70 = arith.constant 0 : index
    %c0_71 = arith.constant 0 : index
    %206 = vector.load %arg11[%c0_70, %c0_71] : memref<32x32xf32, #tpu.memory_space<vmem>>, vector<32x32xf32>
    %cst_72 = arith.constant dense<0.000000e+00> : vector<32x256xf32>
    %207 = tpu.matmul %206, %199, %cst_72 {dimension_numbers = #tpu.dot_dimension_numbers<[1], [0], [0], [1], [0, 0, 1, 1], [], []>} : vector<32x32xf32>, vector<32x256xf32>, vector<32x256xf32> -> vector<32x256xf32>
    %c0_73 = arith.constant 0 : index
    %c0_74 = arith.constant 0 : index
    %208 = vector.load %arg12[%c0_73, %c0_74] : memref<32x32xf32, #tpu.memory_space<vmem>>, vector<32x32xf32>
    %cst_75 = arith.constant dense<0.000000e+00> : vector<32x256xf32>
    %209 = tpu.matmul %208, %205, %cst_75 {dimension_numbers = #tpu.dot_dimension_numbers<[1], [0], [0], [1], [0, 0, 1, 1], [], []>} : vector<32x32xf32>, vector<32x256xf32>, vector<32x256xf32> -> vector<32x256xf32>
    %210 = arith.addf %207, %209 : vector<32x256xf32>
    %c0_76 = arith.constant 0 : index
    %c0_77 = arith.constant 0 : index
    %211 = vector.load %arg13[%c0_76, %c0_77] : memref<32x1xf32, #tpu.memory_space<vmem>>, vector<32x1xf32>
    %212 = vector.broadcast %211 : vector<32x1xf32> to vector<32x256xf32>
    %213 = arith.addf %210, %212 : vector<32x256xf32>
    %c0_78 = arith.constant 0 : index
    %c0_79 = arith.constant 0 : index
    %c0_80 = arith.constant 0 : index
    %214 = vector.load %arg14[%c0_78, %c0_79, %c0_80] : memref<1x96x256xf32, #tpu.memory_space<vmem>>, vector<1x32x256xf32>
    %215 = vector.shape_cast %214 : vector<1x32x256xf32> to vector<32x256xf32>
    %216 = vector.shape_cast %213 : vector<32x256xf32> to vector<1x32x256xf32>
    tpu.vector_store %arg14[%c0_78, %c0_79, %c0_80], %216 {strides = array<i32>} : memref<1x96x256xf32, #tpu.memory_space<vmem>>, vector<1x32x256xf32>,
    %c0_81 = arith.constant 0 : index
    %c32 = arith.constant 32 : index
    %c0_82 = arith.constant 0 : index
    %217 = vector.load %arg14[%c0_81, %c32, %c0_82] : memref<1x96x256xf32, #tpu.memory_space<vmem>>, vector<1x32x256xf32>
    %218 = vector.shape_cast %217 : vector<1x32x256xf32> to vector<32x256xf32>
    %219 = vector.shape_cast %1 : vector<32x256xf32> to vector<1x32x256xf32>
    tpu.vector_store %arg14[%c0_81, %c32, %c0_82], %219 {strides = array<i32>} : memref<1x96x256xf32, #tpu.memory_space<vmem>>, vector<1x32x256xf32>,
    %c0_83 = arith.constant 0 : index
    %c64 = arith.constant 64 : index
    %c0_84 = arith.constant 0 : index
    %220 = vector.load %arg14[%c0_83, %c64, %c0_84] : memref<1x96x256xf32, #tpu.memory_space<vmem>>, vector<1x32x256xf32>
    %221 = vector.shape_cast %220 : vector<1x32x256xf32> to vector<32x256xf32>
    %222 = vector.shape_cast %3 : vector<32x256xf32> to vector<1x32x256xf32>
    tpu.vector_store %arg14[%c0_83, %c64, %c0_84], %222 {strides = array<i32>} : memref<1x96x256xf32, #tpu.memory_space<vmem>>, vector<1x32x256xf32>,
    return
  }
  func.func @transform_0(%arg0: i32) -> (i32, i32, i32) {
    %c0_i32 = arith.constant 0 : i32
    %c0_i32_0 = arith.constant 0 : i32
    %c0_i32_1 = arith.constant 0 : i32
    return %arg0, %c0_i32, %c0_i32_0 : i32, i32, i32
  }
  func.func @transform_1(%arg0: i32) -> (i32, i32, i32) {
    %c0_i32 = arith.constant 0 : i32
    %c0_i32_0 = arith.constant 0 : i32
    %c0_i32_1 = arith.constant 0 : i32
    return %arg0, %c0_i32, %c0_i32_0 : i32, i32, i32
  }
  func.func @transform_2(%arg0: i32) -> (i32, i32) {
    %c0_i32 = arith.constant 0 : i32
    %c0_i32_0 = arith.constant 0 : i32
    %c0_i32_1 = arith.constant 0 : i32
    return %c0_i32, %c0_i32_0 : i32, i32
  }
  func.func @transform_3(%arg0: i32) -> (i32, i32) {
    %c0_i32 = arith.constant 0 : i32
    %c0_i32_0 = arith.constant 0 : i32
    %c0_i32_1 = arith.constant 0 : i32
    return %c0_i32, %c0_i32_0 : i32, i32
  }
  func.func @transform_4(%arg0: i32) -> (i32, i32) {
    %c0_i32 = arith.constant 0 : i32
    %c0_i32_0 = arith.constant 0 : i32
    %c0_i32_1 = arith.constant 0 : i32
    return %c0_i32, %c0_i32_0 : i32, i32
  }
  func.func @transform_5(%arg0: i32) -> (i32, i32) {
    %c0_i32 = arith.constant 0 : i32
    %c0_i32_0 = arith.constant 0 : i32
    %c0_i32_1 = arith.constant 0 : i32
    return %c0_i32, %c0_i32_0 : i32, i32
  }
  func.func @transform_6(%arg0: i32) -> (i32, i32) {
    %c0_i32 = arith.constant 0 : i32
    %c0_i32_0 = arith.constant 0 : i32
    %c0_i32_1 = arith.constant 0 : i32
    return %c0_i32, %c0_i32_0 : i32, i32
  }
  func.func @transform_7(%arg0: i32) -> (i32, i32) {
    %c0_i32 = arith.constant 0 : i32
    %c0_i32_0 = arith.constant 0 : i32
    %c0_i32_1 = arith.constant 0 : i32
    return %c0_i32, %c0_i32_0 : i32, i32
  }
  func.func @transform_8(%arg0: i32) -> (i32, i32) {
    %c0_i32 = arith.constant 0 : i32
    %c0_i32_0 = arith.constant 0 : i32
    %c0_i32_1 = arith.constant 0 : i32
    return %c0_i32, %c0_i32_0 : i32, i32
  }
  func.func @transform_9(%arg0: i32) -> (i32, i32) {
    %c0_i32 = arith.constant 0 : i32
    %c0_i32_0 = arith.constant 0 : i32
    %c0_i32_1 = arith.constant 0 : i32
    return %c0_i32, %c0_i32_0 : i32, i32
  }
  func.func @transform_10(%arg0: i32) -> (i32, i32) {
    %c0_i32 = arith.constant 0 : i32
    %c0_i32_0 = arith.constant 0 : i32
    %c0_i32_1 = arith.constant 0 : i32
    return %c0_i32, %c0_i32_0 : i32, i32
  }
  func.func @transform_11(%arg0: i32) -> (i32, i32) {
    %c0_i32 = arith.constant 0 : i32
    %c0_i32_0 = arith.constant 0 : i32
    %c0_i32_1 = arith.constant 0 : i32
    return %c0_i32, %c0_i32_0 : i32, i32
  }
  func.func @transform_12(%arg0: i32) -> (i32, i32) {
    %c0_i32 = arith.constant 0 : i32
    %c0_i32_0 = arith.constant 0 : i32
    %c0_i32_1 = arith.constant 0 : i32
    return %c0_i32, %c0_i32_0 : i32, i32
  }
  func.func @transform_13(%arg0: i32) -> (i32, i32, i32) {
    %c0_i32 = arith.constant 0 : i32
    %c0_i32_0 = arith.constant 0 : i32
    %c0_i32_1 = arith.constant 0 : i32
    return %arg0, %c0_i32, %c0_i32_0 : i32, i32, i32
  }
}

</mosaic_0001>

<llo_original>
// kernel: tpu_custom_call.1
$region0: #{tpu_custom_call.1}
  #allocation0 [shape = 'u32[]', space=smem, size = 0x4, offset = 0x4, fixed_abs, tag = 'smem constant byte address 0x4 - core index']
  #allocation1 [shape = 'u32[144,128]{1,0:T(1,128)}', space=vmem, size = 0x12000, scoped, tag = 'internal scratch']
  %s0 = inlined_call_operand.vmem [shape: f32[2,32,256], index: 0, kind: input, shape index: {}]
  %s1 = inlined_call_operand.vmem [shape: f32[2,32,256], index: 1, kind: input, shape index: {}]
  %s2 = inlined_call_operand.vmem [shape: f32[96,32], index: 2, kind: input, shape index: {}]
  %s3 = inlined_call_operand.vmem [shape: f32[96,1], index: 3, kind: input, shape index: {}]
  %s4 = inlined_call_operand.vmem [shape: f32[96,32], index: 4, kind: input, shape index: {}]
  %s5 = inlined_call_operand.vmem [shape: f32[96,1], index: 5, kind: input, shape index: {}]
  %s6 = inlined_call_operand.vmem [shape: f32[32,32], index: 6, kind: input, shape index: {}]
  %s7 = inlined_call_operand.vmem [shape: f32[32,1], index: 7, kind: input, shape index: {}]
  %s8 = inlined_call_operand.vmem [shape: f32[32,32], index: 8, kind: input, shape index: {}]
  %s9 = inlined_call_operand.vmem [shape: f32[32,1], index: 9, kind: input, shape index: {}]
  %s10 = inlined_call_operand.vmem [shape: f32[32,32], index: 10, kind: input, shape index: {}]
  %s11 = inlined_call_operand.vmem [shape: f32[32,32], index: 11, kind: input, shape index: {}]
  %s12 = inlined_call_operand.vmem [shape: f32[32,1], index: 12, kind: input, shape index: {}]
  %s13 = inlined_call_operand.hbm [shape: f32[2,96,256], index: 13, kind: output, shape index: {}]
  %s14 = sld [smem:[#allocation0]]
  $region85: #{tpu_custom_call.1} parent=0
    _
  %s16 = ssub.s32 1, %s14
  %s17 = scalar_select 0, %s16, %s14
  $region1: #{tpu_custom_call.1} parent=0
    #allocation2 [shape = 'u8[196608]{0}', space=vmem, size = 0x30000, scoped, tag = 'output window, operand 0']
    #allocation3 [shape = 's32[2]{0}', space=sflag, size = 0x8, scoped, tag = 'scoped memory for tpu_custom_call.1']
    %18 = vsyncpa [#allocation3], 0
    %s19 = scalar_lea.sflag [#allocation3], 1
    %20 = vsyncpa %s19, 0
    loop: start=0, step=1, limit=4
    $region2: #{tpu_custom_call.1} parent=1 // loop_pre_header
      _
    $region3: #{tpu_custom_call.1} parent=1 // loop_header
      %s22 = sphi 0, %s26
      %p23 = scmp.ge.s32.totalorder %s22, 4
      %s32 = sphi 0, %s34
      %s35 = sphi 0, %s32
      %s36 = sphi 0, %s35
      %s52 = sphi 0, %s36
      %s58 = sphi 0, %s60
      %s61 = sphi 0, %s58
      %s62 = sphi 0, %s61
      %s78 = sphi 0, %s62
      %s82 = sphi 0, %s82
      %s84 = sphi 0, %s82
      %s85 = sphi 0, %s84
      %s99 = sphi 0, %s85
      %s103 = sphi 0, %s103
      %s105 = sphi 0, %s103
      %s106 = sphi 0, %s105
      %s120 = sphi 0, %s106
      %s124 = sphi 0, %s124
      %s126 = sphi 0, %s124
      %s127 = sphi 0, %s126
      %s141 = sphi 0, %s127
      %s145 = sphi 0, %s145
      %s147 = sphi 0, %s145
      %s148 = sphi 0, %s147
      %s162 = sphi 0, %s148
      %s166 = sphi 0, %s166
      %s168 = sphi 0, %s166
      %s169 = sphi 0, %s168
      %s183 = sphi 0, %s169
      %s187 = sphi 0, %s187
      %s189 = sphi 0, %s187
      %s190 = sphi 0, %s189
      %s204 = sphi 0, %s190
      %s208 = sphi 0, %s208
      %s210 = sphi 0, %s208
      %s211 = sphi 0, %s210
      %s225 = sphi 0, %s211
      %s229 = sphi 0, %s229
      %s231 = sphi 0, %s229
      %s232 = sphi 0, %s231
      %s246 = sphi 0, %s232
      %s250 = sphi 0, %s250
      %s252 = sphi 0, %s250
      %s253 = sphi 0, %s252
      %s267 = sphi 0, %s253
      %s271 = sphi 0, %s271
      %s273 = sphi 0, %s271
      %s274 = sphi 0, %s273
      %s288 = sphi 0, %s274
      %s292 = sphi 0, %s292
      %s294 = sphi 0, %s292
      %s295 = sphi 0, %s294
      %s309 = sphi 0, %s295
      %s315 = sphi 0, %s317
      %s318 = sphi 0, %s315
      %s319 = sphi 0, %s318
      %s335 = sphi 0, %s319
    $region4: #{tpu_custom_call.1} parent=1 // loop_header_branch
      %25 = sbr.rel (%p23) target = $region8
    $region5: #{tpu_custom_call.1} parent=1 // loop_body
      %s27 = ssub.s32 %s22, 1
      %s28 = ssub.s32 %s22, 2
      %s29 = sadd.s32 %s22, 1
      %s30 = ssub.s32 %s22, %s29
      %p31 = scmp.eq.s32.totalorder %s30, 0
      %s33 = sadd.s32 %s32, 1
      %s34 = scalar_select %p31, %s32, %s33
      %p37 = pneg %p31
      %p38 = scmp.eq.s32.totalorder %s22, 1
      %p39 = por %p37, %p38
      %p40 = scmp.ne.s32.totalorder %s32, %s35
      %p41 = scmp.eq.s32.totalorder %s22, 0
      %p42 = por %p40, %p41
      %p43 = scmp.ne.s32.totalorder %s32, %s35
      %p44 = scmp.eq.s32.totalorder %s27, 1
      %p45 = por %p43, %p44
      %p46 = scmp.ne.s32.totalorder %s35, %s36
      %p47 = scmp.eq.s32.totalorder %s27, 0
      %p48 = por %p46, %p47
      %p49 = scmp.ne.s32.totalorder %s35, %s36
      %p50 = scmp.eq.s32.totalorder %s28, 1
      %p51 = por %p49, %p50
      %p53 = scmp.ne.s32.totalorder %s36, %s52
      %p54 = scmp.eq.s32.totalorder %s28, 0
      %p55 = por %p53, %p54
      %s56 = ssub.s32 %s22, %s29
      %p57 = scmp.eq.s32.totalorder %s56, 0
      %s59 = sadd.s32 %s58, 1
      %s60 = scalar_select %p57, %s58, %s59
      %p63 = pneg %p57
      %p64 = scmp.eq.s32.totalorder %s22, 1
      %p65 = por %p63, %p64
      %p66 = scmp.ne.s32.totalorder %s58, %s61
      %p67 = scmp.eq.s32.totalorder %s22, 0
      %p68 = por %p66, %p67
      %p69 = scmp.ne.s32.totalorder %s58, %s61
      %p70 = scmp.eq.s32.totalorder %s27, 1
      %p71 = por %p69, %p70
      %p72 = scmp.ne.s32.totalorder %s61, %s62
      %p73 = scmp.eq.s32.totalorder %s27, 0
      %p74 = por %p72, %p73
      %p75 = scmp.ne.s32.totalorder %s61, %s62
      %p76 = scmp.eq.s32.totalorder %s28, 1
      %p77 = por %p75, %p76
      %p79 = scmp.ne.s32.totalorder %s62, %s78
      %p80 = scmp.eq.s32.totalorder %s28, 0
      %p81 = por %p79, %p80
      %s83 = sadd.s32 %s82, 1
      %p86 = scmp.eq.s32.totalorder %s22, 1
      %p87 = scmp.ne.s32.totalorder %s82, %s84
      %p88 = scmp.eq.s32.totalorder %s22, 0
      %p89 = por %p87, %p88
      %p90 = scmp.ne.s32.totalorder %s82, %s84
      %p91 = scmp.eq.s32.totalorder %s27, 1
      %p92 = por %p90, %p91
      %p93 = scmp.ne.s32.totalorder %s84, %s85
      %p94 = scmp.eq.s32.totalorder %s27, 0
      %p95 = por %p93, %p94
      %p96 = scmp.ne.s32.totalorder %s84, %s85
      %p97 = scmp.eq.s32.totalorder %s28, 1
      %p98 = por %p96, %p97
      %p100 = scmp.ne.s32.totalorder %s85, %s99
      %p101 = scmp.eq.s32.totalorder %s28, 0
      %p102 = por %p100, %p101
      %s104 = sadd.s32 %s103, 1
      %p107 = scmp.eq.s32.totalorder %s22, 1
      %p108 = scmp.ne.s32.totalorder %s103, %s105
      %p109 = scmp.eq.s32.totalorder %s22, 0
      %p110 = por %p108, %p109
      %p111 = scmp.ne.s32.totalorder %s103, %s105
      %p112 = scmp.eq.s32.totalorder %s27, 1
      %p113 = por %p111, %p112
      %p114 = scmp.ne.s32.totalorder %s105, %s106
      %p115 = scmp.eq.s32.totalorder %s27, 0
      %p116 = por %p114, %p115
      %p117 = scmp.ne.s32.totalorder %s105, %s106
      %p118 = scmp.eq.s32.totalorder %s28, 1
      %p119 = por %p117, %p118
      %p121 = scmp.ne.s32.totalorder %s106, %s120
      %p122 = scmp.eq.s32.totalorder %s28, 0
      %p123 = por %p121, %p122
      %s125 = sadd.s32 %s124, 1
      %p128 = scmp.eq.s32.totalorder %s22, 1
      %p129 = scmp.ne.s32.totalorder %s124, %s126
      %p130 = scmp.eq.s32.totalorder %s22, 0
      %p131 = por %p129, %p130
      %p132 = scmp.ne.s32.totalorder %s124, %s126
      %p133 = scmp.eq.s32.totalorder %s27, 1
      %p134 = por %p132, %p133
      %p135 = scmp.ne.s32.totalorder %s126, %s127
      %p136 = scmp.eq.s32.totalorder %s27, 0
      %p137 = por %p135, %p136
      %p138 = scmp.ne.s32.totalorder %s126, %s127
      %p139 = scmp.eq.s32.totalorder %s28, 1
      %p140 = por %p138, %p139
      %p142 = scmp.ne.s32.totalorder %s127, %s141
      %p143 = scmp.eq.s32.totalorder %s28, 0
      %p144 = por %p142, %p143
      %s146 = sadd.s32 %s145, 1
      %p149 = scmp.eq.s32.totalorder %s22, 1
      %p150 = scmp.ne.s32.totalorder %s145, %s147
      %p151 = scmp.eq.s32.totalorder %s22, 0
      %p152 = por %p150, %p151
      %p153 = scmp.ne.s32.totalorder %s145, %s147
      %p154 = scmp.eq.s32.totalorder %s27, 1
      %p155 = por %p153, %p154
      %p156 = scmp.ne.s32.totalorder %s147, %s148
      %p157 = scmp.eq.s32.totalorder %s27, 0
      %p158 = por %p156, %p157
      %p159 = scmp.ne.s32.totalorder %s147, %s148
      %p160 = scmp.eq.s32.totalorder %s28, 1
      %p161 = por %p159, %p160
      %p163 = scmp.ne.s32.totalorder %s148, %s162
      %p164 = scmp.eq.s32.totalorder %s28, 0
      %p165 = por %p163, %p164
      %s167 = sadd.s32 %s166, 1
      %p170 = scmp.eq.s32.totalorder %s22, 1
      %p171 = scmp.ne.s32.totalorder %s166, %s168
      %p172 = scmp.eq.s32.totalorder %s22, 0
      %p173 = por %p171, %p172
      %p174 = scmp.ne.s32.totalorder %s166, %s168
      %p175 = scmp.eq.s32.totalorder %s27, 1
      %p176 = por %p174, %p175
      %p177 = scmp.ne.s32.totalorder %s168, %s169
      %p178 = scmp.eq.s32.totalorder %s27, 0
      %p179 = por %p177, %p178
      %p180 = scmp.ne.s32.totalorder %s168, %s169
      %p181 = scmp.eq.s32.totalorder %s28, 1
      %p182 = por %p180, %p181
      %p184 = scmp.ne.s32.totalorder %s169, %s183
      %p185 = scmp.eq.s32.totalorder %s28, 0
      %p186 = por %p184, %p185
      %s188 = sadd.s32 %s187, 1
      %p191 = scmp.eq.s32.totalorder %s22, 1
      %p192 = scmp.ne.s32.totalorder %s187, %s189
      %p193 = scmp.eq.s32.totalorder %s22, 0
      %p194 = por %p192, %p193
      %p195 = scmp.ne.s32.totalorder %s187, %s189
      %p196 = scmp.eq.s32.totalorder %s27, 1
      %p197 = por %p195, %p196
      %p198 = scmp.ne.s32.totalorder %s189, %s190
      %p199 = scmp.eq.s32.totalorder %s27, 0
      %p200 = por %p198, %p199
      %p201 = scmp.ne.s32.totalorder %s189, %s190
      %p202 = scmp.eq.s32.totalorder %s28, 1
      %p203 = por %p201, %p202
      %p205 = scmp.ne.s32.totalorder %s190, %s204
      %p206 = scmp.eq.s32.totalorder %s28, 0
      %p207 = por %p205, %p206
      %s209 = sadd.s32 %s208, 1
      %p212 = scmp.eq.s32.totalorder %s22, 1
      %p213 = scmp.ne.s32.totalorder %s208, %s210
      %p214 = scmp.eq.s32.totalorder %s22, 0
      %p215 = por %p213, %p214
      %p216 = scmp.ne.s32.totalorder %s208, %s210
      %p217 = scmp.eq.s32.totalorder %s27, 1
      %p218 = por %p216, %p217
      %p219 = scmp.ne.s32.totalorder %s210, %s211
      %p220 = scmp.eq.s32.totalorder %s27, 0
      %p221 = por %p219, %p220
      %p222 = scmp.ne.s32.totalorder %s210, %s211
      %p223 = scmp.eq.s32.totalorder %s28, 1
      %p224 = por %p222, %p223
      %p226 = scmp.ne.s32.totalorder %s211, %s225
      %p227 = scmp.eq.s32.totalorder %s28, 0
      %p228 = por %p226, %p227
      %s230 = sadd.s32 %s229, 1
      %p233 = scmp.eq.s32.totalorder %s22, 1
      %p234 = scmp.ne.s32.totalorder %s229, %s231
      %p235 = scmp.eq.s32.totalorder %s22, 0
      %p236 = por %p234, %p235
      %p237 = scmp.ne.s32.totalorder %s229, %s231
      %p238 = scmp.eq.s32.totalorder %s27, 1
      %p239 = por %p237, %p238
      %p240 = scmp.ne.s32.totalorder %s231, %s232
      %p241 = scmp.eq.s32.totalorder %s27, 0
      %p242 = por %p240, %p241
      %p243 = scmp.ne.s32.totalorder %s231, %s232
      %p244 = scmp.eq.s32.totalorder %s28, 1
      %p245 = por %p243, %p244
      %p247 = scmp.ne.s32.totalorder %s232, %s246
      %p248 = scmp.eq.s32.totalorder %s28, 0
      %p249 = por %p247, %p248
      %s251 = sadd.s32 %s250, 1
      %p254 = scmp.eq.s32.totalorder %s22, 1
      %p255 = scmp.ne.s32.totalorder %s250, %s252
      %p256 = scmp.eq.s32.totalorder %s22, 0
      %p257 = por %p255, %p256
      %p258 = scmp.ne.s32.totalorder %s250, %s252
      %p259 = scmp.eq.s32.totalorder %s27, 1
      %p260 = por %p258, %p259
      %p261 = scmp.ne.s32.totalorder %s252, %s253
      %p262 = scmp.eq.s32.totalorder %s27, 0
      %p263 = por %p261, %p262
      %p264 = scmp.ne.s32.totalorder %s252, %s253
      %p265 = scmp.eq.s32.totalorder %s28, 1
      %p266 = por %p264, %p265
      %p268 = scmp.ne.s32.totalorder %s253, %s267
      %p269 = scmp.eq.s32.totalorder %s28, 0
      %p270 = por %p268, %p269
      %s272 = sadd.s32 %s271, 1
      %p275 = scmp.eq.s32.totalorder %s22, 1
      %p276 = scmp.ne.s32.totalorder %s271, %s273
      %p277 = scmp.eq.s32.totalorder %s22, 0
      %p278 = por %p276, %p277
      %p279 = scmp.ne.s32.totalorder %s271, %s273
      %p280 = scmp.eq.s32.totalorder %s27, 1
      %p281 = por %p279, %p280
      %p282 = scmp.ne.s32.totalorder %s273, %s274
      %p283 = scmp.eq.s32.totalorder %s27, 0
      %p284 = por %p282, %p283
      %p285 = scmp.ne.s32.totalorder %s273, %s274
      %p286 = scmp.eq.s32.totalorder %s28, 1
      %p287 = por %p285, %p286
      %p289 = scmp.ne.s32.totalorder %s274, %s288
      %p290 = scmp.eq.s32.totalorder %s28, 0
      %p291 = por %p289, %p290
      %s293 = sadd.s32 %s292, 1
      %p296 = scmp.eq.s32.totalorder %s22, 1
      %p297 = scmp.ne.s32.totalorder %s292, %s294
      %p298 = scmp.eq.s32.totalorder %s22, 0
      %p299 = por %p297, %p298
      %p300 = scmp.ne.s32.totalorder %s292, %s294
      %p301 = scmp.eq.s32.totalorder %s27, 1
      %p302 = por %p300, %p301
      %p303 = scmp.ne.s32.totalorder %s294, %s295
      %p304 = scmp.eq.s32.totalorder %s27, 0
      %p305 = por %p303, %p304
      %p306 = scmp.ne.s32.totalorder %s294, %s295
      %p307 = scmp.eq.s32.totalorder %s28, 1
      %p308 = por %p306, %p307
      %p310 = scmp.ne.s32.totalorder %s295, %s309
      %p311 = scmp.eq.s32.totalorder %s28, 0
      %p312 = por %p310, %p311
      %s313 = ssub.s32 %s22, %s29
      %p314 = scmp.eq.s32.totalorder %s313, 0
      %s316 = sadd.s32 %s315, 1
      %s317 = scalar_select %p314, %s315, %s316
      %p320 = pneg %p314
      %p321 = scmp.eq.s32.totalorder %s22, 1
      %p322 = por %p320, %p321
      %p323 = scmp.ne.s32.totalorder %s315, %s318
      %p324 = scmp.eq.s32.totalorder %s22, 0
      %p325 = por %p323, %p324
      %p326 = scmp.ne.s32.totalorder %s315, %s318
      %p327 = scmp.eq.s32.totalorder %s27, 1
      %p328 = por %p326, %p327
      %p329 = scmp.ne.s32.totalorder %s318, %s319
      %p330 = scmp.eq.s32.totalorder %s27, 0
      %p331 = por %p329, %p330
      %p332 = scmp.ne.s32.totalorder %s318, %s319
      %p333 = scmp.eq.s32.totalorder %s28, 1
      %p334 = por %p332, %p333
      %p336 = scmp.ne.s32.totalorder %s319, %s335
      %p337 = scmp.eq.s32.totalorder %s28, 0
      %p338 = por %p336, %p337
      %p339 = scmp.le.s32.totalorder 1, %s22
      %p340 = scmp.lt.s32.totalorder %s22, 3
      %p341 = pnand %p339, %p340
      %p342 = pneg %p341
      // Predicated region
      $region9: #{tpu_custom_call.1} parent=5 // pred_check
        _
      $region10: #{tpu_custom_call.1} parent=5 // pred_check_branch
        %344 = sbr.rel (%p341) target = $region12
      $region11: #{tpu_custom_call.1} parent=5 // pred_region
        %s345 = ssub.s32 %s22, 1
        // Predicated region
        $region13: #{tpu_custom_call.1} parent=11 // pred_check
          %p346 = pneg %p95
        $region14: #{tpu_custom_call.1} parent=11 // pred_check_branch
          %348 = sbr.rel (%p346) target = $region16
        $region15: #{tpu_custom_call.1} parent=11 // pred_region
          _
        $region16: #{tpu_custom_call.1} parent=11 // pred_fallthru
          _
        // Predicated region
        $region17: #{tpu_custom_call.1} parent=11 // pred_check
          %p349 = pneg %p116
        $region18: #{tpu_custom_call.1} parent=11 // pred_check_branch
          %351 = sbr.rel (%p349) target = $region20
        $region19: #{tpu_custom_call.1} parent=11 // pred_region
          _
        $region20: #{tpu_custom_call.1} parent=11 // pred_fallthru
          _
        // Predicated region
        $region21: #{tpu_custom_call.1} parent=11 // pred_check
          %p352 = pneg %p137
        $region22: #{tpu_custom_call.1} parent=11 // pred_check_branch
          %354 = sbr.rel (%p352) target = $region24
        $region23: #{tpu_custom_call.1} parent=11 // pred_region
          _
        $region24: #{tpu_custom_call.1} parent=11 // pred_fallthru
          _
        // Predicated region
        $region25: #{tpu_custom_call.1} parent=11 // pred_check
          %p355 = pneg %p158
        $region26: #{tpu_custom_call.1} parent=11 // pred_check_branch
          %357 = sbr.rel (%p355) target = $region28
        $region27: #{tpu_custom_call.1} parent=11 // pred_region
          _
        $region28: #{tpu_custom_call.1} parent=11 // pred_fallthru
          _
        // Predicated region
        $region29: #{tpu_custom_call.1} parent=11 // pred_check
          %p358 = pneg %p179
        $region30: #{tpu_custom_call.1} parent=11 // pred_check_branch
          %360 = sbr.rel (%p358) target = $region32
        $region31: #{tpu_custom_call.1} parent=11 // pred_region
          _
        $region32: #{tpu_custom_call.1} parent=11 // pred_fallthru
          _
        // Predicated region
        $region33: #{tpu_custom_call.1} parent=11 // pred_check
          %p361 = pneg %p200
        $region34: #{tpu_custom_call.1} parent=11 // pred_check_branch
          %363 = sbr.rel (%p361) target = $region36
        $region35: #{tpu_custom_call.1} parent=11 // pred_region
          _
        $region36: #{tpu_custom_call.1} parent=11 // pred_fallthru
          _
        // Predicated region
        $region37: #{tpu_custom_call.1} parent=11 // pred_check
          %p364 = pneg %p221
        $region38: #{tpu_custom_call.1} parent=11 // pred_check_branch
          %366 = sbr.rel (%p364) target = $region40
        $region39: #{tpu_custom_call.1} parent=11 // pred_region
          _
        $region40: #{tpu_custom_call.1} parent=11 // pred_fallthru
          _
        // Predicated region
        $region41: #{tpu_custom_call.1} parent=11 // pred_check
          %p367 = pneg %p242
        $region42: #{tpu_custom_call.1} parent=11 // pred_check_branch
          %369 = sbr.rel (%p367) target = $region44
        $region43: #{tpu_custom_call.1} parent=11 // pred_region
          _
        $region44: #{tpu_custom_call.1} parent=11 // pred_fallthru
          _
        // Predicated region
        $region45: #{tpu_custom_call.1} parent=11 // pred_check
          %p370 = pneg %p263
        $region46: #{tpu_custom_call.1} parent=11 // pred_check_branch
          %372 = sbr.rel (%p370) target = $region48
        $region47: #{tpu_custom_call.1} parent=11 // pred_region
          _
        $region48: #{tpu_custom_call.1} parent=11 // pred_fallthru
          _
        // Predicated region
        $region49: #{tpu_custom_call.1} parent=11 // pred_check
          %p373 = pneg %p284
        $region50: #{tpu_custom_call.1} parent=11 // pred_check_branch
          %375 = sbr.rel (%p373) target = $region52
        $region51: #{tpu_custom_call.1} parent=11 // pred_region
          _
        $region52: #{tpu_custom_call.1} parent=11 // pred_fallthru
          _
        // Predicated region
        $region53: #{tpu_custom_call.1} parent=11 // pred_check
          %p376 = pneg %p305
        $region54: #{tpu_custom_call.1} parent=11 // pred_check_branch
          %378 = sbr.rel (%p376) target = $region56
        $region55: #{tpu_custom_call.1} parent=11 // pred_region
          _
        $region56: #{tpu_custom_call.1} parent=11 // pred_fallthru
          _
      $region12: #{tpu_custom_call.1} parent=5 // pred_fallthru
        _
      %p379 = scmp.lt.s32.totalorder %s22, 2
      // Predicated region
      $region57: #{tpu_custom_call.1} parent=5 // pred_check
        %p380 = pneg %p379
      $region58: #{tpu_custom_call.1} parent=5 // pred_check_branch
        %382 = sbr.rel (%p380) target = $region60
      $region59: #{tpu_custom_call.1} parent=5 // pred_region
        // Predicated region
        $region61: #{tpu_custom_call.1} parent=59 // pred_check
          %p383 = pneg %p42
        $region62: #{tpu_custom_call.1} parent=59 // pred_check_branch
          %385 = sbr.rel (%p383) target = $region64
        $region63: #{tpu_custom_call.1} parent=59 // pred_region
          %p386 = scmp.lt.s32.totalorder %s22, 1
          %s387 = scalar_select %p386, %s22, 1
          %s388 = smul.addr %s387, 8
          %s389 = smul.addr %s388, 8
          %s390 = scalar_lea.vmem %s0, %s389
        $region64: #{tpu_custom_call.1} parent=59 // pred_fallthru
          _
        // Predicated region
        $region65: #{tpu_custom_call.1} parent=59 // pred_check
          %p391 = pneg %p68
        $region66: #{tpu_custom_call.1} parent=59 // pred_check_branch
          %393 = sbr.rel (%p391) target = $region68
        $region67: #{tpu_custom_call.1} parent=59 // pred_region
          %p394 = scmp.lt.s32.totalorder %s22, 1
          %s395 = scalar_select %p394, %s22, 1
          %s396 = smul.addr %s395, 8
          %s397 = smul.addr %s396, 8
          %s398 = scalar_lea.vmem %s1, %s397
        $region68: #{tpu_custom_call.1} parent=59 // pred_fallthru
          _
      $region60: #{tpu_custom_call.1} parent=5 // pred_fallthru
        _
      %p399 = scmp.le.s32.totalorder 1, %s22
      %p400 = scmp.lt.s32.totalorder %s22, 3
      %p401 = pnand %p399, %p400
      %p402 = pneg %p401
      // Predicated region
      $region69: #{tpu_custom_call.1} parent=5 // pred_check
        _
      $region70: #{tpu_custom_call.1} parent=5 // pred_check_branch
        %404 = sbr.rel (%p401) target = $region72
      $region71: #{tpu_custom_call.1} parent=5 // pred_region
        %s405 = ssub.s32 %s22, 1
        %p406 = scmp.lt.s32.totalorder %s27, 1
        %s407 = scalar_select %p406, %s27, 1
        %s408 = smul.addr %s407, 8
        %s409 = smul.addr %s408, 8
        %s410 = scalar_lea.vmem %s0, %s409
        %p411 = pneg %p48
        %p412 = pneg %p45
        %p413 = scmp.lt.s32.totalorder %s27, 1
        %s414 = scalar_select %p413, %s27, 1
        %s415 = smul.addr %s414, 8
        %s416 = smul.addr %s415, 8
        %s417 = scalar_lea.vmem %s1, %s416
        %p418 = pneg %p74
        %p419 = pneg %p71
        %p420 = pneg %p95
        %p421 = pneg %p92
        %p422 = pneg %p116
        %p423 = pneg %p113
        %p424 = pneg %p137
        %p425 = pneg %p134
        %p426 = pneg %p158
        %p427 = pneg %p155
        %p428 = pneg %p179
        %p429 = pneg %p176
        %p430 = pneg %p200
        %p431 = pneg %p197
        %p432 = pneg %p221
        %p433 = pneg %p218
        %p434 = pneg %p242
        %p435 = pneg %p239
        %p436 = pneg %p263
        %p437 = pneg %p260
        %p438 = pneg %p284
        %p439 = pneg %p281
        %p440 = pneg %p305
        %p441 = pneg %p302
        %p442 = pneg %p331
        %p443 = pneg %p328
        %s444 = sand.u32 %s318, 1
        %s445 = scalar_lea.sflag [#allocation3], %s444
        %s446 = sand.u32 %s318, 1
        %s447 = smul.addr %s446, 192
        %s448 = scalar_lea.vmem [#allocation2], %s447
        %p449 = scmp.lt.s32.totalorder %s27, 1
        %s450 = scalar_select %p449, %s27, 1
        %s451 = smul.addr %s450, 8
        %s452 = smul.addr %s451, 8
        %s453 = scalar_lea.vmem %s0, %s452
        %p454 = scmp.lt.s32.totalorder %s27, 1
        %s455 = scalar_select %p454, %s27, 1
        %s456 = smul.addr %s455, 8
        %s457 = smul.addr %s456, 8
        %s458 = scalar_lea.vmem %s1, %s457
        %v459 = vld [vmem:[%s453] sm:$0xff]
        %v460 = vld [vmem:[%s453 + $0x8] sm:$0xff]
        %v461 = vld [vmem:[%s453 + $0x10] sm:$0xff]
        %v462 = vld [vmem:[%s453 + $0x18] sm:$0xff]
        %v463 = vld [vmem:[%s453 + $0x20] sm:$0xff]
        %v464 = vld [vmem:[%s453 + $0x28] sm:$0xff]
        %v465 = vld [vmem:[%s453 + $0x30] sm:$0xff]
        %v466 = vld [vmem:[%s453 + $0x38] sm:$0xff]
        %v467 = vld [vmem:[%s458] sm:$0xff]
        %v468 = vld [vmem:[%s458 + $0x8] sm:$0xff]
        %v469 = vld [vmem:[%s458 + $0x10] sm:$0xff]
        %v470 = vld [vmem:[%s458 + $0x18] sm:$0xff]
        %v471 = vld [vmem:[%s458 + $0x20] sm:$0xff]
        %v472 = vld [vmem:[%s458 + $0x28] sm:$0xff]
        %v473 = vld [vmem:[%s458 + $0x30] sm:$0xff]
        %v474 = vld [vmem:[%s458 + $0x38] sm:$0xff]
        %v475 = vadd.f32 %v459, %v460
        %476 = vadd.xlane.f32.xlu0 %v475
        %v477 = vpop.xlane.xlu0 %476
        %v478 = vadd.f32 %v461, %v462
        %479 = vadd.xlane.f32.xlu0 %v478
        %v480 = vpop.xlane.xlu0 %479
        %v481 = vadd.f32 %v463, %v464
        %482 = vadd.xlane.f32.xlu0 %v481
        %v483 = vpop.xlane.xlu0 %482
        %v484 = vadd.f32 %v465, %v466
        %485 = vadd.xlane.f32.xlu0 %v484
        %v486 = vpop.xlane.xlu0 %485
        %v487 = vadd.f32 %v477, %v480
        %v488 = vadd.f32 %v487, %v483
        %v489 = vadd.f32 %v488, %v486
        %v490 = vrot.slane %v489, 4
        %v491 = vadd.f32 %v489, %v490
        %v492 = vrot.slane %v491, 2
        %v493 = vadd.f32 %v491, %v492
        %v494 = vrot.slane %v493, 1
        %v495 = vadd.f32 %v493, %v494
        %v496 = vmul.f32 %v459, %v459
        %v497 = vmul.f32 %v460, %v460
        %v498 = vmul.f32 %v461, %v461
        %v499 = vmul.f32 %v462, %v462
        %v500 = vmul.f32 %v463, %v463
        %v501 = vmul.f32 %v464, %v464
        %v502 = vmul.f32 %v465, %v465
        %v503 = vmul.f32 %v466, %v466
        %v504 = vadd.f32 %v496, %v497
        %505 = vadd.xlane.f32.xlu0 %v504
        %v506 = vpop.xlane.xlu0 %505
        %v507 = vadd.f32 %v498, %v499
        %508 = vadd.xlane.f32.xlu0 %v507
        %v509 = vpop.xlane.xlu0 %508
        %v510 = vadd.f32 %v500, %v501
        %511 = vadd.xlane.f32.xlu0 %v510
        %v512 = vpop.xlane.xlu0 %511
        %v513 = vadd.f32 %v502, %v503
        %514 = vadd.xlane.f32.xlu0 %v513
        %v515 = vpop.xlane.xlu0 %514
        %v516 = vadd.f32 %v506, %v509
        %v517 = vadd.f32 %v516, %v512
        %v518 = vadd.f32 %v517, %v515
        %v519 = vrot.slane %v518, 4
        %v520 = vadd.f32 %v518, %v519
        %v521 = vrot.slane %v520, 2
        %v522 = vadd.f32 %v520, %v521
        %v523 = vrot.slane %v522, 1
        %v524 = vadd.f32 %v522, %v523
        %v525 = vmul.f32 %v495, 0.00012207031
        %v526 = vmul.f32 %v524, 0.00012207031
        %v527 = vmul.f32 %v525, %v525
        %v528 = vsub.f32 %v526, %v527
        %v529 = vsub.f32 %v459, %v525
        %v530 = vsub.f32 %v460, %v525
        %v531 = vsub.f32 %v461, %v525
        %v532 = vsub.f32 %v462, %v525
        %v533 = vsub.f32 %v463, %v525
        %v534 = vsub.f32 %v464, %v525
        %v535 = vsub.f32 %v465, %v525
        %v536 = vsub.f32 %v466, %v525
        %v537 = vadd.f32 %v528, 1e-05
        %v538 = vrsqrt.pop %v537
        %v539 = vmul.f32 %v529, %v538
        %v540 = vmul.f32 %v530, %v538
        %v541 = vmul.f32 %v531, %v538
        %v542 = vmul.f32 %v532, %v538
        %v543 = vmul.f32 %v533, %v538
        %v544 = vmul.f32 %v534, %v538
        %v545 = vmul.f32 %v535, %v538
        %v546 = vmul.f32 %v536, %v538
        %v547 = vld [vmem:[%s2] sm:$0xff]
        %v548 = vld [vmem:[%s2 + $0x8] sm:$0xff]
        %v549 = vld [vmem:[%s2 + $0x10] sm:$0xff]
        %v550 = vld [vmem:[%s2 + $0x18] sm:$0xff]
        %v551 = vld [vmem:[%s2 + $0x20] sm:$0xff]
        %v552 = vld [vmem:[%s2 + $0x28] sm:$0xff]
        %v553 = vld [vmem:[%s2 + $0x30] sm:$0xff]
        %v554 = vld [vmem:[%s2 + $0x38] sm:$0xff]
        %v555 = vld [vmem:[%s2 + $0x40] sm:$0xff]
        %v556 = vld [vmem:[%s2 + $0x48] sm:$0xff]
        %v557 = vld [vmem:[%s2 + $0x50] sm:$0xff]
        %v558 = vld [vmem:[%s2 + $0x58] sm:$0xff]
        %v559 = vld [vmem:[%s3] sm:$0xff]
        %v560 = vld [vmem:[%s3 + $0x8] sm:$0xff]
        %v561 = vld [vmem:[%s3 + $0x10] sm:$0xff]
        %v562 = vld [vmem:[%s3 + $0x18] sm:$0xff]
        %v563 = vld [vmem:[%s3 + $0x20] sm:$0xff]
        %v564 = vld [vmem:[%s3 + $0x28] sm:$0xff]
        %v565 = vld [vmem:[%s3 + $0x30] sm:$0xff]
        %v566 = vld [vmem:[%s3 + $0x38] sm:$0xff]
        %v567 = vld [vmem:[%s3 + $0x40] sm:$0xff]
        %v568 = vld [vmem:[%s3 + $0x48] sm:$0xff]
        %v569 = vld [vmem:[%s3 + $0x50] sm:$0xff]
        %v570 = vld [vmem:[%s3 + $0x58] sm:$0xff]
        %572 = vset.pattern.permute.xlu0 0
        %573 = vperm.xlu0 %572, %v559
        %v574 = vpop.permute.xlu0 %573
        %577 = vset.pattern.permute.xlu0 0
        %578 = vperm.xlu0 %577, %v560
        %v579 = vpop.permute.xlu0 %578
        %582 = vset.pattern.permute.xlu0 0
        %583 = vperm.xlu0 %582, %v561
        %v584 = vpop.permute.xlu0 %583
        %587 = vset.pattern.permute.xlu0 0
        %588 = vperm.xlu0 %587, %v562
        %v589 = vpop.permute.xlu0 %588
        %592 = vset.pattern.permute.xlu0 0
        %593 = vperm.xlu0 %592, %v563
        %v594 = vpop.permute.xlu0 %593
        %597 = vset.pattern.permute.xlu0 0
        %598 = vperm.xlu0 %597, %v564
        %v599 = vpop.permute.xlu0 %598
        %602 = vset.pattern.permute.xlu0 0
        %603 = vperm.xlu0 %602, %v565
        %v604 = vpop.permute.xlu0 %603
        %607 = vset.pattern.permute.xlu0 0
        %608 = vperm.xlu0 %607, %v566
        %v609 = vpop.permute.xlu0 %608
        %612 = vset.pattern.permute.xlu0 0
        %613 = vperm.xlu0 %612, %v567
        %v614 = vpop.permute.xlu0 %613
        %617 = vset.pattern.permute.xlu0 0
        %618 = vperm.xlu0 %617, %v568
        %v619 = vpop.permute.xlu0 %618
        %622 = vset.pattern.permute.xlu0 0
        %623 = vperm.xlu0 %622, %v569
        %v624 = vpop.permute.xlu0 %623
        %627 = vset.pattern.permute.xlu0 0
        %628 = vperm.xlu0 %627, %v570
        %v629 = vpop.permute.xlu0 %628
        %vm631 = vcmask 261120
        %v633 = vsel %vm631, %v547, 0
        %v636 = vsel %vm631, %v548, 0
        %v639 = vsel %vm631, %v549, 0
        %v642 = vsel %vm631, %v550, 0
        %v645 = vsel %vm631, %v551, 0
        %v648 = vsel %vm631, %v552, 0
        %v651 = vsel %vm631, %v553, 0
        %v654 = vsel %vm631, %v554, 0
        %v657 = vsel %vm631, %v555, 0
        %v660 = vsel %vm631, %v556, 0
        %v663 = vsel %vm631, %v557, 0
        %v666 = vsel %vm631, %v558, 0
        %668 = vmatprep.subr.mxu0 %v540
        %669 = vmatpush1.msra.mxu0 %v539
        %670 = vmatprep.subr.mxu0 %v542
        %671 = vmatpush1.msra.mxu0 %v541
        %672 = vmatprep.subr.mxu0 %v544
        %673 = vmatpush1.msra.mxu0 %v543
        %674 = vmatprep.subr.mxu0 %v546
        %675 = vmatpush1.msra.mxu0 %v545
        %676 = vmatprep.subr.mxu0 0.0
        %677 = vmatpush1.msra.mxu0 0.0
        %678 = vmatprep.subr.mxu0 0.0
        %679 = vmatpush1.msra.mxu0 0.0
        %680 = vmatprep.subr.mxu0 0.0
        %681 = vmatpush1.msra.mxu0 0.0
        %682 = vmatprep.subr.mxu0 0.0
        %683 = vmatpush1.msra.mxu0 0.0
        %684 = vmatprep.subr.mxu0 0.0
        %685 = vmatpush1.msra.mxu0 0.0
        %686 = vmatprep.subr.mxu0 0.0
        %687 = vmatpush1.msra.mxu0 0.0
        %688 = vmatprep.subr.mxu0 0.0
        %689 = vmatpush1.msra.mxu0 0.0
        %690 = vmatprep.subr.mxu0 0.0
        %691 = vmatpush1.msra.mxu0 0.0
        %692 = vmatprep.subr.mxu0 0.0
        %693 = vmatpush1.msra.mxu0 0.0
        %694 = vmatprep.subr.mxu0 0.0
        %695 = vmatpush1.msra.mxu0 0.0
        %696 = vmatprep.subr.mxu0 0.0
        %697 = vmatpush1.msra.mxu0 0.0
        %698 = vmatprep.subr.mxu0 0.0
        %699 = vmatpush1.msra.mxu0 0.0
        %700 = vmatprep.subr.mxu0 0.0
        %701 = vmatpush1.msra.mxu0 0.0
        %702 = vmatprep.subr.mxu0 0.0
        %703 = vmatpush1.msra.mxu0 0.0
        %704 = vmatprep.subr.mxu0 0.0
        %705 = vmatpush1.msra.mxu0 0.0
        %706 = vmatprep.subr.mxu0 0.0
        %707 = vmatpush1.msra.mxu0 0.0
        %708 = vmatprep.subr.mxu0 0.0
        %709 = vmatpush1.msra.mxu0 0.0
        %710 = vmatprep.subr.mxu0 0.0
        %711 = vmatpush1.msra.mxu0 0.0
        %712 = vmatprep.subr.mxu0 0.0
        %713 = vmatpush1.msra.mxu0 0.0
        %714 = vmatprep.subr.mxu0 0.0
        %715 = vmatpush1.msra.mxu0 0.0
        %716 = vmatprep.subr.mxu0 0.0
        %717 = vmatpush1.msra.mxu0 0.0
        %718 = vmatprep.subr.mxu0 0.0
        %719 = vmatpush1.msra.mxu0 0.0
        %720 = vmatprep.subr.mxu0 0.0
        %721 = vmatpush1.msra.mxu0 0.0
        %722 = vmatprep.subr.mxu0 0.0
        %723 = vmatpush1.msra.mxu0 0.0
        %724 = vmatprep.subr.mxu0 0.0
        %725 = vmatpush1.msra.mxu0 0.0
        %726 = vmatprep.subr.mxu0 0.0
        %727 = vmatpush1.msra.mxu0 0.0
        %728 = vmatprep.subr.mxu0 0.0
        %729 = vmatpush1.msra.mxu0 0.0
        %730 = vmatprep.subr.mxu0 0.0
        %731 = vmatpush1.msra.mxu0 0.0
        %732 = vmatprep.mubr.f32.mxu0 0.0
        %733 = vmatmul.mubr.f32.gmra.mrb[0].mxu0 %v633
        %v734 = vpop.f32.mrb[0].mxu0
        %v735 = vadd.f32 %v574, %v734
        %v736 = vpop.f32.mrb[0].mxu0
        %v737 = vadd.f32 %v574, %v736
        %738 = vmatprep.mubr.f32.mxu0 0.0
        %739 = vmatmul.mubr.f32.gmra.mrb[0].mxu0 %v636
        %v740 = vpop.f32.mrb[0].mxu0
        %v741 = vadd.f32 %v579, %v740
        %v742 = vpop.f32.mrb[0].mxu0
        %v743 = vadd.f32 %v579, %v742
        %744 = vmatprep.mubr.f32.mxu0 0.0
        %745 = vmatmul.mubr.f32.gmra.mrb[0].mxu0 %v639
        %v746 = vpop.f32.mrb[0].mxu0
        %v747 = vadd.f32 %v584, %v746
        %v748 = vpop.f32.mrb[0].mxu0
        %v749 = vadd.f32 %v584, %v748
        %750 = vmatprep.mubr.f32.mxu0 0.0
        %751 = vmatmul.mubr.f32.gmra.mrb[0].mxu0 %v642
        %v752 = vpop.f32.mrb[0].mxu0
        %v753 = vadd.f32 %v589, %v752
        %v754 = vpop.f32.mrb[0].mxu0
        %v755 = vadd.f32 %v589, %v754
        %756 = vmatprep.mubr.f32.mxu0 0.0
        %757 = vmatmul.mubr.f32.gmra.mrb[0].mxu0 %v645
        %v758 = vpop.f32.mrb[0].mxu0
        %v759 = vadd.f32 %v594, %v758
        %v760 = vpop.f32.mrb[0].mxu0
        %v761 = vadd.f32 %v594, %v760
        %762 = vmatprep.mubr.f32.mxu0 0.0
        %763 = vmatmul.mubr.f32.gmra.mrb[0].mxu0 %v648
        %v764 = vpop.f32.mrb[0].mxu0
        %v765 = vadd.f32 %v599, %v764
        %v766 = vpop.f32.mrb[0].mxu0
        %v767 = vadd.f32 %v599, %v766
        %768 = vmatprep.mubr.f32.mxu0 0.0
        %769 = vmatmul.mubr.f32.gmra.mrb[0].mxu0 %v651
        %v770 = vpop.f32.mrb[0].mxu0
        %v771 = vadd.f32 %v604, %v770
        %v772 = vpop.f32.mrb[0].mxu0
        %v773 = vadd.f32 %v604, %v772
        %774 = vmatprep.mubr.f32.mxu0 0.0
        %775 = vmatmul.mubr.f32.gmra.mrb[0].mxu0 %v654
        %v776 = vpop.f32.mrb[0].mxu0
        %v777 = vadd.f32 %v609, %v776
        %v778 = vpop.f32.mrb[0].mxu0
        %v779 = vadd.f32 %v609, %v778
        %780 = vmatprep.mubr.f32.mxu0 0.0
        %781 = vmatmul.mubr.f32.gmra.mrb[0].mxu0 %v657
        %v782 = vpop.f32.mrb[0].mxu0
        %v783 = vadd.f32 %v614, %v782
        %v784 = vpop.f32.mrb[0].mxu0
        %v785 = vadd.f32 %v614, %v784
        %786 = vmatprep.mubr.f32.mxu0 0.0
        %787 = vmatmul.mubr.f32.gmra.mrb[0].mxu0 %v660
        %v788 = vpop.f32.mrb[0].mxu0
        %v789 = vadd.f32 %v619, %v788
        %v790 = vpop.f32.mrb[0].mxu0
        %v791 = vadd.f32 %v619, %v790
        %792 = vmatprep.mubr.f32.mxu0 0.0
        %793 = vmatmul.mubr.f32.gmra.mrb[0].mxu0 %v663
        %v794 = vpop.f32.mrb[0].mxu0
        %v795 = vadd.f32 %v624, %v794
        %v796 = vpop.f32.mrb[0].mxu0
        %v797 = vadd.f32 %v624, %v796
        %798 = vmatprep.mubr.f32.mxu0 0.0
        %799 = vmatmul.mubr.f32.gmra.mrb[0].mxu0 %v666
        %v800 = vpop.f32.mrb[0].mxu0
        %v801 = vadd.f32 %v629, %v800
        %v802 = vpop.f32.mrb[0].mxu0
        %v803 = vadd.f32 %v629, %v802
        %804 = vdwg.mxu0
        %v805 = vadd.f32 %v467, %v468
        %806 = vadd.xlane.f32.xlu0 %v805
        %v807 = vpop.xlane.xlu0 %806
        %v808 = vadd.f32 %v469, %v470
        %809 = vadd.xlane.f32.xlu0 %v808
        %v810 = vpop.xlane.xlu0 %809
        %v811 = vadd.f32 %v471, %v472
        %812 = vadd.xlane.f32.xlu0 %v811
        %v813 = vpop.xlane.xlu0 %812
        %v814 = vadd.f32 %v473, %v474
        %815 = vadd.xlane.f32.xlu0 %v814
        %v816 = vpop.xlane.xlu0 %815
        %v817 = vadd.f32 %v807, %v810
        %v818 = vadd.f32 %v817, %v813
        %v819 = vadd.f32 %v818, %v816
        %v820 = vrot.slane %v819, 4
        %v821 = vadd.f32 %v819, %v820
        %v822 = vrot.slane %v821, 2
        %v823 = vadd.f32 %v821, %v822
        %v824 = vrot.slane %v823, 1
        %v825 = vadd.f32 %v823, %v824
        %v826 = vmul.f32 %v467, %v467
        %v827 = vmul.f32 %v468, %v468
        %v828 = vmul.f32 %v469, %v469
        %v829 = vmul.f32 %v470, %v470
        %v830 = vmul.f32 %v471, %v471
        %v831 = vmul.f32 %v472, %v472
        %v832 = vmul.f32 %v473, %v473
        %v833 = vmul.f32 %v474, %v474
        %v834 = vadd.f32 %v826, %v827
        %835 = vadd.xlane.f32.xlu0 %v834
        %v836 = vpop.xlane.xlu0 %835
        %v837 = vadd.f32 %v828, %v829
        %838 = vadd.xlane.f32.xlu0 %v837
        %v839 = vpop.xlane.xlu0 %838
        %v840 = vadd.f32 %v830, %v831
        %841 = vadd.xlane.f32.xlu0 %v840
        %v842 = vpop.xlane.xlu0 %841
        %v843 = vadd.f32 %v832, %v833
        %844 = vadd.xlane.f32.xlu0 %v843
        %v845 = vpop.xlane.xlu0 %844
        %v846 = vadd.f32 %v836, %v839
        %v847 = vadd.f32 %v846, %v842
        %v848 = vadd.f32 %v847, %v845
        %v849 = vrot.slane %v848, 4
        %v850 = vadd.f32 %v848, %v849
        %v851 = vrot.slane %v850, 2
        %v852 = vadd.f32 %v850, %v851
        %v853 = vrot.slane %v852, 1
        %v854 = vadd.f32 %v852, %v853
        %v855 = vmul.f32 %v825, 0.00012207031
        %v856 = vmul.f32 %v854, 0.00012207031
        %v857 = vmul.f32 %v855, %v855
        %v858 = vsub.f32 %v856, %v857
        %v859 = vsub.f32 %v467, %v855
        %v860 = vsub.f32 %v468, %v855
        %v861 = vsub.f32 %v469, %v855
        %v862 = vsub.f32 %v470, %v855
        %v863 = vsub.f32 %v471, %v855
        %v864 = vsub.f32 %v472, %v855
        %v865 = vsub.f32 %v473, %v855
        %v866 = vsub.f32 %v474, %v855
        %v867 = vadd.f32 %v858, 1e-05
        %v868 = vrsqrt.pop %v867
        %v869 = vmul.f32 %v859, %v868
        %v870 = vmul.f32 %v860, %v868
        %v871 = vmul.f32 %v861, %v868
        %v872 = vmul.f32 %v862, %v868
        %v873 = vmul.f32 %v863, %v868
        %v874 = vmul.f32 %v864, %v868
        %v875 = vmul.f32 %v865, %v868
        %v876 = vmul.f32 %v866, %v868
        %v877 = vld [vmem:[%s4] sm:$0xff]
        %v878 = vld [vmem:[%s4 + $0x8] sm:$0xff]
        %v879 = vld [vmem:[%s4 + $0x10] sm:$0xff]
        %v880 = vld [vmem:[%s4 + $0x18] sm:$0xff]
        %v881 = vld [vmem:[%s4 + $0x20] sm:$0xff]
        %v882 = vld [vmem:[%s4 + $0x28] sm:$0xff]
        %v883 = vld [vmem:[%s4 + $0x30] sm:$0xff]
        %v884 = vld [vmem:[%s4 + $0x38] sm:$0xff]
        %v885 = vld [vmem:[%s4 + $0x40] sm:$0xff]
        %v886 = vld [vmem:[%s4 + $0x48] sm:$0xff]
        %v887 = vld [vmem:[%s4 + $0x50] sm:$0xff]
        %v888 = vld [vmem:[%s4 + $0x58] sm:$0xff]
        %v889 = vld [vmem:[%s5] sm:$0xff]
        %v890 = vld [vmem:[%s5 + $0x8] sm:$0xff]
        %v891 = vld [vmem:[%s5 + $0x10] sm:$0xff]
        %v892 = vld [vmem:[%s5 + $0x18] sm:$0xff]
        %v893 = vld [vmem:[%s5 + $0x20] sm:$0xff]
        %v894 = vld [vmem:[%s5 + $0x28] sm:$0xff]
        %v895 = vld [vmem:[%s5 + $0x30] sm:$0xff]
        %v896 = vld [vmem:[%s5 + $0x38] sm:$0xff]
        %v897 = vld [vmem:[%s5 + $0x40] sm:$0xff]
        %v898 = vld [vmem:[%s5 + $0x48] sm:$0xff]
        %v899 = vld [vmem:[%s5 + $0x50] sm:$0xff]
        %v900 = vld [vmem:[%s5 + $0x58] sm:$0xff]
        %902 = vset.pattern.permute.xlu0 0
        %903 = vperm.xlu0 %902, %v889
        %v904 = vpop.permute.xlu0 %903
        %907 = vset.pattern.permute.xlu0 0
        %908 = vperm.xlu0 %907, %v890
        %v909 = vpop.permute.xlu0 %908
        %912 = vset.pattern.permute.xlu0 0
        %913 = vperm.xlu0 %912, %v891
        %v914 = vpop.permute.xlu0 %913
        %917 = vset.pattern.permute.xlu0 0
        %918 = vperm.xlu0 %917, %v892
        %v919 = vpop.permute.xlu0 %918
        %922 = vset.pattern.permute.xlu0 0
        %923 = vperm.xlu0 %922, %v893
        %v924 = vpop.permute.xlu0 %923
        %927 = vset.pattern.permute.xlu0 0
        %928 = vperm.xlu0 %927, %v894
        %v929 = vpop.permute.xlu0 %928
        %932 = vset.pattern.permute.xlu0 0
        %933 = vperm.xlu0 %932, %v895
        %v934 = vpop.permute.xlu0 %933
        %937 = vset.pattern.permute.xlu0 0
        %938 = vperm.xlu0 %937, %v896
        %v939 = vpop.permute.xlu0 %938
        %942 = vset.pattern.permute.xlu0 0
        %943 = vperm.xlu0 %942, %v897
        %v944 = vpop.permute.xlu0 %943
        %947 = vset.pattern.permute.xlu0 0
        %948 = vperm.xlu0 %947, %v898
        %v949 = vpop.permute.xlu0 %948
        %952 = vset.pattern.permute.xlu0 0
        %953 = vperm.xlu0 %952, %v899
        %v954 = vpop.permute.xlu0 %953
        %957 = vset.pattern.permute.xlu0 0
        %958 = vperm.xlu0 %957, %v900
        %v959 = vpop.permute.xlu0 %958
        %v962 = vsel %vm631, %v877, 0
        %v965 = vsel %vm631, %v878, 0
        %v968 = vsel %vm631, %v879, 0
        %v971 = vsel %vm631, %v880, 0
        %v974 = vsel %vm631, %v881, 0
        %v977 = vsel %vm631, %v882, 0
        %v980 = vsel %vm631, %v883, 0
        %v983 = vsel %vm631, %v884, 0
        %v986 = vsel %vm631, %v885, 0
        %v989 = vsel %vm631, %v886, 0
        %v992 = vsel %vm631, %v887, 0
        %v995 = vsel %vm631, %v888, 0
        %997 = vmatprep.subr.mxu0 %v870
        %998 = vmatpush1.msra.mxu0 %v869
        %999 = vmatprep.subr.mxu0 %v872
        %1000 = vmatpush1.msra.mxu0 %v871
        %1001 = vmatprep.subr.mxu0 %v874
        %1002 = vmatpush1.msra.mxu0 %v873
        %1003 = vmatprep.subr.mxu0 %v876
        %1004 = vmatpush1.msra.mxu0 %v875
        %1005 = vmatprep.subr.mxu0 0.0
        %1006 = vmatpush1.msra.mxu0 0.0
        %1007 = vmatprep.subr.mxu0 0.0
        %1008 = vmatpush1.msra.mxu0 0.0
        %1009 = vmatprep.subr.mxu0 0.0
        %1010 = vmatpush1.msra.mxu0 0.0
        %1011 = vmatprep.subr.mxu0 0.0
        %1012 = vmatpush1.msra.mxu0 0.0
        %1013 = vmatprep.subr.mxu0 0.0
        %1014 = vmatpush1.msra.mxu0 0.0
        %1015 = vmatprep.subr.mxu0 0.0
        %1016 = vmatpush1.msra.mxu0 0.0
        %1017 = vmatprep.subr.mxu0 0.0
        %1018 = vmatpush1.msra.mxu0 0.0
        %1019 = vmatprep.subr.mxu0 0.0
        %1020 = vmatpush1.msra.mxu0 0.0
        %1021 = vmatprep.subr.mxu0 0.0
        %1022 = vmatpush1.msra.mxu0 0.0
        %1023 = vmatprep.subr.mxu0 0.0
        %1024 = vmatpush1.msra.mxu0 0.0
        %1025 = vmatprep.subr.mxu0 0.0
        %1026 = vmatpush1.msra.mxu0 0.0
        %1027 = vmatprep.subr.mxu0 0.0
        %1028 = vmatpush1.msra.mxu0 0.0
        %1029 = vmatprep.subr.mxu0 0.0
        %1030 = vmatpush1.msra.mxu0 0.0
        %1031 = vmatprep.subr.mxu0 0.0
        %1032 = vmatpush1.msra.mxu0 0.0
        %1033 = vmatprep.subr.mxu0 0.0
        %1034 = vmatpush1.msra.mxu0 0.0
        %1035 = vmatprep.subr.mxu0 0.0
        %1036 = vmatpush1.msra.mxu0 0.0
        %1037 = vmatprep.subr.mxu0 0.0
        %1038 = vmatpush1.msra.mxu0 0.0
        %1039 = vmatprep.subr.mxu0 0.0
        %1040 = vmatpush1.msra.mxu0 0.0
        %1041 = vmatprep.subr.mxu0 0.0
        %1042 = vmatpush1.msra.mxu0 0.0
        %1043 = vmatprep.subr.mxu0 0.0
        %1044 = vmatpush1.msra.mxu0 0.0
        %1045 = vmatprep.subr.mxu0 0.0
        %1046 = vmatpush1.msra.mxu0 0.0
        %1047 = vmatprep.subr.mxu0 0.0
        %1048 = vmatpush1.msra.mxu0 0.0
        %1049 = vmatprep.subr.mxu0 0.0
        %1050 = vmatpush1.msra.mxu0 0.0
        %1051 = vmatprep.subr.mxu0 0.0
        %1052 = vmatpush1.msra.mxu0 0.0
        %1053 = vmatprep.subr.mxu0 0.0
        %1054 = vmatpush1.msra.mxu0 0.0
        %1055 = vmatprep.subr.mxu0 0.0
        %1056 = vmatpush1.msra.mxu0 0.0
        %1057 = vmatprep.subr.mxu0 0.0
        %1058 = vmatpush1.msra.mxu0 0.0
        %1059 = vmatprep.subr.mxu0 0.0
        %1060 = vmatpush1.msra.mxu0 0.0
        %1061 = vmatprep.mubr.f32.mxu0 0.0
        %1062 = vmatmul.mubr.f32.gmra.mrb[0].mxu0 %v962
        %v1063 = vpop.f32.mrb[0].mxu0
        %v1064 = vadd.f32 %v904, %v1063
        %v1065 = vpop.f32.mrb[0].mxu0
        %v1066 = vadd.f32 %v904, %v1065
        %1067 = vmatprep.mubr.f32.mxu0 0.0
        %1068 = vmatmul.mubr.f32.gmra.mrb[0].mxu0 %v965
        %v1069 = vpop.f32.mrb[0].mxu0
        %v1070 = vadd.f32 %v909, %v1069
        %v1071 = vpop.f32.mrb[0].mxu0
        %v1072 = vadd.f32 %v909, %v1071
        %1073 = vmatprep.mubr.f32.mxu0 0.0
        %1074 = vmatmul.mubr.f32.gmra.mrb[0].mxu0 %v968
        %v1075 = vpop.f32.mrb[0].mxu0
        %v1076 = vadd.f32 %v914, %v1075
        %v1077 = vpop.f32.mrb[0].mxu0
        %v1078 = vadd.f32 %v914, %v1077
        %1079 = vmatprep.mubr.f32.mxu0 0.0
        %1080 = vmatmul.mubr.f32.gmra.mrb[0].mxu0 %v971
        %v1081 = vpop.f32.mrb[0].mxu0
        %v1082 = vadd.f32 %v919, %v1081
        %v1083 = vpop.f32.mrb[0].mxu0
        %v1084 = vadd.f32 %v919, %v1083
        %1085 = vmatprep.mubr.f32.mxu0 0.0
        %1086 = vmatmul.mubr.f32.gmra.mrb[0].mxu0 %v974
        %v1087 = vpop.f32.mrb[0].mxu0
        %v1088 = vadd.f32 %v924, %v1087
        %v1089 = vpop.f32.mrb[0].mxu0
        %v1090 = vadd.f32 %v924, %v1089
        %1091 = vmatprep.mubr.f32.mxu0 0.0
        %1092 = vmatmul.mubr.f32.gmra.mrb[0].mxu0 %v977
        %v1093 = vpop.f32.mrb[0].mxu0
        %v1094 = vadd.f32 %v929, %v1093
        %v1095 = vpop.f32.mrb[0].mxu0
        %v1096 = vadd.f32 %v929, %v1095
        %1097 = vmatprep.mubr.f32.mxu0 0.0
        %1098 = vmatmul.mubr.f32.gmra.mrb[0].mxu0 %v980
        %v1099 = vpop.f32.mrb[0].mxu0
        %v1100 = vadd.f32 %v934, %v1099
        %v1101 = vpop.f32.mrb[0].mxu0
        %v1102 = vadd.f32 %v934, %v1101
        %1103 = vmatprep.mubr.f32.mxu0 0.0
        %1104 = vmatmul.mubr.f32.gmra.mrb[0].mxu0 %v983
        %v1105 = vpop.f32.mrb[0].mxu0
        %v1106 = vadd.f32 %v939, %v1105
        %v1107 = vpop.f32.mrb[0].mxu0
        %v1108 = vadd.f32 %v939, %v1107
        %1109 = vmatprep.mubr.f32.mxu0 0.0
        %1110 = vmatmul.mubr.f32.gmra.mrb[0].mxu0 %v986
        %v1111 = vpop.f32.mrb[0].mxu0
        %v1112 = vadd.f32 %v944, %v1111
        %v1113 = vpop.f32.mrb[0].mxu0
        %v1114 = vadd.f32 %v944, %v1113
        %1115 = vmatprep.mubr.f32.mxu0 0.0
        %1116 = vmatmul.mubr.f32.gmra.mrb[0].mxu0 %v989
        %v1117 = vpop.f32.mrb[0].mxu0
        %v1118 = vadd.f32 %v949, %v1117
        %v1119 = vpop.f32.mrb[0].mxu0
        %v1120 = vadd.f32 %v949, %v1119
        %1121 = vmatprep.mubr.f32.mxu0 0.0
        %1122 = vmatmul.mubr.f32.gmra.mrb[0].mxu0 %v992
        %v1123 = vpop.f32.mrb[0].mxu0
        %v1124 = vadd.f32 %v954, %v1123
        %v1125 = vpop.f32.mrb[0].mxu0
        %v1126 = vadd.f32 %v954, %v1125
        %1127 = vmatprep.mubr.f32.mxu0 0.0
        %1128 = vmatmul.mubr.f32.gmra.mrb[0].mxu0 %v995
        %v1129 = vpop.f32.mrb[0].mxu0
        %v1130 = vadd.f32 %v959, %v1129
        %v1131 = vpop.f32.mrb[0].mxu0
        %v1132 = vadd.f32 %v959, %v1131
        %1133 = vdwg.mxu0
        %1134 = vxpose.xlu0.b32.start [1/16] %v1088, 128
        %1135 = vxpose.xlu0.b32.cont [2/16] 0.0, 128
        %1136 = vxpose.xlu0.b32.cont [3/16] 0.0, 128
        %1137 = vxpose.xlu0.b32.cont [4/16] 0.0, 128
        %1138 = vxpose.xlu0.b32.cont [5/16] 0.0, 128
        %1139 = vxpose.xlu0.b32.cont [6/16] 0.0, 128
        %1140 = vxpose.xlu0.b32.cont [7/16] 0.0, 128
        %1141 = vxpose.xlu0.b32.cont [8/16] 0.0, 128
        %1142 = vxpose.xlu0.b32.cont [9/16] 0.0, 128
        %1143 = vxpose.xlu0.b32.cont [10/16] 0.0, 128
        %1144 = vxpose.xlu0.b32.cont [11/16] 0.0, 128
        %1145 = vxpose.xlu0.b32.cont [12/16] 0.0, 128
        %1146 = vxpose.xlu0.b32.cont [13/16] 0.0, 128
        %1147 = vxpose.xlu0.b32.cont [14/16] 0.0, 128
        %1148 = vxpose.xlu0.b32.cont [15/16] 0.0, 128
        %1149 = vxpose.xlu0.b32.end [16/16] 0.0, 128
        %v1150 = vpop.trf.xlu0
        %v1151 = vpop.trf.xlu0
        %v1152 = vpop.trf.xlu0
        %v1153 = vpop.trf.xlu0
        %v1154 = vpop.trf.xlu0
        %v1155 = vpop.trf.xlu0
        %v1156 = vpop.trf.xlu0
        %v1157 = vpop.trf.xlu0
        %v1158 = vpop.trf.xlu0
        %v1159 = vpop.trf.xlu0
        %v1160 = vpop.trf.xlu0
        %v1161 = vpop.trf.xlu0
        %v1162 = vpop.trf.xlu0
        %v1163 = vpop.trf.xlu0
        %v1164 = vpop.trf.xlu0
        %v1165 = vpop.trf.xlu0
        %1166 = vxpose.xlu0.b32.start [1/16] %v1090, 128
        %1167 = vxpose.xlu0.b32.cont [2/16] 0.0, 128
        %1168 = vxpose.xlu0.b32.cont [3/16] 0.0, 128
        %1169 = vxpose.xlu0.b32.cont [4/16] 0.0, 128
        %1170 = vxpose.xlu0.b32.cont [5/16] 0.0, 128
        %1171 = vxpose.xlu0.b32.cont [6/16] 0.0, 128
        %1172 = vxpose.xlu0.b32.cont [7/16] 0.0, 128
        %1173 = vxpose.xlu0.b32.cont [8/16] 0.0, 128
        %1174 = vxpose.xlu0.b32.cont [9/16] 0.0, 128
        %1175 = vxpose.xlu0.b32.cont [10/16] 0.0, 128
        %1176 = vxpose.xlu0.b32.cont [11/16] 0.0, 128
        %1177 = vxpose.xlu0.b32.cont [12/16] 0.0, 128
        %1178 = vxpose.xlu0.b32.cont [13/16] 0.0, 128
        %1179 = vxpose.xlu0.b32.cont [14/16] 0.0, 128
        %1180 = vxpose.xlu0.b32.cont [15/16] 0.0, 128
        %1181 = vxpose.xlu0.b32.end [16/16] 0.0, 128
        %v1182 = vpop.trf.xlu0
        %v1183 = vpop.trf.xlu0
        %v1184 = vpop.trf.xlu0
        %v1185 = vpop.trf.xlu0
        %v1186 = vpop.trf.xlu0
        %v1187 = vpop.trf.xlu0
        %v1188 = vpop.trf.xlu0
        %v1189 = vpop.trf.xlu0
        %v1190 = vpop.trf.xlu0
        %v1191 = vpop.trf.xlu0
        %v1192 = vpop.trf.xlu0
        %v1193 = vpop.trf.xlu0
        %v1194 = vpop.trf.xlu0
        %v1195 = vpop.trf.xlu0
        %v1196 = vpop.trf.xlu0
        %v1197 = vpop.trf.xlu0
        %vm1198 = vcmask 64512
        %v1200 = vsel %vm1198, %v1150, 0
        %v1203 = vsel %vm1198, %v1151, 0
        %v1206 = vsel %vm1198, %v1152, 0
        %v1209 = vsel %vm1198, %v1153, 0
        %v1212 = vsel %vm1198, %v1154, 0
        %v1215 = vsel %vm1198, %v1155, 0
        %v1218 = vsel %vm1198, %v1156, 0
        %v1221 = vsel %vm1198, %v1157, 0
        %v1224 = vsel %vm1198, %v1158, 0
        %v1227 = vsel %vm1198, %v1159, 0
        %v1230 = vsel %vm1198, %v1160, 0
        %v1233 = vsel %vm1198, %v1161, 0
        %v1236 = vsel %vm1198, %v1162, 0
        %v1239 = vsel %vm1198, %v1163, 0
        %v1242 = vsel %vm1198, %v1164, 0
        %v1245 = vsel %vm1198, %v1165, 0
        %v1248 = vsel %vm1198, %v1182, 0
        %v1251 = vsel %vm1198, %v1183, 0
        %v1254 = vsel %vm1198, %v1184, 0
        %v1257 = vsel %vm1198, %v1185, 0
        %v1260 = vsel %vm1198, %v1186, 0
        %v1263 = vsel %vm1198, %v1187, 0
        %v1266 = vsel %vm1198, %v1188, 0
        %v1269 = vsel %vm1198, %v1189, 0
        %v1272 = vsel %vm1198, %v1190, 0
        %v1275 = vsel %vm1198, %v1191, 0
        %v1278 = vsel %vm1198, %v1192, 0
        %v1281 = vsel %vm1198, %v1193, 0
        %v1284 = vsel %vm1198, %v1194, 0
        %v1287 = vsel %vm1198, %v1195, 0
        %v1290 = vsel %vm1198, %v1196, 0
        %v1293 = vsel %vm1198, %v1197, 0
        %1295 = vmatprep.subr.mxu0 %v737
        %1296 = vmatpush1.msra.mxu0 %v735
        %1297 = vmatprep.subr.mxu0 0.0
        %1298 = vmatpush1.msra.mxu0 0.0
        %1299 = vmatprep.subr.mxu0 0.0
        %1300 = vmatpush1.msra.mxu0 0.0
        %1301 = vmatprep.subr.mxu0 0.0
        %1302 = vmatpush1.msra.mxu0 0.0
        %1303 = vmatprep.subr.mxu0 0.0
        %1304 = vmatpush1.msra.mxu0 0.0
        %1305 = vmatprep.subr.mxu0 0.0
        %1306 = vmatpush1.msra.mxu0 0.0
        %1307 = vmatprep.subr.mxu0 0.0
        %1308 = vmatpush1.msra.mxu0 0.0
        %1309 = vmatprep.subr.mxu0 0.0
        %1310 = vmatpush1.msra.mxu0 0.0
        %1311 = vmatprep.subr.mxu0 0.0
        %1312 = vmatpush1.msra.mxu0 0.0
        %1313 = vmatprep.subr.mxu0 0.0
        %1314 = vmatpush1.msra.mxu0 0.0
        %1315 = vmatprep.subr.mxu0 0.0
        %1316 = vmatpush1.msra.mxu0 0.0
        %1317 = vmatprep.subr.mxu0 0.0
        %1318 = vmatpush1.msra.mxu0 0.0
        %1319 = vmatprep.subr.mxu0 0.0
        %1320 = vmatpush1.msra.mxu0 0.0
        %1321 = vmatprep.subr.mxu0 0.0
        %1322 = vmatpush1.msra.mxu0 0.0
        %1323 = vmatprep.subr.mxu0 0.0
        %1324 = vmatpush1.msra.mxu0 0.0
        %1325 = vmatprep.subr.mxu0 0.0
        %1326 = vmatpush1.msra.mxu0 0.0
        %1327 = vmatprep.subr.mxu0 0.0
        %1328 = vmatpush1.msra.mxu0 0.0
        %1329 = vmatprep.subr.mxu0 0.0
        %1330 = vmatpush1.msra.mxu0 0.0
        %1331 = vmatprep.subr.mxu0 0.0
        %1332 = vmatpush1.msra.mxu0 0.0
        %1333 = vmatprep.subr.mxu0 0.0
        %1334 = vmatpush1.msra.mxu0 0.0
        %1335 = vmatprep.subr.mxu0 0.0
        %1336 = vmatpush1.msra.mxu0 0.0
        %1337 = vmatprep.subr.mxu0 0.0
        %1338 = vmatpush1.msra.mxu0 0.0
        %1339 = vmatprep.subr.mxu0 0.0
        %1340 = vmatpush1.msra.mxu0 0.0
        %1341 = vmatprep.subr.mxu0 0.0
        %1342 = vmatpush1.msra.mxu0 0.0
        %1343 = vmatprep.subr.mxu0 0.0
        %1344 = vmatpush1.msra.mxu0 0.0
        %1345 = vmatprep.subr.mxu0 0.0
        %1346 = vmatpush1.msra.mxu0 0.0
        %1347 = vmatprep.subr.mxu0 0.0
        %1348 = vmatpush1.msra.mxu0 0.0
        %1349 = vmatprep.subr.mxu0 0.0
        %1350 = vmatpush1.msra.mxu0 0.0
        %1351 = vmatprep.subr.mxu0 0.0
        %1352 = vmatpush1.msra.mxu0 0.0
        %1353 = vmatprep.subr.mxu0 0.0
        %1354 = vmatpush1.msra.mxu0 0.0
        %1355 = vmatprep.subr.mxu0 0.0
        %1356 = vmatpush1.msra.mxu0 0.0
        %1357 = vmatprep.subr.mxu0 0.0
        %1358 = vmatpush1.msra.mxu0 0.0
        %1359 = vmatprep.mubr.f32.mxu0 0.0
        %1360 = vmatmul.mubr.f32.gmra.mrb[0].mxu0 %v1200
        %v1361 = vpop.f32.mrb[0].mxu0
        %v1362 = vadd.f32 0.0, %v1361
        %v1363 = vpop.f32.mrb[0].mxu0
        %v1364 = vadd.f32 0.0, %v1363
        %1365 = vmatprep.mubr.f32.mxu0 0.0
        %1366 = vmatmul.mubr.f32.gmra.mrb[0].mxu0 %v1203
        %v1367 = vpop.f32.mrb[0].mxu0
        %v1368 = vadd.f32 0.0, %v1367
        %v1369 = vpop.f32.mrb[0].mxu0
        %v1370 = vadd.f32 0.0, %v1369
        %1371 = vmatprep.mubr.f32.mxu0 0.0
        %1372 = vmatmul.mubr.f32.gmra.mrb[0].mxu0 %v1206
        %v1373 = vpop.f32.mrb[0].mxu0
        %v1374 = vadd.f32 0.0, %v1373
        %v1375 = vpop.f32.mrb[0].mxu0
        %v1376 = vadd.f32 0.0, %v1375
        %1377 = vmatprep.mubr.f32.mxu0 0.0
        %1378 = vmatmul.mubr.f32.gmra.mrb[0].mxu0 %v1209
        %v1379 = vpop.f32.mrb[0].mxu0
        %v1380 = vadd.f32 0.0, %v1379
        %v1381 = vpop.f32.mrb[0].mxu0
        %v1382 = vadd.f32 0.0, %v1381
        %1383 = vmatprep.mubr.f32.mxu0 0.0
        %1384 = vmatmul.mubr.f32.gmra.mrb[0].mxu0 %v1212
        %v1385 = vpop.f32.mrb[0].mxu0
        %v1386 = vadd.f32 0.0, %v1385
        %v1387 = vpop.f32.mrb[0].mxu0
        %v1388 = vadd.f32 0.0, %v1387
        %1389 = vmatprep.mubr.f32.mxu0 0.0
        %1390 = vmatmul.mubr.f32.gmra.mrb[0].mxu0 %v1215
        %v1391 = vpop.f32.mrb[0].mxu0
        %v1392 = vadd.f32 0.0, %v1391
        %v1393 = vpop.f32.mrb[0].mxu0
        %v1394 = vadd.f32 0.0, %v1393
        %1395 = vmatprep.mubr.f32.mxu0 0.0
        %1396 = vmatmul.mubr.f32.gmra.mrb[0].mxu0 %v1218
        %v1397 = vpop.f32.mrb[0].mxu0
        %v1398 = vadd.f32 0.0, %v1397
        %v1399 = vpop.f32.mrb[0].mxu0
        %v1400 = vadd.f32 0.0, %v1399
        %1401 = vmatprep.mubr.f32.mxu0 0.0
        %1402 = vmatmul.mubr.f32.gmra.mrb[0].mxu0 %v1221
        %v1403 = vpop.f32.mrb[0].mxu0
        %v1404 = vadd.f32 0.0, %v1403
        %v1405 = vpop.f32.mrb[0].mxu0
        %v1406 = vadd.f32 0.0, %v1405
        %1407 = vmatprep.mubr.f32.mxu0 0.0
        %1408 = vmatmul.mubr.f32.gmra.mrb[0].mxu0 %v1224
        %v1409 = vpop.f32.mrb[0].mxu0
        %v1410 = vadd.f32 0.0, %v1409
        %v1411 = vpop.f32.mrb[0].mxu0
        %v1412 = vadd.f32 0.0, %v1411
        %1413 = vmatprep.mubr.f32.mxu0 0.0
        %1414 = vmatmul.mubr.f32.gmra.mrb[0].mxu0 %v1227
        %v1415 = vpop.f32.mrb[0].mxu0
        %v1416 = vadd.f32 0.0, %v1415
        %v1417 = vpop.f32.mrb[0].mxu0
        %v1418 = vadd.f32 0.0, %v1417
        %1419 = vmatprep.mubr.f32.mxu0 0.0
        %1420 = vmatmul.mubr.f32.gmra.mrb[0].mxu0 %v1230
        %v1421 = vpop.f32.mrb[0].mxu0
        %v1422 = vadd.f32 0.0, %v1421
        %v1423 = vpop.f32.mrb[0].mxu0
        %v1424 = vadd.f32 0.0, %v1423
        %1425 = vmatprep.mubr.f32.mxu0 0.0
        %1426 = vmatmul.mubr.f32.gmra.mrb[0].mxu0 %v1233
        %v1427 = vpop.f32.mrb[0].mxu0
        %v1428 = vadd.f32 0.0, %v1427
        %v1429 = vpop.f32.mrb[0].mxu0
        %v1430 = vadd.f32 0.0, %v1429
        %1431 = vmatprep.mubr.f32.mxu0 0.0
        %1432 = vmatmul.mubr.f32.gmra.mrb[0].mxu0 %v1236
        %v1433 = vpop.f32.mrb[0].mxu0
        %v1434 = vadd.f32 0.0, %v1433
        %v1435 = vpop.f32.mrb[0].mxu0
        %v1436 = vadd.f32 0.0, %v1435
        %1437 = vmatprep.mubr.f32.mxu0 0.0
        %1438 = vmatmul.mubr.f32.gmra.mrb[0].mxu0 %v1239
        %v1439 = vpop.f32.mrb[0].mxu0
        %v1440 = vadd.f32 0.0, %v1439
        %v1441 = vpop.f32.mrb[0].mxu0
        %v1442 = vadd.f32 0.0, %v1441
        %1443 = vmatprep.mubr.f32.mxu0 0.0
        %1444 = vmatmul.mubr.f32.gmra.mrb[0].mxu0 %v1242
        %v1445 = vpop.f32.mrb[0].mxu0
        %v1446 = vadd.f32 0.0, %v1445
        %v1447 = vpop.f32.mrb[0].mxu0
        %v1448 = vadd.f32 0.0, %v1447
        %1449 = vmatprep.mubr.f32.mxu0 0.0
        %1450 = vmatmul.mubr.f32.gmra.mrb[0].mxu0 %v1245
        %v1451 = vpop.f32.mrb[0].mxu0
        %v1452 = vadd.f32 0.0, %v1451
        %v1453 = vpop.f32.mrb[0].mxu0
        %v1454 = vadd.f32 0.0, %v1453
        %1455 = vmatprep.mubr.f32.mxu0 0.0
        %1456 = vmatmul.mubr.f32.gmra.mrb[0].mxu0 %v1248
        %v1457 = vpop.f32.mrb[0].mxu0
        %v1458 = vadd.f32 0.0, %v1457
        %v1459 = vpop.f32.mrb[0].mxu0
        %v1460 = vadd.f32 0.0, %v1459
        %1461 = vmatprep.mubr.f32.mxu0 0.0
        %1462 = vmatmul.mubr.f32.gmra.mrb[0].mxu0 %v1251
        %v1463 = vpop.f32.mrb[0].mxu0
        %v1464 = vadd.f32 0.0, %v1463
        %v1465 = vpop.f32.mrb[0].mxu0
        %v1466 = vadd.f32 0.0, %v1465
        %1467 = vmatprep.mubr.f32.mxu0 0.0
        %1468 = vmatmul.mubr.f32.gmra.mrb[0].mxu0 %v1254
        %v1469 = vpop.f32.mrb[0].mxu0
        %v1470 = vadd.f32 0.0, %v1469
        %v1471 = vpop.f32.mrb[0].mxu0
        %v1472 = vadd.f32 0.0, %v1471
        %1473 = vmatprep.mubr.f32.mxu0 0.0
        %1474 = vmatmul.mubr.f32.gmra.mrb[0].mxu0 %v1257
        %v1475 = vpop.f32.mrb[0].mxu0
        %v1476 = vadd.f32 0.0, %v1475
        %v1477 = vpop.f32.mrb[0].mxu0
        %v1478 = vadd.f32 0.0, %v1477
        %1479 = vmatprep.mubr.f32.mxu0 0.0
        %1480 = vmatmul.mubr.f32.gmra.mrb[0].mxu0 %v1260
        %v1481 = vpop.f32.mrb[0].mxu0
        %v1482 = vadd.f32 0.0, %v1481
        %v1483 = vpop.f32.mrb[0].mxu0
        %v1484 = vadd.f32 0.0, %v1483
        %1485 = vmatprep.mubr.f32.mxu0 0.0
        %1486 = vmatmul.mubr.f32.gmra.mrb[0].mxu0 %v1263
        %v1487 = vpop.f32.mrb[0].mxu0
        %v1488 = vadd.f32 0.0, %v1487
        %v1489 = vpop.f32.mrb[0].mxu0
        %v1490 = vadd.f32 0.0, %v1489
        %1491 = vmatprep.mubr.f32.mxu0 0.0
        %1492 = vmatmul.mubr.f32.gmra.mrb[0].mxu0 %v1266
        %v1493 = vpop.f32.mrb[0].mxu0
        %v1494 = vadd.f32 0.0, %v1493
        %v1495 = vpop.f32.mrb[0].mxu0
        %v1496 = vadd.f32 0.0, %v1495
        %1497 = vmatprep.mubr.f32.mxu0 0.0
        %1498 = vmatmul.mubr.f32.gmra.mrb[0].mxu0 %v1269
        %v1499 = vpop.f32.mrb[0].mxu0
        %v1500 = vadd.f32 0.0, %v1499
        %v1501 = vpop.f32.mrb[0].mxu0
        %v1502 = vadd.f32 0.0, %v1501
        %1503 = vmatprep.mubr.f32.mxu0 0.0
        %1504 = vmatmul.mubr.f32.gmra.mrb[0].mxu0 %v1272
        %v1505 = vpop.f32.mrb[0].mxu0
        %v1506 = vadd.f32 0.0, %v1505
        %v1507 = vpop.f32.mrb[0].mxu0
        %v1508 = vadd.f32 0.0, %v1507
        %1509 = vmatprep.mubr.f32.mxu0 0.0
        %1510 = vmatmul.mubr.f32.gmra.mrb[0].mxu0 %v1275
        %v1511 = vpop.f32.mrb[0].mxu0
        %v1512 = vadd.f32 0.0, %v1511
        %v1513 = vpop.f32.mrb[0].mxu0
        %v1514 = vadd.f32 0.0, %v1513
        %1515 = vmatprep.mubr.f32.mxu0 0.0
        %1516 = vmatmul.mubr.f32.gmra.mrb[0].mxu0 %v1278
        %v1517 = vpop.f32.mrb[0].mxu0
        %v1518 = vadd.f32 0.0, %v1517
        %v1519 = vpop.f32.mrb[0].mxu0
        %v1520 = vadd.f32 0.0, %v1519
        %1521 = vmatprep.mubr.f32.mxu0 0.0
        %1522 = vmatmul.mubr.f32.gmra.mrb[0].mxu0 %v1281
        %v1523 = vpop.f32.mrb[0].mxu0
        %v1524 = vadd.f32 0.0, %v1523
        %v1525 = vpop.f32.mrb[0].mxu0
        %v1526 = vadd.f32 0.0, %v1525
        %1527 = vmatprep.mubr.f32.mxu0 0.0
        %1528 = vmatmul.mubr.f32.gmra.mrb[0].mxu0 %v1284
        %v1529 = vpop.f32.mrb[0].mxu0
        %v1530 = vadd.f32 0.0, %v1529
        %v1531 = vpop.f32.mrb[0].mxu0
        %v1532 = vadd.f32 0.0, %v1531
        %1533 = vmatprep.mubr.f32.mxu0 0.0
        %1534 = vmatmul.mubr.f32.gmra.mrb[0].mxu0 %v1287
        %v1535 = vpop.f32.mrb[0].mxu0
        %v1536 = vadd.f32 0.0, %v1535
        %v1537 = vpop.f32.mrb[0].mxu0
        %v1538 = vadd.f32 0.0, %v1537
        %1539 = vmatprep.mubr.f32.mxu0 0.0
        %1540 = vmatmul.mubr.f32.gmra.mrb[0].mxu0 %v1290
        %v1541 = vpop.f32.mrb[0].mxu0
        %v1542 = vadd.f32 0.0, %v1541
        %v1543 = vpop.f32.mrb[0].mxu0
        %v1544 = vadd.f32 0.0, %v1543
        %1545 = vmatprep.mubr.f32.mxu0 0.0
        %1546 = vmatmul.mubr.f32.gmra.mrb[0].mxu0 %v1293
        %v1547 = vpop.f32.mrb[0].mxu0
        %v1548 = vadd.f32 0.0, %v1547
        %v1549 = vpop.f32.mrb[0].mxu0
        %v1550 = vadd.f32 0.0, %v1549
        %1551 = vdwg.mxu0
        %v1552 = vmax.f32 %v1362, %v1374
        %v1553 = vmax.f32 %v1368, %v1380
        %v1554 = vmax.f32 %v1552, %v1386
        %v1555 = vmax.f32 %v1553, %v1392
        %v1556 = vmax.f32 %v1554, %v1398
        %v1557 = vmax.f32 %v1555, %v1404
        %v1558 = vmax.f32 %v1556, %v1410
        %v1559 = vmax.f32 %v1557, %v1416
        %v1560 = vmax.f32 %v1558, %v1422
        %v1561 = vmax.f32 %v1559, %v1428
        %v1562 = vmax.f32 %v1560, %v1434
        %v1563 = vmax.f32 %v1561, %v1440
        %v1564 = vmax.f32 %v1562, %v1446
        %v1565 = vmax.f32 %v1563, %v1452
        %v1566 = vmax.f32 %v1564, %v1458
        %v1567 = vmax.f32 %v1565, %v1464
        %v1568 = vmax.f32 %v1566, %v1470
        %v1569 = vmax.f32 %v1567, %v1476
        %v1570 = vmax.f32 %v1568, %v1482
        %v1571 = vmax.f32 %v1569, %v1488
        %v1572 = vmax.f32 %v1570, %v1494
        %v1573 = vmax.f32 %v1571, %v1500
        %v1574 = vmax.f32 %v1572, %v1506
        %v1575 = vmax.f32 %v1573, %v1512
        %v1576 = vmax.f32 %v1574, %v1518
        %v1577 = vmax.f32 %v1575, %v1524
        %v1578 = vmax.f32 %v1576, %v1530
        %v1579 = vmax.f32 %v1577, %v1536
        %v1580 = vmax.f32 %v1578, %v1542
        %v1581 = vmax.f32 %v1579, %v1548
        %v1582 = vmax.f32 %v1580, %v1581
        %v1583 = vrot.slane %v1582, 4
        %v1584 = vmax.f32 %v1582, %v1583
        %v1585 = vrot.slane %v1584, 2
        %v1586 = vmax.f32 %v1584, %v1585
        %v1587 = vrot.slane %v1586, 1
        %v1588 = vmax.f32 %v1586, %v1587
        %v1589 = vmax.f32 %v1364, %v1376
        %v1590 = vmax.f32 %v1370, %v1382
        %v1591 = vmax.f32 %v1589, %v1388
        %v1592 = vmax.f32 %v1590, %v1394
        %v1593 = vmax.f32 %v1591, %v1400
        %v1594 = vmax.f32 %v1592, %v1406
        %v1595 = vmax.f32 %v1593, %v1412
        %v1596 = vmax.f32 %v1594, %v1418
        %v1597 = vmax.f32 %v1595, %v1424
        %v1598 = vmax.f32 %v1596, %v1430
        %v1599 = vmax.f32 %v1597, %v1436
        %v1600 = vmax.f32 %v1598, %v1442
        %v1601 = vmax.f32 %v1599, %v1448
        %v1602 = vmax.f32 %v1600, %v1454
        %v1603 = vmax.f32 %v1601, %v1460
        %v1604 = vmax.f32 %v1602, %v1466
        %v1605 = vmax.f32 %v1603, %v1472
        %v1606 = vmax.f32 %v1604, %v1478
        %v1607 = vmax.f32 %v1605, %v1484
        %v1608 = vmax.f32 %v1606, %v1490
        %v1609 = vmax.f32 %v1607, %v1496
        %v1610 = vmax.f32 %v1608, %v1502
        %v1611 = vmax.f32 %v1609, %v1508
        %v1612 = vmax.f32 %v1610, %v1514
        %v1613 = vmax.f32 %v1611, %v1520
        %v1614 = vmax.f32 %v1612, %v1526
        %v1615 = vmax.f32 %v1613, %v1532
        %v1616 = vmax.f32 %v1614, %v1538
        %v1617 = vmax.f32 %v1615, %v1544
        %v1618 = vmax.f32 %v1616, %v1550
        %v1619 = vmax.f32 %v1617, %v1618
        %v1620 = vrot.slane %v1619, 4
        %v1621 = vmax.f32 %v1619, %v1620
        %v1622 = vrot.slane %v1621, 2
        %v1623 = vmax.f32 %v1621, %v1622
        %v1624 = vrot.slane %v1623, 1
        %v1625 = vmax.f32 %v1623, %v1624
        %v1626 = vsub.f32 %v1362, %v1588
        %v1627 = vsub.f32 %v1364, %v1625
        %v1628 = vsub.f32 %v1368, %v1588
        %v1629 = vsub.f32 %v1370, %v1625
        %v1630 = vsub.f32 %v1374, %v1588
        %v1631 = vsub.f32 %v1376, %v1625
        %v1632 = vsub.f32 %v1380, %v1588
        %v1633 = vsub.f32 %v1382, %v1625
        %v1634 = vsub.f32 %v1386, %v1588
        %v1635 = vsub.f32 %v1388, %v1625
        %v1636 = vsub.f32 %v1392, %v1588
        %v1637 = vsub.f32 %v1394, %v1625
        %v1638 = vsub.f32 %v1398, %v1588
        %v1639 = vsub.f32 %v1400, %v1625
        %v1640 = vsub.f32 %v1404, %v1588
        %v1641 = vsub.f32 %v1406, %v1625
        %v1642 = vsub.f32 %v1410, %v1588
        %v1643 = vsub.f32 %v1412, %v1625
        %v1644 = vsub.f32 %v1416, %v1588
        %v1645 = vsub.f32 %v1418, %v1625
        %v1646 = vsub.f32 %v1422, %v1588
        %v1647 = vsub.f32 %v1424, %v1625
        %v1648 = vsub.f32 %v1428, %v1588
        %v1649 = vsub.f32 %v1430, %v1625
        %v1650 = vsub.f32 %v1434, %v1588
        %v1651 = vsub.f32 %v1436, %v1625
        %v1652 = vsub.f32 %v1440, %v1588
        %v1653 = vsub.f32 %v1442, %v1625
        %v1654 = vsub.f32 %v1446, %v1588
        %v1655 = vsub.f32 %v1448, %v1625
        %v1656 = vsub.f32 %v1452, %v1588
        %v1657 = vsub.f32 %v1454, %v1625
        %v1658 = vsub.f32 %v1458, %v1588
        %v1659 = vsub.f32 %v1460, %v1625
        %v1660 = vsub.f32 %v1464, %v1588
        %v1661 = vsub.f32 %v1466, %v1625
        %v1662 = vsub.f32 %v1470, %v1588
        %v1663 = vsub.f32 %v1472, %v1625
        %v1664 = vsub.f32 %v1476, %v1588
        %v1665 = vsub.f32 %v1478, %v1625
        %v1666 = vsub.f32 %v1482, %v1588
        %v1667 = vsub.f32 %v1484, %v1625
        %v1668 = vsub.f32 %v1488, %v1588
        %v1669 = vsub.f32 %v1490, %v1625
        %v1670 = vsub.f32 %v1494, %v1588
        %v1671 = vsub.f32 %v1496, %v1625
        %v1672 = vsub.f32 %v1500, %v1588
        %v1673 = vsub.f32 %v1502, %v1625
        %v1674 = vsub.f32 %v1506, %v1588
        %v1675 = vsub.f32 %v1508, %v1625
        %v1676 = vsub.f32 %v1512, %v1588
        %v1677 = vsub.f32 %v1514, %v1625
        %v1678 = vsub.f32 %v1518, %v1588
        %v1679 = vsub.f32 %v1520, %v1625
        %v1680 = vsub.f32 %v1524, %v1588
        %v1681 = vsub.f32 %v1526, %v1625
        %v1682 = vsub.f32 %v1530, %v1588
        %v1683 = vsub.f32 %v1532, %v1625
        %v1684 = vsub.f32 %v1536, %v1588
        %v1685 = vsub.f32 %v1538, %v1625
        %v1686 = vsub.f32 %v1542, %v1588
        %v1687 = vsub.f32 %v1544, %v1625
        %v1688 = vsub.f32 %v1548, %v1588
        %v1689 = vsub.f32 %v1550, %v1625
        %v1690 = vmul.f32 %v1626, 1.442695
        %v1691 = vpow.pop %v1690
        %v1692 = vmul.f32 %v1627, 1.442695
        %v1693 = vpow.pop %v1692
        %v1694 = vmul.f32 %v1628, 1.442695
        %v1695 = vpow.pop %v1694
        %v1696 = vmul.f32 %v1629, 1.442695
        %v1697 = vpow.pop %v1696
        %v1698 = vmul.f32 %v1630, 1.442695
        %v1699 = vpow.pop %v1698
        %v1700 = vmul.f32 %v1631, 1.442695
        %v1701 = vpow.pop %v1700
        %v1702 = vmul.f32 %v1632, 1.442695
        %v1703 = vpow.pop %v1702
        %v1704 = vmul.f32 %v1633, 1.442695
        %v1705 = vpow.pop %v1704
        %v1706 = vmul.f32 %v1634, 1.442695
        %v1707 = vpow.pop %v1706
        %v1708 = vmul.f32 %v1635, 1.442695
        %v1709 = vpow.pop %v1708
        %v1710 = vmul.f32 %v1636, 1.442695
        %v1711 = vpow.pop %v1710
        %v1712 = vmul.f32 %v1637, 1.442695
        %v1713 = vpow.pop %v1712
        %v1714 = vmul.f32 %v1638, 1.442695
        %v1715 = vpow.pop %v1714
        %v1716 = vmul.f32 %v1639, 1.442695
        %v1717 = vpow.pop %v1716
        %v1718 = vmul.f32 %v1640, 1.442695
        %v1719 = vpow.pop %v1718
        %v1720 = vmul.f32 %v1641, 1.442695
        %v1721 = vpow.pop %v1720
        %v1722 = vmul.f32 %v1642, 1.442695
        %v1723 = vpow.pop %v1722
        %v1724 = vmul.f32 %v1643, 1.442695
        %v1725 = vpow.pop %v1724
        %v1726 = vmul.f32 %v1644, 1.442695
        %v1727 = vpow.pop %v1726
        %v1728 = vmul.f32 %v1645, 1.442695
        %v1729 = vpow.pop %v1728
        %v1730 = vmul.f32 %v1646, 1.442695
        %v1731 = vpow.pop %v1730
        %v1732 = vmul.f32 %v1647, 1.442695
        %v1733 = vpow.pop %v1732
        %v1734 = vmul.f32 %v1648, 1.442695
        %v1735 = vpow.pop %v1734
        %v1736 = vmul.f32 %v1649, 1.442695
        %v1737 = vpow.pop %v1736
        %v1738 = vmul.f32 %v1650, 1.442695
        %v1739 = vpow.pop %v1738
        %v1740 = vmul.f32 %v1651, 1.442695
        %v1741 = vpow.pop %v1740
        %v1742 = vmul.f32 %v1652, 1.442695
        %v1743 = vpow.pop %v1742
        %v1744 = vmul.f32 %v1653, 1.442695
        %v1745 = vpow.pop %v1744
        %v1746 = vmul.f32 %v1654, 1.442695
        %v1747 = vpow.pop %v1746
        %v1748 = vmul.f32 %v1655, 1.442695
        %v1749 = vpow.pop %v1748
        %v1750 = vmul.f32 %v1656, 1.442695
        %v1751 = vpow.pop %v1750
        %v1752 = vmul.f32 %v1657, 1.442695
        %v1753 = vpow.pop %v1752
        %v1754 = vmul.f32 %v1658, 1.442695
        %v1755 = vpow.pop %v1754
        %v1756 = vmul.f32 %v1659, 1.442695
        %v1757 = vpow.pop %v1756
        %v1758 = vmul.f32 %v1660, 1.442695
        %v1759 = vpow.pop %v1758
        %v1760 = vmul.f32 %v1661, 1.442695
        %v1761 = vpow.pop %v1760
        %v1762 = vmul.f32 %v1662, 1.442695
        %v1763 = vpow.pop %v1762
        %v1764 = vmul.f32 %v1663, 1.442695
        %v1765 = vpow.pop %v1764
        %v1766 = vmul.f32 %v1664, 1.442695
        %v1767 = vpow.pop %v1766
        %v1768 = vmul.f32 %v1665, 1.442695
        %v1769 = vpow.pop %v1768
        %v1770 = vmul.f32 %v1666, 1.442695
        %v1771 = vpow.pop %v1770
        %v1772 = vmul.f32 %v1667, 1.442695
        %v1773 = vpow.pop %v1772
        %v1774 = vmul.f32 %v1668, 1.442695
        %v1775 = vpow.pop %v1774
        %v1776 = vmul.f32 %v1669, 1.442695
        %v1777 = vpow.pop %v1776
        %v1778 = vmul.f32 %v1670, 1.442695
        %v1779 = vpow.pop %v1778
        %v1780 = vmul.f32 %v1671, 1.442695
        %v1781 = vpow.pop %v1780
        %v1782 = vmul.f32 %v1672, 1.442695
        %v1783 = vpow.pop %v1782
        %v1784 = vmul.f32 %v1673, 1.442695
        %v1785 = vpow.pop %v1784
        %v1786 = vmul.f32 %v1674, 1.442695
        %v1787 = vpow.pop %v1786
        %v1788 = vmul.f32 %v1675, 1.442695
        %v1789 = vpow.pop %v1788
        %v1790 = vmul.f32 %v1676, 1.442695
        %v1791 = vpow.pop %v1790
        %v1792 = vmul.f32 %v1677, 1.442695
        %v1793 = vpow.pop %v1792
        %v1794 = vmul.f32 %v1678, 1.442695
        %v1795 = vpow.pop %v1794
        %v1796 = vmul.f32 %v1679, 1.442695
        %v1797 = vpow.pop %v1796
        %v1798 = vmul.f32 %v1680, 1.442695
        %v1799 = vpow.pop %v1798
        %v1800 = vmul.f32 %v1681, 1.442695
        %v1801 = vpow.pop %v1800
        %v1802 = vmul.f32 %v1682, 1.442695
        %v1803 = vpow.pop %v1802
        %v1804 = vmul.f32 %v1683, 1.442695
        %v1805 = vpow.pop %v1804
        %v1806 = vmul.f32 %v1684, 1.442695
        %v1807 = vpow.pop %v1806
        %v1808 = vmul.f32 %v1685, 1.442695
        %v1809 = vpow.pop %v1808
        %v1810 = vmul.f32 %v1686, 1.442695
        %v1811 = vpow.pop %v1810
        %v1812 = vmul.f32 %v1687, 1.442695
        %v1813 = vpow.pop %v1812
        %v1814 = vmul.f32 %v1688, 1.442695
        %v1815 = vpow.pop %v1814
        %v1816 = vmul.f32 %v1689, 1.442695
        %v1817 = vpow.pop %v1816
        %v1818 = vadd.f32 %v1691, %v1695
        %v1819 = vadd.f32 %v1818, %v1699
        %v1820 = vadd.f32 %v1819, %v1703
        %v1821 = vadd.f32 %v1820, %v1707
        %v1822 = vadd.f32 %v1821, %v1711
        %v1823 = vadd.f32 %v1822, %v1715
        %v1824 = vadd.f32 %v1823, %v1719
        %v1825 = vadd.f32 %v1824, %v1723
        %v1826 = vadd.f32 %v1825, %v1727
        %v1827 = vadd.f32 %v1826, %v1731
        %v1828 = vadd.f32 %v1827, %v1735
        %v1829 = vadd.f32 %v1828, %v1739
        %v1830 = vadd.f32 %v1829, %v1743
        %v1831 = vadd.f32 %v1830, %v1747
        %v1832 = vadd.f32 %v1831, %v1751
        %v1833 = vadd.f32 %v1832, %v1755
        %v1834 = vadd.f32 %v1833, %v1759
        %v1835 = vadd.f32 %v1834, %v1763
        %v1836 = vadd.f32 %v1835, %v1767
        %v1837 = vadd.f32 %v1836, %v1771
        %v1838 = vadd.f32 %v1837, %v1775
        %v1839 = vadd.f32 %v1838, %v1779
        %v1840 = vadd.f32 %v1839, %v1783
        %v1841 = vadd.f32 %v1840, %v1787
        %v1842 = vadd.f32 %v1841, %v1791
        %v1843 = vadd.f32 %v1842, %v1795
        %v1844 = vadd.f32 %v1843, %v1799
        %v1845 = vadd.f32 %v1844, %v1803
        %v1846 = vadd.f32 %v1845, %v1807
        %v1847 = vadd.f32 %v1846, %v1811
        %v1848 = vadd.f32 %v1847, %v1815
        %v1849 = vrot.slane %v1848, 4
        %v1850 = vadd.f32 %v1848, %v1849
        %v1851 = vrot.slane %v1850, 2
        %v1852 = vadd.f32 %v1850, %v1851
        %v1853 = vrot.slane %v1852, 1
        %v1854 = vadd.f32 %v1852, %v1853
        %v1855 = vadd.f32 %v1693, %v1697
        %v1856 = vadd.f32 %v1855, %v1701
        %v1857 = vadd.f32 %v1856, %v1705
        %v1858 = vadd.f32 %v1857, %v1709
        %v1859 = vadd.f32 %v1858, %v1713
        %v1860 = vadd.f32 %v1859, %v1717
        %v1861 = vadd.f32 %v1860, %v1721
        %v1862 = vadd.f32 %v1861, %v1725
        %v1863 = vadd.f32 %v1862, %v1729
        %v1864 = vadd.f32 %v1863, %v1733
        %v1865 = vadd.f32 %v1864, %v1737
        %v1866 = vadd.f32 %v1865, %v1741
        %v1867 = vadd.f32 %v1866, %v1745
        %v1868 = vadd.f32 %v1867, %v1749
        %v1869 = vadd.f32 %v1868, %v1753
        %v1870 = vadd.f32 %v1869, %v1757
        %v1871 = vadd.f32 %v1870, %v1761
        %v1872 = vadd.f32 %v1871, %v1765
        %v1873 = vadd.f32 %v1872, %v1769
        %v1874 = vadd.f32 %v1873, %v1773
        %v1875 = vadd.f32 %v1874, %v1777
        %v1876 = vadd.f32 %v1875, %v1781
        %v1877 = vadd.f32 %v1876, %v1785
        %v1878 = vadd.f32 %v1877, %v1789
        %v1879 = vadd.f32 %v1878, %v1793
        %v1880 = vadd.f32 %v1879, %v1797
        %v1881 = vadd.f32 %v1880, %v1801
        %v1882 = vadd.f32 %v1881, %v1805
        %v1883 = vadd.f32 %v1882, %v1809
        %v1884 = vadd.f32 %v1883, %v1813
        %v1885 = vadd.f32 %v1884, %v1817
        %v1886 = vrot.slane %v1885, 4
        %v1887 = vadd.f32 %v1885, %v1886
        %v1888 = vrot.slane %v1887, 2
        %v1889 = vadd.f32 %v1887, %v1888
        %v1890 = vrot.slane %v1889, 1
        %v1891 = vadd.f32 %v1889, %v1890
        %1892 = vmatprep.subr.mxu0 %v1693
        %1893 = vmatpush1.msra.mxu0 %v1691
        %1894 = vmatprep.subr.mxu0 %v1697
        %1895 = vmatpush1.msra.mxu0 %v1695
        %1896 = vmatprep.subr.mxu0 %v1701
        %1897 = vmatpush1.msra.mxu0 %v1699
        %1898 = vmatprep.subr.mxu0 %v1705
        %1899 = vmatpush1.msra.mxu0 %v1703
        %1900 = vmatprep.subr.mxu0 %v1709
        %1901 = vmatpush1.msra.mxu0 %v1707
        %1902 = vmatprep.subr.mxu0 %v1713
        %1903 = vmatpush1.msra.mxu0 %v1711
        %1904 = vmatprep.subr.mxu0 %v1717
        %1905 = vmatpush1.msra.mxu0 %v1715
        %1906 = vmatprep.subr.mxu0 %v1721
        %1907 = vmatpush1.msra.mxu0 %v1719
        %1908 = vmatprep.subr.mxu0 %v1725
        %1909 = vmatpush1.msra.mxu0 %v1723
        %1910 = vmatprep.subr.mxu0 %v1729
        %1911 = vmatpush1.msra.mxu0 %v1727
        %1912 = vmatprep.subr.mxu0 %v1733
        %1913 = vmatpush1.msra.mxu0 %v1731
        %1914 = vmatprep.subr.mxu0 %v1737
        %1915 = vmatpush1.msra.mxu0 %v1735
        %1916 = vmatprep.subr.mxu0 %v1741
        %1917 = vmatpush1.msra.mxu0 %v1739
        %1918 = vmatprep.subr.mxu0 %v1745
        %1919 = vmatpush1.msra.mxu0 %v1743
        %1920 = vmatprep.subr.mxu0 %v1749
        %1921 = vmatpush1.msra.mxu0 %v1747
        %1922 = vmatprep.subr.mxu0 %v1753
        %1923 = vmatpush1.msra.mxu0 %v1751
        %1924 = vmatprep.subr.mxu0 %v1757
        %1925 = vmatpush1.msra.mxu0 %v1755
        %1926 = vmatprep.subr.mxu0 %v1761
        %1927 = vmatpush1.msra.mxu0 %v1759
        %1928 = vmatprep.subr.mxu0 %v1765
        %1929 = vmatpush1.msra.mxu0 %v1763
        %1930 = vmatprep.subr.mxu0 %v1769
        %1931 = vmatpush1.msra.mxu0 %v1767
        %1932 = vmatprep.subr.mxu0 %v1773
        %1933 = vmatpush1.msra.mxu0 %v1771
        %1934 = vmatprep.subr.mxu0 %v1777
        %1935 = vmatpush1.msra.mxu0 %v1775
        %1936 = vmatprep.subr.mxu0 %v1781
        %1937 = vmatpush1.msra.mxu0 %v1779
        %1938 = vmatprep.subr.mxu0 %v1785
        %1939 = vmatpush1.msra.mxu0 %v1783
        %1940 = vmatprep.subr.mxu0 %v1789
        %1941 = vmatpush1.msra.mxu0 %v1787
        %1942 = vmatprep.subr.mxu0 %v1793
        %1943 = vmatpush1.msra.mxu0 %v1791
        %1944 = vmatprep.subr.mxu0 %v1797
        %1945 = vmatpush1.msra.mxu0 %v1795
        %1946 = vmatprep.subr.mxu0 %v1801
        %1947 = vmatpush1.msra.mxu0 %v1799
        %1948 = vmatprep.subr.mxu0 %v1805
        %1949 = vmatpush1.msra.mxu0 %v1803
        %1950 = vmatprep.subr.mxu0 %v1809
        %1951 = vmatpush1.msra.mxu0 %v1807
        %1952 = vmatprep.subr.mxu0 %v1813
        %1953 = vmatpush1.msra.mxu0 %v1811
        %1954 = vmatprep.subr.mxu0 %v1817
        %1955 = vmatpush1.msra.mxu0 %v1815
        %1956 = vmatprep.mubr.f32.mxu0 %v1114
        %1957 = vmatmul.mubr.f32.gmra.mrb[0].mxu0 %v1112
        %v1958 = vpop.f32.mrb[0].mxu0
        %v1959 = vadd.f32 0.0, %v1958
        %v1960 = vpop.f32.mrb[0].mxu0
        %v1961 = vadd.f32 0.0, %v1960
        %1962 = vdwg.mxu0
        %v1963 = vrcp.pop %v1854
        %v1964 = vrcp.pop %v1891
        %v1965 = vmul.f32 %v1959, %v1963
        %v1966 = vmul.f32 %v1961, %v1964
        %1967 = vxpose.xlu0.b32.start [1/16] %v1094, 128
        %1968 = vxpose.xlu0.b32.cont [2/16] 0.0, 128
        %1969 = vxpose.xlu0.b32.cont [3/16] 0.0, 128
        %1970 = vxpose.xlu0.b32.cont [4/16] 0.0, 128
        %1971 = vxpose.xlu0.b32.cont [5/16] 0.0, 128
        %1972 = vxpose.xlu0.b32.cont [6/16] 0.0, 128
        %1973 = vxpose.xlu0.b32.cont [7/16] 0.0, 128
        %1974 = vxpose.xlu0.b32.cont [8/16] 0.0, 128
        %1975 = vxpose.xlu0.b32.cont [9/16] 0.0, 128
        %1976 = vxpose.xlu0.b32.cont [10/16] 0.0, 128
        %1977 = vxpose.xlu0.b32.cont [11/16] 0.0, 128
        %1978 = vxpose.xlu0.b32.cont [12/16] 0.0, 128
        %1979 = vxpose.xlu0.b32.cont [13/16] 0.0, 128
        %1980 = vxpose.xlu0.b32.cont [14/16] 0.0, 128
        %1981 = vxpose.xlu0.b32.cont [15/16] 0.0, 128
        %1982 = vxpose.xlu0.b32.end [16/16] 0.0, 128
        %v1983 = vpop.trf.xlu0
        %v1984 = vpop.trf.xlu0
        %v1985 = vpop.trf.xlu0
        %v1986 = vpop.trf.xlu0
        %v1987 = vpop.trf.xlu0
        %v1988 = vpop.trf.xlu0
        %v1989 = vpop.trf.xlu0
        %v1990 = vpop.trf.xlu0
        %v1991 = vpop.trf.xlu0
        %v1992 = vpop.trf.xlu0
        %v1993 = vpop.trf.xlu0
        %v1994 = vpop.trf.xlu0
        %v1995 = vpop.trf.xlu0
        %v1996 = vpop.trf.xlu0
        %v1997 = vpop.trf.xlu0
        %v1998 = vpop.trf.xlu0
        %1999 = vxpose.xlu0.b32.start [1/16] %v1096, 128
        %2000 = vxpose.xlu0.b32.cont [2/16] 0.0, 128
        %2001 = vxpose.xlu0.b32.cont [3/16] 0.0, 128
        %2002 = vxpose.xlu0.b32.cont [4/16] 0.0, 128
        %2003 = vxpose.xlu0.b32.cont [5/16] 0.0, 128
        %2004 = vxpose.xlu0.b32.cont [6/16] 0.0, 128
        %2005 = vxpose.xlu0.b32.cont [7/16] 0.0, 128
        %2006 = vxpose.xlu0.b32.cont [8/16] 0.0, 128
        %2007 = vxpose.xlu0.b32.cont [9/16] 0.0, 128
        %2008 = vxpose.xlu0.b32.cont [10/16] 0.0, 128
        %2009 = vxpose.xlu0.b32.cont [11/16] 0.0, 128
        %2010 = vxpose.xlu0.b32.cont [12/16] 0.0, 128
        %2011 = vxpose.xlu0.b32.cont [13/16] 0.0, 128
        %2012 = vxpose.xlu0.b32.cont [14/16] 0.0, 128
        %2013 = vxpose.xlu0.b32.cont [15/16] 0.0, 128
        %2014 = vxpose.xlu0.b32.end [16/16] 0.0, 128
        %v2015 = vpop.trf.xlu0
        %v2016 = vpop.trf.xlu0
        %v2017 = vpop.trf.xlu0
        %v2018 = vpop.trf.xlu0
        %v2019 = vpop.trf.xlu0
        %v2020 = vpop.trf.xlu0
        %v2021 = vpop.trf.xlu0
        %v2022 = vpop.trf.xlu0
        %v2023 = vpop.trf.xlu0
        %v2024 = vpop.trf.xlu0
        %v2025 = vpop.trf.xlu0
        %v2026 = vpop.trf.xlu0
        %v2027 = vpop.trf.xlu0
        %v2028 = vpop.trf.xlu0
        %v2029 = vpop.trf.xlu0
        %v2030 = vpop.trf.xlu0
        %v2032 = vsel %vm1198, %v1983, 0
        %v2035 = vsel %vm1198, %v1984, 0
        %v2038 = vsel %vm1198, %v1985, 0
        %v2041 = vsel %vm1198, %v1986, 0
        %v2044 = vsel %vm1198, %v1987, 0
        %v2047 = vsel %vm1198, %v1988, 0
        %v2050 = vsel %vm1198, %v1989, 0
        %v2053 = vsel %vm1198, %v1990, 0
        %v2056 = vsel %vm1198, %v1991, 0
        %v2059 = vsel %vm1198, %v1992, 0
        %v2062 = vsel %vm1198, %v1993, 0
        %v2065 = vsel %vm1198, %v1994, 0
        %v2068 = vsel %vm1198, %v1995, 0
        %v2071 = vsel %vm1198, %v1996, 0
        %v2074 = vsel %vm1198, %v1997, 0
        %v2077 = vsel %vm1198, %v1998, 0
        %v2080 = vsel %vm1198, %v2015, 0
        %v2083 = vsel %vm1198, %v2016, 0
        %v2086 = vsel %vm1198, %v2017, 0
        %v2089 = vsel %vm1198, %v2018, 0
        %v2092 = vsel %vm1198, %v2019, 0
        %v2095 = vsel %vm1198, %v2020, 0
        %v2098 = vsel %vm1198, %v2021, 0
        %v2101 = vsel %vm1198, %v2022, 0
        %v2104 = vsel %vm1198, %v2023, 0
        %v2107 = vsel %vm1198, %v2024, 0
        %v2110 = vsel %vm1198, %v2025, 0
        %v2113 = vsel %vm1198, %v2026, 0
        %v2116 = vsel %vm1198, %v2027, 0
        %v2119 = vsel %vm1198, %v2028, 0
        %v2122 = vsel %vm1198, %v2029, 0
        %v2125 = vsel %vm1198, %v2030, 0
        %2127 = vmatprep.subr.mxu0 %v743
        %2128 = vmatpush1.msra.mxu0 %v741
        %2129 = vmatprep.subr.mxu0 0.0
        %2130 = vmatpush1.msra.mxu0 0.0
        %2131 = vmatprep.subr.mxu0 0.0
        %2132 = vmatpush1.msra.mxu0 0.0
        %2133 = vmatprep.subr.mxu0 0.0
        %2134 = vmatpush1.msra.mxu0 0.0
        %2135 = vmatprep.subr.mxu0 0.0
        %2136 = vmatpush1.msra.mxu0 0.0
        %2137 = vmatprep.subr.mxu0 0.0
        %2138 = vmatpush1.msra.mxu0 0.0
        %2139 = vmatprep.subr.mxu0 0.0
        %2140 = vmatpush1.msra.mxu0 0.0
        %2141 = vmatprep.subr.mxu0 0.0
        %2142 = vmatpush1.msra.mxu0 0.0
        %2143 = vmatprep.subr.mxu0 0.0
        %2144 = vmatpush1.msra.mxu0 0.0
        %2145 = vmatprep.subr.mxu0 0.0
        %2146 = vmatpush1.msra.mxu0 0.0
        %2147 = vmatprep.subr.mxu0 0.0
        %2148 = vmatpush1.msra.mxu0 0.0
        %2149 = vmatprep.subr.mxu0 0.0
        %2150 = vmatpush1.msra.mxu0 0.0
        %2151 = vmatprep.subr.mxu0 0.0
        %2152 = vmatpush1.msra.mxu0 0.0
        %2153 = vmatprep.subr.mxu0 0.0
        %2154 = vmatpush1.msra.mxu0 0.0
        %2155 = vmatprep.subr.mxu0 0.0
        %2156 = vmatpush1.msra.mxu0 0.0
        %2157 = vmatprep.subr.mxu0 0.0
        %2158 = vmatpush1.msra.mxu0 0.0
        %2159 = vmatprep.subr.mxu0 0.0
        %2160 = vmatpush1.msra.mxu0 0.0
        %2161 = vmatprep.subr.mxu0 0.0
        %2162 = vmatpush1.msra.mxu0 0.0
        %2163 = vmatprep.subr.mxu0 0.0
        %2164 = vmatpush1.msra.mxu0 0.0
        %2165 = vmatprep.subr.mxu0 0.0
        %2166 = vmatpush1.msra.mxu0 0.0
        %2167 = vmatprep.subr.mxu0 0.0
        %2168 = vmatpush1.msra.mxu0 0.0
        %2169 = vmatprep.subr.mxu0 0.0
        %2170 = vmatpush1.msra.mxu0 0.0
        %2171 = vmatprep.subr.mxu0 0.0
        %2172 = vmatpush1.msra.mxu0 0.0
        %2173 = vmatprep.subr.mxu0 0.0
        %2174 = vmatpush1.msra.mxu0 0.0
        %2175 = vmatprep.subr.mxu0 0.0
        %2176 = vmatpush1.msra.mxu0 0.0
        %2177 = vmatprep.subr.mxu0 0.0
        %2178 = vmatpush1.msra.mxu0 0.0
        %2179 = vmatprep.subr.mxu0 0.0
        %2180 = vmatpush1.msra.mxu0 0.0
        %2181 = vmatprep.subr.mxu0 0.0
        %2182 = vmatpush1.msra.mxu0 0.0
        %2183 = vmatprep.subr.mxu0 0.0
        %2184 = vmatpush1.msra.mxu0 0.0
        %2185 = vmatprep.subr.mxu0 0.0
        %2186 = vmatpush1.msra.mxu0 0.0
        %2187 = vmatprep.subr.mxu0 0.0
        %2188 = vmatpush1.msra.mxu0 0.0
        %2189 = vmatprep.subr.mxu0 0.0
        %2190 = vmatpush1.msra.mxu0 0.0
        %2191 = vmatprep.mubr.f32.mxu0 0.0
        %2192 = vmatmul.mubr.f32.gmra.mrb[0].mxu0 %v2032
        %v2193 = vpop.f32.mrb[0].mxu0
        %v2194 = vadd.f32 0.0, %v2193
        %v2195 = vpop.f32.mrb[0].mxu0
        %v2196 = vadd.f32 0.0, %v2195
        %2197 = vmatprep.mubr.f32.mxu0 0.0
        %2198 = vmatmul.mubr.f32.gmra.mrb[0].mxu0 %v2035
        %v2199 = vpop.f32.mrb[0].mxu0
        %v2200 = vadd.f32 0.0, %v2199
        %v2201 = vpop.f32.mrb[0].mxu0
        %v2202 = vadd.f32 0.0, %v2201
        %2203 = vmatprep.mubr.f32.mxu0 0.0
        %2204 = vmatmul.mubr.f32.gmra.mrb[0].mxu0 %v2038
        %v2205 = vpop.f32.mrb[0].mxu0
        %v2206 = vadd.f32 0.0, %v2205
        %v2207 = vpop.f32.mrb[0].mxu0
        %v2208 = vadd.f32 0.0, %v2207
        %2209 = vmatprep.mubr.f32.mxu0 0.0
        %2210 = vmatmul.mubr.f32.gmra.mrb[0].mxu0 %v2041
        %v2211 = vpop.f32.mrb[0].mxu0
        %v2212 = vadd.f32 0.0, %v2211
        %v2213 = vpop.f32.mrb[0].mxu0
        %v2214 = vadd.f32 0.0, %v2213
        %2215 = vmatprep.mubr.f32.mxu0 0.0
        %2216 = vmatmul.mubr.f32.gmra.mrb[0].mxu0 %v2044
        %v2217 = vpop.f32.mrb[0].mxu0
        %v2218 = vadd.f32 0.0, %v2217
        %v2219 = vpop.f32.mrb[0].mxu0
        %v2220 = vadd.f32 0.0, %v2219
        %2221 = vmatprep.mubr.f32.mxu0 0.0
        %2222 = vmatmul.mubr.f32.gmra.mrb[0].mxu0 %v2047
        %v2223 = vpop.f32.mrb[0].mxu0
        %v2224 = vadd.f32 0.0, %v2223
        %v2225 = vpop.f32.mrb[0].mxu0
        %v2226 = vadd.f32 0.0, %v2225
        %2227 = vmatprep.mubr.f32.mxu0 0.0
        %2228 = vmatmul.mubr.f32.gmra.mrb[0].mxu0 %v2050
        %v2229 = vpop.f32.mrb[0].mxu0
        %v2230 = vadd.f32 0.0, %v2229
        %v2231 = vpop.f32.mrb[0].mxu0
        %v2232 = vadd.f32 0.0, %v2231
        %2233 = vmatprep.mubr.f32.mxu0 0.0
        %2234 = vmatmul.mubr.f32.gmra.mrb[0].mxu0 %v2053
        %v2235 = vpop.f32.mrb[0].mxu0
        %v2236 = vadd.f32 0.0, %v2235
        %v2237 = vpop.f32.mrb[0].mxu0
        %v2238 = vadd.f32 0.0, %v2237
        %2239 = vmatprep.mubr.f32.mxu0 0.0
        %2240 = vmatmul.mubr.f32.gmra.mrb[0].mxu0 %v2056
        %v2241 = vpop.f32.mrb[0].mxu0
        %v2242 = vadd.f32 0.0, %v2241
        %v2243 = vpop.f32.mrb[0].mxu0
        %v2244 = vadd.f32 0.0, %v2243
        %2245 = vmatprep.mubr.f32.mxu0 0.0
        %2246 = vmatmul.mubr.f32.gmra.mrb[0].mxu0 %v2059
        %v2247 = vpop.f32.mrb[0].mxu0
        %v2248 = vadd.f32 0.0, %v2247
        %v2249 = vpop.f32.mrb[0].mxu0
        %v2250 = vadd.f32 0.0, %v2249
        %2251 = vmatprep.mubr.f32.mxu0 0.0
        %2252 = vmatmul.mubr.f32.gmra.mrb[0].mxu0 %v2062
        %v2253 = vpop.f32.mrb[0].mxu0
        %v2254 = vadd.f32 0.0, %v2253
        %v2255 = vpop.f32.mrb[0].mxu0
        %v2256 = vadd.f32 0.0, %v2255
        %2257 = vmatprep.mubr.f32.mxu0 0.0
        %2258 = vmatmul.mubr.f32.gmra.mrb[0].mxu0 %v2065
        %v2259 = vpop.f32.mrb[0].mxu0
        %v2260 = vadd.f32 0.0, %v2259
        %v2261 = vpop.f32.mrb[0].mxu0
        %v2262 = vadd.f32 0.0, %v2261
        %2263 = vmatprep.mubr.f32.mxu0 0.0
        %2264 = vmatmul.mubr.f32.gmra.mrb[0].mxu0 %v2068
        %v2265 = vpop.f32.mrb[0].mxu0
        %v2266 = vadd.f32 0.0, %v2265
        %v2267 = vpop.f32.mrb[0].mxu0
        %v2268 = vadd.f32 0.0, %v2267
        %2269 = vmatprep.mubr.f32.mxu0 0.0
        %2270 = vmatmul.mubr.f32.gmra.mrb[0].mxu0 %v2071
        %v2271 = vpop.f32.mrb[0].mxu0
        %v2272 = vadd.f32 0.0, %v2271
        %v2273 = vpop.f32.mrb[0].mxu0
        %v2274 = vadd.f32 0.0, %v2273
        %2275 = vmatprep.mubr.f32.mxu0 0.0
        %2276 = vmatmul.mubr.f32.gmra.mrb[0].mxu0 %v2074
        %v2277 = vpop.f32.mrb[0].mxu0
        %v2278 = vadd.f32 0.0, %v2277
        %v2279 = vpop.f32.mrb[0].mxu0
        %v2280 = vadd.f32 0.0, %v2279
        %2281 = vmatprep.mubr.f32.mxu0 0.0
        %2282 = vmatmul.mubr.f32.gmra.mrb[0].mxu0 %v2077
        %v2283 = vpop.f32.mrb[0].mxu0
        %v2284 = vadd.f32 0.0, %v2283
        %v2285 = vpop.f32.mrb[0].mxu0
        %v2286 = vadd.f32 0.0, %v2285
        %2287 = vmatprep.mubr.f32.mxu0 0.0
        %2288 = vmatmul.mubr.f32.gmra.mrb[0].mxu0 %v2080
        %v2289 = vpop.f32.mrb[0].mxu0
        %v2290 = vadd.f32 0.0, %v2289
        %v2291 = vpop.f32.mrb[0].mxu0
        %v2292 = vadd.f32 0.0, %v2291
        %2293 = vmatprep.mubr.f32.mxu0 0.0
        %2294 = vmatmul.mubr.f32.gmra.mrb[0].mxu0 %v2083
        %v2295 = vpop.f32.mrb[0].mxu0
        %v2296 = vadd.f32 0.0, %v2295
        %v2297 = vpop.f32.mrb[0].mxu0
        %v2298 = vadd.f32 0.0, %v2297
        %2299 = vmatprep.mubr.f32.mxu0 0.0
        %2300 = vmatmul.mubr.f32.gmra.mrb[0].mxu0 %v2086
        %v2301 = vpop.f32.mrb[0].mxu0
        %v2302 = vadd.f32 0.0, %v2301
        %v2303 = vpop.f32.mrb[0].mxu0
        %v2304 = vadd.f32 0.0, %v2303
        %2305 = vmatprep.mubr.f32.mxu0 0.0
        %2306 = vmatmul.mubr.f32.gmra.mrb[0].mxu0 %v2089
        %v2307 = vpop.f32.mrb[0].mxu0
        %v2308 = vadd.f32 0.0, %v2307
        %v2309 = vpop.f32.mrb[0].mxu0
        %v2310 = vadd.f32 0.0, %v2309
        %2311 = vmatprep.mubr.f32.mxu0 0.0
        %2312 = vmatmul.mubr.f32.gmra.mrb[0].mxu0 %v2092
        %v2313 = vpop.f32.mrb[0].mxu0
        %v2314 = vadd.f32 0.0, %v2313
        %v2315 = vpop.f32.mrb[0].mxu0
        %v2316 = vadd.f32 0.0, %v2315
        %2317 = vmatprep.mubr.f32.mxu0 0.0
        %2318 = vmatmul.mubr.f32.gmra.mrb[0].mxu0 %v2095
        %v2319 = vpop.f32.mrb[0].mxu0
        %v2320 = vadd.f32 0.0, %v2319
        %v2321 = vpop.f32.mrb[0].mxu0
        %v2322 = vadd.f32 0.0, %v2321
        %2323 = vmatprep.mubr.f32.mxu0 0.0
        %2324 = vmatmul.mubr.f32.gmra.mrb[0].mxu0 %v2098
        %v2325 = vpop.f32.mrb[0].mxu0
        %v2326 = vadd.f32 0.0, %v2325
        %v2327 = vpop.f32.mrb[0].mxu0
        %v2328 = vadd.f32 0.0, %v2327
        %2329 = vmatprep.mubr.f32.mxu0 0.0
        %2330 = vmatmul.mubr.f32.gmra.mrb[0].mxu0 %v2101
        %v2331 = vpop.f32.mrb[0].mxu0
        %v2332 = vadd.f32 0.0, %v2331
        %v2333 = vpop.f32.mrb[0].mxu0
        %v2334 = vadd.f32 0.0, %v2333
        %2335 = vmatprep.mubr.f32.mxu0 0.0
        %2336 = vmatmul.mubr.f32.gmra.mrb[0].mxu0 %v2104
        %v2337 = vpop.f32.mrb[0].mxu0
        %v2338 = vadd.f32 0.0, %v2337
        %v2339 = vpop.f32.mrb[0].mxu0
        %v2340 = vadd.f32 0.0, %v2339
        %2341 = vmatprep.mubr.f32.mxu0 0.0
        %2342 = vmatmul.mubr.f32.gmra.mrb[0].mxu0 %v2107
        %v2343 = vpop.f32.mrb[0].mxu0
        %v2344 = vadd.f32 0.0, %v2343
        %v2345 = vpop.f32.mrb[0].mxu0
        %v2346 = vadd.f32 0.0, %v2345
        %2347 = vmatprep.mubr.f32.mxu0 0.0
        %2348 = vmatmul.mubr.f32.gmra.mrb[0].mxu0 %v2110
        %v2349 = vpop.f32.mrb[0].mxu0
        %v2350 = vadd.f32 0.0, %v2349
        %v2351 = vpop.f32.mrb[0].mxu0
        %v2352 = vadd.f32 0.0, %v2351
        %2353 = vmatprep.mubr.f32.mxu0 0.0
        %2354 = vmatmul.mubr.f32.gmra.mrb[0].mxu0 %v2113
        %v2355 = vpop.f32.mrb[0].mxu0
        %v2356 = vadd.f32 0.0, %v2355
        %v2357 = vpop.f32.mrb[0].mxu0
        %v2358 = vadd.f32 0.0, %v2357
        %2359 = vmatprep.mubr.f32.mxu0 0.0
        %2360 = vmatmul.mubr.f32.gmra.mrb[0].mxu0 %v2116
        %v2361 = vpop.f32.mrb[0].mxu0
        %v2362 = vadd.f32 0.0, %v2361
        %v2363 = vpop.f32.mrb[0].mxu0
        %v2364 = vadd.f32 0.0, %v2363
        %2365 = vmatprep.mubr.f32.mxu0 0.0
        %2366 = vmatmul.mubr.f32.gmra.mrb[0].mxu0 %v2119
        %v2367 = vpop.f32.mrb[0].mxu0
        %v2368 = vadd.f32 0.0, %v2367
        %v2369 = vpop.f32.mrb[0].mxu0
        %v2370 = vadd.f32 0.0, %v2369
        %2371 = vmatprep.mubr.f32.mxu0 0.0
        %2372 = vmatmul.mubr.f32.gmra.mrb[0].mxu0 %v2122
        %v2373 = vpop.f32.mrb[0].mxu0
        %v2374 = vadd.f32 0.0, %v2373
        %v2375 = vpop.f32.mrb[0].mxu0
        %v2376 = vadd.f32 0.0, %v2375
        %2377 = vmatprep.mubr.f32.mxu0 0.0
        %2378 = vmatmul.mubr.f32.gmra.mrb[0].mxu0 %v2125
        %v2379 = vpop.f32.mrb[0].mxu0
        %v2380 = vadd.f32 0.0, %v2379
        %v2381 = vpop.f32.mrb[0].mxu0
        %v2382 = vadd.f32 0.0, %v2381
        %2383 = vdwg.mxu0
        %v2384 = vmax.f32 %v2194, %v2206
        %v2385 = vmax.f32 %v2200, %v2212
        %v2386 = vmax.f32 %v2384, %v2218
        %v2387 = vmax.f32 %v2385, %v2224
        %v2388 = vmax.f32 %v2386, %v2230
        %v2389 = vmax.f32 %v2387, %v2236
        %v2390 = vmax.f32 %v2388, %v2242
        %v2391 = vmax.f32 %v2389, %v2248
        %v2392 = vmax.f32 %v2390, %v2254
        %v2393 = vmax.f32 %v2391, %v2260
        %v2394 = vmax.f32 %v2392, %v2266
        %v2395 = vmax.f32 %v2393, %v2272
        %v2396 = vmax.f32 %v2394, %v2278
        %v2397 = vmax.f32 %v2395, %v2284
        %v2398 = vmax.f32 %v2396, %v2290
        %v2399 = vmax.f32 %v2397, %v2296
        %v2400 = vmax.f32 %v2398, %v2302
        %v2401 = vmax.f32 %v2399, %v2308
        %v2402 = vmax.f32 %v2400, %v2314
        %v2403 = vmax.f32 %v2401, %v2320
        %v2404 = vmax.f32 %v2402, %v2326
        %v2405 = vmax.f32 %v2403, %v2332
        %v2406 = vmax.f32 %v2404, %v2338
        %v2407 = vmax.f32 %v2405, %v2344
        %v2408 = vmax.f32 %v2406, %v2350
        %v2409 = vmax.f32 %v2407, %v2356
        %v2410 = vmax.f32 %v2408, %v2362
        %v2411 = vmax.f32 %v2409, %v2368
        %v2412 = vmax.f32 %v2410, %v2374
        %v2413 = vmax.f32 %v2411, %v2380
        %v2414 = vmax.f32 %v2412, %v2413
        %v2415 = vrot.slane %v2414, 4
        %v2416 = vmax.f32 %v2414, %v2415
        %v2417 = vrot.slane %v2416, 2
        %v2418 = vmax.f32 %v2416, %v2417
        %v2419 = vrot.slane %v2418, 1
        %v2420 = vmax.f32 %v2418, %v2419
        %v2421 = vmax.f32 %v2196, %v2208
        %v2422 = vmax.f32 %v2202, %v2214
        %v2423 = vmax.f32 %v2421, %v2220
        %v2424 = vmax.f32 %v2422, %v2226
        %v2425 = vmax.f32 %v2423, %v2232
        %v2426 = vmax.f32 %v2424, %v2238
        %v2427 = vmax.f32 %v2425, %v2244
        %v2428 = vmax.f32 %v2426, %v2250
        %v2429 = vmax.f32 %v2427, %v2256
        %v2430 = vmax.f32 %v2428, %v2262
        %v2431 = vmax.f32 %v2429, %v2268
        %v2432 = vmax.f32 %v2430, %v2274
        %v2433 = vmax.f32 %v2431, %v2280
        %v2434 = vmax.f32 %v2432, %v2286
        %v2435 = vmax.f32 %v2433, %v2292
        %v2436 = vmax.f32 %v2434, %v2298
        %v2437 = vmax.f32 %v2435, %v2304
        %v2438 = vmax.f32 %v2436, %v2310
        %v2439 = vmax.f32 %v2437, %v2316
        %v2440 = vmax.f32 %v2438, %v2322
        %v2441 = vmax.f32 %v2439, %v2328
        %v2442 = vmax.f32 %v2440, %v2334
        %v2443 = vmax.f32 %v2441, %v2340
        %v2444 = vmax.f32 %v2442, %v2346
        %v2445 = vmax.f32 %v2443, %v2352
        %v2446 = vmax.f32 %v2444, %v2358
        %v2447 = vmax.f32 %v2445, %v2364
        %v2448 = vmax.f32 %v2446, %v2370
        %v2449 = vmax.f32 %v2447, %v2376
        %v2450 = vmax.f32 %v2448, %v2382
        %v2451 = vmax.f32 %v2449, %v2450
        %v2452 = vrot.slane %v2451, 4
        %v2453 = vmax.f32 %v2451, %v2452
        %v2454 = vrot.slane %v2453, 2
        %v2455 = vmax.f32 %v2453, %v2454
        %v2456 = vrot.slane %v2455, 1
        %v2457 = vmax.f32 %v2455, %v2456
        %v2458 = vsub.f32 %v2194, %v2420
        %v2459 = vsub.f32 %v2196, %v2457
        %v2460 = vsub.f32 %v2200, %v2420
        %v2461 = vsub.f32 %v2202, %v2457
        %v2462 = vsub.f32 %v2206, %v2420
        %v2463 = vsub.f32 %v2208, %v2457
        %v2464 = vsub.f32 %v2212, %v2420
        %v2465 = vsub.f32 %v2214, %v2457
        %v2466 = vsub.f32 %v2218, %v2420
        %v2467 = vsub.f32 %v2220, %v2457
        %v2468 = vsub.f32 %v2224, %v2420
        %v2469 = vsub.f32 %v2226, %v2457
        %v2470 = vsub.f32 %v2230, %v2420
        %v2471 = vsub.f32 %v2232, %v2457
        %v2472 = vsub.f32 %v2236, %v2420
        %v2473 = vsub.f32 %v2238, %v2457
        %v2474 = vsub.f32 %v2242, %v2420
        %v2475 = vsub.f32 %v2244, %v2457
        %v2476 = vsub.f32 %v2248, %v2420
        %v2477 = vsub.f32 %v2250, %v2457
        %v2478 = vsub.f32 %v2254, %v2420
        %v2479 = vsub.f32 %v2256, %v2457
        %v2480 = vsub.f32 %v2260, %v2420
        %v2481 = vsub.f32 %v2262, %v2457
        %v2482 = vsub.f32 %v2266, %v2420
        %v2483 = vsub.f32 %v2268, %v2457
        %v2484 = vsub.f32 %v2272, %v2420
        %v2485 = vsub.f32 %v2274, %v2457
        %v2486 = vsub.f32 %v2278, %v2420
        %v2487 = vsub.f32 %v2280, %v2457
        %v2488 = vsub.f32 %v2284, %v2420
        %v2489 = vsub.f32 %v2286, %v2457
        %v2490 = vsub.f32 %v2290, %v2420
        %v2491 = vsub.f32 %v2292, %v2457
        %v2492 = vsub.f32 %v2296, %v2420
        %v2493 = vsub.f32 %v2298, %v2457
        %v2494 = vsub.f32 %v2302, %v2420
        %v2495 = vsub.f32 %v2304, %v2457
        %v2496 = vsub.f32 %v2308, %v2420
        %v2497 = vsub.f32 %v2310, %v2457
        %v2498 = vsub.f32 %v2314, %v2420
        %v2499 = vsub.f32 %v2316, %v2457
        %v2500 = vsub.f32 %v2320, %v2420
        %v2501 = vsub.f32 %v2322, %v2457
        %v2502 = vsub.f32 %v2326, %v2420
        %v2503 = vsub.f32 %v2328, %v2457
        %v2504 = vsub.f32 %v2332, %v2420
        %v2505 = vsub.f32 %v2334, %v2457
        %v2506 = vsub.f32 %v2338, %v2420
        %v2507 = vsub.f32 %v2340, %v2457
        %v2508 = vsub.f32 %v2344, %v2420
        %v2509 = vsub.f32 %v2346, %v2457
        %v2510 = vsub.f32 %v2350, %v2420
        %v2511 = vsub.f32 %v2352, %v2457
        %v2512 = vsub.f32 %v2356, %v2420
        %v2513 = vsub.f32 %v2358, %v2457
        %v2514 = vsub.f32 %v2362, %v2420
        %v2515 = vsub.f32 %v2364, %v2457
        %v2516 = vsub.f32 %v2368, %v2420
        %v2517 = vsub.f32 %v2370, %v2457
        %v2518 = vsub.f32 %v2374, %v2420
        %v2519 = vsub.f32 %v2376, %v2457
        %v2520 = vsub.f32 %v2380, %v2420
        %v2521 = vsub.f32 %v2382, %v2457
        %v2522 = vmul.f32 %v2458, 1.442695
        %v2523 = vpow.pop %v2522
        %v2524 = vmul.f32 %v2459, 1.442695
        %v2525 = vpow.pop %v2524
        %v2526 = vmul.f32 %v2460, 1.442695
        %v2527 = vpow.pop %v2526
        %v2528 = vmul.f32 %v2461, 1.442695
        %v2529 = vpow.pop %v2528
        %v2530 = vmul.f32 %v2462, 1.442695
        %v2531 = vpow.pop %v2530
        %v2532 = vmul.f32 %v2463, 1.442695
        %v2533 = vpow.pop %v2532
        %v2534 = vmul.f32 %v2464, 1.442695
        %v2535 = vpow.pop %v2534
        %v2536 = vmul.f32 %v2465, 1.442695
        %v2537 = vpow.pop %v2536
        %v2538 = vmul.f32 %v2466, 1.442695
        %v2539 = vpow.pop %v2538
        %v2540 = vmul.f32 %v2467, 1.442695
        %v2541 = vpow.pop %v2540
        %v2542 = vmul.f32 %v2468, 1.442695
        %v2543 = vpow.pop %v2542
        %v2544 = vmul.f32 %v2469, 1.442695
        %v2545 = vpow.pop %v2544
        %v2546 = vmul.f32 %v2470, 1.442695
        %v2547 = vpow.pop %v2546
        %v2548 = vmul.f32 %v2471, 1.442695
        %v2549 = vpow.pop %v2548
        %v2550 = vmul.f32 %v2472, 1.442695
        %v2551 = vpow.pop %v2550
        %v2552 = vmul.f32 %v2473, 1.442695
        %v2553 = vpow.pop %v2552
        %v2554 = vmul.f32 %v2474, 1.442695
        %v2555 = vpow.pop %v2554
        %v2556 = vmul.f32 %v2475, 1.442695
        %v2557 = vpow.pop %v2556
        %v2558 = vmul.f32 %v2476, 1.442695
        %v2559 = vpow.pop %v2558
        %v2560 = vmul.f32 %v2477, 1.442695
        %v2561 = vpow.pop %v2560
        %v2562 = vmul.f32 %v2478, 1.442695
        %v2563 = vpow.pop %v2562
        %v2564 = vmul.f32 %v2479, 1.442695
        %v2565 = vpow.pop %v2564
        %v2566 = vmul.f32 %v2480, 1.442695
        %v2567 = vpow.pop %v2566
        %v2568 = vmul.f32 %v2481, 1.442695
        %v2569 = vpow.pop %v2568
        %v2570 = vmul.f32 %v2482, 1.442695
        %v2571 = vpow.pop %v2570
        %v2572 = vmul.f32 %v2483, 1.442695
        %v2573 = vpow.pop %v2572
        %v2574 = vmul.f32 %v2484, 1.442695
        %v2575 = vpow.pop %v2574
        %v2576 = vmul.f32 %v2485, 1.442695
        %v2577 = vpow.pop %v2576
        %v2578 = vmul.f32 %v2486, 1.442695
        %v2579 = vpow.pop %v2578
        %v2580 = vmul.f32 %v2487, 1.442695
        %v2581 = vpow.pop %v2580
        %v2582 = vmul.f32 %v2488, 1.442695
        %v2583 = vpow.pop %v2582
        %v2584 = vmul.f32 %v2489, 1.442695
        %v2585 = vpow.pop %v2584
        %v2586 = vmul.f32 %v2490, 1.442695
        %v2587 = vpow.pop %v2586
        %v2588 = vmul.f32 %v2491, 1.442695
        %v2589 = vpow.pop %v2588
        %v2590 = vmul.f32 %v2492, 1.442695
        %v2591 = vpow.pop %v2590
        %v2592 = vmul.f32 %v2493, 1.442695
        %v2593 = vpow.pop %v2592
        %v2594 = vmul.f32 %v2494, 1.442695
        %v2595 = vpow.pop %v2594
        %v2596 = vmul.f32 %v2495, 1.442695
        %v2597 = vpow.pop %v2596
        %v2598 = vmul.f32 %v2496, 1.442695
        %v2599 = vpow.pop %v2598
        %v2600 = vmul.f32 %v2497, 1.442695
        %v2601 = vpow.pop %v2600
        %v2602 = vmul.f32 %v2498, 1.442695
        %v2603 = vpow.pop %v2602
        %v2604 = vmul.f32 %v2499, 1.442695
        %v2605 = vpow.pop %v2604
        %v2606 = vmul.f32 %v2500, 1.442695
        %v2607 = vpow.pop %v2606
        %v2608 = vmul.f32 %v2501, 1.442695
        %v2609 = vpow.pop %v2608
        %v2610 = vmul.f32 %v2502, 1.442695
        %v2611 = vpow.pop %v2610
        %v2612 = vmul.f32 %v2503, 1.442695
        %v2613 = vpow.pop %v2612
        %v2614 = vmul.f32 %v2504, 1.442695
        %v2615 = vpow.pop %v2614
        %v2616 = vmul.f32 %v2505, 1.442695
        %v2617 = vpow.pop %v2616
        %v2618 = vmul.f32 %v2506, 1.442695
        %v2619 = vpow.pop %v2618
        %v2620 = vmul.f32 %v2507, 1.442695
        %v2621 = vpow.pop %v2620
        %v2622 = vmul.f32 %v2508, 1.442695
        %v2623 = vpow.pop %v2622
        %v2624 = vmul.f32 %v2509, 1.442695
        %v2625 = vpow.pop %v2624
        %v2626 = vmul.f32 %v2510, 1.442695
        %v2627 = vpow.pop %v2626
        %v2628 = vmul.f32 %v2511, 1.442695
        %v2629 = vpow.pop %v2628
        %v2630 = vmul.f32 %v2512, 1.442695
        %v2631 = vpow.pop %v2630
        %v2632 = vmul.f32 %v2513, 1.442695
        %v2633 = vpow.pop %v2632
        %v2634 = vmul.f32 %v2514, 1.442695
        %v2635 = vpow.pop %v2634
        %v2636 = vmul.f32 %v2515, 1.442695
        %v2637 = vpow.pop %v2636
        %v2638 = vmul.f32 %v2516, 1.442695
        %v2639 = vpow.pop %v2638
        %v2640 = vmul.f32 %v2517, 1.442695
        %v2641 = vpow.pop %v2640
        %v2642 = vmul.f32 %v2518, 1.442695
        %v2643 = vpow.pop %v2642
        %v2644 = vmul.f32 %v2519, 1.442695
        %v2645 = vpow.pop %v2644
        %v2646 = vmul.f32 %v2520, 1.442695
        %v2647 = vpow.pop %v2646
        %v2648 = vmul.f32 %v2521, 1.442695
        %v2649 = vpow.pop %v2648
        %v2650 = vadd.f32 %v2523, %v2527
        %v2651 = vadd.f32 %v2650, %v2531
        %v2652 = vadd.f32 %v2651, %v2535
        %v2653 = vadd.f32 %v2652, %v2539
        %v2654 = vadd.f32 %v2653, %v2543
        %v2655 = vadd.f32 %v2654, %v2547
        %v2656 = vadd.f32 %v2655, %v2551
        %v2657 = vadd.f32 %v2656, %v2555
        %v2658 = vadd.f32 %v2657, %v2559
        %v2659 = vadd.f32 %v2658, %v2563
        %v2660 = vadd.f32 %v2659, %v2567
        %v2661 = vadd.f32 %v2660, %v2571
        %v2662 = vadd.f32 %v2661, %v2575
        %v2663 = vadd.f32 %v2662, %v2579
        %v2664 = vadd.f32 %v2663, %v2583
        %v2665 = vadd.f32 %v2664, %v2587
        %v2666 = vadd.f32 %v2665, %v2591
        %v2667 = vadd.f32 %v2666, %v2595
        %v2668 = vadd.f32 %v2667, %v2599
        %v2669 = vadd.f32 %v2668, %v2603
        %v2670 = vadd.f32 %v2669, %v2607
        %v2671 = vadd.f32 %v2670, %v2611
        %v2672 = vadd.f32 %v2671, %v2615
        %v2673 = vadd.f32 %v2672, %v2619
        %v2674 = vadd.f32 %v2673, %v2623
        %v2675 = vadd.f32 %v2674, %v2627
        %v2676 = vadd.f32 %v2675, %v2631
        %v2677 = vadd.f32 %v2676, %v2635
        %v2678 = vadd.f32 %v2677, %v2639
        %v2679 = vadd.f32 %v2678, %v2643
        %v2680 = vadd.f32 %v2679, %v2647
        %v2681 = vrot.slane %v2680, 4
        %v2682 = vadd.f32 %v2680, %v2681
        %v2683 = vrot.slane %v2682, 2
        %v2684 = vadd.f32 %v2682, %v2683
        %v2685 = vrot.slane %v2684, 1
        %v2686 = vadd.f32 %v2684, %v2685
        %v2687 = vadd.f32 %v2525, %v2529
        %v2688 = vadd.f32 %v2687, %v2533
        %v2689 = vadd.f32 %v2688, %v2537
        %v2690 = vadd.f32 %v2689, %v2541
        %v2691 = vadd.f32 %v2690, %v2545
        %v2692 = vadd.f32 %v2691, %v2549
        %v2693 = vadd.f32 %v2692, %v2553
        %v2694 = vadd.f32 %v2693, %v2557
        %v2695 = vadd.f32 %v2694, %v2561
        %v2696 = vadd.f32 %v2695, %v2565
        %v2697 = vadd.f32 %v2696, %v2569
        %v2698 = vadd.f32 %v2697, %v2573
        %v2699 = vadd.f32 %v2698, %v2577
        %v2700 = vadd.f32 %v2699, %v2581
        %v2701 = vadd.f32 %v2700, %v2585
        %v2702 = vadd.f32 %v2701, %v2589
        %v2703 = vadd.f32 %v2702, %v2593
        %v2704 = vadd.f32 %v2703, %v2597
        %v2705 = vadd.f32 %v2704, %v2601
        %v2706 = vadd.f32 %v2705, %v2605
        %v2707 = vadd.f32 %v2706, %v2609
        %v2708 = vadd.f32 %v2707, %v2613
        %v2709 = vadd.f32 %v2708, %v2617
        %v2710 = vadd.f32 %v2709, %v2621
        %v2711 = vadd.f32 %v2710, %v2625
        %v2712 = vadd.f32 %v2711, %v2629
        %v2713 = vadd.f32 %v2712, %v2633
        %v2714 = vadd.f32 %v2713, %v2637
        %v2715 = vadd.f32 %v2714, %v2641
        %v2716 = vadd.f32 %v2715, %v2645
        %v2717 = vadd.f32 %v2716, %v2649
        %v2718 = vrot.slane %v2717, 4
        %v2719 = vadd.f32 %v2717, %v2718
        %v2720 = vrot.slane %v2719, 2
        %v2721 = vadd.f32 %v2719, %v2720
        %v2722 = vrot.slane %v2721, 1
        %v2723 = vadd.f32 %v2721, %v2722
        %2724 = vmatprep.subr.mxu0 %v2525
        %2725 = vmatpush1.msra.mxu0 %v2523
        %2726 = vmatprep.subr.mxu0 %v2529
        %2727 = vmatpush1.msra.mxu0 %v2527
        %2728 = vmatprep.subr.mxu0 %v2533
        %2729 = vmatpush1.msra.mxu0 %v2531
        %2730 = vmatprep.subr.mxu0 %v2537
        %2731 = vmatpush1.msra.mxu0 %v2535
        %2732 = vmatprep.subr.mxu0 %v2541
        %2733 = vmatpush1.msra.mxu0 %v2539
        %2734 = vmatprep.subr.mxu0 %v2545
        %2735 = vmatpush1.msra.mxu0 %v2543
        %2736 = vmatprep.subr.mxu0 %v2549
        %2737 = vmatpush1.msra.mxu0 %v2547
        %2738 = vmatprep.subr.mxu0 %v2553
        %2739 = vmatpush1.msra.mxu0 %v2551
        %2740 = vmatprep.subr.mxu0 %v2557
        %2741 = vmatpush1.msra.mxu0 %v2555
        %2742 = vmatprep.subr.mxu0 %v2561
        %2743 = vmatpush1.msra.mxu0 %v2559
        %2744 = vmatprep.subr.mxu0 %v2565
        %2745 = vmatpush1.msra.mxu0 %v2563
        %2746 = vmatprep.subr.mxu0 %v2569
        %2747 = vmatpush1.msra.mxu0 %v2567
        %2748 = vmatprep.subr.mxu0 %v2573
        %2749 = vmatpush1.msra.mxu0 %v2571
        %2750 = vmatprep.subr.mxu0 %v2577
        %2751 = vmatpush1.msra.mxu0 %v2575
        %2752 = vmatprep.subr.mxu0 %v2581
        %2753 = vmatpush1.msra.mxu0 %v2579
        %2754 = vmatprep.subr.mxu0 %v2585
        %2755 = vmatpush1.msra.mxu0 %v2583
        %2756 = vmatprep.subr.mxu0 %v2589
        %2757 = vmatpush1.msra.mxu0 %v2587
        %2758 = vmatprep.subr.mxu0 %v2593
        %2759 = vmatpush1.msra.mxu0 %v2591
        %2760 = vmatprep.subr.mxu0 %v2597
        %2761 = vmatpush1.msra.mxu0 %v2595
        %2762 = vmatprep.subr.mxu0 %v2601
        %2763 = vmatpush1.msra.mxu0 %v2599
        %2764 = vmatprep.subr.mxu0 %v2605
        %2765 = vmatpush1.msra.mxu0 %v2603
        %2766 = vmatprep.subr.mxu0 %v2609
        %2767 = vmatpush1.msra.mxu0 %v2607
        %2768 = vmatprep.subr.mxu0 %v2613
        %2769 = vmatpush1.msra.mxu0 %v2611
        %2770 = vmatprep.subr.mxu0 %v2617
        %2771 = vmatpush1.msra.mxu0 %v2615
        %2772 = vmatprep.subr.mxu0 %v2621
        %2773 = vmatpush1.msra.mxu0 %v2619
        %2774 = vmatprep.subr.mxu0 %v2625
        %2775 = vmatpush1.msra.mxu0 %v2623
        %2776 = vmatprep.subr.mxu0 %v2629
        %2777 = vmatpush1.msra.mxu0 %v2627
        %2778 = vmatprep.subr.mxu0 %v2633
        %2779 = vmatpush1.msra.mxu0 %v2631
        %2780 = vmatprep.subr.mxu0 %v2637
        %2781 = vmatpush1.msra.mxu0 %v2635
        %2782 = vmatprep.subr.mxu0 %v2641
        %2783 = vmatpush1.msra.mxu0 %v2639
        %2784 = vmatprep.subr.mxu0 %v2645
        %2785 = vmatpush1.msra.mxu0 %v2643
        %2786 = vmatprep.subr.mxu0 %v2649
        %2787 = vmatpush1.msra.mxu0 %v2647
        %2788 = vmatprep.mubr.f32.mxu0 %v1120
        %2789 = vmatmul.mubr.f32.gmra.mrb[0].mxu0 %v1118
        %v2790 = vpop.f32.mrb[0].mxu0
        %v2791 = vadd.f32 0.0, %v2790
        %v2792 = vpop.f32.mrb[0].mxu0
        %v2793 = vadd.f32 0.0, %v2792
        %2794 = vdwg.mxu0
        %v2795 = vrcp.pop %v2686
        %v2796 = vrcp.pop %v2723
        %v2797 = vmul.f32 %v2791, %v2795
        %v2798 = vmul.f32 %v2793, %v2796
        %2799 = vxpose.xlu0.b32.start [1/16] %v1100, 128
        %2800 = vxpose.xlu0.b32.cont [2/16] 0.0, 128
        %2801 = vxpose.xlu0.b32.cont [3/16] 0.0, 128
        %2802 = vxpose.xlu0.b32.cont [4/16] 0.0, 128
        %2803 = vxpose.xlu0.b32.cont [5/16] 0.0, 128
        %2804 = vxpose.xlu0.b32.cont [6/16] 0.0, 128
        %2805 = vxpose.xlu0.b32.cont [7/16] 0.0, 128
        %2806 = vxpose.xlu0.b32.cont [8/16] 0.0, 128
        %2807 = vxpose.xlu0.b32.cont [9/16] 0.0, 128
        %2808 = vxpose.xlu0.b32.cont [10/16] 0.0, 128
        %2809 = vxpose.xlu0.b32.cont [11/16] 0.0, 128
        %2810 = vxpose.xlu0.b32.cont [12/16] 0.0, 128
        %2811 = vxpose.xlu0.b32.cont [13/16] 0.0, 128
        %2812 = vxpose.xlu0.b32.cont [14/16] 0.0, 128
        %2813 = vxpose.xlu0.b32.cont [15/16] 0.0, 128
        %2814 = vxpose.xlu0.b32.end [16/16] 0.0, 128
        %v2815 = vpop.trf.xlu0
        %v2816 = vpop.trf.xlu0
        %v2817 = vpop.trf.xlu0
        %v2818 = vpop.trf.xlu0
        %v2819 = vpop.trf.xlu0
        %v2820 = vpop.trf.xlu0
        %v2821 = vpop.trf.xlu0
        %v2822 = vpop.trf.xlu0
        %v2823 = vpop.trf.xlu0
        %v2824 = vpop.trf.xlu0
        %v2825 = vpop.trf.xlu0
        %v2826 = vpop.trf.xlu0
        %v2827 = vpop.trf.xlu0
        %v2828 = vpop.trf.xlu0
        %v2829 = vpop.trf.xlu0
        %v2830 = vpop.trf.xlu0
        %2831 = vxpose.xlu0.b32.start [1/16] %v1102, 128
        %2832 = vxpose.xlu0.b32.cont [2/16] 0.0, 128
        %2833 = vxpose.xlu0.b32.cont [3/16] 0.0, 128
        %2834 = vxpose.xlu0.b32.cont [4/16] 0.0, 128
        %2835 = vxpose.xlu0.b32.cont [5/16] 0.0, 128
        %2836 = vxpose.xlu0.b32.cont [6/16] 0.0, 128
        %2837 = vxpose.xlu0.b32.cont [7/16] 0.0, 128
        %2838 = vxpose.xlu0.b32.cont [8/16] 0.0, 128
        %2839 = vxpose.xlu0.b32.cont [9/16] 0.0, 128
        %2840 = vxpose.xlu0.b32.cont [10/16] 0.0, 128
        %2841 = vxpose.xlu0.b32.cont [11/16] 0.0, 128
        %2842 = vxpose.xlu0.b32.cont [12/16] 0.0, 128
        %2843 = vxpose.xlu0.b32.cont [13/16] 0.0, 128
        %2844 = vxpose.xlu0.b32.cont [14/16] 0.0, 128
        %2845 = vxpose.xlu0.b32.cont [15/16] 0.0, 128
        %2846 = vxpose.xlu0.b32.end [16/16] 0.0, 128
        %v2847 = vpop.trf.xlu0
        %v2848 = vpop.trf.xlu0
        %v2849 = vpop.trf.xlu0
        %v2850 = vpop.trf.xlu0
        %v2851 = vpop.trf.xlu0
        %v2852 = vpop.trf.xlu0
        %v2853 = vpop.trf.xlu0
        %v2854 = vpop.trf.xlu0
        %v2855 = vpop.trf.xlu0
        %v2856 = vpop.trf.xlu0
        %v2857 = vpop.trf.xlu0
        %v2858 = vpop.trf.xlu0
        %v2859 = vpop.trf.xlu0
        %v2860 = vpop.trf.xlu0
        %v2861 = vpop.trf.xlu0
        %v2862 = vpop.trf.xlu0
        %v2864 = vsel %vm1198, %v2815, 0
        %v2867 = vsel %vm1198, %v2816, 0
        %v2870 = vsel %vm1198, %v2817, 0
        %v2873 = vsel %vm1198, %v2818, 0
        %v2876 = vsel %vm1198, %v2819, 0
        %v2879 = vsel %vm1198, %v2820, 0
        %v2882 = vsel %vm1198, %v2821, 0
        %v2885 = vsel %vm1198, %v2822, 0
        %v2888 = vsel %vm1198, %v2823, 0
        %v2891 = vsel %vm1198, %v2824, 0
        %v2894 = vsel %vm1198, %v2825, 0
        %v2897 = vsel %vm1198, %v2826, 0
        %v2900 = vsel %vm1198, %v2827, 0
        %v2903 = vsel %vm1198, %v2828, 0
        %v2906 = vsel %vm1198, %v2829, 0
        %v2909 = vsel %vm1198, %v2830, 0
        %v2912 = vsel %vm1198, %v2847, 0
        %v2915 = vsel %vm1198, %v2848, 0
        %v2918 = vsel %vm1198, %v2849, 0
        %v2921 = vsel %vm1198, %v2850, 0
        %v2924 = vsel %vm1198, %v2851, 0
        %v2927 = vsel %vm1198, %v2852, 0
        %v2930 = vsel %vm1198, %v2853, 0
        %v2933 = vsel %vm1198, %v2854, 0
        %v2936 = vsel %vm1198, %v2855, 0
        %v2939 = vsel %vm1198, %v2856, 0
        %v2942 = vsel %vm1198, %v2857, 0
        %v2945 = vsel %vm1198, %v2858, 0
        %v2948 = vsel %vm1198, %v2859, 0
        %v2951 = vsel %vm1198, %v2860, 0
        %v2954 = vsel %vm1198, %v2861, 0
        %v2957 = vsel %vm1198, %v2862, 0
        %2959 = vmatprep.subr.mxu0 %v749
        %2960 = vmatpush1.msra.mxu0 %v747
        %2961 = vmatprep.subr.mxu0 0.0
        %2962 = vmatpush1.msra.mxu0 0.0
        %2963 = vmatprep.subr.mxu0 0.0
        %2964 = vmatpush1.msra.mxu0 0.0
        %2965 = vmatprep.subr.mxu0 0.0
        %2966 = vmatpush1.msra.mxu0 0.0
        %2967 = vmatprep.subr.mxu0 0.0
        %2968 = vmatpush1.msra.mxu0 0.0
        %2969 = vmatprep.subr.mxu0 0.0
        %2970 = vmatpush1.msra.mxu0 0.0
        %2971 = vmatprep.subr.mxu0 0.0
        %2972 = vmatpush1.msra.mxu0 0.0
        %2973 = vmatprep.subr.mxu0 0.0
        %2974 = vmatpush1.msra.mxu0 0.0
        %2975 = vmatprep.subr.mxu0 0.0
        %2976 = vmatpush1.msra.mxu0 0.0
        %2977 = vmatprep.subr.mxu0 0.0
        %2978 = vmatpush1.msra.mxu0 0.0
        %2979 = vmatprep.subr.mxu0 0.0
        %2980 = vmatpush1.msra.mxu0 0.0
        %2981 = vmatprep.subr.mxu0 0.0
        %2982 = vmatpush1.msra.mxu0 0.0
        %2983 = vmatprep.subr.mxu0 0.0
        %2984 = vmatpush1.msra.mxu0 0.0
        %2985 = vmatprep.subr.mxu0 0.0
        %2986 = vmatpush1.msra.mxu0 0.0
        %2987 = vmatprep.subr.mxu0 0.0
        %2988 = vmatpush1.msra.mxu0 0.0
        %2989 = vmatprep.subr.mxu0 0.0
        %2990 = vmatpush1.msra.mxu0 0.0
        %2991 = vmatprep.subr.mxu0 0.0
        %2992 = vmatpush1.msra.mxu0 0.0
        %2993 = vmatprep.subr.mxu0 0.0
        %2994 = vmatpush1.msra.mxu0 0.0
        %2995 = vmatprep.subr.mxu0 0.0
        %2996 = vmatpush1.msra.mxu0 0.0
        %2997 = vmatprep.subr.mxu0 0.0
        %2998 = vmatpush1.msra.mxu0 0.0
        %2999 = vmatprep.subr.mxu0 0.0
        %3000 = vmatpush1.msra.mxu0 0.0
        %3001 = vmatprep.subr.mxu0 0.0
        %3002 = vmatpush1.msra.mxu0 0.0
        %3003 = vmatprep.subr.mxu0 0.0
        %3004 = vmatpush1.msra.mxu0 0.0
        %3005 = vmatprep.subr.mxu0 0.0
        %3006 = vmatpush1.msra.mxu0 0.0
        %3007 = vmatprep.subr.mxu0 0.0
        %3008 = vmatpush1.msra.mxu0 0.0
        %3009 = vmatprep.subr.mxu0 0.0
        %3010 = vmatpush1.msra.mxu0 0.0
        %3011 = vmatprep.subr.mxu0 0.0
        %3012 = vmatpush1.msra.mxu0 0.0
        %3013 = vmatprep.subr.mxu0 0.0
        %3014 = vmatpush1.msra.mxu0 0.0
        %3015 = vmatprep.subr.mxu0 0.0
        %3016 = vmatpush1.msra.mxu0 0.0
        %3017 = vmatprep.subr.mxu0 0.0
        %3018 = vmatpush1.msra.mxu0 0.0
        %3019 = vmatprep.subr.mxu0 0.0
        %3020 = vmatpush1.msra.mxu0 0.0
        %3021 = vmatprep.subr.mxu0 0.0
        %3022 = vmatpush1.msra.mxu0 0.0
        %3023 = vmatprep.mubr.f32.mxu0 0.0
        %3024 = vmatmul.mubr.f32.gmra.mrb[0].mxu0 %v2864
        %v3025 = vpop.f32.mrb[0].mxu0
        %v3026 = vadd.f32 0.0, %v3025
        %v3027 = vpop.f32.mrb[0].mxu0
        %v3028 = vadd.f32 0.0, %v3027
        %3029 = vmatprep.mubr.f32.mxu0 0.0
        %3030 = vmatmul.mubr.f32.gmra.mrb[0].mxu0 %v2867
        %v3031 = vpop.f32.mrb[0].mxu0
        %v3032 = vadd.f32 0.0, %v3031
        %v3033 = vpop.f32.mrb[0].mxu0
        %v3034 = vadd.f32 0.0, %v3033
        %3035 = vmatprep.mubr.f32.mxu0 0.0
        %3036 = vmatmul.mubr.f32.gmra.mrb[0].mxu0 %v2870
        %v3037 = vpop.f32.mrb[0].mxu0
        %v3038 = vadd.f32 0.0, %v3037
        %v3039 = vpop.f32.mrb[0].mxu0
        %v3040 = vadd.f32 0.0, %v3039
        %3041 = vmatprep.mubr.f32.mxu0 0.0
        %3042 = vmatmul.mubr.f32.gmra.mrb[0].mxu0 %v2873
        %v3043 = vpop.f32.mrb[0].mxu0
        %v3044 = vadd.f32 0.0, %v3043
        %v3045 = vpop.f32.mrb[0].mxu0
        %v3046 = vadd.f32 0.0, %v3045
        %3047 = vmatprep.mubr.f32.mxu0 0.0
        %3048 = vmatmul.mubr.f32.gmra.mrb[0].mxu0 %v2876
        %v3049 = vpop.f32.mrb[0].mxu0
        %v3050 = vadd.f32 0.0, %v3049
        %v3051 = vpop.f32.mrb[0].mxu0
        %v3052 = vadd.f32 0.0, %v3051
        %3053 = vmatprep.mubr.f32.mxu0 0.0
        %3054 = vmatmul.mubr.f32.gmra.mrb[0].mxu0 %v2879
        %v3055 = vpop.f32.mrb[0].mxu0
        %v3056 = vadd.f32 0.0, %v3055
        %v3057 = vpop.f32.mrb[0].mxu0
        %v3058 = vadd.f32 0.0, %v3057
        %3059 = vmatprep.mubr.f32.mxu0 0.0
        %3060 = vmatmul.mubr.f32.gmra.mrb[0].mxu0 %v2882
        %v3061 = vpop.f32.mrb[0].mxu0
        %v3062 = vadd.f32 0.0, %v3061
        %v3063 = vpop.f32.mrb[0].mxu0
        %v3064 = vadd.f32 0.0, %v3063
        %3065 = vmatprep.mubr.f32.mxu0 0.0
        %3066 = vmatmul.mubr.f32.gmra.mrb[0].mxu0 %v2885
        %v3067 = vpop.f32.mrb[0].mxu0
        %v3068 = vadd.f32 0.0, %v3067
        %v3069 = vpop.f32.mrb[0].mxu0
        %v3070 = vadd.f32 0.0, %v3069
        %3071 = vmatprep.mubr.f32.mxu0 0.0
        %3072 = vmatmul.mubr.f32.gmra.mrb[0].mxu0 %v2888
        %v3073 = vpop.f32.mrb[0].mxu0
        %v3074 = vadd.f32 0.0, %v3073
        %v3075 = vpop.f32.mrb[0].mxu0
        %v3076 = vadd.f32 0.0, %v3075
        %3077 = vmatprep.mubr.f32.mxu0 0.0
        %3078 = vmatmul.mubr.f32.gmra.mrb[0].mxu0 %v2891
        %v3079 = vpop.f32.mrb[0].mxu0
        %v3080 = vadd.f32 0.0, %v3079
        %v3081 = vpop.f32.mrb[0].mxu0
        %v3082 = vadd.f32 0.0, %v3081
        %3083 = vmatprep.mubr.f32.mxu0 0.0
        %3084 = vmatmul.mubr.f32.gmra.mrb[0].mxu0 %v2894
        %v3085 = vpop.f32.mrb[0].mxu0
        %v3086 = vadd.f32 0.0, %v3085
        %v3087 = vpop.f32.mrb[0].mxu0
        %v3088 = vadd.f32 0.0, %v3087
        %3089 = vmatprep.mubr.f32.mxu0 0.0
        %3090 = vmatmul.mubr.f32.gmra.mrb[0].mxu0 %v2897
        %v3091 = vpop.f32.mrb[0].mxu0
        %v3092 = vadd.f32 0.0, %v3091
        %v3093 = vpop.f32.mrb[0].mxu0
        %v3094 = vadd.f32 0.0, %v3093
        %3095 = vmatprep.mubr.f32.mxu0 0.0
        %3096 = vmatmul.mubr.f32.gmra.mrb[0].mxu0 %v2900
        %v3097 = vpop.f32.mrb[0].mxu0
        %v3098 = vadd.f32 0.0, %v3097
        %v3099 = vpop.f32.mrb[0].mxu0
        %v3100 = vadd.f32 0.0, %v3099
        %3101 = vmatprep.mubr.f32.mxu0 0.0
        %3102 = vmatmul.mubr.f32.gmra.mrb[0].mxu0 %v2903
        %v3103 = vpop.f32.mrb[0].mxu0
        %v3104 = vadd.f32 0.0, %v3103
        %v3105 = vpop.f32.mrb[0].mxu0
        %v3106 = vadd.f32 0.0, %v3105
        %3107 = vmatprep.mubr.f32.mxu0 0.0
        %3108 = vmatmul.mubr.f32.gmra.mrb[0].mxu0 %v2906
        %v3109 = vpop.f32.mrb[0].mxu0
        %v3110 = vadd.f32 0.0, %v3109
        %v3111 = vpop.f32.mrb[0].mxu0
        %v3112 = vadd.f32 0.0, %v3111
        %3113 = vmatprep.mubr.f32.mxu0 0.0
        %3114 = vmatmul.mubr.f32.gmra.mrb[0].mxu0 %v2909
        %v3115 = vpop.f32.mrb[0].mxu0
        %v3116 = vadd.f32 0.0, %v3115
        %v3117 = vpop.f32.mrb[0].mxu0
        %v3118 = vadd.f32 0.0, %v3117
        %3119 = vmatprep.mubr.f32.mxu0 0.0
        %3120 = vmatmul.mubr.f32.gmra.mrb[0].mxu0 %v2912
        %v3121 = vpop.f32.mrb[0].mxu0
        %v3122 = vadd.f32 0.0, %v3121
        %v3123 = vpop.f32.mrb[0].mxu0
        %v3124 = vadd.f32 0.0, %v3123
        %3125 = vmatprep.mubr.f32.mxu0 0.0
        %3126 = vmatmul.mubr.f32.gmra.mrb[0].mxu0 %v2915
        %v3127 = vpop.f32.mrb[0].mxu0
        %v3128 = vadd.f32 0.0, %v3127
        %v3129 = vpop.f32.mrb[0].mxu0
        %v3130 = vadd.f32 0.0, %v3129
        %3131 = vmatprep.mubr.f32.mxu0 0.0
        %3132 = vmatmul.mubr.f32.gmra.mrb[0].mxu0 %v2918
        %v3133 = vpop.f32.mrb[0].mxu0
        %v3134 = vadd.f32 0.0, %v3133
        %v3135 = vpop.f32.mrb[0].mxu0
        %v3136 = vadd.f32 0.0, %v3135
        %3137 = vmatprep.mubr.f32.mxu0 0.0
        %3138 = vmatmul.mubr.f32.gmra.mrb[0].mxu0 %v2921
        %v3139 = vpop.f32.mrb[0].mxu0
        %v3140 = vadd.f32 0.0, %v3139
        %v3141 = vpop.f32.mrb[0].mxu0
        %v3142 = vadd.f32 0.0, %v3141
        %3143 = vmatprep.mubr.f32.mxu0 0.0
        %3144 = vmatmul.mubr.f32.gmra.mrb[0].mxu0 %v2924
        %v3145 = vpop.f32.mrb[0].mxu0
        %v3146 = vadd.f32 0.0, %v3145
        %v3147 = vpop.f32.mrb[0].mxu0
        %v3148 = vadd.f32 0.0, %v3147
        %3149 = vmatprep.mubr.f32.mxu0 0.0
        %3150 = vmatmul.mubr.f32.gmra.mrb[0].mxu0 %v2927
        %v3151 = vpop.f32.mrb[0].mxu0
        %v3152 = vadd.f32 0.0, %v3151
        %v3153 = vpop.f32.mrb[0].mxu0
        %v3154 = vadd.f32 0.0, %v3153
        %3155 = vmatprep.mubr.f32.mxu0 0.0
        %3156 = vmatmul.mubr.f32.gmra.mrb[0].mxu0 %v2930
        %v3157 = vpop.f32.mrb[0].mxu0
        %v3158 = vadd.f32 0.0, %v3157
        %v3159 = vpop.f32.mrb[0].mxu0
        %v3160 = vadd.f32 0.0, %v3159
        %3161 = vmatprep.mubr.f32.mxu0 0.0
        %3162 = vmatmul.mubr.f32.gmra.mrb[0].mxu0 %v2933
        %v3163 = vpop.f32.mrb[0].mxu0
        %v3164 = vadd.f32 0.0, %v3163
        %v3165 = vpop.f32.mrb[0].mxu0
        %v3166 = vadd.f32 0.0, %v3165
        %3167 = vmatprep.mubr.f32.mxu0 0.0
        %3168 = vmatmul.mubr.f32.gmra.mrb[0].mxu0 %v2936
        %v3169 = vpop.f32.mrb[0].mxu0
        %v3170 = vadd.f32 0.0, %v3169
        %v3171 = vpop.f32.mrb[0].mxu0
        %v3172 = vadd.f32 0.0, %v3171
        %3173 = vmatprep.mubr.f32.mxu0 0.0
        %3174 = vmatmul.mubr.f32.gmra.mrb[0].mxu0 %v2939
        %v3175 = vpop.f32.mrb[0].mxu0
        %v3176 = vadd.f32 0.0, %v3175
        %v3177 = vpop.f32.mrb[0].mxu0
        %v3178 = vadd.f32 0.0, %v3177
        %3179 = vmatprep.mubr.f32.mxu0 0.0
        %3180 = vmatmul.mubr.f32.gmra.mrb[0].mxu0 %v2942
        %v3181 = vpop.f32.mrb[0].mxu0
        %v3182 = vadd.f32 0.0, %v3181
        %v3183 = vpop.f32.mrb[0].mxu0
        %v3184 = vadd.f32 0.0, %v3183
        %3185 = vmatprep.mubr.f32.mxu0 0.0
        %3186 = vmatmul.mubr.f32.gmra.mrb[0].mxu0 %v2945
        %v3187 = vpop.f32.mrb[0].mxu0
        %v3188 = vadd.f32 0.0, %v3187
        %v3189 = vpop.f32.mrb[0].mxu0
        %v3190 = vadd.f32 0.0, %v3189
        %3191 = vmatprep.mubr.f32.mxu0 0.0
        %3192 = vmatmul.mubr.f32.gmra.mrb[0].mxu0 %v2948
        %v3193 = vpop.f32.mrb[0].mxu0
        %v3194 = vadd.f32 0.0, %v3193
        %v3195 = vpop.f32.mrb[0].mxu0
        %v3196 = vadd.f32 0.0, %v3195
        %3197 = vmatprep.mubr.f32.mxu0 0.0
        %3198 = vmatmul.mubr.f32.gmra.mrb[0].mxu0 %v2951
        %v3199 = vpop.f32.mrb[0].mxu0
        %v3200 = vadd.f32 0.0, %v3199
        %v3201 = vpop.f32.mrb[0].mxu0
        %v3202 = vadd.f32 0.0, %v3201
        %3203 = vmatprep.mubr.f32.mxu0 0.0
        %3204 = vmatmul.mubr.f32.gmra.mrb[0].mxu0 %v2954
        %v3205 = vpop.f32.mrb[0].mxu0
        %v3206 = vadd.f32 0.0, %v3205
        %v3207 = vpop.f32.mrb[0].mxu0
        %v3208 = vadd.f32 0.0, %v3207
        %3209 = vmatprep.mubr.f32.mxu0 0.0
        %3210 = vmatmul.mubr.f32.gmra.mrb[0].mxu0 %v2957
        %v3211 = vpop.f32.mrb[0].mxu0
        %v3212 = vadd.f32 0.0, %v3211
        %v3213 = vpop.f32.mrb[0].mxu0
        %v3214 = vadd.f32 0.0, %v3213
        %3215 = vdwg.mxu0
        %v3216 = vmax.f32 %v3026, %v3038
        %v3217 = vmax.f32 %v3032, %v3044
        %v3218 = vmax.f32 %v3216, %v3050
        %v3219 = vmax.f32 %v3217, %v3056
        %v3220 = vmax.f32 %v3218, %v3062
        %v3221 = vmax.f32 %v3219, %v3068
        %v3222 = vmax.f32 %v3220, %v3074
        %v3223 = vmax.f32 %v3221, %v3080
        %v3224 = vmax.f32 %v3222, %v3086
        %v3225 = vmax.f32 %v3223, %v3092
        %v3226 = vmax.f32 %v3224, %v3098
        %v3227 = vmax.f32 %v3225, %v3104
        %v3228 = vmax.f32 %v3226, %v3110
        %v3229 = vmax.f32 %v3227, %v3116
        %v3230 = vmax.f32 %v3228, %v3122
        %v3231 = vmax.f32 %v3229, %v3128
        %v3232 = vmax.f32 %v3230, %v3134
        %v3233 = vmax.f32 %v3231, %v3140
        %v3234 = vmax.f32 %v3232, %v3146
        %v3235 = vmax.f32 %v3233, %v3152
        %v3236 = vmax.f32 %v3234, %v3158
        %v3237 = vmax.f32 %v3235, %v3164
        %v3238 = vmax.f32 %v3236, %v3170
        %v3239 = vmax.f32 %v3237, %v3176
        %v3240 = vmax.f32 %v3238, %v3182
        %v3241 = vmax.f32 %v3239, %v3188
        %v3242 = vmax.f32 %v3240, %v3194
        %v3243 = vmax.f32 %v3241, %v3200
        %v3244 = vmax.f32 %v3242, %v3206
        %v3245 = vmax.f32 %v3243, %v3212
        %v3246 = vmax.f32 %v3244, %v3245
        %v3247 = vrot.slane %v3246, 4
        %v3248 = vmax.f32 %v3246, %v3247
        %v3249 = vrot.slane %v3248, 2
        %v3250 = vmax.f32 %v3248, %v3249
        %v3251 = vrot.slane %v3250, 1
        %v3252 = vmax.f32 %v3250, %v3251
        %v3253 = vmax.f32 %v3028, %v3040
        %v3254 = vmax.f32 %v3034, %v3046
        %v3255 = vmax.f32 %v3253, %v3052
        %v3256 = vmax.f32 %v3254, %v3058
        %v3257 = vmax.f32 %v3255, %v3064
        %v3258 = vmax.f32 %v3256, %v3070
        %v3259 = vmax.f32 %v3257, %v3076
        %v3260 = vmax.f32 %v3258, %v3082
        %v3261 = vmax.f32 %v3259, %v3088
        %v3262 = vmax.f32 %v3260, %v3094
        %v3263 = vmax.f32 %v3261, %v3100
        %v3264 = vmax.f32 %v3262, %v3106
        %v3265 = vmax.f32 %v3263, %v3112
        %v3266 = vmax.f32 %v3264, %v3118
        %v3267 = vmax.f32 %v3265, %v3124
        %v3268 = vmax.f32 %v3266, %v3130
        %v3269 = vmax.f32 %v3267, %v3136
        %v3270 = vmax.f32 %v3268, %v3142
        %v3271 = vmax.f32 %v3269, %v3148
        %v3272 = vmax.f32 %v3270, %v3154
        %v3273 = vmax.f32 %v3271, %v3160
        %v3274 = vmax.f32 %v3272, %v3166
        %v3275 = vmax.f32 %v3273, %v3172
        %v3276 = vmax.f32 %v3274, %v3178
        %v3277 = vmax.f32 %v3275, %v3184
        %v3278 = vmax.f32 %v3276, %v3190
        %v3279 = vmax.f32 %v3277, %v3196
        %v3280 = vmax.f32 %v3278, %v3202
        %v3281 = vmax.f32 %v3279, %v3208
        %v3282 = vmax.f32 %v3280, %v3214
        %v3283 = vmax.f32 %v3281, %v3282
        %v3284 = vrot.slane %v3283, 4
        %v3285 = vmax.f32 %v3283, %v3284
        %v3286 = vrot.slane %v3285, 2
        %v3287 = vmax.f32 %v3285, %v3286
        %v3288 = vrot.slane %v3287, 1
        %v3289 = vmax.f32 %v3287, %v3288
        %v3290 = vsub.f32 %v3026, %v3252
        %v3291 = vsub.f32 %v3028, %v3289
        %v3292 = vsub.f32 %v3032, %v3252
        %v3293 = vsub.f32 %v3034, %v3289
        %v3294 = vsub.f32 %v3038, %v3252
        %v3295 = vsub.f32 %v3040, %v3289
        %v3296 = vsub.f32 %v3044, %v3252
        %v3297 = vsub.f32 %v3046, %v3289
        %v3298 = vsub.f32 %v3050, %v3252
        %v3299 = vsub.f32 %v3052, %v3289
        %v3300 = vsub.f32 %v3056, %v3252
        %v3301 = vsub.f32 %v3058, %v3289
        %v3302 = vsub.f32 %v3062, %v3252
        %v3303 = vsub.f32 %v3064, %v3289
        %v3304 = vsub.f32 %v3068, %v3252
        %v3305 = vsub.f32 %v3070, %v3289
        %v3306 = vsub.f32 %v3074, %v3252
        %v3307 = vsub.f32 %v3076, %v3289
        %v3308 = vsub.f32 %v3080, %v3252
        %v3309 = vsub.f32 %v3082, %v3289
        %v3310 = vsub.f32 %v3086, %v3252
        %v3311 = vsub.f32 %v3088, %v3289
        %v3312 = vsub.f32 %v3092, %v3252
        %v3313 = vsub.f32 %v3094, %v3289
        %v3314 = vsub.f32 %v3098, %v3252
        %v3315 = vsub.f32 %v3100, %v3289
        %v3316 = vsub.f32 %v3104, %v3252
        %v3317 = vsub.f32 %v3106, %v3289
        %v3318 = vsub.f32 %v3110, %v3252
        %v3319 = vsub.f32 %v3112, %v3289
        %v3320 = vsub.f32 %v3116, %v3252
        %v3321 = vsub.f32 %v3118, %v3289
        %v3322 = vsub.f32 %v3122, %v3252
        %v3323 = vsub.f32 %v3124, %v3289
        %v3324 = vsub.f32 %v3128, %v3252
        %v3325 = vsub.f32 %v3130, %v3289
        %v3326 = vsub.f32 %v3134, %v3252
        %v3327 = vsub.f32 %v3136, %v3289
        %v3328 = vsub.f32 %v3140, %v3252
        %v3329 = vsub.f32 %v3142, %v3289
        %v3330 = vsub.f32 %v3146, %v3252
        %v3331 = vsub.f32 %v3148, %v3289
        %v3332 = vsub.f32 %v3152, %v3252
        %v3333 = vsub.f32 %v3154, %v3289
        %v3334 = vsub.f32 %v3158, %v3252
        %v3335 = vsub.f32 %v3160, %v3289
        %v3336 = vsub.f32 %v3164, %v3252
        %v3337 = vsub.f32 %v3166, %v3289
        %v3338 = vsub.f32 %v3170, %v3252
        %v3339 = vsub.f32 %v3172, %v3289
        %v3340 = vsub.f32 %v3176, %v3252
        %v3341 = vsub.f32 %v3178, %v3289
        %v3342 = vsub.f32 %v3182, %v3252
        %v3343 = vsub.f32 %v3184, %v3289
        %v3344 = vsub.f32 %v3188, %v3252
        %v3345 = vsub.f32 %v3190, %v3289
        %v3346 = vsub.f32 %v3194, %v3252
        %v3347 = vsub.f32 %v3196, %v3289
        %v3348 = vsub.f32 %v3200, %v3252
        %v3349 = vsub.f32 %v3202, %v3289
        %v3350 = vsub.f32 %v3206, %v3252
        %v3351 = vsub.f32 %v3208, %v3289
        %v3352 = vsub.f32 %v3212, %v3252
        %v3353 = vsub.f32 %v3214, %v3289
        %v3354 = vmul.f32 %v3290, 1.442695
        %v3355 = vpow.pop %v3354
        %v3356 = vmul.f32 %v3291, 1.442695
        %v3357 = vpow.pop %v3356
        %v3358 = vmul.f32 %v3292, 1.442695
        %v3359 = vpow.pop %v3358
        %v3360 = vmul.f32 %v3293, 1.442695
        %v3361 = vpow.pop %v3360
        %v3362 = vmul.f32 %v3294, 1.442695
        %v3363 = vpow.pop %v3362
        %v3364 = vmul.f32 %v3295, 1.442695
        %v3365 = vpow.pop %v3364
        %v3366 = vmul.f32 %v3296, 1.442695
        %v3367 = vpow.pop %v3366
        %v3368 = vmul.f32 %v3297, 1.442695
        %v3369 = vpow.pop %v3368
        %v3370 = vmul.f32 %v3298, 1.442695
        %v3371 = vpow.pop %v3370
        %v3372 = vmul.f32 %v3299, 1.442695
        %v3373 = vpow.pop %v3372
        %v3374 = vmul.f32 %v3300, 1.442695
        %v3375 = vpow.pop %v3374
        %v3376 = vmul.f32 %v3301, 1.442695
        %v3377 = vpow.pop %v3376
        %v3378 = vmul.f32 %v3302, 1.442695
        %v3379 = vpow.pop %v3378
        %v3380 = vmul.f32 %v3303, 1.442695
        %v3381 = vpow.pop %v3380
        %v3382 = vmul.f32 %v3304, 1.442695
        %v3383 = vpow.pop %v3382
        %v3384 = vmul.f32 %v3305, 1.442695
        %v3385 = vpow.pop %v3384
        %v3386 = vmul.f32 %v3306, 1.442695
        %v3387 = vpow.pop %v3386
        %v3388 = vmul.f32 %v3307, 1.442695
        %v3389 = vpow.pop %v3388
        %v3390 = vmul.f32 %v3308, 1.442695
        %v3391 = vpow.pop %v3390
        %v3392 = vmul.f32 %v3309, 1.442695
        %v3393 = vpow.pop %v3392
        %v3394 = vmul.f32 %v3310, 1.442695
        %v3395 = vpow.pop %v3394
        %v3396 = vmul.f32 %v3311, 1.442695
        %v3397 = vpow.pop %v3396
        %v3398 = vmul.f32 %v3312, 1.442695
        %v3399 = vpow.pop %v3398
        %v3400 = vmul.f32 %v3313, 1.442695
        %v3401 = vpow.pop %v3400
        %v3402 = vmul.f32 %v3314, 1.442695
        %v3403 = vpow.pop %v3402
        %v3404 = vmul.f32 %v3315, 1.442695
        %v3405 = vpow.pop %v3404
        %v3406 = vmul.f32 %v3316, 1.442695
        %v3407 = vpow.pop %v3406
        %v3408 = vmul.f32 %v3317, 1.442695
        %v3409 = vpow.pop %v3408
        %v3410 = vmul.f32 %v3318, 1.442695
        %v3411 = vpow.pop %v3410
        %v3412 = vmul.f32 %v3319, 1.442695
        %v3413 = vpow.pop %v3412
        %v3414 = vmul.f32 %v3320, 1.442695
        %v3415 = vpow.pop %v3414
        %v3416 = vmul.f32 %v3321, 1.442695
        %v3417 = vpow.pop %v3416
        %v3418 = vmul.f32 %v3322, 1.442695
        %v3419 = vpow.pop %v3418
        %v3420 = vmul.f32 %v3323, 1.442695
        %v3421 = vpow.pop %v3420
        %v3422 = vmul.f32 %v3324, 1.442695
        %v3423 = vpow.pop %v3422
        %v3424 = vmul.f32 %v3325, 1.442695
        %v3425 = vpow.pop %v3424
        %v3426 = vmul.f32 %v3326, 1.442695
        %v3427 = vpow.pop %v3426
        %v3428 = vmul.f32 %v3327, 1.442695
        %v3429 = vpow.pop %v3428
        %v3430 = vmul.f32 %v3328, 1.442695
        %v3431 = vpow.pop %v3430
        %v3432 = vmul.f32 %v3329, 1.442695
        %v3433 = vpow.pop %v3432
        %v3434 = vmul.f32 %v3330, 1.442695
        %v3435 = vpow.pop %v3434
        %v3436 = vmul.f32 %v3331, 1.442695
        %v3437 = vpow.pop %v3436
        %v3438 = vmul.f32 %v3332, 1.442695
        %v3439 = vpow.pop %v3438
        %v3440 = vmul.f32 %v3333, 1.442695
        %v3441 = vpow.pop %v3440
        %v3442 = vmul.f32 %v3334, 1.442695
        %v3443 = vpow.pop %v3442
        %v3444 = vmul.f32 %v3335, 1.442695
        %v3445 = vpow.pop %v3444
        %v3446 = vmul.f32 %v3336, 1.442695
        %v3447 = vpow.pop %v3446
        %v3448 = vmul.f32 %v3337, 1.442695
        %v3449 = vpow.pop %v3448
        %v3450 = vmul.f32 %v3338, 1.442695
        %v3451 = vpow.pop %v3450
        %v3452 = vmul.f32 %v3339, 1.442695
        %v3453 = vpow.pop %v3452
        %v3454 = vmul.f32 %v3340, 1.442695
        %v3455 = vpow.pop %v3454
        %v3456 = vmul.f32 %v3341, 1.442695
        %v3457 = vpow.pop %v3456
        %v3458 = vmul.f32 %v3342, 1.442695
        %v3459 = vpow.pop %v3458
        %v3460 = vmul.f32 %v3343, 1.442695
        %v3461 = vpow.pop %v3460
        %v3462 = vmul.f32 %v3344, 1.442695
        %v3463 = vpow.pop %v3462
        %v3464 = vmul.f32 %v3345, 1.442695
        %v3465 = vpow.pop %v3464
        %v3466 = vmul.f32 %v3346, 1.442695
        %v3467 = vpow.pop %v3466
        %v3468 = vmul.f32 %v3347, 1.442695
        %v3469 = vpow.pop %v3468
        %v3470 = vmul.f32 %v3348, 1.442695
        %v3471 = vpow.pop %v3470
        %v3472 = vmul.f32 %v3349, 1.442695
        %v3473 = vpow.pop %v3472
        %v3474 = vmul.f32 %v3350, 1.442695
        %v3475 = vpow.pop %v3474
        %v3476 = vmul.f32 %v3351, 1.442695
        %v3477 = vpow.pop %v3476
        %v3478 = vmul.f32 %v3352, 1.442695
        %v3479 = vpow.pop %v3478
        %v3480 = vmul.f32 %v3353, 1.442695
        %v3481 = vpow.pop %v3480
        %v3482 = vadd.f32 %v3355, %v3359
        %v3483 = vadd.f32 %v3482, %v3363
        %v3484 = vadd.f32 %v3483, %v3367
        %v3485 = vadd.f32 %v3484, %v3371
        %v3486 = vadd.f32 %v3485, %v3375
        %v3487 = vadd.f32 %v3486, %v3379
        %v3488 = vadd.f32 %v3487, %v3383
        %v3489 = vadd.f32 %v3488, %v3387
        %v3490 = vadd.f32 %v3489, %v3391
        %v3491 = vadd.f32 %v3490, %v3395
        %v3492 = vadd.f32 %v3491, %v3399
        %v3493 = vadd.f32 %v3492, %v3403
        %v3494 = vadd.f32 %v3493, %v3407
        %v3495 = vadd.f32 %v3494, %v3411
        %v3496 = vadd.f32 %v3495, %v3415
        %v3497 = vadd.f32 %v3496, %v3419
        %v3498 = vadd.f32 %v3497, %v3423
        %v3499 = vadd.f32 %v3498, %v3427
        %v3500 = vadd.f32 %v3499, %v3431
        %v3501 = vadd.f32 %v3500, %v3435
        %v3502 = vadd.f32 %v3501, %v3439
        %v3503 = vadd.f32 %v3502, %v3443
        %v3504 = vadd.f32 %v3503, %v3447
        %v3505 = vadd.f32 %v3504, %v3451
        %v3506 = vadd.f32 %v3505, %v3455
        %v3507 = vadd.f32 %v3506, %v3459
        %v3508 = vadd.f32 %v3507, %v3463
        %v3509 = vadd.f32 %v3508, %v3467
        %v3510 = vadd.f32 %v3509, %v3471
        %v3511 = vadd.f32 %v3510, %v3475
        %v3512 = vadd.f32 %v3511, %v3479
        %v3513 = vrot.slane %v3512, 4
        %v3514 = vadd.f32 %v3512, %v3513
        %v3515 = vrot.slane %v3514, 2
        %v3516 = vadd.f32 %v3514, %v3515
        %v3517 = vrot.slane %v3516, 1
        %v3518 = vadd.f32 %v3516, %v3517
        %v3519 = vadd.f32 %v3357, %v3361
        %v3520 = vadd.f32 %v3519, %v3365
        %v3521 = vadd.f32 %v3520, %v3369
        %v3522 = vadd.f32 %v3521, %v3373
        %v3523 = vadd.f32 %v3522, %v3377
        %v3524 = vadd.f32 %v3523, %v3381
        %v3525 = vadd.f32 %v3524, %v3385
        %v3526 = vadd.f32 %v3525, %v3389
        %v3527 = vadd.f32 %v3526, %v3393
        %v3528 = vadd.f32 %v3527, %v3397
        %v3529 = vadd.f32 %v3528, %v3401
        %v3530 = vadd.f32 %v3529, %v3405
        %v3531 = vadd.f32 %v3530, %v3409
        %v3532 = vadd.f32 %v3531, %v3413
        %v3533 = vadd.f32 %v3532, %v3417
        %v3534 = vadd.f32 %v3533, %v3421
        %v3535 = vadd.f32 %v3534, %v3425
        %v3536 = vadd.f32 %v3535, %v3429
        %v3537 = vadd.f32 %v3536, %v3433
        %v3538 = vadd.f32 %v3537, %v3437
        %v3539 = vadd.f32 %v3538, %v3441
        %v3540 = vadd.f32 %v3539, %v3445
        %v3541 = vadd.f32 %v3540, %v3449
        %v3542 = vadd.f32 %v3541, %v3453
        %v3543 = vadd.f32 %v3542, %v3457
        %v3544 = vadd.f32 %v3543, %v3461
        %v3545 = vadd.f32 %v3544, %v3465
        %v3546 = vadd.f32 %v3545, %v3469
        %v3547 = vadd.f32 %v3546, %v3473
        %v3548 = vadd.f32 %v3547, %v3477
        %v3549 = vadd.f32 %v3548, %v3481
        %v3550 = vrot.slane %v3549, 4
        %v3551 = vadd.f32 %v3549, %v3550
        %v3552 = vrot.slane %v3551, 2
        %v3553 = vadd.f32 %v3551, %v3552
        %v3554 = vrot.slane %v3553, 1
        %v3555 = vadd.f32 %v3553, %v3554
        %3556 = vmatprep.subr.mxu0 %v3357
        %3557 = vmatpush1.msra.mxu0 %v3355
        %3558 = vmatprep.subr.mxu0 %v3361
        %3559 = vmatpush1.msra.mxu0 %v3359
        %3560 = vmatprep.subr.mxu0 %v3365
        %3561 = vmatpush1.msra.mxu0 %v3363
        %3562 = vmatprep.subr.mxu0 %v3369
        %3563 = vmatpush1.msra.mxu0 %v3367
        %3564 = vmatprep.subr.mxu0 %v3373
        %3565 = vmatpush1.msra.mxu0 %v3371
        %3566 = vmatprep.subr.mxu0 %v3377
        %3567 = vmatpush1.msra.mxu0 %v3375
        %3568 = vmatprep.subr.mxu0 %v3381
        %3569 = vmatpush1.msra.mxu0 %v3379
        %3570 = vmatprep.subr.mxu0 %v3385
        %3571 = vmatpush1.msra.mxu0 %v3383
        %3572 = vmatprep.subr.mxu0 %v3389
        %3573 = vmatpush1.msra.mxu0 %v3387
        %3574 = vmatprep.subr.mxu0 %v3393
        %3575 = vmatpush1.msra.mxu0 %v3391
        %3576 = vmatprep.subr.mxu0 %v3397
        %3577 = vmatpush1.msra.mxu0 %v3395
        %3578 = vmatprep.subr.mxu0 %v3401
        %3579 = vmatpush1.msra.mxu0 %v3399
        %3580 = vmatprep.subr.mxu0 %v3405
        %3581 = vmatpush1.msra.mxu0 %v3403
        %3582 = vmatprep.subr.mxu0 %v3409
        %3583 = vmatpush1.msra.mxu0 %v3407
        %3584 = vmatprep.subr.mxu0 %v3413
        %3585 = vmatpush1.msra.mxu0 %v3411
        %3586 = vmatprep.subr.mxu0 %v3417
        %3587 = vmatpush1.msra.mxu0 %v3415
        %3588 = vmatprep.subr.mxu0 %v3421
        %3589 = vmatpush1.msra.mxu0 %v3419
        %3590 = vmatprep.subr.mxu0 %v3425
        %3591 = vmatpush1.msra.mxu0 %v3423
        %3592 = vmatprep.subr.mxu0 %v3429
        %3593 = vmatpush1.msra.mxu0 %v3427
        %3594 = vmatprep.subr.mxu0 %v3433
        %3595 = vmatpush1.msra.mxu0 %v3431
        %3596 = vmatprep.subr.mxu0 %v3437
        %3597 = vmatpush1.msra.mxu0 %v3435
        %3598 = vmatprep.subr.mxu0 %v3441
        %3599 = vmatpush1.msra.mxu0 %v3439
        %3600 = vmatprep.subr.mxu0 %v3445
        %3601 = vmatpush1.msra.mxu0 %v3443
        %3602 = vmatprep.subr.mxu0 %v3449
        %3603 = vmatpush1.msra.mxu0 %v3447
        %3604 = vmatprep.subr.mxu0 %v3453
        %3605 = vmatpush1.msra.mxu0 %v3451
        %3606 = vmatprep.subr.mxu0 %v3457
        %3607 = vmatpush1.msra.mxu0 %v3455
        %3608 = vmatprep.subr.mxu0 %v3461
        %3609 = vmatpush1.msra.mxu0 %v3459
        %3610 = vmatprep.subr.mxu0 %v3465
        %3611 = vmatpush1.msra.mxu0 %v3463
        %3612 = vmatprep.subr.mxu0 %v3469
        %3613 = vmatpush1.msra.mxu0 %v3467
        %3614 = vmatprep.subr.mxu0 %v3473
        %3615 = vmatpush1.msra.mxu0 %v3471
        %3616 = vmatprep.subr.mxu0 %v3477
        %3617 = vmatpush1.msra.mxu0 %v3475
        %3618 = vmatprep.subr.mxu0 %v3481
        %3619 = vmatpush1.msra.mxu0 %v3479
        %3620 = vmatprep.mubr.f32.mxu0 %v1126
        %3621 = vmatmul.mubr.f32.gmra.mrb[0].mxu0 %v1124
        %v3622 = vpop.f32.mrb[0].mxu0
        %v3623 = vadd.f32 0.0, %v3622
        %v3624 = vpop.f32.mrb[0].mxu0
        %v3625 = vadd.f32 0.0, %v3624
        %3626 = vdwg.mxu0
        %v3627 = vrcp.pop %v3518
        %v3628 = vrcp.pop %v3555
        %v3629 = vmul.f32 %v3623, %v3627
        %v3630 = vmul.f32 %v3625, %v3628
        %3631 = vxpose.xlu0.b32.start [1/16] %v1106, 128
        %3632 = vxpose.xlu0.b32.cont [2/16] 0.0, 128
        %3633 = vxpose.xlu0.b32.cont [3/16] 0.0, 128
        %3634 = vxpose.xlu0.b32.cont [4/16] 0.0, 128
        %3635 = vxpose.xlu0.b32.cont [5/16] 0.0, 128
        %3636 = vxpose.xlu0.b32.cont [6/16] 0.0, 128
        %3637 = vxpose.xlu0.b32.cont [7/16] 0.0, 128
        %3638 = vxpose.xlu0.b32.cont [8/16] 0.0, 128
        %3639 = vxpose.xlu0.b32.cont [9/16] 0.0, 128
        %3640 = vxpose.xlu0.b32.cont [10/16] 0.0, 128
        %3641 = vxpose.xlu0.b32.cont [11/16] 0.0, 128
        %3642 = vxpose.xlu0.b32.cont [12/16] 0.0, 128
        %3643 = vxpose.xlu0.b32.cont [13/16] 0.0, 128
        %3644 = vxpose.xlu0.b32.cont [14/16] 0.0, 128
        %3645 = vxpose.xlu0.b32.cont [15/16] 0.0, 128
        %3646 = vxpose.xlu0.b32.end [16/16] 0.0, 128
        %v3647 = vpop.trf.xlu0
        %v3648 = vpop.trf.xlu0
        %v3649 = vpop.trf.xlu0
        %v3650 = vpop.trf.xlu0
        %v3651 = vpop.trf.xlu0
        %v3652 = vpop.trf.xlu0
        %v3653 = vpop.trf.xlu0
        %v3654 = vpop.trf.xlu0
        %v3655 = vpop.trf.xlu0
        %v3656 = vpop.trf.xlu0
        %v3657 = vpop.trf.xlu0
        %v3658 = vpop.trf.xlu0
        %v3659 = vpop.trf.xlu0
        %v3660 = vpop.trf.xlu0
        %v3661 = vpop.trf.xlu0
        %v3662 = vpop.trf.xlu0
        %3663 = vxpose.xlu0.b32.start [1/16] %v1108, 128
        %3664 = vxpose.xlu0.b32.cont [2/16] 0.0, 128
        %3665 = vxpose.xlu0.b32.cont [3/16] 0.0, 128
        %3666 = vxpose.xlu0.b32.cont [4/16] 0.0, 128
        %3667 = vxpose.xlu0.b32.cont [5/16] 0.0, 128
        %3668 = vxpose.xlu0.b32.cont [6/16] 0.0, 128
        %3669 = vxpose.xlu0.b32.cont [7/16] 0.0, 128
        %3670 = vxpose.xlu0.b32.cont [8/16] 0.0, 128
        %3671 = vxpose.xlu0.b32.cont [9/16] 0.0, 128
        %3672 = vxpose.xlu0.b32.cont [10/16] 0.0, 128
        %3673 = vxpose.xlu0.b32.cont [11/16] 0.0, 128
        %3674 = vxpose.xlu0.b32.cont [12/16] 0.0, 128
        %3675 = vxpose.xlu0.b32.cont [13/16] 0.0, 128
        %3676 = vxpose.xlu0.b32.cont [14/16] 0.0, 128
        %3677 = vxpose.xlu0.b32.cont [15/16] 0.0, 128
        %3678 = vxpose.xlu0.b32.end [16/16] 0.0, 128
        %v3679 = vpop.trf.xlu0
        %v3680 = vpop.trf.xlu0
        %v3681 = vpop.trf.xlu0
        %v3682 = vpop.trf.xlu0
        %v3683 = vpop.trf.xlu0
        %v3684 = vpop.trf.xlu0
        %v3685 = vpop.trf.xlu0
        %v3686 = vpop.trf.xlu0
        %v3687 = vpop.trf.xlu0
        %v3688 = vpop.trf.xlu0
        %v3689 = vpop.trf.xlu0
        %v3690 = vpop.trf.xlu0
        %v3691 = vpop.trf.xlu0
        %v3692 = vpop.trf.xlu0
        %v3693 = vpop.trf.xlu0
        %v3694 = vpop.trf.xlu0
        %v3696 = vsel %vm1198, %v3647, 0
        %v3699 = vsel %vm1198, %v3648, 0
        %v3702 = vsel %vm1198, %v3649, 0
        %v3705 = vsel %vm1198, %v3650, 0
        %v3708 = vsel %vm1198, %v3651, 0
        %v3711 = vsel %vm1198, %v3652, 0
        %v3714 = vsel %vm1198, %v3653, 0
        %v3717 = vsel %vm1198, %v3654, 0
        %v3720 = vsel %vm1198, %v3655, 0
        %v3723 = vsel %vm1198, %v3656, 0
        %v3726 = vsel %vm1198, %v3657, 0
        %v3729 = vsel %vm1198, %v3658, 0
        %v3732 = vsel %vm1198, %v3659, 0
        %v3735 = vsel %vm1198, %v3660, 0
        %v3738 = vsel %vm1198, %v3661, 0
        %v3741 = vsel %vm1198, %v3662, 0
        %v3744 = vsel %vm1198, %v3679, 0
        %v3747 = vsel %vm1198, %v3680, 0
        %v3750 = vsel %vm1198, %v3681, 0
        %v3753 = vsel %vm1198, %v3682, 0
        %v3756 = vsel %vm1198, %v3683, 0
        %v3759 = vsel %vm1198, %v3684, 0
        %v3762 = vsel %vm1198, %v3685, 0
        %v3765 = vsel %vm1198, %v3686, 0
        %v3768 = vsel %vm1198, %v3687, 0
        %v3771 = vsel %vm1198, %v3688, 0
        %v3774 = vsel %vm1198, %v3689, 0
        %v3777 = vsel %vm1198, %v3690, 0
        %v3780 = vsel %vm1198, %v3691, 0
        %v3783 = vsel %vm1198, %v3692, 0
        %v3786 = vsel %vm1198, %v3693, 0
        %v3789 = vsel %vm1198, %v3694, 0
        %3791 = vmatprep.subr.mxu0 %v755
        %3792 = vmatpush1.msra.mxu0 %v753
        %3793 = vmatprep.subr.mxu0 0.0
        %3794 = vmatpush1.msra.mxu0 0.0
        %3795 = vmatprep.subr.mxu0 0.0
        %3796 = vmatpush1.msra.mxu0 0.0
        %3797 = vmatprep.subr.mxu0 0.0
        %3798 = vmatpush1.msra.mxu0 0.0
        %3799 = vmatprep.subr.mxu0 0.0
        %3800 = vmatpush1.msra.mxu0 0.0
        %3801 = vmatprep.subr.mxu0 0.0
        %3802 = vmatpush1.msra.mxu0 0.0
        %3803 = vmatprep.subr.mxu0 0.0
        %3804 = vmatpush1.msra.mxu0 0.0
        %3805 = vmatprep.subr.mxu0 0.0
        %3806 = vmatpush1.msra.mxu0 0.0
        %3807 = vmatprep.subr.mxu0 0.0
        %3808 = vmatpush1.msra.mxu0 0.0
        %3809 = vmatprep.subr.mxu0 0.0
        %3810 = vmatpush1.msra.mxu0 0.0
        %3811 = vmatprep.subr.mxu0 0.0
        %3812 = vmatpush1.msra.mxu0 0.0
        %3813 = vmatprep.subr.mxu0 0.0
        %3814 = vmatpush1.msra.mxu0 0.0
        %3815 = vmatprep.subr.mxu0 0.0
        %3816 = vmatpush1.msra.mxu0 0.0
        %3817 = vmatprep.subr.mxu0 0.0
        %3818 = vmatpush1.msra.mxu0 0.0
        %3819 = vmatprep.subr.mxu0 0.0
        %3820 = vmatpush1.msra.mxu0 0.0
        %3821 = vmatprep.subr.mxu0 0.0
        %3822 = vmatpush1.msra.mxu0 0.0
        %3823 = vmatprep.subr.mxu0 0.0
        %3824 = vmatpush1.msra.mxu0 0.0
        %3825 = vmatprep.subr.mxu0 0.0
        %3826 = vmatpush1.msra.mxu0 0.0
        %3827 = vmatprep.subr.mxu0 0.0
        %3828 = vmatpush1.msra.mxu0 0.0
        %3829 = vmatprep.subr.mxu0 0.0
        %3830 = vmatpush1.msra.mxu0 0.0
        %3831 = vmatprep.subr.mxu0 0.0
        %3832 = vmatpush1.msra.mxu0 0.0
        %3833 = vmatprep.subr.mxu0 0.0
        %3834 = vmatpush1.msra.mxu0 0.0
        %3835 = vmatprep.subr.mxu0 0.0
        %3836 = vmatpush1.msra.mxu0 0.0
        %3837 = vmatprep.subr.mxu0 0.0
        %3838 = vmatpush1.msra.mxu0 0.0
        %3839 = vmatprep.subr.mxu0 0.0
        %3840 = vmatpush1.msra.mxu0 0.0
        %3841 = vmatprep.subr.mxu0 0.0
        %3842 = vmatpush1.msra.mxu0 0.0
        %3843 = vmatprep.subr.mxu0 0.0
        %3844 = vmatpush1.msra.mxu0 0.0
        %3845 = vmatprep.subr.mxu0 0.0
        %3846 = vmatpush1.msra.mxu0 0.0
        %3847 = vmatprep.subr.mxu0 0.0
        %3848 = vmatpush1.msra.mxu0 0.0
        %3849 = vmatprep.subr.mxu0 0.0
        %3850 = vmatpush1.msra.mxu0 0.0
        %3851 = vmatprep.subr.mxu0 0.0
        %3852 = vmatpush1.msra.mxu0 0.0
        %3853 = vmatprep.subr.mxu0 0.0
        %3854 = vmatpush1.msra.mxu0 0.0
        %3855 = vmatprep.mubr.f32.mxu0 0.0
        %3856 = vmatmul.mubr.f32.gmra.mrb[0].mxu0 %v3696
        %v3857 = vpop.f32.mrb[0].mxu0
        %v3858 = vadd.f32 0.0, %v3857
        %v3859 = vpop.f32.mrb[0].mxu0
        %v3860 = vadd.f32 0.0, %v3859
        %3861 = vmatprep.mubr.f32.mxu0 0.0
        %3862 = vmatmul.mubr.f32.gmra.mrb[0].mxu0 %v3699
        %v3863 = vpop.f32.mrb[0].mxu0
        %v3864 = vadd.f32 0.0, %v3863
        %v3865 = vpop.f32.mrb[0].mxu0
        %v3866 = vadd.f32 0.0, %v3865
        %3867 = vmatprep.mubr.f32.mxu0 0.0
        %3868 = vmatmul.mubr.f32.gmra.mrb[0].mxu0 %v3702
        %v3869 = vpop.f32.mrb[0].mxu0
        %v3870 = vadd.f32 0.0, %v3869
        %v3871 = vpop.f32.mrb[0].mxu0
        %v3872 = vadd.f32 0.0, %v3871
        %3873 = vmatprep.mubr.f32.mxu0 0.0
        %3874 = vmatmul.mubr.f32.gmra.mrb[0].mxu0 %v3705
        %v3875 = vpop.f32.mrb[0].mxu0
        %v3876 = vadd.f32 0.0, %v3875
        %v3877 = vpop.f32.mrb[0].mxu0
        %v3878 = vadd.f32 0.0, %v3877
        %3879 = vmatprep.mubr.f32.mxu0 0.0
        %3880 = vmatmul.mubr.f32.gmra.mrb[0].mxu0 %v3708
        %v3881 = vpop.f32.mrb[0].mxu0
        %v3882 = vadd.f32 0.0, %v3881
        %v3883 = vpop.f32.mrb[0].mxu0
        %v3884 = vadd.f32 0.0, %v3883
        %3885 = vmatprep.mubr.f32.mxu0 0.0
        %3886 = vmatmul.mubr.f32.gmra.mrb[0].mxu0 %v3711
        %v3887 = vpop.f32.mrb[0].mxu0
        %v3888 = vadd.f32 0.0, %v3887
        %v3889 = vpop.f32.mrb[0].mxu0
        %v3890 = vadd.f32 0.0, %v3889
        %3891 = vmatprep.mubr.f32.mxu0 0.0
        %3892 = vmatmul.mubr.f32.gmra.mrb[0].mxu0 %v3714
        %v3893 = vpop.f32.mrb[0].mxu0
        %v3894 = vadd.f32 0.0, %v3893
        %v3895 = vpop.f32.mrb[0].mxu0
        %v3896 = vadd.f32 0.0, %v3895
        %3897 = vmatprep.mubr.f32.mxu0 0.0
        %3898 = vmatmul.mubr.f32.gmra.mrb[0].mxu0 %v3717
        %v3899 = vpop.f32.mrb[0].mxu0
        %v3900 = vadd.f32 0.0, %v3899
        %v3901 = vpop.f32.mrb[0].mxu0
        %v3902 = vadd.f32 0.0, %v3901
        %3903 = vmatprep.mubr.f32.mxu0 0.0
        %3904 = vmatmul.mubr.f32.gmra.mrb[0].mxu0 %v3720
        %v3905 = vpop.f32.mrb[0].mxu0
        %v3906 = vadd.f32 0.0, %v3905
        %v3907 = vpop.f32.mrb[0].mxu0
        %v3908 = vadd.f32 0.0, %v3907
        %3909 = vmatprep.mubr.f32.mxu0 0.0
        %3910 = vmatmul.mubr.f32.gmra.mrb[0].mxu0 %v3723
        %v3911 = vpop.f32.mrb[0].mxu0
        %v3912 = vadd.f32 0.0, %v3911
        %v3913 = vpop.f32.mrb[0].mxu0
        %v3914 = vadd.f32 0.0, %v3913
        %3915 = vmatprep.mubr.f32.mxu0 0.0
        %3916 = vmatmul.mubr.f32.gmra.mrb[0].mxu0 %v3726
        %v3917 = vpop.f32.mrb[0].mxu0
        %v3918 = vadd.f32 0.0, %v3917
        %v3919 = vpop.f32.mrb[0].mxu0
        %v3920 = vadd.f32 0.0, %v3919
        %3921 = vmatprep.mubr.f32.mxu0 0.0
        %3922 = vmatmul.mubr.f32.gmra.mrb[0].mxu0 %v3729
        %v3923 = vpop.f32.mrb[0].mxu0
        %v3924 = vadd.f32 0.0, %v3923
        %v3925 = vpop.f32.mrb[0].mxu0
        %v3926 = vadd.f32 0.0, %v3925
        %3927 = vmatprep.mubr.f32.mxu0 0.0
        %3928 = vmatmul.mubr.f32.gmra.mrb[0].mxu0 %v3732
        %v3929 = vpop.f32.mrb[0].mxu0
        %v3930 = vadd.f32 0.0, %v3929
        %v3931 = vpop.f32.mrb[0].mxu0
        %v3932 = vadd.f32 0.0, %v3931
        %3933 = vmatprep.mubr.f32.mxu0 0.0
        %3934 = vmatmul.mubr.f32.gmra.mrb[0].mxu0 %v3735
        %v3935 = vpop.f32.mrb[0].mxu0
        %v3936 = vadd.f32 0.0, %v3935
        %v3937 = vpop.f32.mrb[0].mxu0
        %v3938 = vadd.f32 0.0, %v3937
        %3939 = vmatprep.mubr.f32.mxu0 0.0
        %3940 = vmatmul.mubr.f32.gmra.mrb[0].mxu0 %v3738
        %v3941 = vpop.f32.mrb[0].mxu0
        %v3942 = vadd.f32 0.0, %v3941
        %v3943 = vpop.f32.mrb[0].mxu0
        %v3944 = vadd.f32 0.0, %v3943
        %3945 = vmatprep.mubr.f32.mxu0 0.0
        %3946 = vmatmul.mubr.f32.gmra.mrb[0].mxu0 %v3741
        %v3947 = vpop.f32.mrb[0].mxu0
        %v3948 = vadd.f32 0.0, %v3947
        %v3949 = vpop.f32.mrb[0].mxu0
        %v3950 = vadd.f32 0.0, %v3949
        %3951 = vmatprep.mubr.f32.mxu0 0.0
        %3952 = vmatmul.mubr.f32.gmra.mrb[0].mxu0 %v3744
        %v3953 = vpop.f32.mrb[0].mxu0
        %v3954 = vadd.f32 0.0, %v3953
        %v3955 = vpop.f32.mrb[0].mxu0
        %v3956 = vadd.f32 0.0, %v3955
        %3957 = vmatprep.mubr.f32.mxu0 0.0
        %3958 = vmatmul.mubr.f32.gmra.mrb[0].mxu0 %v3747
        %v3959 = vpop.f32.mrb[0].mxu0
        %v3960 = vadd.f32 0.0, %v3959
        %v3961 = vpop.f32.mrb[0].mxu0
        %v3962 = vadd.f32 0.0, %v3961
        %3963 = vmatprep.mubr.f32.mxu0 0.0
        %3964 = vmatmul.mubr.f32.gmra.mrb[0].mxu0 %v3750
        %v3965 = vpop.f32.mrb[0].mxu0
        %v3966 = vadd.f32 0.0, %v3965
        %v3967 = vpop.f32.mrb[0].mxu0
        %v3968 = vadd.f32 0.0, %v3967
        %3969 = vmatprep.mubr.f32.mxu0 0.0
        %3970 = vmatmul.mubr.f32.gmra.mrb[0].mxu0 %v3753
        %v3971 = vpop.f32.mrb[0].mxu0
        %v3972 = vadd.f32 0.0, %v3971
        %v3973 = vpop.f32.mrb[0].mxu0
        %v3974 = vadd.f32 0.0, %v3973
        %3975 = vmatprep.mubr.f32.mxu0 0.0
        %3976 = vmatmul.mubr.f32.gmra.mrb[0].mxu0 %v3756
        %v3977 = vpop.f32.mrb[0].mxu0
        %v3978 = vadd.f32 0.0, %v3977
        %v3979 = vpop.f32.mrb[0].mxu0
        %v3980 = vadd.f32 0.0, %v3979
        %3981 = vmatprep.mubr.f32.mxu0 0.0
        %3982 = vmatmul.mubr.f32.gmra.mrb[0].mxu0 %v3759
        %v3983 = vpop.f32.mrb[0].mxu0
        %v3984 = vadd.f32 0.0, %v3983
        %v3985 = vpop.f32.mrb[0].mxu0
        %v3986 = vadd.f32 0.0, %v3985
        %3987 = vmatprep.mubr.f32.mxu0 0.0
        %3988 = vmatmul.mubr.f32.gmra.mrb[0].mxu0 %v3762
        %v3989 = vpop.f32.mrb[0].mxu0
        %v3990 = vadd.f32 0.0, %v3989
        %v3991 = vpop.f32.mrb[0].mxu0
        %v3992 = vadd.f32 0.0, %v3991
        %3993 = vmatprep.mubr.f32.mxu0 0.0
        %3994 = vmatmul.mubr.f32.gmra.mrb[0].mxu0 %v3765
        %v3995 = vpop.f32.mrb[0].mxu0
        %v3996 = vadd.f32 0.0, %v3995
        %v3997 = vpop.f32.mrb[0].mxu0
        %v3998 = vadd.f32 0.0, %v3997
        %3999 = vmatprep.mubr.f32.mxu0 0.0
        %4000 = vmatmul.mubr.f32.gmra.mrb[0].mxu0 %v3768
        %v4001 = vpop.f32.mrb[0].mxu0
        %v4002 = vadd.f32 0.0, %v4001
        %v4003 = vpop.f32.mrb[0].mxu0
        %v4004 = vadd.f32 0.0, %v4003
        %4005 = vmatprep.mubr.f32.mxu0 0.0
        %4006 = vmatmul.mubr.f32.gmra.mrb[0].mxu0 %v3771
        %v4007 = vpop.f32.mrb[0].mxu0
        %v4008 = vadd.f32 0.0, %v4007
        %v4009 = vpop.f32.mrb[0].mxu0
        %v4010 = vadd.f32 0.0, %v4009
        %4011 = vmatprep.mubr.f32.mxu0 0.0
        %4012 = vmatmul.mubr.f32.gmra.mrb[0].mxu0 %v3774
        %v4013 = vpop.f32.mrb[0].mxu0
        %v4014 = vadd.f32 0.0, %v4013
        %v4015 = vpop.f32.mrb[0].mxu0
        %v4016 = vadd.f32 0.0, %v4015
        %4017 = vmatprep.mubr.f32.mxu0 0.0
        %4018 = vmatmul.mubr.f32.gmra.mrb[0].mxu0 %v3777
        %v4019 = vpop.f32.mrb[0].mxu0
        %v4020 = vadd.f32 0.0, %v4019
        %v4021 = vpop.f32.mrb[0].mxu0
        %v4022 = vadd.f32 0.0, %v4021
        %4023 = vmatprep.mubr.f32.mxu0 0.0
        %4024 = vmatmul.mubr.f32.gmra.mrb[0].mxu0 %v3780
        %v4025 = vpop.f32.mrb[0].mxu0
        %v4026 = vadd.f32 0.0, %v4025
        %v4027 = vpop.f32.mrb[0].mxu0
        %v4028 = vadd.f32 0.0, %v4027
        %4029 = vmatprep.mubr.f32.mxu0 0.0
        %4030 = vmatmul.mubr.f32.gmra.mrb[0].mxu0 %v3783
        %v4031 = vpop.f32.mrb[0].mxu0
        %v4032 = vadd.f32 0.0, %v4031
        %v4033 = vpop.f32.mrb[0].mxu0
        %v4034 = vadd.f32 0.0, %v4033
        %4035 = vmatprep.mubr.f32.mxu0 0.0
        %4036 = vmatmul.mubr.f32.gmra.mrb[0].mxu0 %v3786
        %v4037 = vpop.f32.mrb[0].mxu0
        %v4038 = vadd.f32 0.0, %v4037
        %v4039 = vpop.f32.mrb[0].mxu0
        %v4040 = vadd.f32 0.0, %v4039
        %4041 = vmatprep.mubr.f32.mxu0 0.0
        %4042 = vmatmul.mubr.f32.gmra.mrb[0].mxu0 %v3789
        %v4043 = vpop.f32.mrb[0].mxu0
        %v4044 = vadd.f32 0.0, %v4043
        %v4045 = vpop.f32.mrb[0].mxu0
        %v4046 = vadd.f32 0.0, %v4045
        %4047 = vdwg.mxu0
        %v4048 = vmax.f32 %v3858, %v3870
        %v4049 = vmax.f32 %v3864, %v3876
        %v4050 = vmax.f32 %v4048, %v3882
        %v4051 = vmax.f32 %v4049, %v3888
        %v4052 = vmax.f32 %v4050, %v3894
        %v4053 = vmax.f32 %v4051, %v3900
        %v4054 = vmax.f32 %v4052, %v3906
        %v4055 = vmax.f32 %v4053, %v3912
        %v4056 = vmax.f32 %v4054, %v3918
        %v4057 = vmax.f32 %v4055, %v3924
        %v4058 = vmax.f32 %v4056, %v3930
        %v4059 = vmax.f32 %v4057, %v3936
        %v4060 = vmax.f32 %v4058, %v3942
        %v4061 = vmax.f32 %v4059, %v3948
        %v4062 = vmax.f32 %v4060, %v3954
        %v4063 = vmax.f32 %v4061, %v3960
        %v4064 = vmax.f32 %v4062, %v3966
        %v4065 = vmax.f32 %v4063, %v3972
        %v4066 = vmax.f32 %v4064, %v3978
        %v4067 = vmax.f32 %v4065, %v3984
        %v4068 = vmax.f32 %v4066, %v3990
        %v4069 = vmax.f32 %v4067, %v3996
        %v4070 = vmax.f32 %v4068, %v4002
        %v4071 = vmax.f32 %v4069, %v4008
        %v4072 = vmax.f32 %v4070, %v4014
        %v4073 = vmax.f32 %v4071, %v4020
        %v4074 = vmax.f32 %v4072, %v4026
        %v4075 = vmax.f32 %v4073, %v4032
        %v4076 = vmax.f32 %v4074, %v4038
        %v4077 = vmax.f32 %v4075, %v4044
        %v4078 = vmax.f32 %v4076, %v4077
        %v4079 = vrot.slane %v4078, 4
        %v4080 = vmax.f32 %v4078, %v4079
        %v4081 = vrot.slane %v4080, 2
        %v4082 = vmax.f32 %v4080, %v4081
        %v4083 = vrot.slane %v4082, 1
        %v4084 = vmax.f32 %v4082, %v4083
        %v4085 = vmax.f32 %v3860, %v3872
        %v4086 = vmax.f32 %v3866, %v3878
        %v4087 = vmax.f32 %v4085, %v3884
        %v4088 = vmax.f32 %v4086, %v3890
        %v4089 = vmax.f32 %v4087, %v3896
        %v4090 = vmax.f32 %v4088, %v3902
        %v4091 = vmax.f32 %v4089, %v3908
        %v4092 = vmax.f32 %v4090, %v3914
        %v4093 = vmax.f32 %v4091, %v3920
        %v4094 = vmax.f32 %v4092, %v3926
        %v4095 = vmax.f32 %v4093, %v3932
        %v4096 = vmax.f32 %v4094, %v3938
        %v4097 = vmax.f32 %v4095, %v3944
        %v4098 = vmax.f32 %v4096, %v3950
        %v4099 = vmax.f32 %v4097, %v3956
        %v4100 = vmax.f32 %v4098, %v3962
        %v4101 = vmax.f32 %v4099, %v3968
        %v4102 = vmax.f32 %v4100, %v3974
        %v4103 = vmax.f32 %v4101, %v3980
        %v4104 = vmax.f32 %v4102, %v3986
        %v4105 = vmax.f32 %v4103, %v3992
        %v4106 = vmax.f32 %v4104, %v3998
        %v4107 = vmax.f32 %v4105, %v4004
        %v4108 = vmax.f32 %v4106, %v4010
        %v4109 = vmax.f32 %v4107, %v4016
        %v4110 = vmax.f32 %v4108, %v4022
        %v4111 = vmax.f32 %v4109, %v4028
        %v4112 = vmax.f32 %v4110, %v4034
        %v4113 = vmax.f32 %v4111, %v4040
        %v4114 = vmax.f32 %v4112, %v4046
        %v4115 = vmax.f32 %v4113, %v4114
        %v4116 = vrot.slane %v4115, 4
        %v4117 = vmax.f32 %v4115, %v4116
        %v4118 = vrot.slane %v4117, 2
        %v4119 = vmax.f32 %v4117, %v4118
        %v4120 = vrot.slane %v4119, 1
        %v4121 = vmax.f32 %v4119, %v4120
        %v4122 = vsub.f32 %v3858, %v4084
        %v4123 = vsub.f32 %v3860, %v4121
        %v4124 = vsub.f32 %v3864, %v4084
        %v4125 = vsub.f32 %v3866, %v4121
        %v4126 = vsub.f32 %v3870, %v4084
        %v4127 = vsub.f32 %v3872, %v4121
        %v4128 = vsub.f32 %v3876, %v4084
        %v4129 = vsub.f32 %v3878, %v4121
        %v4130 = vsub.f32 %v3882, %v4084
        %v4131 = vsub.f32 %v3884, %v4121
        %v4132 = vsub.f32 %v3888, %v4084
        %v4133 = vsub.f32 %v3890, %v4121
        %v4134 = vsub.f32 %v3894, %v4084
        %v4135 = vsub.f32 %v3896, %v4121
        %v4136 = vsub.f32 %v3900, %v4084
        %v4137 = vsub.f32 %v3902, %v4121
        %v4138 = vsub.f32 %v3906, %v4084
        %v4139 = vsub.f32 %v3908, %v4121
        %v4140 = vsub.f32 %v3912, %v4084
        %v4141 = vsub.f32 %v3914, %v4121
        %v4142 = vsub.f32 %v3918, %v4084
        %v4143 = vsub.f32 %v3920, %v4121
        %v4144 = vsub.f32 %v3924, %v4084
        %v4145 = vsub.f32 %v3926, %v4121
        %v4146 = vsub.f32 %v3930, %v4084
        %v4147 = vsub.f32 %v3932, %v4121
        %v4148 = vsub.f32 %v3936, %v4084
        %v4149 = vsub.f32 %v3938, %v4121
        %v4150 = vsub.f32 %v3942, %v4084
        %v4151 = vsub.f32 %v3944, %v4121
        %v4152 = vsub.f32 %v3948, %v4084
        %v4153 = vsub.f32 %v3950, %v4121
        %v4154 = vsub.f32 %v3954, %v4084
        %v4155 = vsub.f32 %v3956, %v4121
        %v4156 = vsub.f32 %v3960, %v4084
        %v4157 = vsub.f32 %v3962, %v4121
        %v4158 = vsub.f32 %v3966, %v4084
        %v4159 = vsub.f32 %v3968, %v4121
        %v4160 = vsub.f32 %v3972, %v4084
        %v4161 = vsub.f32 %v3974, %v4121
        %v4162 = vsub.f32 %v3978, %v4084
        %v4163 = vsub.f32 %v3980, %v4121
        %v4164 = vsub.f32 %v3984, %v4084
        %v4165 = vsub.f32 %v3986, %v4121
        %v4166 = vsub.f32 %v3990, %v4084
        %v4167 = vsub.f32 %v3992, %v4121
        %v4168 = vsub.f32 %v3996, %v4084
        %v4169 = vsub.f32 %v3998, %v4121
        %v4170 = vsub.f32 %v4002, %v4084
        %v4171 = vsub.f32 %v4004, %v4121
        %v4172 = vsub.f32 %v4008, %v4084
        %v4173 = vsub.f32 %v4010, %v4121
        %v4174 = vsub.f32 %v4014, %v4084
        %v4175 = vsub.f32 %v4016, %v4121
        %v4176 = vsub.f32 %v4020, %v4084
        %v4177 = vsub.f32 %v4022, %v4121
        %v4178 = vsub.f32 %v4026, %v4084
        %v4179 = vsub.f32 %v4028, %v4121
        %v4180 = vsub.f32 %v4032, %v4084
        %v4181 = vsub.f32 %v4034, %v4121
        %v4182 = vsub.f32 %v4038, %v4084
        %v4183 = vsub.f32 %v4040, %v4121
        %v4184 = vsub.f32 %v4044, %v4084
        %v4185 = vsub.f32 %v4046, %v4121
        %v4186 = vmul.f32 %v4122, 1.442695
        %v4187 = vpow.pop %v4186
        %v4188 = vmul.f32 %v4123, 1.442695
        %v4189 = vpow.pop %v4188
        %v4190 = vmul.f32 %v4124, 1.442695
        %v4191 = vpow.pop %v4190
        %v4192 = vmul.f32 %v4125, 1.442695
        %v4193 = vpow.pop %v4192
        %v4194 = vmul.f32 %v4126, 1.442695
        %v4195 = vpow.pop %v4194
        %v4196 = vmul.f32 %v4127, 1.442695
        %v4197 = vpow.pop %v4196
        %v4198 = vmul.f32 %v4128, 1.442695
        %v4199 = vpow.pop %v4198
        %v4200 = vmul.f32 %v4129, 1.442695
        %v4201 = vpow.pop %v4200
        %v4202 = vmul.f32 %v4130, 1.442695
        %v4203 = vpow.pop %v4202
        %v4204 = vmul.f32 %v4131, 1.442695
        %v4205 = vpow.pop %v4204
        %v4206 = vmul.f32 %v4132, 1.442695
        %v4207 = vpow.pop %v4206
        %v4208 = vmul.f32 %v4133, 1.442695
        %v4209 = vpow.pop %v4208
        %v4210 = vmul.f32 %v4134, 1.442695
        %v4211 = vpow.pop %v4210
        %v4212 = vmul.f32 %v4135, 1.442695
        %v4213 = vpow.pop %v4212
        %v4214 = vmul.f32 %v4136, 1.442695
        %v4215 = vpow.pop %v4214
        %v4216 = vmul.f32 %v4137, 1.442695
        %v4217 = vpow.pop %v4216
        %v4218 = vmul.f32 %v4138, 1.442695
        %v4219 = vpow.pop %v4218
        %v4220 = vmul.f32 %v4139, 1.442695
        %v4221 = vpow.pop %v4220
        %v4222 = vmul.f32 %v4140, 1.442695
        %v4223 = vpow.pop %v4222
        %v4224 = vmul.f32 %v4141, 1.442695
        %v4225 = vpow.pop %v4224
        %v4226 = vmul.f32 %v4142, 1.442695
        %v4227 = vpow.pop %v4226
        %v4228 = vmul.f32 %v4143, 1.442695
        %v4229 = vpow.pop %v4228
        %v4230 = vmul.f32 %v4144, 1.442695
        %v4231 = vpow.pop %v4230
        %v4232 = vmul.f32 %v4145, 1.442695
        %v4233 = vpow.pop %v4232
        %v4234 = vmul.f32 %v4146, 1.442695
        %v4235 = vpow.pop %v4234
        %v4236 = vmul.f32 %v4147, 1.442695
        %v4237 = vpow.pop %v4236
        %v4238 = vmul.f32 %v4148, 1.442695
        %v4239 = vpow.pop %v4238
        %v4240 = vmul.f32 %v4149, 1.442695
        %v4241 = vpow.pop %v4240
        %v4242 = vmul.f32 %v4150, 1.442695
        %v4243 = vpow.pop %v4242
        %v4244 = vmul.f32 %v4151, 1.442695
        %v4245 = vpow.pop %v4244
        %v4246 = vmul.f32 %v4152, 1.442695
        %v4247 = vpow.pop %v4246
        %v4248 = vmul.f32 %v4153, 1.442695
        %v4249 = vpow.pop %v4248
        %v4250 = vmul.f32 %v4154, 1.442695
        %v4251 = vpow.pop %v4250
        %v4252 = vmul.f32 %v4155, 1.442695
        %v4253 = vpow.pop %v4252
        %v4254 = vmul.f32 %v4156, 1.442695
        %v4255 = vpow.pop %v4254
        %v4256 = vmul.f32 %v4157, 1.442695
        %v4257 = vpow.pop %v4256
        %v4258 = vmul.f32 %v4158, 1.442695
        %v4259 = vpow.pop %v4258
        %v4260 = vmul.f32 %v4159, 1.442695
        %v4261 = vpow.pop %v4260
        %v4262 = vmul.f32 %v4160, 1.442695
        %v4263 = vpow.pop %v4262
        %v4264 = vmul.f32 %v4161, 1.442695
        %v4265 = vpow.pop %v4264
        %v4266 = vmul.f32 %v4162, 1.442695
        %v4267 = vpow.pop %v4266
        %v4268 = vmul.f32 %v4163, 1.442695
        %v4269 = vpow.pop %v4268
        %v4270 = vmul.f32 %v4164, 1.442695
        %v4271 = vpow.pop %v4270
        %v4272 = vmul.f32 %v4165, 1.442695
        %v4273 = vpow.pop %v4272
        %v4274 = vmul.f32 %v4166, 1.442695
        %v4275 = vpow.pop %v4274
        %v4276 = vmul.f32 %v4167, 1.442695
        %v4277 = vpow.pop %v4276
        %v4278 = vmul.f32 %v4168, 1.442695
        %v4279 = vpow.pop %v4278
        %v4280 = vmul.f32 %v4169, 1.442695
        %v4281 = vpow.pop %v4280
        %v4282 = vmul.f32 %v4170, 1.442695
        %v4283 = vpow.pop %v4282
        %v4284 = vmul.f32 %v4171, 1.442695
        %v4285 = vpow.pop %v4284
        %v4286 = vmul.f32 %v4172, 1.442695
        %v4287 = vpow.pop %v4286
        %v4288 = vmul.f32 %v4173, 1.442695
        %v4289 = vpow.pop %v4288
        %v4290 = vmul.f32 %v4174, 1.442695
        %v4291 = vpow.pop %v4290
        %v4292 = vmul.f32 %v4175, 1.442695
        %v4293 = vpow.pop %v4292
        %v4294 = vmul.f32 %v4176, 1.442695
        %v4295 = vpow.pop %v4294
        %v4296 = vmul.f32 %v4177, 1.442695
        %v4297 = vpow.pop %v4296
        %v4298 = vmul.f32 %v4178, 1.442695
        %v4299 = vpow.pop %v4298
        %v4300 = vmul.f32 %v4179, 1.442695
        %v4301 = vpow.pop %v4300
        %v4302 = vmul.f32 %v4180, 1.442695
        %v4303 = vpow.pop %v4302
        %v4304 = vmul.f32 %v4181, 1.442695
        %v4305 = vpow.pop %v4304
        %v4306 = vmul.f32 %v4182, 1.442695
        %v4307 = vpow.pop %v4306
        %v4308 = vmul.f32 %v4183, 1.442695
        %v4309 = vpow.pop %v4308
        %v4310 = vmul.f32 %v4184, 1.442695
        %v4311 = vpow.pop %v4310
        %v4312 = vmul.f32 %v4185, 1.442695
        %v4313 = vpow.pop %v4312
        %v4314 = vadd.f32 %v4187, %v4191
        %v4315 = vadd.f32 %v4314, %v4195
        %v4316 = vadd.f32 %v4315, %v4199
        %v4317 = vadd.f32 %v4316, %v4203
        %v4318 = vadd.f32 %v4317, %v4207
        %v4319 = vadd.f32 %v4318, %v4211
        %v4320 = vadd.f32 %v4319, %v4215
        %v4321 = vadd.f32 %v4320, %v4219
        %v4322 = vadd.f32 %v4321, %v4223
        %v4323 = vadd.f32 %v4322, %v4227
        %v4324 = vadd.f32 %v4323, %v4231
        %v4325 = vadd.f32 %v4324, %v4235
        %v4326 = vadd.f32 %v4325, %v4239
        %v4327 = vadd.f32 %v4326, %v4243
        %v4328 = vadd.f32 %v4327, %v4247
        %v4329 = vadd.f32 %v4328, %v4251
        %v4330 = vadd.f32 %v4329, %v4255
        %v4331 = vadd.f32 %v4330, %v4259
        %v4332 = vadd.f32 %v4331, %v4263
        %v4333 = vadd.f32 %v4332, %v4267
        %v4334 = vadd.f32 %v4333, %v4271
        %v4335 = vadd.f32 %v4334, %v4275
        %v4336 = vadd.f32 %v4335, %v4279
        %v4337 = vadd.f32 %v4336, %v4283
        %v4338 = vadd.f32 %v4337, %v4287
        %v4339 = vadd.f32 %v4338, %v4291
        %v4340 = vadd.f32 %v4339, %v4295
        %v4341 = vadd.f32 %v4340, %v4299
        %v4342 = vadd.f32 %v4341, %v4303
        %v4343 = vadd.f32 %v4342, %v4307
        %v4344 = vadd.f32 %v4343, %v4311
        %v4345 = vrot.slane %v4344, 4
        %v4346 = vadd.f32 %v4344, %v4345
        %v4347 = vrot.slane %v4346, 2
        %v4348 = vadd.f32 %v4346, %v4347
        %v4349 = vrot.slane %v4348, 1
        %v4350 = vadd.f32 %v4348, %v4349
        %v4351 = vadd.f32 %v4189, %v4193
        %v4352 = vadd.f32 %v4351, %v4197
        %v4353 = vadd.f32 %v4352, %v4201
        %v4354 = vadd.f32 %v4353, %v4205
        %v4355 = vadd.f32 %v4354, %v4209
        %v4356 = vadd.f32 %v4355, %v4213
        %v4357 = vadd.f32 %v4356, %v4217
        %v4358 = vadd.f32 %v4357, %v4221
        %v4359 = vadd.f32 %v4358, %v4225
        %v4360 = vadd.f32 %v4359, %v4229
        %v4361 = vadd.f32 %v4360, %v4233
        %v4362 = vadd.f32 %v4361, %v4237
        %v4363 = vadd.f32 %v4362, %v4241
        %v4364 = vadd.f32 %v4363, %v4245
        %v4365 = vadd.f32 %v4364, %v4249
        %v4366 = vadd.f32 %v4365, %v4253
        %v4367 = vadd.f32 %v4366, %v4257
        %v4368 = vadd.f32 %v4367, %v4261
        %v4369 = vadd.f32 %v4368, %v4265
        %v4370 = vadd.f32 %v4369, %v4269
        %v4371 = vadd.f32 %v4370, %v4273
        %v4372 = vadd.f32 %v4371, %v4277
        %v4373 = vadd.f32 %v4372, %v4281
        %v4374 = vadd.f32 %v4373, %v4285
        %v4375 = vadd.f32 %v4374, %v4289
        %v4376 = vadd.f32 %v4375, %v4293
        %v4377 = vadd.f32 %v4376, %v4297
        %v4378 = vadd.f32 %v4377, %v4301
        %v4379 = vadd.f32 %v4378, %v4305
        %v4380 = vadd.f32 %v4379, %v4309
        %v4381 = vadd.f32 %v4380, %v4313
        %v4382 = vrot.slane %v4381, 4
        %v4383 = vadd.f32 %v4381, %v4382
        %v4384 = vrot.slane %v4383, 2
        %v4385 = vadd.f32 %v4383, %v4384
        %v4386 = vrot.slane %v4385, 1
        %v4387 = vadd.f32 %v4385, %v4386
        %4388 = vmatprep.subr.mxu0 %v4189
        %4389 = vmatpush1.msra.mxu0 %v4187
        %4390 = vmatprep.subr.mxu0 %v4193
        %4391 = vmatpush1.msra.mxu0 %v4191
        %4392 = vmatprep.subr.mxu0 %v4197
        %4393 = vmatpush1.msra.mxu0 %v4195
        %4394 = vmatprep.subr.mxu0 %v4201
        %4395 = vmatpush1.msra.mxu0 %v4199
        %4396 = vmatprep.subr.mxu0 %v4205
        %4397 = vmatpush1.msra.mxu0 %v4203
        %4398 = vmatprep.subr.mxu0 %v4209
        %4399 = vmatpush1.msra.mxu0 %v4207
        %4400 = vmatprep.subr.mxu0 %v4213
        %4401 = vmatpush1.msra.mxu0 %v4211
        %4402 = vmatprep.subr.mxu0 %v4217
        %4403 = vmatpush1.msra.mxu0 %v4215
        %4404 = vmatprep.subr.mxu0 %v4221
        %4405 = vmatpush1.msra.mxu0 %v4219
        %4406 = vmatprep.subr.mxu0 %v4225
        %4407 = vmatpush1.msra.mxu0 %v4223
        %4408 = vmatprep.subr.mxu0 %v4229
        %4409 = vmatpush1.msra.mxu0 %v4227
        %4410 = vmatprep.subr.mxu0 %v4233
        %4411 = vmatpush1.msra.mxu0 %v4231
        %4412 = vmatprep.subr.mxu0 %v4237
        %4413 = vmatpush1.msra.mxu0 %v4235
        %4414 = vmatprep.subr.mxu0 %v4241
        %4415 = vmatpush1.msra.mxu0 %v4239
        %4416 = vmatprep.subr.mxu0 %v4245
        %4417 = vmatpush1.msra.mxu0 %v4243
        %4418 = vmatprep.subr.mxu0 %v4249
        %4419 = vmatpush1.msra.mxu0 %v4247
        %4420 = vmatprep.subr.mxu0 %v4253
        %4421 = vmatpush1.msra.mxu0 %v4251
        %4422 = vmatprep.subr.mxu0 %v4257
        %4423 = vmatpush1.msra.mxu0 %v4255
        %4424 = vmatprep.subr.mxu0 %v4261
        %4425 = vmatpush1.msra.mxu0 %v4259
        %4426 = vmatprep.subr.mxu0 %v4265
        %4427 = vmatpush1.msra.mxu0 %v4263
        %4428 = vmatprep.subr.mxu0 %v4269
        %4429 = vmatpush1.msra.mxu0 %v4267
        %4430 = vmatprep.subr.mxu0 %v4273
        %4431 = vmatpush1.msra.mxu0 %v4271
        %4432 = vmatprep.subr.mxu0 %v4277
        %4433 = vmatpush1.msra.mxu0 %v4275
        %4434 = vmatprep.subr.mxu0 %v4281
        %4435 = vmatpush1.msra.mxu0 %v4279
        %4436 = vmatprep.subr.mxu0 %v4285
        %4437 = vmatpush1.msra.mxu0 %v4283
        %4438 = vmatprep.subr.mxu0 %v4289
        %4439 = vmatpush1.msra.mxu0 %v4287
        %4440 = vmatprep.subr.mxu0 %v4293
        %4441 = vmatpush1.msra.mxu0 %v4291
        %4442 = vmatprep.subr.mxu0 %v4297
        %4443 = vmatpush1.msra.mxu0 %v4295
        %4444 = vmatprep.subr.mxu0 %v4301
        %4445 = vmatpush1.msra.mxu0 %v4299
        %4446 = vmatprep.subr.mxu0 %v4305
        %4447 = vmatpush1.msra.mxu0 %v4303
        %4448 = vmatprep.subr.mxu0 %v4309
        %4449 = vmatpush1.msra.mxu0 %v4307
        %4450 = vmatprep.subr.mxu0 %v4313
        %4451 = vmatpush1.msra.mxu0 %v4311
        %4452 = vmatprep.mubr.f32.mxu0 %v1132
        %4453 = vmatmul.mubr.f32.gmra.mrb[0].mxu0 %v1130
        %v4454 = vpop.f32.mrb[0].mxu0
        %v4455 = vadd.f32 0.0, %v4454
        %v4456 = vpop.f32.mrb[0].mxu0
        %v4457 = vadd.f32 0.0, %v4456
        %4458 = vdwg.mxu0
        %v4459 = vrcp.pop %v4350
        %v4460 = vrcp.pop %v4387
        %v4461 = vmul.f32 %v4455, %v4459
        %v4462 = vmul.f32 %v4457, %v4460
        %4463 = vxpose.xlu0.b32.start [1/16] %v759, 128
        %4464 = vxpose.xlu0.b32.cont [2/16] 0.0, 128
        %4465 = vxpose.xlu0.b32.cont [3/16] 0.0, 128
        %4466 = vxpose.xlu0.b32.cont [4/16] 0.0, 128
        %4467 = vxpose.xlu0.b32.cont [5/16] 0.0, 128
        %4468 = vxpose.xlu0.b32.cont [6/16] 0.0, 128
        %4469 = vxpose.xlu0.b32.cont [7/16] 0.0, 128
        %4470 = vxpose.xlu0.b32.cont [8/16] 0.0, 128
        %4471 = vxpose.xlu0.b32.cont [9/16] 0.0, 128
        %4472 = vxpose.xlu0.b32.cont [10/16] 0.0, 128
        %4473 = vxpose.xlu0.b32.cont [11/16] 0.0, 128
        %4474 = vxpose.xlu0.b32.cont [12/16] 0.0, 128
        %4475 = vxpose.xlu0.b32.cont [13/16] 0.0, 128
        %4476 = vxpose.xlu0.b32.cont [14/16] 0.0, 128
        %4477 = vxpose.xlu0.b32.cont [15/16] 0.0, 128
        %4478 = vxpose.xlu0.b32.end [16/16] 0.0, 128
        %v4479 = vpop.trf.xlu0
        %v4480 = vpop.trf.xlu0
        %v4481 = vpop.trf.xlu0
        %v4482 = vpop.trf.xlu0
        %v4483 = vpop.trf.xlu0
        %v4484 = vpop.trf.xlu0
        %v4485 = vpop.trf.xlu0
        %v4486 = vpop.trf.xlu0
        %v4487 = vpop.trf.xlu0
        %v4488 = vpop.trf.xlu0
        %v4489 = vpop.trf.xlu0
        %v4490 = vpop.trf.xlu0
        %v4491 = vpop.trf.xlu0
        %v4492 = vpop.trf.xlu0
        %v4493 = vpop.trf.xlu0
        %v4494 = vpop.trf.xlu0
        %4495 = vxpose.xlu0.b32.start [1/16] %v761, 128
        %4496 = vxpose.xlu0.b32.cont [2/16] 0.0, 128
        %4497 = vxpose.xlu0.b32.cont [3/16] 0.0, 128
        %4498 = vxpose.xlu0.b32.cont [4/16] 0.0, 128
        %4499 = vxpose.xlu0.b32.cont [5/16] 0.0, 128
        %4500 = vxpose.xlu0.b32.cont [6/16] 0.0, 128
        %4501 = vxpose.xlu0.b32.cont [7/16] 0.0, 128
        %4502 = vxpose.xlu0.b32.cont [8/16] 0.0, 128
        %4503 = vxpose.xlu0.b32.cont [9/16] 0.0, 128
        %4504 = vxpose.xlu0.b32.cont [10/16] 0.0, 128
        %4505 = vxpose.xlu0.b32.cont [11/16] 0.0, 128
        %4506 = vxpose.xlu0.b32.cont [12/16] 0.0, 128
        %4507 = vxpose.xlu0.b32.cont [13/16] 0.0, 128
        %4508 = vxpose.xlu0.b32.cont [14/16] 0.0, 128
        %4509 = vxpose.xlu0.b32.cont [15/16] 0.0, 128
        %4510 = vxpose.xlu0.b32.end [16/16] 0.0, 128
        %v4511 = vpop.trf.xlu0
        %v4512 = vpop.trf.xlu0
        %v4513 = vpop.trf.xlu0
        %v4514 = vpop.trf.xlu0
        %v4515 = vpop.trf.xlu0
        %v4516 = vpop.trf.xlu0
        %v4517 = vpop.trf.xlu0
        %v4518 = vpop.trf.xlu0
        %v4519 = vpop.trf.xlu0
        %v4520 = vpop.trf.xlu0
        %v4521 = vpop.trf.xlu0
        %v4522 = vpop.trf.xlu0
        %v4523 = vpop.trf.xlu0
        %v4524 = vpop.trf.xlu0
        %v4525 = vpop.trf.xlu0
        %v4526 = vpop.trf.xlu0
        %v4528 = vsel %vm1198, %v4479, 0
        %v4531 = vsel %vm1198, %v4480, 0
        %v4534 = vsel %vm1198, %v4481, 0
        %v4537 = vsel %vm1198, %v4482, 0
        %v4540 = vsel %vm1198, %v4483, 0
        %v4543 = vsel %vm1198, %v4484, 0
        %v4546 = vsel %vm1198, %v4485, 0
        %v4549 = vsel %vm1198, %v4486, 0
        %v4552 = vsel %vm1198, %v4487, 0
        %v4555 = vsel %vm1198, %v4488, 0
        %v4558 = vsel %vm1198, %v4489, 0
        %v4561 = vsel %vm1198, %v4490, 0
        %v4564 = vsel %vm1198, %v4491, 0
        %v4567 = vsel %vm1198, %v4492, 0
        %v4570 = vsel %vm1198, %v4493, 0
        %v4573 = vsel %vm1198, %v4494, 0
        %v4576 = vsel %vm1198, %v4511, 0
        %v4579 = vsel %vm1198, %v4512, 0
        %v4582 = vsel %vm1198, %v4513, 0
        %v4585 = vsel %vm1198, %v4514, 0
        %v4588 = vsel %vm1198, %v4515, 0
        %v4591 = vsel %vm1198, %v4516, 0
        %v4594 = vsel %vm1198, %v4517, 0
        %v4597 = vsel %vm1198, %v4518, 0
        %v4600 = vsel %vm1198, %v4519, 0
        %v4603 = vsel %vm1198, %v4520, 0
        %v4606 = vsel %vm1198, %v4521, 0
        %v4609 = vsel %vm1198, %v4522, 0
        %v4612 = vsel %vm1198, %v4523, 0
        %v4615 = vsel %vm1198, %v4524, 0
        %v4618 = vsel %vm1198, %v4525, 0
        %v4621 = vsel %vm1198, %v4526, 0
        %4623 = vmatprep.subr.mxu0 %v1066
        %4624 = vmatpush1.msra.mxu0 %v1064
        %4625 = vmatprep.subr.mxu0 0.0
        %4626 = vmatpush1.msra.mxu0 0.0
        %4627 = vmatprep.subr.mxu0 0.0
        %4628 = vmatpush1.msra.mxu0 0.0
        %4629 = vmatprep.subr.mxu0 0.0
        %4630 = vmatpush1.msra.mxu0 0.0
        %4631 = vmatprep.subr.mxu0 0.0
        %4632 = vmatpush1.msra.mxu0 0.0
        %4633 = vmatprep.subr.mxu0 0.0
        %4634 = vmatpush1.msra.mxu0 0.0
        %4635 = vmatprep.subr.mxu0 0.0
        %4636 = vmatpush1.msra.mxu0 0.0
        %4637 = vmatprep.subr.mxu0 0.0
        %4638 = vmatpush1.msra.mxu0 0.0
        %4639 = vmatprep.subr.mxu0 0.0
        %4640 = vmatpush1.msra.mxu0 0.0
        %4641 = vmatprep.subr.mxu0 0.0
        %4642 = vmatpush1.msra.mxu0 0.0
        %4643 = vmatprep.subr.mxu0 0.0
        %4644 = vmatpush1.msra.mxu0 0.0
        %4645 = vmatprep.subr.mxu0 0.0
        %4646 = vmatpush1.msra.mxu0 0.0
        %4647 = vmatprep.subr.mxu0 0.0
        %4648 = vmatpush1.msra.mxu0 0.0
        %4649 = vmatprep.subr.mxu0 0.0
        %4650 = vmatpush1.msra.mxu0 0.0
        %4651 = vmatprep.subr.mxu0 0.0
        %4652 = vmatpush1.msra.mxu0 0.0
        %4653 = vmatprep.subr.mxu0 0.0
        %4654 = vmatpush1.msra.mxu0 0.0
        %4655 = vmatprep.subr.mxu0 0.0
        %4656 = vmatpush1.msra.mxu0 0.0
        %4657 = vmatprep.subr.mxu0 0.0
        %4658 = vmatpush1.msra.mxu0 0.0
        %4659 = vmatprep.subr.mxu0 0.0
        %4660 = vmatpush1.msra.mxu0 0.0
        %4661 = vmatprep.subr.mxu0 0.0
        %4662 = vmatpush1.msra.mxu0 0.0
        %4663 = vmatprep.subr.mxu0 0.0
        %4664 = vmatpush1.msra.mxu0 0.0
        %4665 = vmatprep.subr.mxu0 0.0
        %4666 = vmatpush1.msra.mxu0 0.0
        %4667 = vmatprep.subr.mxu0 0.0
        %4668 = vmatpush1.msra.mxu0 0.0
        %4669 = vmatprep.subr.mxu0 0.0
        %4670 = vmatpush1.msra.mxu0 0.0
        %4671 = vmatprep.subr.mxu0 0.0
        %4672 = vmatpush1.msra.mxu0 0.0
        %4673 = vmatprep.subr.mxu0 0.0
        %4674 = vmatpush1.msra.mxu0 0.0
        %4675 = vmatprep.subr.mxu0 0.0
        %4676 = vmatpush1.msra.mxu0 0.0
        %4677 = vmatprep.subr.mxu0 0.0
        %4678 = vmatpush1.msra.mxu0 0.0
        %4679 = vmatprep.subr.mxu0 0.0
        %4680 = vmatpush1.msra.mxu0 0.0
        %4681 = vmatprep.subr.mxu0 0.0
        %4682 = vmatpush1.msra.mxu0 0.0
        %4683 = vmatprep.subr.mxu0 0.0
        %4684 = vmatpush1.msra.mxu0 0.0
        %4685 = vmatprep.subr.mxu0 0.0
        %4686 = vmatpush1.msra.mxu0 0.0
        %4687 = vmatprep.mubr.f32.mxu0 0.0
        %4688 = vmatmul.mubr.f32.gmra.mrb[0].mxu0 %v4528
        %v4689 = vpop.f32.mrb[0].mxu0
        %v4690 = vadd.f32 0.0, %v4689
        %v4691 = vpop.f32.mrb[0].mxu0
        %v4692 = vadd.f32 0.0, %v4691
        %4693 = vmatprep.mubr.f32.mxu0 0.0
        %4694 = vmatmul.mubr.f32.gmra.mrb[0].mxu0 %v4531
        %v4695 = vpop.f32.mrb[0].mxu0
        %v4696 = vadd.f32 0.0, %v4695
        %v4697 = vpop.f32.mrb[0].mxu0
        %v4698 = vadd.f32 0.0, %v4697
        %4699 = vmatprep.mubr.f32.mxu0 0.0
        %4700 = vmatmul.mubr.f32.gmra.mrb[0].mxu0 %v4534
        %v4701 = vpop.f32.mrb[0].mxu0
        %v4702 = vadd.f32 0.0, %v4701
        %v4703 = vpop.f32.mrb[0].mxu0
        %v4704 = vadd.f32 0.0, %v4703
        %4705 = vmatprep.mubr.f32.mxu0 0.0
        %4706 = vmatmul.mubr.f32.gmra.mrb[0].mxu0 %v4537
        %v4707 = vpop.f32.mrb[0].mxu0
        %v4708 = vadd.f32 0.0, %v4707
        %v4709 = vpop.f32.mrb[0].mxu0
        %v4710 = vadd.f32 0.0, %v4709
        %4711 = vmatprep.mubr.f32.mxu0 0.0
        %4712 = vmatmul.mubr.f32.gmra.mrb[0].mxu0 %v4540
        %v4713 = vpop.f32.mrb[0].mxu0
        %v4714 = vadd.f32 0.0, %v4713
        %v4715 = vpop.f32.mrb[0].mxu0
        %v4716 = vadd.f32 0.0, %v4715
        %4717 = vmatprep.mubr.f32.mxu0 0.0
        %4718 = vmatmul.mubr.f32.gmra.mrb[0].mxu0 %v4543
        %v4719 = vpop.f32.mrb[0].mxu0
        %v4720 = vadd.f32 0.0, %v4719
        %v4721 = vpop.f32.mrb[0].mxu0
        %v4722 = vadd.f32 0.0, %v4721
        %4723 = vmatprep.mubr.f32.mxu0 0.0
        %4724 = vmatmul.mubr.f32.gmra.mrb[0].mxu0 %v4546
        %v4725 = vpop.f32.mrb[0].mxu0
        %v4726 = vadd.f32 0.0, %v4725
        %v4727 = vpop.f32.mrb[0].mxu0
        %v4728 = vadd.f32 0.0, %v4727
        %4729 = vmatprep.mubr.f32.mxu0 0.0
        %4730 = vmatmul.mubr.f32.gmra.mrb[0].mxu0 %v4549
        %v4731 = vpop.f32.mrb[0].mxu0
        %v4732 = vadd.f32 0.0, %v4731
        %v4733 = vpop.f32.mrb[0].mxu0
        %v4734 = vadd.f32 0.0, %v4733
        %4735 = vmatprep.mubr.f32.mxu0 0.0
        %4736 = vmatmul.mubr.f32.gmra.mrb[0].mxu0 %v4552
        %v4737 = vpop.f32.mrb[0].mxu0
        %v4738 = vadd.f32 0.0, %v4737
        %v4739 = vpop.f32.mrb[0].mxu0
        %v4740 = vadd.f32 0.0, %v4739
        %4741 = vmatprep.mubr.f32.mxu0 0.0
        %4742 = vmatmul.mubr.f32.gmra.mrb[0].mxu0 %v4555
        %v4743 = vpop.f32.mrb[0].mxu0
        %v4744 = vadd.f32 0.0, %v4743
        %v4745 = vpop.f32.mrb[0].mxu0
        %v4746 = vadd.f32 0.0, %v4745
        %4747 = vmatprep.mubr.f32.mxu0 0.0
        %4748 = vmatmul.mubr.f32.gmra.mrb[0].mxu0 %v4558
        %v4749 = vpop.f32.mrb[0].mxu0
        %v4750 = vadd.f32 0.0, %v4749
        %v4751 = vpop.f32.mrb[0].mxu0
        %v4752 = vadd.f32 0.0, %v4751
        %4753 = vmatprep.mubr.f32.mxu0 0.0
        %4754 = vmatmul.mubr.f32.gmra.mrb[0].mxu0 %v4561
        %v4755 = vpop.f32.mrb[0].mxu0
        %v4756 = vadd.f32 0.0, %v4755
        %v4757 = vpop.f32.mrb[0].mxu0
        %v4758 = vadd.f32 0.0, %v4757
        %4759 = vmatprep.mubr.f32.mxu0 0.0
        %4760 = vmatmul.mubr.f32.gmra.mrb[0].mxu0 %v4564
        %v4761 = vpop.f32.mrb[0].mxu0
        %v4762 = vadd.f32 0.0, %v4761
        %v4763 = vpop.f32.mrb[0].mxu0
        %v4764 = vadd.f32 0.0, %v4763
        %4765 = vmatprep.mubr.f32.mxu0 0.0
        %4766 = vmatmul.mubr.f32.gmra.mrb[0].mxu0 %v4567
        %v4767 = vpop.f32.mrb[0].mxu0
        %v4768 = vadd.f32 0.0, %v4767
        %v4769 = vpop.f32.mrb[0].mxu0
        %v4770 = vadd.f32 0.0, %v4769
        %4771 = vmatprep.mubr.f32.mxu0 0.0
        %4772 = vmatmul.mubr.f32.gmra.mrb[0].mxu0 %v4570
        %v4773 = vpop.f32.mrb[0].mxu0
        %v4774 = vadd.f32 0.0, %v4773
        %v4775 = vpop.f32.mrb[0].mxu0
        %v4776 = vadd.f32 0.0, %v4775
        %4777 = vmatprep.mubr.f32.mxu0 0.0
        %4778 = vmatmul.mubr.f32.gmra.mrb[0].mxu0 %v4573
        %v4779 = vpop.f32.mrb[0].mxu0
        %v4780 = vadd.f32 0.0, %v4779
        %v4781 = vpop.f32.mrb[0].mxu0
        %v4782 = vadd.f32 0.0, %v4781
        %4783 = vmatprep.mubr.f32.mxu0 0.0
        %4784 = vmatmul.mubr.f32.gmra.mrb[0].mxu0 %v4576
        %v4785 = vpop.f32.mrb[0].mxu0
        %v4786 = vadd.f32 0.0, %v4785
        %v4787 = vpop.f32.mrb[0].mxu0
        %v4788 = vadd.f32 0.0, %v4787
        %4789 = vmatprep.mubr.f32.mxu0 0.0
        %4790 = vmatmul.mubr.f32.gmra.mrb[0].mxu0 %v4579
        %v4791 = vpop.f32.mrb[0].mxu0
        %v4792 = vadd.f32 0.0, %v4791
        %v4793 = vpop.f32.mrb[0].mxu0
        %v4794 = vadd.f32 0.0, %v4793
        %4795 = vmatprep.mubr.f32.mxu0 0.0
        %4796 = vmatmul.mubr.f32.gmra.mrb[0].mxu0 %v4582
        %v4797 = vpop.f32.mrb[0].mxu0
        %v4798 = vadd.f32 0.0, %v4797
        %v4799 = vpop.f32.mrb[0].mxu0
        %v4800 = vadd.f32 0.0, %v4799
        %4801 = vmatprep.mubr.f32.mxu0 0.0
        %4802 = vmatmul.mubr.f32.gmra.mrb[0].mxu0 %v4585
        %v4803 = vpop.f32.mrb[0].mxu0
        %v4804 = vadd.f32 0.0, %v4803
        %v4805 = vpop.f32.mrb[0].mxu0
        %v4806 = vadd.f32 0.0, %v4805
        %4807 = vmatprep.mubr.f32.mxu0 0.0
        %4808 = vmatmul.mubr.f32.gmra.mrb[0].mxu0 %v4588
        %v4809 = vpop.f32.mrb[0].mxu0
        %v4810 = vadd.f32 0.0, %v4809
        %v4811 = vpop.f32.mrb[0].mxu0
        %v4812 = vadd.f32 0.0, %v4811
        %4813 = vmatprep.mubr.f32.mxu0 0.0
        %4814 = vmatmul.mubr.f32.gmra.mrb[0].mxu0 %v4591
        %v4815 = vpop.f32.mrb[0].mxu0
        %v4816 = vadd.f32 0.0, %v4815
        %v4817 = vpop.f32.mrb[0].mxu0
        %v4818 = vadd.f32 0.0, %v4817
        %4819 = vmatprep.mubr.f32.mxu0 0.0
        %4820 = vmatmul.mubr.f32.gmra.mrb[0].mxu0 %v4594
        %v4821 = vpop.f32.mrb[0].mxu0
        %v4822 = vadd.f32 0.0, %v4821
        %v4823 = vpop.f32.mrb[0].mxu0
        %v4824 = vadd.f32 0.0, %v4823
        %4825 = vmatprep.mubr.f32.mxu0 0.0
        %4826 = vmatmul.mubr.f32.gmra.mrb[0].mxu0 %v4597
        %v4827 = vpop.f32.mrb[0].mxu0
        %v4828 = vadd.f32 0.0, %v4827
        %v4829 = vpop.f32.mrb[0].mxu0
        %v4830 = vadd.f32 0.0, %v4829
        %4831 = vmatprep.mubr.f32.mxu0 0.0
        %4832 = vmatmul.mubr.f32.gmra.mrb[0].mxu0 %v4600
        %v4833 = vpop.f32.mrb[0].mxu0
        %v4834 = vadd.f32 0.0, %v4833
        %v4835 = vpop.f32.mrb[0].mxu0
        %v4836 = vadd.f32 0.0, %v4835
        %4837 = vmatprep.mubr.f32.mxu0 0.0
        %4838 = vmatmul.mubr.f32.gmra.mrb[0].mxu0 %v4603
        %v4839 = vpop.f32.mrb[0].mxu0
        %v4840 = vadd.f32 0.0, %v4839
        %v4841 = vpop.f32.mrb[0].mxu0
        %v4842 = vadd.f32 0.0, %v4841
        %4843 = vmatprep.mubr.f32.mxu0 0.0
        %4844 = vmatmul.mubr.f32.gmra.mrb[0].mxu0 %v4606
        %v4845 = vpop.f32.mrb[0].mxu0
        %v4846 = vadd.f32 0.0, %v4845
        %v4847 = vpop.f32.mrb[0].mxu0
        %v4848 = vadd.f32 0.0, %v4847
        %4849 = vmatprep.mubr.f32.mxu0 0.0
        %4850 = vmatmul.mubr.f32.gmra.mrb[0].mxu0 %v4609
        %v4851 = vpop.f32.mrb[0].mxu0
        %v4852 = vadd.f32 0.0, %v4851
        %v4853 = vpop.f32.mrb[0].mxu0
        %v4854 = vadd.f32 0.0, %v4853
        %4855 = vmatprep.mubr.f32.mxu0 0.0
        %4856 = vmatmul.mubr.f32.gmra.mrb[0].mxu0 %v4612
        %v4857 = vpop.f32.mrb[0].mxu0
        %v4858 = vadd.f32 0.0, %v4857
        %v4859 = vpop.f32.mrb[0].mxu0
        %v4860 = vadd.f32 0.0, %v4859
        %4861 = vmatprep.mubr.f32.mxu0 0.0
        %4862 = vmatmul.mubr.f32.gmra.mrb[0].mxu0 %v4615
        %v4863 = vpop.f32.mrb[0].mxu0
        %v4864 = vadd.f32 0.0, %v4863
        %v4865 = vpop.f32.mrb[0].mxu0
        %v4866 = vadd.f32 0.0, %v4865
        %4867 = vmatprep.mubr.f32.mxu0 0.0
        %4868 = vmatmul.mubr.f32.gmra.mrb[0].mxu0 %v4618
        %v4869 = vpop.f32.mrb[0].mxu0
        %v4870 = vadd.f32 0.0, %v4869
        %v4871 = vpop.f32.mrb[0].mxu0
        %v4872 = vadd.f32 0.0, %v4871
        %4873 = vmatprep.mubr.f32.mxu0 0.0
        %4874 = vmatmul.mubr.f32.gmra.mrb[0].mxu0 %v4621
        %v4875 = vpop.f32.mrb[0].mxu0
        %v4876 = vadd.f32 0.0, %v4875
        %v4877 = vpop.f32.mrb[0].mxu0
        %v4878 = vadd.f32 0.0, %v4877
        %4879 = vdwg.mxu0
        %v4880 = vmax.f32 %v4690, %v4702
        %v4881 = vmax.f32 %v4696, %v4708
        %v4882 = vmax.f32 %v4880, %v4714
        %v4883 = vmax.f32 %v4881, %v4720
        %v4884 = vmax.f32 %v4882, %v4726
        %v4885 = vmax.f32 %v4883, %v4732
        %v4886 = vmax.f32 %v4884, %v4738
        %v4887 = vmax.f32 %v4885, %v4744
        %v4888 = vmax.f32 %v4886, %v4750
        %v4889 = vmax.f32 %v4887, %v4756
        %v4890 = vmax.f32 %v4888, %v4762
        %v4891 = vmax.f32 %v4889, %v4768
        %v4892 = vmax.f32 %v4890, %v4774
        %v4893 = vmax.f32 %v4891, %v4780
        %v4894 = vmax.f32 %v4892, %v4786
        %v4895 = vmax.f32 %v4893, %v4792
        %v4896 = vmax.f32 %v4894, %v4798
        %v4897 = vmax.f32 %v4895, %v4804
        %v4898 = vmax.f32 %v4896, %v4810
        %v4899 = vmax.f32 %v4897, %v4816
        %v4900 = vmax.f32 %v4898, %v4822
        %v4901 = vmax.f32 %v4899, %v4828
        %v4902 = vmax.f32 %v4900, %v4834
        %v4903 = vmax.f32 %v4901, %v4840
        %v4904 = vmax.f32 %v4902, %v4846
        %v4905 = vmax.f32 %v4903, %v4852
        %v4906 = vmax.f32 %v4904, %v4858
        %v4907 = vmax.f32 %v4905, %v4864
        %v4908 = vmax.f32 %v4906, %v4870
        %v4909 = vmax.f32 %v4907, %v4876
        %v4910 = vmax.f32 %v4908, %v4909
        %v4911 = vrot.slane %v4910, 4
        %v4912 = vmax.f32 %v4910, %v4911
        %v4913 = vrot.slane %v4912, 2
        %v4914 = vmax.f32 %v4912, %v4913
        %v4915 = vrot.slane %v4914, 1
        %v4916 = vmax.f32 %v4914, %v4915
        %v4917 = vmax.f32 %v4692, %v4704
        %v4918 = vmax.f32 %v4698, %v4710
        %v4919 = vmax.f32 %v4917, %v4716
        %v4920 = vmax.f32 %v4918, %v4722
        %v4921 = vmax.f32 %v4919, %v4728
        %v4922 = vmax.f32 %v4920, %v4734
        %v4923 = vmax.f32 %v4921, %v4740
        %v4924 = vmax.f32 %v4922, %v4746
        %v4925 = vmax.f32 %v4923, %v4752
        %v4926 = vmax.f32 %v4924, %v4758
        %v4927 = vmax.f32 %v4925, %v4764
        %v4928 = vmax.f32 %v4926, %v4770
        %v4929 = vmax.f32 %v4927, %v4776
        %v4930 = vmax.f32 %v4928, %v4782
        %v4931 = vmax.f32 %v4929, %v4788
        %v4932 = vmax.f32 %v4930, %v4794
        %v4933 = vmax.f32 %v4931, %v4800
        %v4934 = vmax.f32 %v4932, %v4806
        %v4935 = vmax.f32 %v4933, %v4812
        %v4936 = vmax.f32 %v4934, %v4818
        %v4937 = vmax.f32 %v4935, %v4824
        %v4938 = vmax.f32 %v4936, %v4830
        %v4939 = vmax.f32 %v4937, %v4836
        %v4940 = vmax.f32 %v4938, %v4842
        %v4941 = vmax.f32 %v4939, %v4848
        %v4942 = vmax.f32 %v4940, %v4854
        %v4943 = vmax.f32 %v4941, %v4860
        %v4944 = vmax.f32 %v4942, %v4866
        %v4945 = vmax.f32 %v4943, %v4872
        %v4946 = vmax.f32 %v4944, %v4878
        %v4947 = vmax.f32 %v4945, %v4946
        %v4948 = vrot.slane %v4947, 4
        %v4949 = vmax.f32 %v4947, %v4948
        %v4950 = vrot.slane %v4949, 2
        %v4951 = vmax.f32 %v4949, %v4950
        %v4952 = vrot.slane %v4951, 1
        %v4953 = vmax.f32 %v4951, %v4952
        %v4954 = vsub.f32 %v4690, %v4916
        %v4955 = vsub.f32 %v4692, %v4953
        %v4956 = vsub.f32 %v4696, %v4916
        %v4957 = vsub.f32 %v4698, %v4953
        %v4958 = vsub.f32 %v4702, %v4916
        %v4959 = vsub.f32 %v4704, %v4953
        %v4960 = vsub.f32 %v4708, %v4916
        %v4961 = vsub.f32 %v4710, %v4953
        %v4962 = vsub.f32 %v4714, %v4916
        %v4963 = vsub.f32 %v4716, %v4953
        %v4964 = vsub.f32 %v4720, %v4916
        %v4965 = vsub.f32 %v4722, %v4953
        %v4966 = vsub.f32 %v4726, %v4916
        %v4967 = vsub.f32 %v4728, %v4953
        %v4968 = vsub.f32 %v4732, %v4916
        %v4969 = vsub.f32 %v4734, %v4953
        %v4970 = vsub.f32 %v4738, %v4916
        %v4971 = vsub.f32 %v4740, %v4953
        %v4972 = vsub.f32 %v4744, %v4916
        %v4973 = vsub.f32 %v4746, %v4953
        %v4974 = vsub.f32 %v4750, %v4916
        %v4975 = vsub.f32 %v4752, %v4953
        %v4976 = vsub.f32 %v4756, %v4916
        %v4977 = vsub.f32 %v4758, %v4953
        %v4978 = vsub.f32 %v4762, %v4916
        %v4979 = vsub.f32 %v4764, %v4953
        %v4980 = vsub.f32 %v4768, %v4916
        %v4981 = vsub.f32 %v4770, %v4953
        %v4982 = vsub.f32 %v4774, %v4916
        %v4983 = vsub.f32 %v4776, %v4953
        %v4984 = vsub.f32 %v4780, %v4916
        %v4985 = vsub.f32 %v4782, %v4953
        %v4986 = vsub.f32 %v4786, %v4916
        %v4987 = vsub.f32 %v4788, %v4953
        %v4988 = vsub.f32 %v4792, %v4916
        %v4989 = vsub.f32 %v4794, %v4953
        %v4990 = vsub.f32 %v4798, %v4916
        %v4991 = vsub.f32 %v4800, %v4953
        %v4992 = vsub.f32 %v4804, %v4916
        %v4993 = vsub.f32 %v4806, %v4953
        %v4994 = vsub.f32 %v4810, %v4916
        %v4995 = vsub.f32 %v4812, %v4953
        %v4996 = vsub.f32 %v4816, %v4916
        %v4997 = vsub.f32 %v4818, %v4953
        %v4998 = vsub.f32 %v4822, %v4916
        %v4999 = vsub.f32 %v4824, %v4953
        %v5000 = vsub.f32 %v4828, %v4916
        %v5001 = vsub.f32 %v4830, %v4953
        %v5002 = vsub.f32 %v4834, %v4916
        %v5003 = vsub.f32 %v4836, %v4953
        %v5004 = vsub.f32 %v4840, %v4916
        %v5005 = vsub.f32 %v4842, %v4953
        %v5006 = vsub.f32 %v4846, %v4916
        %v5007 = vsub.f32 %v4848, %v4953
        %v5008 = vsub.f32 %v4852, %v4916
        %v5009 = vsub.f32 %v4854, %v4953
        %v5010 = vsub.f32 %v4858, %v4916
        %v5011 = vsub.f32 %v4860, %v4953
        %v5012 = vsub.f32 %v4864, %v4916
        %v5013 = vsub.f32 %v4866, %v4953
        %v5014 = vsub.f32 %v4870, %v4916
        %v5015 = vsub.f32 %v4872, %v4953
        %v5016 = vsub.f32 %v4876, %v4916
        %v5017 = vsub.f32 %v4878, %v4953
        %v5018 = vmul.f32 %v4954, 1.442695
        %v5019 = vpow.pop %v5018
        %v5020 = vmul.f32 %v4955, 1.442695
        %v5021 = vpow.pop %v5020
        %v5022 = vmul.f32 %v4956, 1.442695
        %v5023 = vpow.pop %v5022
        %v5024 = vmul.f32 %v4957, 1.442695
        %v5025 = vpow.pop %v5024
        %v5026 = vmul.f32 %v4958, 1.442695
        %v5027 = vpow.pop %v5026
        %v5028 = vmul.f32 %v4959, 1.442695
        %v5029 = vpow.pop %v5028
        %v5030 = vmul.f32 %v4960, 1.442695
        %v5031 = vpow.pop %v5030
        %v5032 = vmul.f32 %v4961, 1.442695
        %v5033 = vpow.pop %v5032
        %v5034 = vmul.f32 %v4962, 1.442695
        %v5035 = vpow.pop %v5034
        %v5036 = vmul.f32 %v4963, 1.442695
        %v5037 = vpow.pop %v5036
        %v5038 = vmul.f32 %v4964, 1.442695
        %v5039 = vpow.pop %v5038
        %v5040 = vmul.f32 %v4965, 1.442695
        %v5041 = vpow.pop %v5040
        %v5042 = vmul.f32 %v4966, 1.442695
        %v5043 = vpow.pop %v5042
        %v5044 = vmul.f32 %v4967, 1.442695
        %v5045 = vpow.pop %v5044
        %v5046 = vmul.f32 %v4968, 1.442695
        %v5047 = vpow.pop %v5046
        %v5048 = vmul.f32 %v4969, 1.442695
        %v5049 = vpow.pop %v5048
        %v5050 = vmul.f32 %v4970, 1.442695
        %v5051 = vpow.pop %v5050
        %v5052 = vmul.f32 %v4971, 1.442695
        %v5053 = vpow.pop %v5052
        %v5054 = vmul.f32 %v4972, 1.442695
        %v5055 = vpow.pop %v5054
        %v5056 = vmul.f32 %v4973, 1.442695
        %v5057 = vpow.pop %v5056
        %v5058 = vmul.f32 %v4974, 1.442695
        %v5059 = vpow.pop %v5058
        %v5060 = vmul.f32 %v4975, 1.442695
        %v5061 = vpow.pop %v5060
        %v5062 = vmul.f32 %v4976, 1.442695
        %v5063 = vpow.pop %v5062
        %v5064 = vmul.f32 %v4977, 1.442695
        %v5065 = vpow.pop %v5064
        %v5066 = vmul.f32 %v4978, 1.442695
        %v5067 = vpow.pop %v5066
        %v5068 = vmul.f32 %v4979, 1.442695
        %v5069 = vpow.pop %v5068
        %v5070 = vmul.f32 %v4980, 1.442695
        %v5071 = vpow.pop %v5070
        %v5072 = vmul.f32 %v4981, 1.442695
        %v5073 = vpow.pop %v5072
        %v5074 = vmul.f32 %v4982, 1.442695
        %v5075 = vpow.pop %v5074
        %v5076 = vmul.f32 %v4983, 1.442695
        %v5077 = vpow.pop %v5076
        %v5078 = vmul.f32 %v4984, 1.442695
        %v5079 = vpow.pop %v5078
        %v5080 = vmul.f32 %v4985, 1.442695
        %v5081 = vpow.pop %v5080
        %v5082 = vmul.f32 %v4986, 1.442695
        %v5083 = vpow.pop %v5082
        %v5084 = vmul.f32 %v4987, 1.442695
        %v5085 = vpow.pop %v5084
        %v5086 = vmul.f32 %v4988, 1.442695
        %v5087 = vpow.pop %v5086
        %v5088 = vmul.f32 %v4989, 1.442695
        %v5089 = vpow.pop %v5088
        %v5090 = vmul.f32 %v4990, 1.442695
        %v5091 = vpow.pop %v5090
        %v5092 = vmul.f32 %v4991, 1.442695
        %v5093 = vpow.pop %v5092
        %v5094 = vmul.f32 %v4992, 1.442695
        %v5095 = vpow.pop %v5094
        %v5096 = vmul.f32 %v4993, 1.442695
        %v5097 = vpow.pop %v5096
        %v5098 = vmul.f32 %v4994, 1.442695
        %v5099 = vpow.pop %v5098
        %v5100 = vmul.f32 %v4995, 1.442695
        %v5101 = vpow.pop %v5100
        %v5102 = vmul.f32 %v4996, 1.442695
        %v5103 = vpow.pop %v5102
        %v5104 = vmul.f32 %v4997, 1.442695
        %v5105 = vpow.pop %v5104
        %v5106 = vmul.f32 %v4998, 1.442695
        %v5107 = vpow.pop %v5106
        %v5108 = vmul.f32 %v4999, 1.442695
        %v5109 = vpow.pop %v5108
        %v5110 = vmul.f32 %v5000, 1.442695
        %v5111 = vpow.pop %v5110
        %v5112 = vmul.f32 %v5001, 1.442695
        %v5113 = vpow.pop %v5112
        %v5114 = vmul.f32 %v5002, 1.442695
        %v5115 = vpow.pop %v5114
        %v5116 = vmul.f32 %v5003, 1.442695
        %v5117 = vpow.pop %v5116
        %v5118 = vmul.f32 %v5004, 1.442695
        %v5119 = vpow.pop %v5118
        %v5120 = vmul.f32 %v5005, 1.442695
        %v5121 = vpow.pop %v5120
        %v5122 = vmul.f32 %v5006, 1.442695
        %v5123 = vpow.pop %v5122
        %v5124 = vmul.f32 %v5007, 1.442695
        %v5125 = vpow.pop %v5124
        %v5126 = vmul.f32 %v5008, 1.442695
        %v5127 = vpow.pop %v5126
        %v5128 = vmul.f32 %v5009, 1.442695
        %v5129 = vpow.pop %v5128
        %v5130 = vmul.f32 %v5010, 1.442695
        %v5131 = vpow.pop %v5130
        %v5132 = vmul.f32 %v5011, 1.442695
        %v5133 = vpow.pop %v5132
        %v5134 = vmul.f32 %v5012, 1.442695
        %v5135 = vpow.pop %v5134
        %v5136 = vmul.f32 %v5013, 1.442695
        %v5137 = vpow.pop %v5136
        %v5138 = vmul.f32 %v5014, 1.442695
        %v5139 = vpow.pop %v5138
        %v5140 = vmul.f32 %v5015, 1.442695
        %v5141 = vpow.pop %v5140
        %v5142 = vmul.f32 %v5016, 1.442695
        %v5143 = vpow.pop %v5142
        %v5144 = vmul.f32 %v5017, 1.442695
        %v5145 = vpow.pop %v5144
        %v5146 = vadd.f32 %v5019, %v5023
        %v5147 = vadd.f32 %v5146, %v5027
        %v5148 = vadd.f32 %v5147, %v5031
        %v5149 = vadd.f32 %v5148, %v5035
        %v5150 = vadd.f32 %v5149, %v5039
        %v5151 = vadd.f32 %v5150, %v5043
        %v5152 = vadd.f32 %v5151, %v5047
        %v5153 = vadd.f32 %v5152, %v5051
        %v5154 = vadd.f32 %v5153, %v5055
        %v5155 = vadd.f32 %v5154, %v5059
        %v5156 = vadd.f32 %v5155, %v5063
        %v5157 = vadd.f32 %v5156, %v5067
        %v5158 = vadd.f32 %v5157, %v5071
        %v5159 = vadd.f32 %v5158, %v5075
        %v5160 = vadd.f32 %v5159, %v5079
        %v5161 = vadd.f32 %v5160, %v5083
        %v5162 = vadd.f32 %v5161, %v5087
        %v5163 = vadd.f32 %v5162, %v5091
        %v5164 = vadd.f32 %v5163, %v5095
        %v5165 = vadd.f32 %v5164, %v5099
        %v5166 = vadd.f32 %v5165, %v5103
        %v5167 = vadd.f32 %v5166, %v5107
        %v5168 = vadd.f32 %v5167, %v5111
        %v5169 = vadd.f32 %v5168, %v5115
        %v5170 = vadd.f32 %v5169, %v5119
        %v5171 = vadd.f32 %v5170, %v5123
        %v5172 = vadd.f32 %v5171, %v5127
        %v5173 = vadd.f32 %v5172, %v5131
        %v5174 = vadd.f32 %v5173, %v5135
        %v5175 = vadd.f32 %v5174, %v5139
        %v5176 = vadd.f32 %v5175, %v5143
        %v5177 = vrot.slane %v5176, 4
        %v5178 = vadd.f32 %v5176, %v5177
        %v5179 = vrot.slane %v5178, 2
        %v5180 = vadd.f32 %v5178, %v5179
        %v5181 = vrot.slane %v5180, 1
        %v5182 = vadd.f32 %v5180, %v5181
        %v5183 = vadd.f32 %v5021, %v5025
        %v5184 = vadd.f32 %v5183, %v5029
        %v5185 = vadd.f32 %v5184, %v5033
        %v5186 = vadd.f32 %v5185, %v5037
        %v5187 = vadd.f32 %v5186, %v5041
        %v5188 = vadd.f32 %v5187, %v5045
        %v5189 = vadd.f32 %v5188, %v5049
        %v5190 = vadd.f32 %v5189, %v5053
        %v5191 = vadd.f32 %v5190, %v5057
        %v5192 = vadd.f32 %v5191, %v5061
        %v5193 = vadd.f32 %v5192, %v5065
        %v5194 = vadd.f32 %v5193, %v5069
        %v5195 = vadd.f32 %v5194, %v5073
        %v5196 = vadd.f32 %v5195, %v5077
        %v5197 = vadd.f32 %v5196, %v5081
        %v5198 = vadd.f32 %v5197, %v5085
        %v5199 = vadd.f32 %v5198, %v5089
        %v5200 = vadd.f32 %v5199, %v5093
        %v5201 = vadd.f32 %v5200, %v5097
        %v5202 = vadd.f32 %v5201, %v5101
        %v5203 = vadd.f32 %v5202, %v5105
        %v5204 = vadd.f32 %v5203, %v5109
        %v5205 = vadd.f32 %v5204, %v5113
        %v5206 = vadd.f32 %v5205, %v5117
        %v5207 = vadd.f32 %v5206, %v5121
        %v5208 = vadd.f32 %v5207, %v5125
        %v5209 = vadd.f32 %v5208, %v5129
        %v5210 = vadd.f32 %v5209, %v5133
        %v5211 = vadd.f32 %v5210, %v5137
        %v5212 = vadd.f32 %v5211, %v5141
        %v5213 = vadd.f32 %v5212, %v5145
        %v5214 = vrot.slane %v5213, 4
        %v5215 = vadd.f32 %v5213, %v5214
        %v5216 = vrot.slane %v5215, 2
        %v5217 = vadd.f32 %v5215, %v5216
        %v5218 = vrot.slane %v5217, 1
        %v5219 = vadd.f32 %v5217, %v5218
        %5220 = vmatprep.subr.mxu0 %v5021
        %5221 = vmatpush1.msra.mxu0 %v5019
        %5222 = vmatprep.subr.mxu0 %v5025
        %5223 = vmatpush1.msra.mxu0 %v5023
        %5224 = vmatprep.subr.mxu0 %v5029
        %5225 = vmatpush1.msra.mxu0 %v5027
        %5226 = vmatprep.subr.mxu0 %v5033
        %5227 = vmatpush1.msra.mxu0 %v5031
        %5228 = vmatprep.subr.mxu0 %v5037
        %5229 = vmatpush1.msra.mxu0 %v5035
        %5230 = vmatprep.subr.mxu0 %v5041
        %5231 = vmatpush1.msra.mxu0 %v5039
        %5232 = vmatprep.subr.mxu0 %v5045
        %5233 = vmatpush1.msra.mxu0 %v5043
        %5234 = vmatprep.subr.mxu0 %v5049
        %5235 = vmatpush1.msra.mxu0 %v5047
        %5236 = vmatprep.subr.mxu0 %v5053
        %5237 = vmatpush1.msra.mxu0 %v5051
        %5238 = vmatprep.subr.mxu0 %v5057
        %5239 = vmatpush1.msra.mxu0 %v5055
        %5240 = vmatprep.subr.mxu0 %v5061
        %5241 = vmatpush1.msra.mxu0 %v5059
        %5242 = vmatprep.subr.mxu0 %v5065
        %5243 = vmatpush1.msra.mxu0 %v5063
        %5244 = vmatprep.subr.mxu0 %v5069
        %5245 = vmatpush1.msra.mxu0 %v5067
        %5246 = vmatprep.subr.mxu0 %v5073
        %5247 = vmatpush1.msra.mxu0 %v5071
        %5248 = vmatprep.subr.mxu0 %v5077
        %5249 = vmatpush1.msra.mxu0 %v5075
        %5250 = vmatprep.subr.mxu0 %v5081
        %5251 = vmatpush1.msra.mxu0 %v5079
        %5252 = vmatprep.subr.mxu0 %v5085
        %5253 = vmatpush1.msra.mxu0 %v5083
        %5254 = vmatprep.subr.mxu0 %v5089
        %5255 = vmatpush1.msra.mxu0 %v5087
        %5256 = vmatprep.subr.mxu0 %v5093
        %5257 = vmatpush1.msra.mxu0 %v5091
        %5258 = vmatprep.subr.mxu0 %v5097
        %5259 = vmatpush1.msra.mxu0 %v5095
        %5260 = vmatprep.subr.mxu0 %v5101
        %5261 = vmatpush1.msra.mxu0 %v5099
        %5262 = vmatprep.subr.mxu0 %v5105
        %5263 = vmatpush1.msra.mxu0 %v5103
        %5264 = vmatprep.subr.mxu0 %v5109
        %5265 = vmatpush1.msra.mxu0 %v5107
        %5266 = vmatprep.subr.mxu0 %v5113
        %5267 = vmatpush1.msra.mxu0 %v5111
        %5268 = vmatprep.subr.mxu0 %v5117
        %5269 = vmatpush1.msra.mxu0 %v5115
        %5270 = vmatprep.subr.mxu0 %v5121
        %5271 = vmatpush1.msra.mxu0 %v5119
        %5272 = vmatprep.subr.mxu0 %v5125
        %5273 = vmatpush1.msra.mxu0 %v5123
        %5274 = vmatprep.subr.mxu0 %v5129
        %5275 = vmatpush1.msra.mxu0 %v5127
        %5276 = vmatprep.subr.mxu0 %v5133
        %5277 = vmatpush1.msra.mxu0 %v5131
        %5278 = vmatprep.subr.mxu0 %v5137
        %5279 = vmatpush1.msra.mxu0 %v5135
        %5280 = vmatprep.subr.mxu0 %v5141
        %5281 = vmatpush1.msra.mxu0 %v5139
        %5282 = vmatprep.subr.mxu0 %v5145
        %5283 = vmatpush1.msra.mxu0 %v5143
        %5284 = vmatprep.mubr.f32.mxu0 %v785
        %5285 = vmatmul.mubr.f32.gmra.mrb[0].mxu0 %v783
        %v5286 = vpop.f32.mrb[0].mxu0
        %v5287 = vadd.f32 0.0, %v5286
        %v5288 = vpop.f32.mrb[0].mxu0
        %v5289 = vadd.f32 0.0, %v5288
        %5290 = vdwg.mxu0
        %v5291 = vrcp.pop %v5182
        %v5292 = vrcp.pop %v5219
        %v5293 = vmul.f32 %v5287, %v5291
        %v5294 = vmul.f32 %v5289, %v5292
        %5295 = vxpose.xlu0.b32.start [1/16] %v765, 128
        %5296 = vxpose.xlu0.b32.cont [2/16] 0.0, 128
        %5297 = vxpose.xlu0.b32.cont [3/16] 0.0, 128
        %5298 = vxpose.xlu0.b32.cont [4/16] 0.0, 128
        %5299 = vxpose.xlu0.b32.cont [5/16] 0.0, 128
        %5300 = vxpose.xlu0.b32.cont [6/16] 0.0, 128
        %5301 = vxpose.xlu0.b32.cont [7/16] 0.0, 128
        %5302 = vxpose.xlu0.b32.cont [8/16] 0.0, 128
        %5303 = vxpose.xlu0.b32.cont [9/16] 0.0, 128
        %5304 = vxpose.xlu0.b32.cont [10/16] 0.0, 128
        %5305 = vxpose.xlu0.b32.cont [11/16] 0.0, 128
        %5306 = vxpose.xlu0.b32.cont [12/16] 0.0, 128
        %5307 = vxpose.xlu0.b32.cont [13/16] 0.0, 128
        %5308 = vxpose.xlu0.b32.cont [14/16] 0.0, 128
        %5309 = vxpose.xlu0.b32.cont [15/16] 0.0, 128
        %5310 = vxpose.xlu0.b32.end [16/16] 0.0, 128
        %v5311 = vpop.trf.xlu0
        %v5312 = vpop.trf.xlu0
        %v5313 = vpop.trf.xlu0
        %v5314 = vpop.trf.xlu0
        %v5315 = vpop.trf.xlu0
        %v5316 = vpop.trf.xlu0
        %v5317 = vpop.trf.xlu0
        %v5318 = vpop.trf.xlu0
        %v5319 = vpop.trf.xlu0
        %v5320 = vpop.trf.xlu0
        %v5321 = vpop.trf.xlu0
        %v5322 = vpop.trf.xlu0
        %v5323 = vpop.trf.xlu0
        %v5324 = vpop.trf.xlu0
        %v5325 = vpop.trf.xlu0
        %v5326 = vpop.trf.xlu0
        %5327 = vxpose.xlu0.b32.start [1/16] %v767, 128
        %5328 = vxpose.xlu0.b32.cont [2/16] 0.0, 128
        %5329 = vxpose.xlu0.b32.cont [3/16] 0.0, 128
        %5330 = vxpose.xlu0.b32.cont [4/16] 0.0, 128
        %5331 = vxpose.xlu0.b32.cont [5/16] 0.0, 128
        %5332 = vxpose.xlu0.b32.cont [6/16] 0.0, 128
        %5333 = vxpose.xlu0.b32.cont [7/16] 0.0, 128
        %5334 = vxpose.xlu0.b32.cont [8/16] 0.0, 128
        %5335 = vxpose.xlu0.b32.cont [9/16] 0.0, 128
        %5336 = vxpose.xlu0.b32.cont [10/16] 0.0, 128
        %5337 = vxpose.xlu0.b32.cont [11/16] 0.0, 128
        %5338 = vxpose.xlu0.b32.cont [12/16] 0.0, 128
        %5339 = vxpose.xlu0.b32.cont [13/16] 0.0, 128
        %5340 = vxpose.xlu0.b32.cont [14/16] 0.0, 128
        %5341 = vxpose.xlu0.b32.cont [15/16] 0.0, 128
        %5342 = vxpose.xlu0.b32.end [16/16] 0.0, 128
        %v5343 = vpop.trf.xlu0
        %v5344 = vpop.trf.xlu0
        %v5345 = vpop.trf.xlu0
        %v5346 = vpop.trf.xlu0
        %v5347 = vpop.trf.xlu0
        %v5348 = vpop.trf.xlu0
        %v5349 = vpop.trf.xlu0
        %v5350 = vpop.trf.xlu0
        %v5351 = vpop.trf.xlu0
        %v5352 = vpop.trf.xlu0
        %v5353 = vpop.trf.xlu0
        %v5354 = vpop.trf.xlu0
        %v5355 = vpop.trf.xlu0
        %v5356 = vpop.trf.xlu0
        %v5357 = vpop.trf.xlu0
        %v5358 = vpop.trf.xlu0
        %v5360 = vsel %vm1198, %v5311, 0
        %v5363 = vsel %vm1198, %v5312, 0
        %v5366 = vsel %vm1198, %v5313, 0
        %v5369 = vsel %vm1198, %v5314, 0
        %v5372 = vsel %vm1198, %v5315, 0
        %v5375 = vsel %vm1198, %v5316, 0
        %v5378 = vsel %vm1198, %v5317, 0
        %v5381 = vsel %vm1198, %v5318, 0
        %v5384 = vsel %vm1198, %v5319, 0
        %v5387 = vsel %vm1198, %v5320, 0
        %v5390 = vsel %vm1198, %v5321, 0
        %v5393 = vsel %vm1198, %v5322, 0
        %v5396 = vsel %vm1198, %v5323, 0
        %v5399 = vsel %vm1198, %v5324, 0
        %v5402 = vsel %vm1198, %v5325, 0
        %v5405 = vsel %vm1198, %v5326, 0
        %v5408 = vsel %vm1198, %v5343, 0
        %v5411 = vsel %vm1198, %v5344, 0
        %v5414 = vsel %vm1198, %v5345, 0
        %v5417 = vsel %vm1198, %v5346, 0
        %v5420 = vsel %vm1198, %v5347, 0
        %v5423 = vsel %vm1198, %v5348, 0
        %v5426 = vsel %vm1198, %v5349, 0
        %v5429 = vsel %vm1198, %v5350, 0
        %v5432 = vsel %vm1198, %v5351, 0
        %v5435 = vsel %vm1198, %v5352, 0
        %v5438 = vsel %vm1198, %v5353, 0
        %v5441 = vsel %vm1198, %v5354, 0
        %v5444 = vsel %vm1198, %v5355, 0
        %v5447 = vsel %vm1198, %v5356, 0
        %v5450 = vsel %vm1198, %v5357, 0
        %v5453 = vsel %vm1198, %v5358, 0
        %5455 = vmatprep.subr.mxu0 %v1072
        %5456 = vmatpush1.msra.mxu0 %v1070
        %5457 = vmatprep.subr.mxu0 0.0
        %5458 = vmatpush1.msra.mxu0 0.0
        %5459 = vmatprep.subr.mxu0 0.0
        %5460 = vmatpush1.msra.mxu0 0.0
        %5461 = vmatprep.subr.mxu0 0.0
        %5462 = vmatpush1.msra.mxu0 0.0
        %5463 = vmatprep.subr.mxu0 0.0
        %5464 = vmatpush1.msra.mxu0 0.0
        %5465 = vmatprep.subr.mxu0 0.0
        %5466 = vmatpush1.msra.mxu0 0.0
        %5467 = vmatprep.subr.mxu0 0.0
        %5468 = vmatpush1.msra.mxu0 0.0
        %5469 = vmatprep.subr.mxu0 0.0
        %5470 = vmatpush1.msra.mxu0 0.0
        %5471 = vmatprep.subr.mxu0 0.0
        %5472 = vmatpush1.msra.mxu0 0.0
        %5473 = vmatprep.subr.mxu0 0.0
        %5474 = vmatpush1.msra.mxu0 0.0
        %5475 = vmatprep.subr.mxu0 0.0
        %5476 = vmatpush1.msra.mxu0 0.0
        %5477 = vmatprep.subr.mxu0 0.0
        %5478 = vmatpush1.msra.mxu0 0.0
        %5479 = vmatprep.subr.mxu0 0.0
        %5480 = vmatpush1.msra.mxu0 0.0
        %5481 = vmatprep.subr.mxu0 0.0
        %5482 = vmatpush1.msra.mxu0 0.0
        %5483 = vmatprep.subr.mxu0 0.0
        %5484 = vmatpush1.msra.mxu0 0.0
        %5485 = vmatprep.subr.mxu0 0.0
        %5486 = vmatpush1.msra.mxu0 0.0
        %5487 = vmatprep.subr.mxu0 0.0
        %5488 = vmatpush1.msra.mxu0 0.0
        %5489 = vmatprep.subr.mxu0 0.0
        %5490 = vmatpush1.msra.mxu0 0.0
        %5491 = vmatprep.subr.mxu0 0.0
        %5492 = vmatpush1.msra.mxu0 0.0
        %5493 = vmatprep.subr.mxu0 0.0
        %5494 = vmatpush1.msra.mxu0 0.0
        %5495 = vmatprep.subr.mxu0 0.0
        %5496 = vmatpush1.msra.mxu0 0.0
        %5497 = vmatprep.subr.mxu0 0.0
        %5498 = vmatpush1.msra.mxu0 0.0
        %5499 = vmatprep.subr.mxu0 0.0
        %5500 = vmatpush1.msra.mxu0 0.0
        %5501 = vmatprep.subr.mxu0 0.0
        %5502 = vmatpush1.msra.mxu0 0.0
        %5503 = vmatprep.subr.mxu0 0.0
        %5504 = vmatpush1.msra.mxu0 0.0
        %5505 = vmatprep.subr.mxu0 0.0
        %5506 = vmatpush1.msra.mxu0 0.0
        %5507 = vmatprep.subr.mxu0 0.0
        %5508 = vmatpush1.msra.mxu0 0.0
        %5509 = vmatprep.subr.mxu0 0.0
        %5510 = vmatpush1.msra.mxu0 0.0
        %5511 = vmatprep.subr.mxu0 0.0
        %5512 = vmatpush1.msra.mxu0 0.0
        %5513 = vmatprep.subr.mxu0 0.0
        %5514 = vmatpush1.msra.mxu0 0.0
        %5515 = vmatprep.subr.mxu0 0.0
        %5516 = vmatpush1.msra.mxu0 0.0
        %5517 = vmatprep.subr.mxu0 0.0
        %5518 = vmatpush1.msra.mxu0 0.0
        %5519 = vmatprep.mubr.f32.mxu0 0.0
        %5520 = vmatmul.mubr.f32.gmra.mrb[0].mxu0 %v5360
        %v5521 = vpop.f32.mrb[0].mxu0
        %v5522 = vadd.f32 0.0, %v5521
        %v5523 = vpop.f32.mrb[0].mxu0
        %v5524 = vadd.f32 0.0, %v5523
        %5525 = vmatprep.mubr.f32.mxu0 0.0
        %5526 = vmatmul.mubr.f32.gmra.mrb[0].mxu0 %v5363
        %v5527 = vpop.f32.mrb[0].mxu0
        %v5528 = vadd.f32 0.0, %v5527
        %v5529 = vpop.f32.mrb[0].mxu0
        %v5530 = vadd.f32 0.0, %v5529
        %5531 = vmatprep.mubr.f32.mxu0 0.0
        %5532 = vmatmul.mubr.f32.gmra.mrb[0].mxu0 %v5366
        %v5533 = vpop.f32.mrb[0].mxu0
        %v5534 = vadd.f32 0.0, %v5533
        %v5535 = vpop.f32.mrb[0].mxu0
        %v5536 = vadd.f32 0.0, %v5535
        %5537 = vmatprep.mubr.f32.mxu0 0.0
        %5538 = vmatmul.mubr.f32.gmra.mrb[0].mxu0 %v5369
        %v5539 = vpop.f32.mrb[0].mxu0
        %v5540 = vadd.f32 0.0, %v5539
        %v5541 = vpop.f32.mrb[0].mxu0
        %v5542 = vadd.f32 0.0, %v5541
        %5543 = vmatprep.mubr.f32.mxu0 0.0
        %5544 = vmatmul.mubr.f32.gmra.mrb[0].mxu0 %v5372
        %v5545 = vpop.f32.mrb[0].mxu0
        %v5546 = vadd.f32 0.0, %v5545
        %v5547 = vpop.f32.mrb[0].mxu0
        %v5548 = vadd.f32 0.0, %v5547
        %5549 = vmatprep.mubr.f32.mxu0 0.0
        %5550 = vmatmul.mubr.f32.gmra.mrb[0].mxu0 %v5375
        %v5551 = vpop.f32.mrb[0].mxu0
        %v5552 = vadd.f32 0.0, %v5551
        %v5553 = vpop.f32.mrb[0].mxu0
        %v5554 = vadd.f32 0.0, %v5553
        %5555 = vmatprep.mubr.f32.mxu0 0.0
        %5556 = vmatmul.mubr.f32.gmra.mrb[0].mxu0 %v5378
        %v5557 = vpop.f32.mrb[0].mxu0
        %v5558 = vadd.f32 0.0, %v5557
        %v5559 = vpop.f32.mrb[0].mxu0
        %v5560 = vadd.f32 0.0, %v5559
        %5561 = vmatprep.mubr.f32.mxu0 0.0
        %5562 = vmatmul.mubr.f32.gmra.mrb[0].mxu0 %v5381
        %v5563 = vpop.f32.mrb[0].mxu0
        %v5564 = vadd.f32 0.0, %v5563
        %v5565 = vpop.f32.mrb[0].mxu0
        %v5566 = vadd.f32 0.0, %v5565
        %5567 = vmatprep.mubr.f32.mxu0 0.0
        %5568 = vmatmul.mubr.f32.gmra.mrb[0].mxu0 %v5384
        %v5569 = vpop.f32.mrb[0].mxu0
        %v5570 = vadd.f32 0.0, %v5569
        %v5571 = vpop.f32.mrb[0].mxu0
        %v5572 = vadd.f32 0.0, %v5571
        %5573 = vmatprep.mubr.f32.mxu0 0.0
        %5574 = vmatmul.mubr.f32.gmra.mrb[0].mxu0 %v5387
        %v5575 = vpop.f32.mrb[0].mxu0
        %v5576 = vadd.f32 0.0, %v5575
        %v5577 = vpop.f32.mrb[0].mxu0
        %v5578 = vadd.f32 0.0, %v5577
        %5579 = vmatprep.mubr.f32.mxu0 0.0
        %5580 = vmatmul.mubr.f32.gmra.mrb[0].mxu0 %v5390
        %v5581 = vpop.f32.mrb[0].mxu0
        %v5582 = vadd.f32 0.0, %v5581
        %v5583 = vpop.f32.mrb[0].mxu0
        %v5584 = vadd.f32 0.0, %v5583
        %5585 = vmatprep.mubr.f32.mxu0 0.0
        %5586 = vmatmul.mubr.f32.gmra.mrb[0].mxu0 %v5393
        %v5587 = vpop.f32.mrb[0].mxu0
        %v5588 = vadd.f32 0.0, %v5587
        %v5589 = vpop.f32.mrb[0].mxu0
        %v5590 = vadd.f32 0.0, %v5589
        %5591 = vmatprep.mubr.f32.mxu0 0.0
        %5592 = vmatmul.mubr.f32.gmra.mrb[0].mxu0 %v5396
        %v5593 = vpop.f32.mrb[0].mxu0
        %v5594 = vadd.f32 0.0, %v5593
        %v5595 = vpop.f32.mrb[0].mxu0
        %v5596 = vadd.f32 0.0, %v5595
        %5597 = vmatprep.mubr.f32.mxu0 0.0
        %5598 = vmatmul.mubr.f32.gmra.mrb[0].mxu0 %v5399
        %v5599 = vpop.f32.mrb[0].mxu0
        %v5600 = vadd.f32 0.0, %v5599
        %v5601 = vpop.f32.mrb[0].mxu0
        %v5602 = vadd.f32 0.0, %v5601
        %5603 = vmatprep.mubr.f32.mxu0 0.0
        %5604 = vmatmul.mubr.f32.gmra.mrb[0].mxu0 %v5402
        %v5605 = vpop.f32.mrb[0].mxu0
        %v5606 = vadd.f32 0.0, %v5605
        %v5607 = vpop.f32.mrb[0].mxu0
        %v5608 = vadd.f32 0.0, %v5607
        %5609 = vmatprep.mubr.f32.mxu0 0.0
        %5610 = vmatmul.mubr.f32.gmra.mrb[0].mxu0 %v5405
        %v5611 = vpop.f32.mrb[0].mxu0
        %v5612 = vadd.f32 0.0, %v5611
        %v5613 = vpop.f32.mrb[0].mxu0
        %v5614 = vadd.f32 0.0, %v5613
        %5615 = vmatprep.mubr.f32.mxu0 0.0
        %5616 = vmatmul.mubr.f32.gmra.mrb[0].mxu0 %v5408
        %v5617 = vpop.f32.mrb[0].mxu0
        %v5618 = vadd.f32 0.0, %v5617
        %v5619 = vpop.f32.mrb[0].mxu0
        %v5620 = vadd.f32 0.0, %v5619
        %5621 = vmatprep.mubr.f32.mxu0 0.0
        %5622 = vmatmul.mubr.f32.gmra.mrb[0].mxu0 %v5411
        %v5623 = vpop.f32.mrb[0].mxu0
        %v5624 = vadd.f32 0.0, %v5623
        %v5625 = vpop.f32.mrb[0].mxu0
        %v5626 = vadd.f32 0.0, %v5625
        %5627 = vmatprep.mubr.f32.mxu0 0.0
        %5628 = vmatmul.mubr.f32.gmra.mrb[0].mxu0 %v5414
        %v5629 = vpop.f32.mrb[0].mxu0
        %v5630 = vadd.f32 0.0, %v5629
        %v5631 = vpop.f32.mrb[0].mxu0
        %v5632 = vadd.f32 0.0, %v5631
        %5633 = vmatprep.mubr.f32.mxu0 0.0
        %5634 = vmatmul.mubr.f32.gmra.mrb[0].mxu0 %v5417
        %v5635 = vpop.f32.mrb[0].mxu0
        %v5636 = vadd.f32 0.0, %v5635
        %v5637 = vpop.f32.mrb[0].mxu0
        %v5638 = vadd.f32 0.0, %v5637
        %5639 = vmatprep.mubr.f32.mxu0 0.0
        %5640 = vmatmul.mubr.f32.gmra.mrb[0].mxu0 %v5420
        %v5641 = vpop.f32.mrb[0].mxu0
        %v5642 = vadd.f32 0.0, %v5641
        %v5643 = vpop.f32.mrb[0].mxu0
        %v5644 = vadd.f32 0.0, %v5643
        %5645 = vmatprep.mubr.f32.mxu0 0.0
        %5646 = vmatmul.mubr.f32.gmra.mrb[0].mxu0 %v5423
        %v5647 = vpop.f32.mrb[0].mxu0
        %v5648 = vadd.f32 0.0, %v5647
        %v5649 = vpop.f32.mrb[0].mxu0
        %v5650 = vadd.f32 0.0, %v5649
        %5651 = vmatprep.mubr.f32.mxu0 0.0
        %5652 = vmatmul.mubr.f32.gmra.mrb[0].mxu0 %v5426
        %v5653 = vpop.f32.mrb[0].mxu0
        %v5654 = vadd.f32 0.0, %v5653
        %v5655 = vpop.f32.mrb[0].mxu0
        %v5656 = vadd.f32 0.0, %v5655
        %5657 = vmatprep.mubr.f32.mxu0 0.0
        %5658 = vmatmul.mubr.f32.gmra.mrb[0].mxu0 %v5429
        %v5659 = vpop.f32.mrb[0].mxu0
        %v5660 = vadd.f32 0.0, %v5659
        %v5661 = vpop.f32.mrb[0].mxu0
        %v5662 = vadd.f32 0.0, %v5661
        %5663 = vmatprep.mubr.f32.mxu0 0.0
        %5664 = vmatmul.mubr.f32.gmra.mrb[0].mxu0 %v5432
        %v5665 = vpop.f32.mrb[0].mxu0
        %v5666 = vadd.f32 0.0, %v5665
        %v5667 = vpop.f32.mrb[0].mxu0
        %v5668 = vadd.f32 0.0, %v5667
        %5669 = vmatprep.mubr.f32.mxu0 0.0
        %5670 = vmatmul.mubr.f32.gmra.mrb[0].mxu0 %v5435
        %v5671 = vpop.f32.mrb[0].mxu0
        %v5672 = vadd.f32 0.0, %v5671
        %v5673 = vpop.f32.mrb[0].mxu0
        %v5674 = vadd.f32 0.0, %v5673
        %5675 = vmatprep.mubr.f32.mxu0 0.0
        %5676 = vmatmul.mubr.f32.gmra.mrb[0].mxu0 %v5438
        %v5677 = vpop.f32.mrb[0].mxu0
        %v5678 = vadd.f32 0.0, %v5677
        %v5679 = vpop.f32.mrb[0].mxu0
        %v5680 = vadd.f32 0.0, %v5679
        %5681 = vmatprep.mubr.f32.mxu0 0.0
        %5682 = vmatmul.mubr.f32.gmra.mrb[0].mxu0 %v5441
        %v5683 = vpop.f32.mrb[0].mxu0
        %v5684 = vadd.f32 0.0, %v5683
        %v5685 = vpop.f32.mrb[0].mxu0
        %v5686 = vadd.f32 0.0, %v5685
        %5687 = vmatprep.mubr.f32.mxu0 0.0
        %5688 = vmatmul.mubr.f32.gmra.mrb[0].mxu0 %v5444
        %v5689 = vpop.f32.mrb[0].mxu0
        %v5690 = vadd.f32 0.0, %v5689
        %v5691 = vpop.f32.mrb[0].mxu0
        %v5692 = vadd.f32 0.0, %v5691
        %5693 = vmatprep.mubr.f32.mxu0 0.0
        %5694 = vmatmul.mubr.f32.gmra.mrb[0].mxu0 %v5447
        %v5695 = vpop.f32.mrb[0].mxu0
        %v5696 = vadd.f32 0.0, %v5695
        %v5697 = vpop.f32.mrb[0].mxu0
        %v5698 = vadd.f32 0.0, %v5697
        %5699 = vmatprep.mubr.f32.mxu0 0.0
        %5700 = vmatmul.mubr.f32.gmra.mrb[0].mxu0 %v5450
        %v5701 = vpop.f32.mrb[0].mxu0
        %v5702 = vadd.f32 0.0, %v5701
        %v5703 = vpop.f32.mrb[0].mxu0
        %v5704 = vadd.f32 0.0, %v5703
        %5705 = vmatprep.mubr.f32.mxu0 0.0
        %5706 = vmatmul.mubr.f32.gmra.mrb[0].mxu0 %v5453
        %v5707 = vpop.f32.mrb[0].mxu0
        %v5708 = vadd.f32 0.0, %v5707
        %v5709 = vpop.f32.mrb[0].mxu0
        %v5710 = vadd.f32 0.0, %v5709
        %5711 = vdwg.mxu0
        %v5712 = vmax.f32 %v5522, %v5534
        %v5713 = vmax.f32 %v5528, %v5540
        %v5714 = vmax.f32 %v5712, %v5546
        %v5715 = vmax.f32 %v5713, %v5552
        %v5716 = vmax.f32 %v5714, %v5558
        %v5717 = vmax.f32 %v5715, %v5564
        %v5718 = vmax.f32 %v5716, %v5570
        %v5719 = vmax.f32 %v5717, %v5576
        %v5720 = vmax.f32 %v5718, %v5582
        %v5721 = vmax.f32 %v5719, %v5588
        %v5722 = vmax.f32 %v5720, %v5594
        %v5723 = vmax.f32 %v5721, %v5600
        %v5724 = vmax.f32 %v5722, %v5606
        %v5725 = vmax.f32 %v5723, %v5612
        %v5726 = vmax.f32 %v5724, %v5618
        %v5727 = vmax.f32 %v5725, %v5624
        %v5728 = vmax.f32 %v5726, %v5630
        %v5729 = vmax.f32 %v5727, %v5636
        %v5730 = vmax.f32 %v5728, %v5642
        %v5731 = vmax.f32 %v5729, %v5648
        %v5732 = vmax.f32 %v5730, %v5654
        %v5733 = vmax.f32 %v5731, %v5660
        %v5734 = vmax.f32 %v5732, %v5666
        %v5735 = vmax.f32 %v5733, %v5672
        %v5736 = vmax.f32 %v5734, %v5678
        %v5737 = vmax.f32 %v5735, %v5684
        %v5738 = vmax.f32 %v5736, %v5690
        %v5739 = vmax.f32 %v5737, %v5696
        %v5740 = vmax.f32 %v5738, %v5702
        %v5741 = vmax.f32 %v5739, %v5708
        %v5742 = vmax.f32 %v5740, %v5741
        %v5743 = vrot.slane %v5742, 4
        %v5744 = vmax.f32 %v5742, %v5743
        %v5745 = vrot.slane %v5744, 2
        %v5746 = vmax.f32 %v5744, %v5745
        %v5747 = vrot.slane %v5746, 1
        %v5748 = vmax.f32 %v5746, %v5747
        %v5749 = vmax.f32 %v5524, %v5536
        %v5750 = vmax.f32 %v5530, %v5542
        %v5751 = vmax.f32 %v5749, %v5548
        %v5752 = vmax.f32 %v5750, %v5554
        %v5753 = vmax.f32 %v5751, %v5560
        %v5754 = vmax.f32 %v5752, %v5566
        %v5755 = vmax.f32 %v5753, %v5572
        %v5756 = vmax.f32 %v5754, %v5578
        %v5757 = vmax.f32 %v5755, %v5584
        %v5758 = vmax.f32 %v5756, %v5590
        %v5759 = vmax.f32 %v5757, %v5596
        %v5760 = vmax.f32 %v5758, %v5602
        %v5761 = vmax.f32 %v5759, %v5608
        %v5762 = vmax.f32 %v5760, %v5614
        %v5763 = vmax.f32 %v5761, %v5620
        %v5764 = vmax.f32 %v5762, %v5626
        %v5765 = vmax.f32 %v5763, %v5632
        %v5766 = vmax.f32 %v5764, %v5638
        %v5767 = vmax.f32 %v5765, %v5644
        %v5768 = vmax.f32 %v5766, %v5650
        %v5769 = vmax.f32 %v5767, %v5656
        %v5770 = vmax.f32 %v5768, %v5662
        %v5771 = vmax.f32 %v5769, %v5668
        %v5772 = vmax.f32 %v5770, %v5674
        %v5773 = vmax.f32 %v5771, %v5680
        %v5774 = vmax.f32 %v5772, %v5686
        %v5775 = vmax.f32 %v5773, %v5692
        %v5776 = vmax.f32 %v5774, %v5698
        %v5777 = vmax.f32 %v5775, %v5704
        %v5778 = vmax.f32 %v5776, %v5710
        %v5779 = vmax.f32 %v5777, %v5778
        %v5780 = vrot.slane %v5779, 4
        %v5781 = vmax.f32 %v5779, %v5780
        %v5782 = vrot.slane %v5781, 2
        %v5783 = vmax.f32 %v5781, %v5782
        %v5784 = vrot.slane %v5783, 1
        %v5785 = vmax.f32 %v5783, %v5784
        %v5786 = vsub.f32 %v5522, %v5748
        %v5787 = vsub.f32 %v5524, %v5785
        %v5788 = vsub.f32 %v5528, %v5748
        %v5789 = vsub.f32 %v5530, %v5785
        %v5790 = vsub.f32 %v5534, %v5748
        %v5791 = vsub.f32 %v5536, %v5785
        %v5792 = vsub.f32 %v5540, %v5748
        %v5793 = vsub.f32 %v5542, %v5785
        %v5794 = vsub.f32 %v5546, %v5748
        %v5795 = vsub.f32 %v5548, %v5785
        %v5796 = vsub.f32 %v5552, %v5748
        %v5797 = vsub.f32 %v5554, %v5785
        %v5798 = vsub.f32 %v5558, %v5748
        %v5799 = vsub.f32 %v5560, %v5785
        %v5800 = vsub.f32 %v5564, %v5748
        %v5801 = vsub.f32 %v5566, %v5785
        %v5802 = vsub.f32 %v5570, %v5748
        %v5803 = vsub.f32 %v5572, %v5785
        %v5804 = vsub.f32 %v5576, %v5748
        %v5805 = vsub.f32 %v5578, %v5785
        %v5806 = vsub.f32 %v5582, %v5748
        %v5807 = vsub.f32 %v5584, %v5785
        %v5808 = vsub.f32 %v5588, %v5748
        %v5809 = vsub.f32 %v5590, %v5785
        %v5810 = vsub.f32 %v5594, %v5748
        %v5811 = vsub.f32 %v5596, %v5785
        %v5812 = vsub.f32 %v5600, %v5748
        %v5813 = vsub.f32 %v5602, %v5785
        %v5814 = vsub.f32 %v5606, %v5748
        %v5815 = vsub.f32 %v5608, %v5785
        %v5816 = vsub.f32 %v5612, %v5748
        %v5817 = vsub.f32 %v5614, %v5785
        %v5818 = vsub.f32 %v5618, %v5748
        %v5819 = vsub.f32 %v5620, %v5785
        %v5820 = vsub.f32 %v5624, %v5748
        %v5821 = vsub.f32 %v5626, %v5785
        %v5822 = vsub.f32 %v5630, %v5748
        %v5823 = vsub.f32 %v5632, %v5785
        %v5824 = vsub.f32 %v5636, %v5748
        %v5825 = vsub.f32 %v5638, %v5785
        %v5826 = vsub.f32 %v5642, %v5748
        %v5827 = vsub.f32 %v5644, %v5785
        %v5828 = vsub.f32 %v5648, %v5748
        %v5829 = vsub.f32 %v5650, %v5785
        %v5830 = vsub.f32 %v5654, %v5748
        %v5831 = vsub.f32 %v5656, %v5785
        %v5832 = vsub.f32 %v5660, %v5748
        %v5833 = vsub.f32 %v5662, %v5785
        %v5834 = vsub.f32 %v5666, %v5748
        %v5835 = vsub.f32 %v5668, %v5785
        %v5836 = vsub.f32 %v5672, %v5748
        %v5837 = vsub.f32 %v5674, %v5785
        %v5838 = vsub.f32 %v5678, %v5748
        %v5839 = vsub.f32 %v5680, %v5785
        %v5840 = vsub.f32 %v5684, %v5748
        %v5841 = vsub.f32 %v5686, %v5785
        %v5842 = vsub.f32 %v5690, %v5748
        %v5843 = vsub.f32 %v5692, %v5785
        %v5844 = vsub.f32 %v5696, %v5748
        %v5845 = vsub.f32 %v5698, %v5785
        %v5846 = vsub.f32 %v5702, %v5748
        %v5847 = vsub.f32 %v5704, %v5785
        %v5848 = vsub.f32 %v5708, %v5748
        %v5849 = vsub.f32 %v5710, %v5785
        %v5850 = vmul.f32 %v5786, 1.442695
        %v5851 = vpow.pop %v5850
        %v5852 = vmul.f32 %v5787, 1.442695
        %v5853 = vpow.pop %v5852
        %v5854 = vmul.f32 %v5788, 1.442695
        %v5855 = vpow.pop %v5854
        %v5856 = vmul.f32 %v5789, 1.442695
        %v5857 = vpow.pop %v5856
        %v5858 = vmul.f32 %v5790, 1.442695
        %v5859 = vpow.pop %v5858
        %v5860 = vmul.f32 %v5791, 1.442695
        %v5861 = vpow.pop %v5860
        %v5862 = vmul.f32 %v5792, 1.442695
        %v5863 = vpow.pop %v5862
        %v5864 = vmul.f32 %v5793, 1.442695
        %v5865 = vpow.pop %v5864
        %v5866 = vmul.f32 %v5794, 1.442695
        %v5867 = vpow.pop %v5866
        %v5868 = vmul.f32 %v5795, 1.442695
        %v5869 = vpow.pop %v5868
        %v5870 = vmul.f32 %v5796, 1.442695
        %v5871 = vpow.pop %v5870
        %v5872 = vmul.f32 %v5797, 1.442695
        %v5873 = vpow.pop %v5872
        %v5874 = vmul.f32 %v5798, 1.442695
        %v5875 = vpow.pop %v5874
        %v5876 = vmul.f32 %v5799, 1.442695
        %v5877 = vpow.pop %v5876
        %v5878 = vmul.f32 %v5800, 1.442695
        %v5879 = vpow.pop %v5878
        %v5880 = vmul.f32 %v5801, 1.442695
        %v5881 = vpow.pop %v5880
        %v5882 = vmul.f32 %v5802, 1.442695
        %v5883 = vpow.pop %v5882
        %v5884 = vmul.f32 %v5803, 1.442695
        %v5885 = vpow.pop %v5884
        %v5886 = vmul.f32 %v5804, 1.442695
        %v5887 = vpow.pop %v5886
        %v5888 = vmul.f32 %v5805, 1.442695
        %v5889 = vpow.pop %v5888
        %v5890 = vmul.f32 %v5806, 1.442695
        %v5891 = vpow.pop %v5890
        %v5892 = vmul.f32 %v5807, 1.442695
        %v5893 = vpow.pop %v5892
        %v5894 = vmul.f32 %v5808, 1.442695
        %v5895 = vpow.pop %v5894
        %v5896 = vmul.f32 %v5809, 1.442695
        %v5897 = vpow.pop %v5896
        %v5898 = vmul.f32 %v5810, 1.442695
        %v5899 = vpow.pop %v5898
        %v5900 = vmul.f32 %v5811, 1.442695
        %v5901 = vpow.pop %v5900
        %v5902 = vmul.f32 %v5812, 1.442695
        %v5903 = vpow.pop %v5902
        %v5904 = vmul.f32 %v5813, 1.442695
        %v5905 = vpow.pop %v5904
        %v5906 = vmul.f32 %v5814, 1.442695
        %v5907 = vpow.pop %v5906
        %v5908 = vmul.f32 %v5815, 1.442695
        %v5909 = vpow.pop %v5908
        %v5910 = vmul.f32 %v5816, 1.442695
        %v5911 = vpow.pop %v5910
        %v5912 = vmul.f32 %v5817, 1.442695
        %v5913 = vpow.pop %v5912
        %v5914 = vmul.f32 %v5818, 1.442695
        %v5915 = vpow.pop %v5914
        %v5916 = vmul.f32 %v5819, 1.442695
        %v5917 = vpow.pop %v5916
        %v5918 = vmul.f32 %v5820, 1.442695
        %v5919 = vpow.pop %v5918
        %v5920 = vmul.f32 %v5821, 1.442695
        %v5921 = vpow.pop %v5920
        %v5922 = vmul.f32 %v5822, 1.442695
        %v5923 = vpow.pop %v5922
        %v5924 = vmul.f32 %v5823, 1.442695
        %v5925 = vpow.pop %v5924
        %v5926 = vmul.f32 %v5824, 1.442695
        %v5927 = vpow.pop %v5926
        %v5928 = vmul.f32 %v5825, 1.442695
        %v5929 = vpow.pop %v5928
        %v5930 = vmul.f32 %v5826, 1.442695
        %v5931 = vpow.pop %v5930
        %v5932 = vmul.f32 %v5827, 1.442695
        %v5933 = vpow.pop %v5932
        %v5934 = vmul.f32 %v5828, 1.442695
        %v5935 = vpow.pop %v5934
        %v5936 = vmul.f32 %v5829, 1.442695
        %v5937 = vpow.pop %v5936
        %v5938 = vmul.f32 %v5830, 1.442695
        %v5939 = vpow.pop %v5938
        %v5940 = vmul.f32 %v5831, 1.442695
        %v5941 = vpow.pop %v5940
        %v5942 = vmul.f32 %v5832, 1.442695
        %v5943 = vpow.pop %v5942
        %v5944 = vmul.f32 %v5833, 1.442695
        %v5945 = vpow.pop %v5944
        %v5946 = vmul.f32 %v5834, 1.442695
        %v5947 = vpow.pop %v5946
        %v5948 = vmul.f32 %v5835, 1.442695
        %v5949 = vpow.pop %v5948
        %v5950 = vmul.f32 %v5836, 1.442695
        %v5951 = vpow.pop %v5950
        %v5952 = vmul.f32 %v5837, 1.442695
        %v5953 = vpow.pop %v5952
        %v5954 = vmul.f32 %v5838, 1.442695
        %v5955 = vpow.pop %v5954
        %v5956 = vmul.f32 %v5839, 1.442695
        %v5957 = vpow.pop %v5956
        %v5958 = vmul.f32 %v5840, 1.442695
        %v5959 = vpow.pop %v5958
        %v5960 = vmul.f32 %v5841, 1.442695
        %v5961 = vpow.pop %v5960
        %v5962 = vmul.f32 %v5842, 1.442695
        %v5963 = vpow.pop %v5962
        %v5964 = vmul.f32 %v5843, 1.442695
        %v5965 = vpow.pop %v5964
        %v5966 = vmul.f32 %v5844, 1.442695
        %v5967 = vpow.pop %v5966
        %v5968 = vmul.f32 %v5845, 1.442695
        %v5969 = vpow.pop %v5968
        %v5970 = vmul.f32 %v5846, 1.442695
        %v5971 = vpow.pop %v5970
        %v5972 = vmul.f32 %v5847, 1.442695
        %v5973 = vpow.pop %v5972
        %v5974 = vmul.f32 %v5848, 1.442695
        %v5975 = vpow.pop %v5974
        %v5976 = vmul.f32 %v5849, 1.442695
        %v5977 = vpow.pop %v5976
        %v5978 = vadd.f32 %v5851, %v5855
        %v5979 = vadd.f32 %v5978, %v5859
        %v5980 = vadd.f32 %v5979, %v5863
        %v5981 = vadd.f32 %v5980, %v5867
        %v5982 = vadd.f32 %v5981, %v5871
        %v5983 = vadd.f32 %v5982, %v5875
        %v5984 = vadd.f32 %v5983, %v5879
        %v5985 = vadd.f32 %v5984, %v5883
        %v5986 = vadd.f32 %v5985, %v5887
        %v5987 = vadd.f32 %v5986, %v5891
        %v5988 = vadd.f32 %v5987, %v5895
        %v5989 = vadd.f32 %v5988, %v5899
        %v5990 = vadd.f32 %v5989, %v5903
        %v5991 = vadd.f32 %v5990, %v5907
        %v5992 = vadd.f32 %v5991, %v5911
        %v5993 = vadd.f32 %v5992, %v5915
        %v5994 = vadd.f32 %v5993, %v5919
        %v5995 = vadd.f32 %v5994, %v5923
        %v5996 = vadd.f32 %v5995, %v5927
        %v5997 = vadd.f32 %v5996, %v5931
        %v5998 = vadd.f32 %v5997, %v5935
        %v5999 = vadd.f32 %v5998, %v5939
        %v6000 = vadd.f32 %v5999, %v5943
        %v6001 = vadd.f32 %v6000, %v5947
        %v6002 = vadd.f32 %v6001, %v5951
        %v6003 = vadd.f32 %v6002, %v5955
        %v6004 = vadd.f32 %v6003, %v5959
        %v6005 = vadd.f32 %v6004, %v5963
        %v6006 = vadd.f32 %v6005, %v5967
        %v6007 = vadd.f32 %v6006, %v5971
        %v6008 = vadd.f32 %v6007, %v5975
        %v6009 = vrot.slane %v6008, 4
        %v6010 = vadd.f32 %v6008, %v6009
        %v6011 = vrot.slane %v6010, 2
        %v6012 = vadd.f32 %v6010, %v6011
        %v6013 = vrot.slane %v6012, 1
        %v6014 = vadd.f32 %v6012, %v6013
        %v6015 = vadd.f32 %v5853, %v5857
        %v6016 = vadd.f32 %v6015, %v5861
        %v6017 = vadd.f32 %v6016, %v5865
        %v6018 = vadd.f32 %v6017, %v5869
        %v6019 = vadd.f32 %v6018, %v5873
        %v6020 = vadd.f32 %v6019, %v5877
        %v6021 = vadd.f32 %v6020, %v5881
        %v6022 = vadd.f32 %v6021, %v5885
        %v6023 = vadd.f32 %v6022, %v5889
        %v6024 = vadd.f32 %v6023, %v5893
        %v6025 = vadd.f32 %v6024, %v5897
        %v6026 = vadd.f32 %v6025, %v5901
        %v6027 = vadd.f32 %v6026, %v5905
        %v6028 = vadd.f32 %v6027, %v5909
        %v6029 = vadd.f32 %v6028, %v5913
        %v6030 = vadd.f32 %v6029, %v5917
        %v6031 = vadd.f32 %v6030, %v5921
        %v6032 = vadd.f32 %v6031, %v5925
        %v6033 = vadd.f32 %v6032, %v5929
        %v6034 = vadd.f32 %v6033, %v5933
        %v6035 = vadd.f32 %v6034, %v5937
        %v6036 = vadd.f32 %v6035, %v5941
        %v6037 = vadd.f32 %v6036, %v5945
        %v6038 = vadd.f32 %v6037, %v5949
        %v6039 = vadd.f32 %v6038, %v5953
        %v6040 = vadd.f32 %v6039, %v5957
        %v6041 = vadd.f32 %v6040, %v5961
        %v6042 = vadd.f32 %v6041, %v5965
        %v6043 = vadd.f32 %v6042, %v5969
        %v6044 = vadd.f32 %v6043, %v5973
        %v6045 = vadd.f32 %v6044, %v5977
        %v6046 = vrot.slane %v6045, 4
        %v6047 = vadd.f32 %v6045, %v6046
        %v6048 = vrot.slane %v6047, 2
        %v6049 = vadd.f32 %v6047, %v6048
        %v6050 = vrot.slane %v6049, 1
        %v6051 = vadd.f32 %v6049, %v6050
        %6052 = vmatprep.subr.mxu0 %v5853
        %6053 = vmatpush1.msra.mxu0 %v5851
        %6054 = vmatprep.subr.mxu0 %v5857
        %6055 = vmatpush1.msra.mxu0 %v5855
        %6056 = vmatprep.subr.mxu0 %v5861
        %6057 = vmatpush1.msra.mxu0 %v5859
        %6058 = vmatprep.subr.mxu0 %v5865
        %6059 = vmatpush1.msra.mxu0 %v5863
        %6060 = vmatprep.subr.mxu0 %v5869
        %6061 = vmatpush1.msra.mxu0 %v5867
        %6062 = vmatprep.subr.mxu0 %v5873
        %6063 = vmatpush1.msra.mxu0 %v5871
        %6064 = vmatprep.subr.mxu0 %v5877
        %6065 = vmatpush1.msra.mxu0 %v5875
        %6066 = vmatprep.subr.mxu0 %v5881
        %6067 = vmatpush1.msra.mxu0 %v5879
        %6068 = vmatprep.subr.mxu0 %v5885
        %6069 = vmatpush1.msra.mxu0 %v5883
        %6070 = vmatprep.subr.mxu0 %v5889
        %6071 = vmatpush1.msra.mxu0 %v5887
        %6072 = vmatprep.subr.mxu0 %v5893
        %6073 = vmatpush1.msra.mxu0 %v5891
        %6074 = vmatprep.subr.mxu0 %v5897
        %6075 = vmatpush1.msra.mxu0 %v5895
        %6076 = vmatprep.subr.mxu0 %v5901
        %6077 = vmatpush1.msra.mxu0 %v5899
        %6078 = vmatprep.subr.mxu0 %v5905
        %6079 = vmatpush1.msra.mxu0 %v5903
        %6080 = vmatprep.subr.mxu0 %v5909
        %6081 = vmatpush1.msra.mxu0 %v5907
        %6082 = vmatprep.subr.mxu0 %v5913
        %6083 = vmatpush1.msra.mxu0 %v5911
        %6084 = vmatprep.subr.mxu0 %v5917
        %6085 = vmatpush1.msra.mxu0 %v5915
        %6086 = vmatprep.subr.mxu0 %v5921
        %6087 = vmatpush1.msra.mxu0 %v5919
        %6088 = vmatprep.subr.mxu0 %v5925
        %6089 = vmatpush1.msra.mxu0 %v5923
        %6090 = vmatprep.subr.mxu0 %v5929
        %6091 = vmatpush1.msra.mxu0 %v5927
        %6092 = vmatprep.subr.mxu0 %v5933
        %6093 = vmatpush1.msra.mxu0 %v5931
        %6094 = vmatprep.subr.mxu0 %v5937
        %6095 = vmatpush1.msra.mxu0 %v5935
        %6096 = vmatprep.subr.mxu0 %v5941
        %6097 = vmatpush1.msra.mxu0 %v5939
        %6098 = vmatprep.subr.mxu0 %v5945
        %6099 = vmatpush1.msra.mxu0 %v5943
        %6100 = vmatprep.subr.mxu0 %v5949
        %6101 = vmatpush1.msra.mxu0 %v5947
        %6102 = vmatprep.subr.mxu0 %v5953
        %6103 = vmatpush1.msra.mxu0 %v5951
        %6104 = vmatprep.subr.mxu0 %v5957
        %6105 = vmatpush1.msra.mxu0 %v5955
        %6106 = vmatprep.subr.mxu0 %v5961
        %6107 = vmatpush1.msra.mxu0 %v5959
        %6108 = vmatprep.subr.mxu0 %v5965
        %6109 = vmatpush1.msra.mxu0 %v5963
        %6110 = vmatprep.subr.mxu0 %v5969
        %6111 = vmatpush1.msra.mxu0 %v5967
        %6112 = vmatprep.subr.mxu0 %v5973
        %6113 = vmatpush1.msra.mxu0 %v5971
        %6114 = vmatprep.subr.mxu0 %v5977
        %6115 = vmatpush1.msra.mxu0 %v5975
        %6116 = vmatprep.mubr.f32.mxu0 %v791
        %6117 = vmatmul.mubr.f32.gmra.mrb[0].mxu0 %v789
        %v6118 = vpop.f32.mrb[0].mxu0
        %v6119 = vadd.f32 0.0, %v6118
        %v6120 = vpop.f32.mrb[0].mxu0
        %v6121 = vadd.f32 0.0, %v6120
        %6122 = vdwg.mxu0
        %v6123 = vrcp.pop %v6014
        %v6124 = vrcp.pop %v6051
        %v6125 = vmul.f32 %v6119, %v6123
        %v6126 = vmul.f32 %v6121, %v6124
        %6127 = vxpose.xlu0.b32.start [1/16] %v771, 128
        %6128 = vxpose.xlu0.b32.cont [2/16] 0.0, 128
        %6129 = vxpose.xlu0.b32.cont [3/16] 0.0, 128
        %6130 = vxpose.xlu0.b32.cont [4/16] 0.0, 128
        %6131 = vxpose.xlu0.b32.cont [5/16] 0.0, 128
        %6132 = vxpose.xlu0.b32.cont [6/16] 0.0, 128
        %6133 = vxpose.xlu0.b32.cont [7/16] 0.0, 128
        %6134 = vxpose.xlu0.b32.cont [8/16] 0.0, 128
        %6135 = vxpose.xlu0.b32.cont [9/16] 0.0, 128
        %6136 = vxpose.xlu0.b32.cont [10/16] 0.0, 128
        %6137 = vxpose.xlu0.b32.cont [11/16] 0.0, 128
        %6138 = vxpose.xlu0.b32.cont [12/16] 0.0, 128
        %6139 = vxpose.xlu0.b32.cont [13/16] 0.0, 128
        %6140 = vxpose.xlu0.b32.cont [14/16] 0.0, 128
        %6141 = vxpose.xlu0.b32.cont [15/16] 0.0, 128
        %6142 = vxpose.xlu0.b32.end [16/16] 0.0, 128
        %v6143 = vpop.trf.xlu0
        %v6144 = vpop.trf.xlu0
        %v6145 = vpop.trf.xlu0
        %v6146 = vpop.trf.xlu0
        %v6147 = vpop.trf.xlu0
        %v6148 = vpop.trf.xlu0
        %v6149 = vpop.trf.xlu0
        %v6150 = vpop.trf.xlu0
        %v6151 = vpop.trf.xlu0
        %v6152 = vpop.trf.xlu0
        %v6153 = vpop.trf.xlu0
        %v6154 = vpop.trf.xlu0
        %v6155 = vpop.trf.xlu0
        %v6156 = vpop.trf.xlu0
        %v6157 = vpop.trf.xlu0
        %v6158 = vpop.trf.xlu0
        %6159 = vxpose.xlu0.b32.start [1/16] %v773, 128
        %6160 = vxpose.xlu0.b32.cont [2/16] 0.0, 128
        %6161 = vxpose.xlu0.b32.cont [3/16] 0.0, 128
        %6162 = vxpose.xlu0.b32.cont [4/16] 0.0, 128
        %6163 = vxpose.xlu0.b32.cont [5/16] 0.0, 128
        %6164 = vxpose.xlu0.b32.cont [6/16] 0.0, 128
        %6165 = vxpose.xlu0.b32.cont [7/16] 0.0, 128
        %6166 = vxpose.xlu0.b32.cont [8/16] 0.0, 128
        %6167 = vxpose.xlu0.b32.cont [9/16] 0.0, 128
        %6168 = vxpose.xlu0.b32.cont [10/16] 0.0, 128
        %6169 = vxpose.xlu0.b32.cont [11/16] 0.0, 128
        %6170 = vxpose.xlu0.b32.cont [12/16] 0.0, 128
        %6171 = vxpose.xlu0.b32.cont [13/16] 0.0, 128
        %6172 = vxpose.xlu0.b32.cont [14/16] 0.0, 128
        %6173 = vxpose.xlu0.b32.cont [15/16] 0.0, 128
        %6174 = vxpose.xlu0.b32.end [16/16] 0.0, 128
        %v6175 = vpop.trf.xlu0
        %v6176 = vpop.trf.xlu0
        %v6177 = vpop.trf.xlu0
        %v6178 = vpop.trf.xlu0
        %v6179 = vpop.trf.xlu0
        %v6180 = vpop.trf.xlu0
        %v6181 = vpop.trf.xlu0
        %v6182 = vpop.trf.xlu0
        %v6183 = vpop.trf.xlu0
        %v6184 = vpop.trf.xlu0
        %v6185 = vpop.trf.xlu0
        %v6186 = vpop.trf.xlu0
        %v6187 = vpop.trf.xlu0
        %v6188 = vpop.trf.xlu0
        %v6189 = vpop.trf.xlu0
        %v6190 = vpop.trf.xlu0
        %v6192 = vsel %vm1198, %v6143, 0
        %v6195 = vsel %vm1198, %v6144, 0
        %v6198 = vsel %vm1198, %v6145, 0
        %v6201 = vsel %vm1198, %v6146, 0
        %v6204 = vsel %vm1198, %v6147, 0
        %v6207 = vsel %vm1198, %v6148, 0
        %v6210 = vsel %vm1198, %v6149, 0
        %v6213 = vsel %vm1198, %v6150, 0
        %v6216 = vsel %vm1198, %v6151, 0
        %v6219 = vsel %vm1198, %v6152, 0
        %v6222 = vsel %vm1198, %v6153, 0
        %v6225 = vsel %vm1198, %v6154, 0
        %v6228 = vsel %vm1198, %v6155, 0
        %v6231 = vsel %vm1198, %v6156, 0
        %v6234 = vsel %vm1198, %v6157, 0
        %v6237 = vsel %vm1198, %v6158, 0
        %v6240 = vsel %vm1198, %v6175, 0
        %v6243 = vsel %vm1198, %v6176, 0
        %v6246 = vsel %vm1198, %v6177, 0
        %v6249 = vsel %vm1198, %v6178, 0
        %v6252 = vsel %vm1198, %v6179, 0
        %v6255 = vsel %vm1198, %v6180, 0
        %v6258 = vsel %vm1198, %v6181, 0
        %v6261 = vsel %vm1198, %v6182, 0
        %v6264 = vsel %vm1198, %v6183, 0
        %v6267 = vsel %vm1198, %v6184, 0
        %v6270 = vsel %vm1198, %v6185, 0
        %v6273 = vsel %vm1198, %v6186, 0
        %v6276 = vsel %vm1198, %v6187, 0
        %v6279 = vsel %vm1198, %v6188, 0
        %v6282 = vsel %vm1198, %v6189, 0
        %v6285 = vsel %vm1198, %v6190, 0
        %6287 = vmatprep.subr.mxu0 %v1078
        %6288 = vmatpush1.msra.mxu0 %v1076
        %6289 = vmatprep.subr.mxu0 0.0
        %6290 = vmatpush1.msra.mxu0 0.0
        %6291 = vmatprep.subr.mxu0 0.0
        %6292 = vmatpush1.msra.mxu0 0.0
        %6293 = vmatprep.subr.mxu0 0.0
        %6294 = vmatpush1.msra.mxu0 0.0
        %6295 = vmatprep.subr.mxu0 0.0
        %6296 = vmatpush1.msra.mxu0 0.0
        %6297 = vmatprep.subr.mxu0 0.0
        %6298 = vmatpush1.msra.mxu0 0.0
        %6299 = vmatprep.subr.mxu0 0.0
        %6300 = vmatpush1.msra.mxu0 0.0
        %6301 = vmatprep.subr.mxu0 0.0
        %6302 = vmatpush1.msra.mxu0 0.0
        %6303 = vmatprep.subr.mxu0 0.0
        %6304 = vmatpush1.msra.mxu0 0.0
        %6305 = vmatprep.subr.mxu0 0.0
        %6306 = vmatpush1.msra.mxu0 0.0
        %6307 = vmatprep.subr.mxu0 0.0
        %6308 = vmatpush1.msra.mxu0 0.0
        %6309 = vmatprep.subr.mxu0 0.0
        %6310 = vmatpush1.msra.mxu0 0.0
        %6311 = vmatprep.subr.mxu0 0.0
        %6312 = vmatpush1.msra.mxu0 0.0
        %6313 = vmatprep.subr.mxu0 0.0
        %6314 = vmatpush1.msra.mxu0 0.0
        %6315 = vmatprep.subr.mxu0 0.0
        %6316 = vmatpush1.msra.mxu0 0.0
        %6317 = vmatprep.subr.mxu0 0.0
        %6318 = vmatpush1.msra.mxu0 0.0
        %6319 = vmatprep.subr.mxu0 0.0
        %6320 = vmatpush1.msra.mxu0 0.0
        %6321 = vmatprep.subr.mxu0 0.0
        %6322 = vmatpush1.msra.mxu0 0.0
        %6323 = vmatprep.subr.mxu0 0.0
        %6324 = vmatpush1.msra.mxu0 0.0
        %6325 = vmatprep.subr.mxu0 0.0
        %6326 = vmatpush1.msra.mxu0 0.0
        %6327 = vmatprep.subr.mxu0 0.0
        %6328 = vmatpush1.msra.mxu0 0.0
        %6329 = vmatprep.subr.mxu0 0.0
        %6330 = vmatpush1.msra.mxu0 0.0
        %6331 = vmatprep.subr.mxu0 0.0
        %6332 = vmatpush1.msra.mxu0 0.0
        %6333 = vmatprep.subr.mxu0 0.0
        %6334 = vmatpush1.msra.mxu0 0.0
        %6335 = vmatprep.subr.mxu0 0.0
        %6336 = vmatpush1.msra.mxu0 0.0
        %6337 = vmatprep.subr.mxu0 0.0
        %6338 = vmatpush1.msra.mxu0 0.0
        %6339 = vmatprep.subr.mxu0 0.0
        %6340 = vmatpush1.msra.mxu0 0.0
        %6341 = vmatprep.subr.mxu0 0.0
        %6342 = vmatpush1.msra.mxu0 0.0
        %6343 = vmatprep.subr.mxu0 0.0
        %6344 = vmatpush1.msra.mxu0 0.0
        %6345 = vmatprep.subr.mxu0 0.0
        %6346 = vmatpush1.msra.mxu0 0.0
        %6347 = vmatprep.subr.mxu0 0.0
        %6348 = vmatpush1.msra.mxu0 0.0
        %6349 = vmatprep.subr.mxu0 0.0
        %6350 = vmatpush1.msra.mxu0 0.0
        %6351 = vmatprep.mubr.f32.mxu0 0.0
        %6352 = vmatmul.mubr.f32.gmra.mrb[0].mxu0 %v6192
        %v6353 = vpop.f32.mrb[0].mxu0
        %v6354 = vadd.f32 0.0, %v6353
        %v6355 = vpop.f32.mrb[0].mxu0
        %v6356 = vadd.f32 0.0, %v6355
        %6357 = vmatprep.mubr.f32.mxu0 0.0
        %6358 = vmatmul.mubr.f32.gmra.mrb[0].mxu0 %v6195
        %v6359 = vpop.f32.mrb[0].mxu0
        %v6360 = vadd.f32 0.0, %v6359
        %v6361 = vpop.f32.mrb[0].mxu0
        %v6362 = vadd.f32 0.0, %v6361
        %6363 = vmatprep.mubr.f32.mxu0 0.0
        %6364 = vmatmul.mubr.f32.gmra.mrb[0].mxu0 %v6198
        %v6365 = vpop.f32.mrb[0].mxu0
        %v6366 = vadd.f32 0.0, %v6365
        %v6367 = vpop.f32.mrb[0].mxu0
        %v6368 = vadd.f32 0.0, %v6367
        %6369 = vmatprep.mubr.f32.mxu0 0.0
        %6370 = vmatmul.mubr.f32.gmra.mrb[0].mxu0 %v6201
        %v6371 = vpop.f32.mrb[0].mxu0
        %v6372 = vadd.f32 0.0, %v6371
        %v6373 = vpop.f32.mrb[0].mxu0
        %v6374 = vadd.f32 0.0, %v6373
        %6375 = vmatprep.mubr.f32.mxu0 0.0
        %6376 = vmatmul.mubr.f32.gmra.mrb[0].mxu0 %v6204
        %v6377 = vpop.f32.mrb[0].mxu0
        %v6378 = vadd.f32 0.0, %v6377
        %v6379 = vpop.f32.mrb[0].mxu0
        %v6380 = vadd.f32 0.0, %v6379
        %6381 = vmatprep.mubr.f32.mxu0 0.0
        %6382 = vmatmul.mubr.f32.gmra.mrb[0].mxu0 %v6207
        %v6383 = vpop.f32.mrb[0].mxu0
        %v6384 = vadd.f32 0.0, %v6383
        %v6385 = vpop.f32.mrb[0].mxu0
        %v6386 = vadd.f32 0.0, %v6385
        %6387 = vmatprep.mubr.f32.mxu0 0.0
        %6388 = vmatmul.mubr.f32.gmra.mrb[0].mxu0 %v6210
        %v6389 = vpop.f32.mrb[0].mxu0
        %v6390 = vadd.f32 0.0, %v6389
        %v6391 = vpop.f32.mrb[0].mxu0
        %v6392 = vadd.f32 0.0, %v6391
        %6393 = vmatprep.mubr.f32.mxu0 0.0
        %6394 = vmatmul.mubr.f32.gmra.mrb[0].mxu0 %v6213
        %v6395 = vpop.f32.mrb[0].mxu0
        %v6396 = vadd.f32 0.0, %v6395
        %v6397 = vpop.f32.mrb[0].mxu0
        %v6398 = vadd.f32 0.0, %v6397
        %6399 = vmatprep.mubr.f32.mxu0 0.0
        %6400 = vmatmul.mubr.f32.gmra.mrb[0].mxu0 %v6216
        %v6401 = vpop.f32.mrb[0].mxu0
        %v6402 = vadd.f32 0.0, %v6401
        %v6403 = vpop.f32.mrb[0].mxu0
        %v6404 = vadd.f32 0.0, %v6403
        %6405 = vmatprep.mubr.f32.mxu0 0.0
        %6406 = vmatmul.mubr.f32.gmra.mrb[0].mxu0 %v6219
        %v6407 = vpop.f32.mrb[0].mxu0
        %v6408 = vadd.f32 0.0, %v6407
        %v6409 = vpop.f32.mrb[0].mxu0
        %v6410 = vadd.f32 0.0, %v6409
        %6411 = vmatprep.mubr.f32.mxu0 0.0
        %6412 = vmatmul.mubr.f32.gmra.mrb[0].mxu0 %v6222
        %v6413 = vpop.f32.mrb[0].mxu0
        %v6414 = vadd.f32 0.0, %v6413
        %v6415 = vpop.f32.mrb[0].mxu0
        %v6416 = vadd.f32 0.0, %v6415
        %6417 = vmatprep.mubr.f32.mxu0 0.0
        %6418 = vmatmul.mubr.f32.gmra.mrb[0].mxu0 %v6225
        %v6419 = vpop.f32.mrb[0].mxu0
        %v6420 = vadd.f32 0.0, %v6419
        %v6421 = vpop.f32.mrb[0].mxu0
        %v6422 = vadd.f32 0.0, %v6421
        %6423 = vmatprep.mubr.f32.mxu0 0.0
        %6424 = vmatmul.mubr.f32.gmra.mrb[0].mxu0 %v6228
        %v6425 = vpop.f32.mrb[0].mxu0
        %v6426 = vadd.f32 0.0, %v6425
        %v6427 = vpop.f32.mrb[0].mxu0
        %v6428 = vadd.f32 0.0, %v6427
        %6429 = vmatprep.mubr.f32.mxu0 0.0
        %6430 = vmatmul.mubr.f32.gmra.mrb[0].mxu0 %v6231
        %v6431 = vpop.f32.mrb[0].mxu0
        %v6432 = vadd.f32 0.0, %v6431
        %v6433 = vpop.f32.mrb[0].mxu0
        %v6434 = vadd.f32 0.0, %v6433
        %6435 = vmatprep.mubr.f32.mxu0 0.0
        %6436 = vmatmul.mubr.f32.gmra.mrb[0].mxu0 %v6234
        %v6437 = vpop.f32.mrb[0].mxu0
        %v6438 = vadd.f32 0.0, %v6437
        %v6439 = vpop.f32.mrb[0].mxu0
        %v6440 = vadd.f32 0.0, %v6439
        %6441 = vmatprep.mubr.f32.mxu0 0.0
        %6442 = vmatmul.mubr.f32.gmra.mrb[0].mxu0 %v6237
        %v6443 = vpop.f32.mrb[0].mxu0
        %v6444 = vadd.f32 0.0, %v6443
        %v6445 = vpop.f32.mrb[0].mxu0
        %v6446 = vadd.f32 0.0, %v6445
        %6447 = vmatprep.mubr.f32.mxu0 0.0
        %6448 = vmatmul.mubr.f32.gmra.mrb[0].mxu0 %v6240
        %v6449 = vpop.f32.mrb[0].mxu0
        %v6450 = vadd.f32 0.0, %v6449
        %v6451 = vpop.f32.mrb[0].mxu0
        %v6452 = vadd.f32 0.0, %v6451
        %6453 = vmatprep.mubr.f32.mxu0 0.0
        %6454 = vmatmul.mubr.f32.gmra.mrb[0].mxu0 %v6243
        %v6455 = vpop.f32.mrb[0].mxu0
        %v6456 = vadd.f32 0.0, %v6455
        %v6457 = vpop.f32.mrb[0].mxu0
        %v6458 = vadd.f32 0.0, %v6457
        %6459 = vmatprep.mubr.f32.mxu0 0.0
        %6460 = vmatmul.mubr.f32.gmra.mrb[0].mxu0 %v6246
        %v6461 = vpop.f32.mrb[0].mxu0
        %v6462 = vadd.f32 0.0, %v6461
        %v6463 = vpop.f32.mrb[0].mxu0
        %v6464 = vadd.f32 0.0, %v6463
        %6465 = vmatprep.mubr.f32.mxu0 0.0
        %6466 = vmatmul.mubr.f32.gmra.mrb[0].mxu0 %v6249
        %v6467 = vpop.f32.mrb[0].mxu0
        %v6468 = vadd.f32 0.0, %v6467
        %v6469 = vpop.f32.mrb[0].mxu0
        %v6470 = vadd.f32 0.0, %v6469
        %6471 = vmatprep.mubr.f32.mxu0 0.0
        %6472 = vmatmul.mubr.f32.gmra.mrb[0].mxu0 %v6252
        %v6473 = vpop.f32.mrb[0].mxu0
        %v6474 = vadd.f32 0.0, %v6473
        %v6475 = vpop.f32.mrb[0].mxu0
        %v6476 = vadd.f32 0.0, %v6475
        %6477 = vmatprep.mubr.f32.mxu0 0.0
        %6478 = vmatmul.mubr.f32.gmra.mrb[0].mxu0 %v6255
        %v6479 = vpop.f32.mrb[0].mxu0
        %v6480 = vadd.f32 0.0, %v6479
        %v6481 = vpop.f32.mrb[0].mxu0
        %v6482 = vadd.f32 0.0, %v6481
        %6483 = vmatprep.mubr.f32.mxu0 0.0
        %6484 = vmatmul.mubr.f32.gmra.mrb[0].mxu0 %v6258
        %v6485 = vpop.f32.mrb[0].mxu0
        %v6486 = vadd.f32 0.0, %v6485
        %v6487 = vpop.f32.mrb[0].mxu0
        %v6488 = vadd.f32 0.0, %v6487
        %6489 = vmatprep.mubr.f32.mxu0 0.0
        %6490 = vmatmul.mubr.f32.gmra.mrb[0].mxu0 %v6261
        %v6491 = vpop.f32.mrb[0].mxu0
        %v6492 = vadd.f32 0.0, %v6491
        %v6493 = vpop.f32.mrb[0].mxu0
        %v6494 = vadd.f32 0.0, %v6493
        %6495 = vmatprep.mubr.f32.mxu0 0.0
        %6496 = vmatmul.mubr.f32.gmra.mrb[0].mxu0 %v6264
        %v6497 = vpop.f32.mrb[0].mxu0
        %v6498 = vadd.f32 0.0, %v6497
        %v6499 = vpop.f32.mrb[0].mxu0
        %v6500 = vadd.f32 0.0, %v6499
        %6501 = vmatprep.mubr.f32.mxu0 0.0
        %6502 = vmatmul.mubr.f32.gmra.mrb[0].mxu0 %v6267
        %v6503 = vpop.f32.mrb[0].mxu0
        %v6504 = vadd.f32 0.0, %v6503
        %v6505 = vpop.f32.mrb[0].mxu0
        %v6506 = vadd.f32 0.0, %v6505
        %6507 = vmatprep.mubr.f32.mxu0 0.0
        %6508 = vmatmul.mubr.f32.gmra.mrb[0].mxu0 %v6270
        %v6509 = vpop.f32.mrb[0].mxu0
        %v6510 = vadd.f32 0.0, %v6509
        %v6511 = vpop.f32.mrb[0].mxu0
        %v6512 = vadd.f32 0.0, %v6511
        %6513 = vmatprep.mubr.f32.mxu0 0.0
        %6514 = vmatmul.mubr.f32.gmra.mrb[0].mxu0 %v6273
        %v6515 = vpop.f32.mrb[0].mxu0
        %v6516 = vadd.f32 0.0, %v6515
        %v6517 = vpop.f32.mrb[0].mxu0
        %v6518 = vadd.f32 0.0, %v6517
        %6519 = vmatprep.mubr.f32.mxu0 0.0
        %6520 = vmatmul.mubr.f32.gmra.mrb[0].mxu0 %v6276
        %v6521 = vpop.f32.mrb[0].mxu0
        %v6522 = vadd.f32 0.0, %v6521
        %v6523 = vpop.f32.mrb[0].mxu0
        %v6524 = vadd.f32 0.0, %v6523
        %6525 = vmatprep.mubr.f32.mxu0 0.0
        %6526 = vmatmul.mubr.f32.gmra.mrb[0].mxu0 %v6279
        %v6527 = vpop.f32.mrb[0].mxu0
        %v6528 = vadd.f32 0.0, %v6527
        %v6529 = vpop.f32.mrb[0].mxu0
        %v6530 = vadd.f32 0.0, %v6529
        %6531 = vmatprep.mubr.f32.mxu0 0.0
        %6532 = vmatmul.mubr.f32.gmra.mrb[0].mxu0 %v6282
        %v6533 = vpop.f32.mrb[0].mxu0
        %v6534 = vadd.f32 0.0, %v6533
        %v6535 = vpop.f32.mrb[0].mxu0
        %v6536 = vadd.f32 0.0, %v6535
        %6537 = vmatprep.mubr.f32.mxu0 0.0
        %6538 = vmatmul.mubr.f32.gmra.mrb[0].mxu0 %v6285
        %v6539 = vpop.f32.mrb[0].mxu0
        %v6540 = vadd.f32 0.0, %v6539
        %v6541 = vpop.f32.mrb[0].mxu0
        %v6542 = vadd.f32 0.0, %v6541
        %6543 = vdwg.mxu0
        %v6544 = vmax.f32 %v6354, %v6366
        %v6545 = vmax.f32 %v6360, %v6372
        %v6546 = vmax.f32 %v6544, %v6378
        %v6547 = vmax.f32 %v6545, %v6384
        %v6548 = vmax.f32 %v6546, %v6390
        %v6549 = vmax.f32 %v6547, %v6396
        %v6550 = vmax.f32 %v6548, %v6402
        %v6551 = vmax.f32 %v6549, %v6408
        %v6552 = vmax.f32 %v6550, %v6414
        %v6553 = vmax.f32 %v6551, %v6420
        %v6554 = vmax.f32 %v6552, %v6426
        %v6555 = vmax.f32 %v6553, %v6432
        %v6556 = vmax.f32 %v6554, %v6438
        %v6557 = vmax.f32 %v6555, %v6444
        %v6558 = vmax.f32 %v6556, %v6450
        %v6559 = vmax.f32 %v6557, %v6456
        %v6560 = vmax.f32 %v6558, %v6462
        %v6561 = vmax.f32 %v6559, %v6468
        %v6562 = vmax.f32 %v6560, %v6474
        %v6563 = vmax.f32 %v6561, %v6480
        %v6564 = vmax.f32 %v6562, %v6486
        %v6565 = vmax.f32 %v6563, %v6492
        %v6566 = vmax.f32 %v6564, %v6498
        %v6567 = vmax.f32 %v6565, %v6504
        %v6568 = vmax.f32 %v6566, %v6510
        %v6569 = vmax.f32 %v6567, %v6516
        %v6570 = vmax.f32 %v6568, %v6522
        %v6571 = vmax.f32 %v6569, %v6528
        %v6572 = vmax.f32 %v6570, %v6534
        %v6573 = vmax.f32 %v6571, %v6540
        %v6574 = vmax.f32 %v6572, %v6573
        %v6575 = vrot.slane %v6574, 4
        %v6576 = vmax.f32 %v6574, %v6575
        %v6577 = vrot.slane %v6576, 2
        %v6578 = vmax.f32 %v6576, %v6577
        %v6579 = vrot.slane %v6578, 1
        %v6580 = vmax.f32 %v6578, %v6579
        %v6581 = vmax.f32 %v6356, %v6368
        %v6582 = vmax.f32 %v6362, %v6374
        %v6583 = vmax.f32 %v6581, %v6380
        %v6584 = vmax.f32 %v6582, %v6386
        %v6585 = vmax.f32 %v6583, %v6392
        %v6586 = vmax.f32 %v6584, %v6398
        %v6587 = vmax.f32 %v6585, %v6404
        %v6588 = vmax.f32 %v6586, %v6410
        %v6589 = vmax.f32 %v6587, %v6416
        %v6590 = vmax.f32 %v6588, %v6422
        %v6591 = vmax.f32 %v6589, %v6428
        %v6592 = vmax.f32 %v6590, %v6434
        %v6593 = vmax.f32 %v6591, %v6440
        %v6594 = vmax.f32 %v6592, %v6446
        %v6595 = vmax.f32 %v6593, %v6452
        %v6596 = vmax.f32 %v6594, %v6458
        %v6597 = vmax.f32 %v6595, %v6464
        %v6598 = vmax.f32 %v6596, %v6470
        %v6599 = vmax.f32 %v6597, %v6476
        %v6600 = vmax.f32 %v6598, %v6482
        %v6601 = vmax.f32 %v6599, %v6488
        %v6602 = vmax.f32 %v6600, %v6494
        %v6603 = vmax.f32 %v6601, %v6500
        %v6604 = vmax.f32 %v6602, %v6506
        %v6605 = vmax.f32 %v6603, %v6512
        %v6606 = vmax.f32 %v6604, %v6518
        %v6607 = vmax.f32 %v6605, %v6524
        %v6608 = vmax.f32 %v6606, %v6530
        %v6609 = vmax.f32 %v6607, %v6536
        %v6610 = vmax.f32 %v6608, %v6542
        %v6611 = vmax.f32 %v6609, %v6610
        %v6612 = vrot.slane %v6611, 4
        %v6613 = vmax.f32 %v6611, %v6612
        %v6614 = vrot.slane %v6613, 2
        %v6615 = vmax.f32 %v6613, %v6614
        %v6616 = vrot.slane %v6615, 1
        %v6617 = vmax.f32 %v6615, %v6616
        %v6618 = vsub.f32 %v6354, %v6580
        %v6619 = vsub.f32 %v6356, %v6617
        %v6620 = vsub.f32 %v6360, %v6580
        %v6621 = vsub.f32 %v6362, %v6617
        %v6622 = vsub.f32 %v6366, %v6580
        %v6623 = vsub.f32 %v6368, %v6617
        %v6624 = vsub.f32 %v6372, %v6580
        %v6625 = vsub.f32 %v6374, %v6617
        %v6626 = vsub.f32 %v6378, %v6580
        %v6627 = vsub.f32 %v6380, %v6617
        %v6628 = vsub.f32 %v6384, %v6580
        %v6629 = vsub.f32 %v6386, %v6617
        %v6630 = vsub.f32 %v6390, %v6580
        %v6631 = vsub.f32 %v6392, %v6617
        %v6632 = vsub.f32 %v6396, %v6580
        %v6633 = vsub.f32 %v6398, %v6617
        %v6634 = vsub.f32 %v6402, %v6580
        %v6635 = vsub.f32 %v6404, %v6617
        %v6636 = vsub.f32 %v6408, %v6580
        %v6637 = vsub.f32 %v6410, %v6617
        %v6638 = vsub.f32 %v6414, %v6580
        %v6639 = vsub.f32 %v6416, %v6617
        %v6640 = vsub.f32 %v6420, %v6580
        %v6641 = vsub.f32 %v6422, %v6617
        %v6642 = vsub.f32 %v6426, %v6580
        %v6643 = vsub.f32 %v6428, %v6617
        %v6644 = vsub.f32 %v6432, %v6580
        %v6645 = vsub.f32 %v6434, %v6617
        %v6646 = vsub.f32 %v6438, %v6580
        %v6647 = vsub.f32 %v6440, %v6617
        %v6648 = vsub.f32 %v6444, %v6580
        %v6649 = vsub.f32 %v6446, %v6617
        %v6650 = vsub.f32 %v6450, %v6580
        %v6651 = vsub.f32 %v6452, %v6617
        %v6652 = vsub.f32 %v6456, %v6580
        %v6653 = vsub.f32 %v6458, %v6617
        %v6654 = vsub.f32 %v6462, %v6580
        %v6655 = vsub.f32 %v6464, %v6617
        %v6656 = vsub.f32 %v6468, %v6580
        %v6657 = vsub.f32 %v6470, %v6617
        %v6658 = vsub.f32 %v6474, %v6580
        %v6659 = vsub.f32 %v6476, %v6617
        %v6660 = vsub.f32 %v6480, %v6580
        %v6661 = vsub.f32 %v6482, %v6617
        %v6662 = vsub.f32 %v6486, %v6580
        %v6663 = vsub.f32 %v6488, %v6617
        %v6664 = vsub.f32 %v6492, %v6580
        %v6665 = vsub.f32 %v6494, %v6617
        %v6666 = vsub.f32 %v6498, %v6580
        %v6667 = vsub.f32 %v6500, %v6617
        %v6668 = vsub.f32 %v6504, %v6580
        %v6669 = vsub.f32 %v6506, %v6617
        %v6670 = vsub.f32 %v6510, %v6580
        %v6671 = vsub.f32 %v6512, %v6617
        %v6672 = vsub.f32 %v6516, %v6580
        %v6673 = vsub.f32 %v6518, %v6617
        %v6674 = vsub.f32 %v6522, %v6580
        %v6675 = vsub.f32 %v6524, %v6617
        %v6676 = vsub.f32 %v6528, %v6580
        %v6677 = vsub.f32 %v6530, %v6617
        %v6678 = vsub.f32 %v6534, %v6580
        %v6679 = vsub.f32 %v6536, %v6617
        %v6680 = vsub.f32 %v6540, %v6580
        %v6681 = vsub.f32 %v6542, %v6617
        %v6682 = vmul.f32 %v6618, 1.442695
        %v6683 = vpow.pop %v6682
        %v6684 = vmul.f32 %v6619, 1.442695
        %v6685 = vpow.pop %v6684
        %v6686 = vmul.f32 %v6620, 1.442695
        %v6687 = vpow.pop %v6686
        %v6688 = vmul.f32 %v6621, 1.442695
        %v6689 = vpow.pop %v6688
        %v6690 = vmul.f32 %v6622, 1.442695
        %v6691 = vpow.pop %v6690
        %v6692 = vmul.f32 %v6623, 1.442695
        %v6693 = vpow.pop %v6692
        %v6694 = vmul.f32 %v6624, 1.442695
        %v6695 = vpow.pop %v6694
        %v6696 = vmul.f32 %v6625, 1.442695
        %v6697 = vpow.pop %v6696
        %v6698 = vmul.f32 %v6626, 1.442695
        %v6699 = vpow.pop %v6698
        %v6700 = vmul.f32 %v6627, 1.442695
        %v6701 = vpow.pop %v6700
        %v6702 = vmul.f32 %v6628, 1.442695
        %v6703 = vpow.pop %v6702
        %v6704 = vmul.f32 %v6629, 1.442695
        %v6705 = vpow.pop %v6704
        %v6706 = vmul.f32 %v6630, 1.442695
        %v6707 = vpow.pop %v6706
        %v6708 = vmul.f32 %v6631, 1.442695
        %v6709 = vpow.pop %v6708
        %v6710 = vmul.f32 %v6632, 1.442695
        %v6711 = vpow.pop %v6710
        %v6712 = vmul.f32 %v6633, 1.442695
        %v6713 = vpow.pop %v6712
        %v6714 = vmul.f32 %v6634, 1.442695
        %v6715 = vpow.pop %v6714
        %v6716 = vmul.f32 %v6635, 1.442695
        %v6717 = vpow.pop %v6716
        %v6718 = vmul.f32 %v6636, 1.442695
        %v6719 = vpow.pop %v6718
        %v6720 = vmul.f32 %v6637, 1.442695
        %v6721 = vpow.pop %v6720
        %v6722 = vmul.f32 %v6638, 1.442695
        %v6723 = vpow.pop %v6722
        %v6724 = vmul.f32 %v6639, 1.442695
        %v6725 = vpow.pop %v6724
        %v6726 = vmul.f32 %v6640, 1.442695
        %v6727 = vpow.pop %v6726
        %v6728 = vmul.f32 %v6641, 1.442695
        %v6729 = vpow.pop %v6728
        %v6730 = vmul.f32 %v6642, 1.442695
        %v6731 = vpow.pop %v6730
        %v6732 = vmul.f32 %v6643, 1.442695
        %v6733 = vpow.pop %v6732
        %v6734 = vmul.f32 %v6644, 1.442695
        %v6735 = vpow.pop %v6734
        %v6736 = vmul.f32 %v6645, 1.442695
        %v6737 = vpow.pop %v6736
        %v6738 = vmul.f32 %v6646, 1.442695
        %v6739 = vpow.pop %v6738
        %v6740 = vmul.f32 %v6647, 1.442695
        %v6741 = vpow.pop %v6740
        %v6742 = vmul.f32 %v6648, 1.442695
        %v6743 = vpow.pop %v6742
        %v6744 = vmul.f32 %v6649, 1.442695
        %v6745 = vpow.pop %v6744
        %v6746 = vmul.f32 %v6650, 1.442695
        %v6747 = vpow.pop %v6746
        %v6748 = vmul.f32 %v6651, 1.442695
        %v6749 = vpow.pop %v6748
        %v6750 = vmul.f32 %v6652, 1.442695
        %v6751 = vpow.pop %v6750
        %v6752 = vmul.f32 %v6653, 1.442695
        %v6753 = vpow.pop %v6752
        %v6754 = vmul.f32 %v6654, 1.442695
        %v6755 = vpow.pop %v6754
        %v6756 = vmul.f32 %v6655, 1.442695
        %v6757 = vpow.pop %v6756
        %v6758 = vmul.f32 %v6656, 1.442695
        %v6759 = vpow.pop %v6758
        %v6760 = vmul.f32 %v6657, 1.442695
        %v6761 = vpow.pop %v6760
        %v6762 = vmul.f32 %v6658, 1.442695
        %v6763 = vpow.pop %v6762
        %v6764 = vmul.f32 %v6659, 1.442695
        %v6765 = vpow.pop %v6764
        %v6766 = vmul.f32 %v6660, 1.442695
        %v6767 = vpow.pop %v6766
        %v6768 = vmul.f32 %v6661, 1.442695
        %v6769 = vpow.pop %v6768
        %v6770 = vmul.f32 %v6662, 1.442695
        %v6771 = vpow.pop %v6770
        %v6772 = vmul.f32 %v6663, 1.442695
        %v6773 = vpow.pop %v6772
        %v6774 = vmul.f32 %v6664, 1.442695
        %v6775 = vpow.pop %v6774
        %v6776 = vmul.f32 %v6665, 1.442695
        %v6777 = vpow.pop %v6776
        %v6778 = vmul.f32 %v6666, 1.442695
        %v6779 = vpow.pop %v6778
        %v6780 = vmul.f32 %v6667, 1.442695
        %v6781 = vpow.pop %v6780
        %v6782 = vmul.f32 %v6668, 1.442695
        %v6783 = vpow.pop %v6782
        %v6784 = vmul.f32 %v6669, 1.442695
        %v6785 = vpow.pop %v6784
        %v6786 = vmul.f32 %v6670, 1.442695
        %v6787 = vpow.pop %v6786
        %v6788 = vmul.f32 %v6671, 1.442695
        %v6789 = vpow.pop %v6788
        %v6790 = vmul.f32 %v6672, 1.442695
        %v6791 = vpow.pop %v6790
        %v6792 = vmul.f32 %v6673, 1.442695
        %v6793 = vpow.pop %v6792
        %v6794 = vmul.f32 %v6674, 1.442695
        %v6795 = vpow.pop %v6794
        %v6796 = vmul.f32 %v6675, 1.442695
        %v6797 = vpow.pop %v6796
        %v6798 = vmul.f32 %v6676, 1.442695
        %v6799 = vpow.pop %v6798
        %v6800 = vmul.f32 %v6677, 1.442695
        %v6801 = vpow.pop %v6800
        %v6802 = vmul.f32 %v6678, 1.442695
        %v6803 = vpow.pop %v6802
        %v6804 = vmul.f32 %v6679, 1.442695
        %v6805 = vpow.pop %v6804
        %v6806 = vmul.f32 %v6680, 1.442695
        %v6807 = vpow.pop %v6806
        %v6808 = vmul.f32 %v6681, 1.442695
        %v6809 = vpow.pop %v6808
        %v6810 = vadd.f32 %v6683, %v6687
        %v6811 = vadd.f32 %v6810, %v6691
        %v6812 = vadd.f32 %v6811, %v6695
        %v6813 = vadd.f32 %v6812, %v6699
        %v6814 = vadd.f32 %v6813, %v6703
        %v6815 = vadd.f32 %v6814, %v6707
        %v6816 = vadd.f32 %v6815, %v6711
        %v6817 = vadd.f32 %v6816, %v6715
        %v6818 = vadd.f32 %v6817, %v6719
        %v6819 = vadd.f32 %v6818, %v6723
        %v6820 = vadd.f32 %v6819, %v6727
        %v6821 = vadd.f32 %v6820, %v6731
        %v6822 = vadd.f32 %v6821, %v6735
        %v6823 = vadd.f32 %v6822, %v6739
        %v6824 = vadd.f32 %v6823, %v6743
        %v6825 = vadd.f32 %v6824, %v6747
        %v6826 = vadd.f32 %v6825, %v6751
        %v6827 = vadd.f32 %v6826, %v6755
        %v6828 = vadd.f32 %v6827, %v6759
        %v6829 = vadd.f32 %v6828, %v6763
        %v6830 = vadd.f32 %v6829, %v6767
        %v6831 = vadd.f32 %v6830, %v6771
        %v6832 = vadd.f32 %v6831, %v6775
        %v6833 = vadd.f32 %v6832, %v6779
        %v6834 = vadd.f32 %v6833, %v6783
        %v6835 = vadd.f32 %v6834, %v6787
        %v6836 = vadd.f32 %v6835, %v6791
        %v6837 = vadd.f32 %v6836, %v6795
        %v6838 = vadd.f32 %v6837, %v6799
        %v6839 = vadd.f32 %v6838, %v6803
        %v6840 = vadd.f32 %v6839, %v6807
        %v6841 = vrot.slane %v6840, 4
        %v6842 = vadd.f32 %v6840, %v6841
        %v6843 = vrot.slane %v6842, 2
        %v6844 = vadd.f32 %v6842, %v6843
        %v6845 = vrot.slane %v6844, 1
        %v6846 = vadd.f32 %v6844, %v6845
        %v6847 = vadd.f32 %v6685, %v6689
        %v6848 = vadd.f32 %v6847, %v6693
        %v6849 = vadd.f32 %v6848, %v6697
        %v6850 = vadd.f32 %v6849, %v6701
        %v6851 = vadd.f32 %v6850, %v6705
        %v6852 = vadd.f32 %v6851, %v6709
        %v6853 = vadd.f32 %v6852, %v6713
        %v6854 = vadd.f32 %v6853, %v6717
        %v6855 = vadd.f32 %v6854, %v6721
        %v6856 = vadd.f32 %v6855, %v6725
        %v6857 = vadd.f32 %v6856, %v6729
        %v6858 = vadd.f32 %v6857, %v6733
        %v6859 = vadd.f32 %v6858, %v6737
        %v6860 = vadd.f32 %v6859, %v6741
        %v6861 = vadd.f32 %v6860, %v6745
        %v6862 = vadd.f32 %v6861, %v6749
        %v6863 = vadd.f32 %v6862, %v6753
        %v6864 = vadd.f32 %v6863, %v6757
        %v6865 = vadd.f32 %v6864, %v6761
        %v6866 = vadd.f32 %v6865, %v6765
        %v6867 = vadd.f32 %v6866, %v6769
        %v6868 = vadd.f32 %v6867, %v6773
        %v6869 = vadd.f32 %v6868, %v6777
        %v6870 = vadd.f32 %v6869, %v6781
        %v6871 = vadd.f32 %v6870, %v6785
        %v6872 = vadd.f32 %v6871, %v6789
        %v6873 = vadd.f32 %v6872, %v6793
        %v6874 = vadd.f32 %v6873, %v6797
        %v6875 = vadd.f32 %v6874, %v6801
        %v6876 = vadd.f32 %v6875, %v6805
        %v6877 = vadd.f32 %v6876, %v6809
        %v6878 = vrot.slane %v6877, 4
        %v6879 = vadd.f32 %v6877, %v6878
        %v6880 = vrot.slane %v6879, 2
        %v6881 = vadd.f32 %v6879, %v6880
        %v6882 = vrot.slane %v6881, 1
        %v6883 = vadd.f32 %v6881, %v6882
        %6884 = vmatprep.subr.mxu0 %v6685
        %6885 = vmatpush1.msra.mxu0 %v6683
        %6886 = vmatprep.subr.mxu0 %v6689
        %6887 = vmatpush1.msra.mxu0 %v6687
        %6888 = vmatprep.subr.mxu0 %v6693
        %6889 = vmatpush1.msra.mxu0 %v6691
        %6890 = vmatprep.subr.mxu0 %v6697
        %6891 = vmatpush1.msra.mxu0 %v6695
        %6892 = vmatprep.subr.mxu0 %v6701
        %6893 = vmatpush1.msra.mxu0 %v6699
        %6894 = vmatprep.subr.mxu0 %v6705
        %6895 = vmatpush1.msra.mxu0 %v6703
        %6896 = vmatprep.subr.mxu0 %v6709
        %6897 = vmatpush1.msra.mxu0 %v6707
        %6898 = vmatprep.subr.mxu0 %v6713
        %6899 = vmatpush1.msra.mxu0 %v6711
        %6900 = vmatprep.subr.mxu0 %v6717
        %6901 = vmatpush1.msra.mxu0 %v6715
        %6902 = vmatprep.subr.mxu0 %v6721
        %6903 = vmatpush1.msra.mxu0 %v6719
        %6904 = vmatprep.subr.mxu0 %v6725
        %6905 = vmatpush1.msra.mxu0 %v6723
        %6906 = vmatprep.subr.mxu0 %v6729
        %6907 = vmatpush1.msra.mxu0 %v6727
        %6908 = vmatprep.subr.mxu0 %v6733
        %6909 = vmatpush1.msra.mxu0 %v6731
        %6910 = vmatprep.subr.mxu0 %v6737
        %6911 = vmatpush1.msra.mxu0 %v6735
        %6912 = vmatprep.subr.mxu0 %v6741
        %6913 = vmatpush1.msra.mxu0 %v6739
        %6914 = vmatprep.subr.mxu0 %v6745
        %6915 = vmatpush1.msra.mxu0 %v6743
        %6916 = vmatprep.subr.mxu0 %v6749
        %6917 = vmatpush1.msra.mxu0 %v6747
        %6918 = vmatprep.subr.mxu0 %v6753
        %6919 = vmatpush1.msra.mxu0 %v6751
        %6920 = vmatprep.subr.mxu0 %v6757
        %6921 = vmatpush1.msra.mxu0 %v6755
        %6922 = vmatprep.subr.mxu0 %v6761
        %6923 = vmatpush1.msra.mxu0 %v6759
        %6924 = vmatprep.subr.mxu0 %v6765
        %6925 = vmatpush1.msra.mxu0 %v6763
        %6926 = vmatprep.subr.mxu0 %v6769
        %6927 = vmatpush1.msra.mxu0 %v6767
        %6928 = vmatprep.subr.mxu0 %v6773
        %6929 = vmatpush1.msra.mxu0 %v6771
        %6930 = vmatprep.subr.mxu0 %v6777
        %6931 = vmatpush1.msra.mxu0 %v6775
        %6932 = vmatprep.subr.mxu0 %v6781
        %6933 = vmatpush1.msra.mxu0 %v6779
        %6934 = vmatprep.subr.mxu0 %v6785
        %6935 = vmatpush1.msra.mxu0 %v6783
        %6936 = vmatprep.subr.mxu0 %v6789
        %6937 = vmatpush1.msra.mxu0 %v6787
        %6938 = vmatprep.subr.mxu0 %v6793
        %6939 = vmatpush1.msra.mxu0 %v6791
        %6940 = vmatprep.subr.mxu0 %v6797
        %6941 = vmatpush1.msra.mxu0 %v6795
        %6942 = vmatprep.subr.mxu0 %v6801
        %6943 = vmatpush1.msra.mxu0 %v6799
        %6944 = vmatprep.subr.mxu0 %v6805
        %6945 = vmatpush1.msra.mxu0 %v6803
        %6946 = vmatprep.subr.mxu0 %v6809
        %6947 = vmatpush1.msra.mxu0 %v6807
        %6948 = vmatprep.mubr.f32.mxu0 %v797
        %6949 = vmatmul.mubr.f32.gmra.mrb[0].mxu0 %v795
        %v6950 = vpop.f32.mrb[0].mxu0
        %v6951 = vadd.f32 0.0, %v6950
        %v6952 = vpop.f32.mrb[0].mxu0
        %v6953 = vadd.f32 0.0, %v6952
        %6954 = vdwg.mxu0
        %v6955 = vrcp.pop %v6846
        %v6956 = vrcp.pop %v6883
        %v6957 = vmul.f32 %v6951, %v6955
        %v6958 = vmul.f32 %v6953, %v6956
        %6959 = vxpose.xlu0.b32.start [1/16] %v777, 128
        %6960 = vxpose.xlu0.b32.cont [2/16] 0.0, 128
        %6961 = vxpose.xlu0.b32.cont [3/16] 0.0, 128
        %6962 = vxpose.xlu0.b32.cont [4/16] 0.0, 128
        %6963 = vxpose.xlu0.b32.cont [5/16] 0.0, 128
        %6964 = vxpose.xlu0.b32.cont [6/16] 0.0, 128
        %6965 = vxpose.xlu0.b32.cont [7/16] 0.0, 128
        %6966 = vxpose.xlu0.b32.cont [8/16] 0.0, 128
        %6967 = vxpose.xlu0.b32.cont [9/16] 0.0, 128
        %6968 = vxpose.xlu0.b32.cont [10/16] 0.0, 128
        %6969 = vxpose.xlu0.b32.cont [11/16] 0.0, 128
        %6970 = vxpose.xlu0.b32.cont [12/16] 0.0, 128
        %6971 = vxpose.xlu0.b32.cont [13/16] 0.0, 128
        %6972 = vxpose.xlu0.b32.cont [14/16] 0.0, 128
        %6973 = vxpose.xlu0.b32.cont [15/16] 0.0, 128
        %6974 = vxpose.xlu0.b32.end [16/16] 0.0, 128
        %v6975 = vpop.trf.xlu0
        %v6976 = vpop.trf.xlu0
        %v6977 = vpop.trf.xlu0
        %v6978 = vpop.trf.xlu0
        %v6979 = vpop.trf.xlu0
        %v6980 = vpop.trf.xlu0
        %v6981 = vpop.trf.xlu0
        %v6982 = vpop.trf.xlu0
        %v6983 = vpop.trf.xlu0
        %v6984 = vpop.trf.xlu0
        %v6985 = vpop.trf.xlu0
        %v6986 = vpop.trf.xlu0
        %v6987 = vpop.trf.xlu0
        %v6988 = vpop.trf.xlu0
        %v6989 = vpop.trf.xlu0
        %v6990 = vpop.trf.xlu0
        %6991 = vxpose.xlu0.b32.start [1/16] %v779, 128
        %6992 = vxpose.xlu0.b32.cont [2/16] 0.0, 128
        %6993 = vxpose.xlu0.b32.cont [3/16] 0.0, 128
        %6994 = vxpose.xlu0.b32.cont [4/16] 0.0, 128
        %6995 = vxpose.xlu0.b32.cont [5/16] 0.0, 128
        %6996 = vxpose.xlu0.b32.cont [6/16] 0.0, 128
        %6997 = vxpose.xlu0.b32.cont [7/16] 0.0, 128
        %6998 = vxpose.xlu0.b32.cont [8/16] 0.0, 128
        %6999 = vxpose.xlu0.b32.cont [9/16] 0.0, 128
        %7000 = vxpose.xlu0.b32.cont [10/16] 0.0, 128
        %7001 = vxpose.xlu0.b32.cont [11/16] 0.0, 128
        %7002 = vxpose.xlu0.b32.cont [12/16] 0.0, 128
        %7003 = vxpose.xlu0.b32.cont [13/16] 0.0, 128
        %7004 = vxpose.xlu0.b32.cont [14/16] 0.0, 128
        %7005 = vxpose.xlu0.b32.cont [15/16] 0.0, 128
        %7006 = vxpose.xlu0.b32.end [16/16] 0.0, 128
        %v7007 = vpop.trf.xlu0
        %v7008 = vpop.trf.xlu0
        %v7009 = vpop.trf.xlu0
        %v7010 = vpop.trf.xlu0
        %v7011 = vpop.trf.xlu0
        %v7012 = vpop.trf.xlu0
        %v7013 = vpop.trf.xlu0
        %v7014 = vpop.trf.xlu0
        %v7015 = vpop.trf.xlu0
        %v7016 = vpop.trf.xlu0
        %v7017 = vpop.trf.xlu0
        %v7018 = vpop.trf.xlu0
        %v7019 = vpop.trf.xlu0
        %v7020 = vpop.trf.xlu0
        %v7021 = vpop.trf.xlu0
        %v7022 = vpop.trf.xlu0
        %v7024 = vsel %vm1198, %v6975, 0
        %v7027 = vsel %vm1198, %v6976, 0
        %v7030 = vsel %vm1198, %v6977, 0
        %v7033 = vsel %vm1198, %v6978, 0
        %v7036 = vsel %vm1198, %v6979, 0
        %v7039 = vsel %vm1198, %v6980, 0
        %v7042 = vsel %vm1198, %v6981, 0
        %v7045 = vsel %vm1198, %v6982, 0
        %v7048 = vsel %vm1198, %v6983, 0
        %v7051 = vsel %vm1198, %v6984, 0
        %v7054 = vsel %vm1198, %v6985, 0
        %v7057 = vsel %vm1198, %v6986, 0
        %v7060 = vsel %vm1198, %v6987, 0
        %v7063 = vsel %vm1198, %v6988, 0
        %v7066 = vsel %vm1198, %v6989, 0
        %v7069 = vsel %vm1198, %v6990, 0
        %v7072 = vsel %vm1198, %v7007, 0
        %v7075 = vsel %vm1198, %v7008, 0
        %v7078 = vsel %vm1198, %v7009, 0
        %v7081 = vsel %vm1198, %v7010, 0
        %v7084 = vsel %vm1198, %v7011, 0
        %v7087 = vsel %vm1198, %v7012, 0
        %v7090 = vsel %vm1198, %v7013, 0
        %v7093 = vsel %vm1198, %v7014, 0
        %v7096 = vsel %vm1198, %v7015, 0
        %v7099 = vsel %vm1198, %v7016, 0
        %v7102 = vsel %vm1198, %v7017, 0
        %v7105 = vsel %vm1198, %v7018, 0
        %v7108 = vsel %vm1198, %v7019, 0
        %v7111 = vsel %vm1198, %v7020, 0
        %v7114 = vsel %vm1198, %v7021, 0
        %v7117 = vsel %vm1198, %v7022, 0
        %7119 = vmatprep.subr.mxu0 %v1084
        %7120 = vmatpush1.msra.mxu0 %v1082
        %7121 = vmatprep.subr.mxu0 0.0
        %7122 = vmatpush1.msra.mxu0 0.0
        %7123 = vmatprep.subr.mxu0 0.0
        %7124 = vmatpush1.msra.mxu0 0.0
        %7125 = vmatprep.subr.mxu0 0.0
        %7126 = vmatpush1.msra.mxu0 0.0
        %7127 = vmatprep.subr.mxu0 0.0
        %7128 = vmatpush1.msra.mxu0 0.0
        %7129 = vmatprep.subr.mxu0 0.0
        %7130 = vmatpush1.msra.mxu0 0.0
        %7131 = vmatprep.subr.mxu0 0.0
        %7132 = vmatpush1.msra.mxu0 0.0
        %7133 = vmatprep.subr.mxu0 0.0
        %7134 = vmatpush1.msra.mxu0 0.0
        %7135 = vmatprep.subr.mxu0 0.0
        %7136 = vmatpush1.msra.mxu0 0.0
        %7137 = vmatprep.subr.mxu0 0.0
        %7138 = vmatpush1.msra.mxu0 0.0
        %7139 = vmatprep.subr.mxu0 0.0
        %7140 = vmatpush1.msra.mxu0 0.0
        %7141 = vmatprep.subr.mxu0 0.0
        %7142 = vmatpush1.msra.mxu0 0.0
        %7143 = vmatprep.subr.mxu0 0.0
        %7144 = vmatpush1.msra.mxu0 0.0
        %7145 = vmatprep.subr.mxu0 0.0
        %7146 = vmatpush1.msra.mxu0 0.0
        %7147 = vmatprep.subr.mxu0 0.0
        %7148 = vmatpush1.msra.mxu0 0.0
        %7149 = vmatprep.subr.mxu0 0.0
        %7150 = vmatpush1.msra.mxu0 0.0
        %7151 = vmatprep.subr.mxu0 0.0
        %7152 = vmatpush1.msra.mxu0 0.0
        %7153 = vmatprep.subr.mxu0 0.0
        %7154 = vmatpush1.msra.mxu0 0.0
        %7155 = vmatprep.subr.mxu0 0.0
        %7156 = vmatpush1.msra.mxu0 0.0
        %7157 = vmatprep.subr.mxu0 0.0
        %7158 = vmatpush1.msra.mxu0 0.0
        %7159 = vmatprep.subr.mxu0 0.0
        %7160 = vmatpush1.msra.mxu0 0.0
        %7161 = vmatprep.subr.mxu0 0.0
        %7162 = vmatpush1.msra.mxu0 0.0
        %7163 = vmatprep.subr.mxu0 0.0
        %7164 = vmatpush1.msra.mxu0 0.0
        %7165 = vmatprep.subr.mxu0 0.0
        %7166 = vmatpush1.msra.mxu0 0.0
        %7167 = vmatprep.subr.mxu0 0.0
        %7168 = vmatpush1.msra.mxu0 0.0
        %7169 = vmatprep.subr.mxu0 0.0
        %7170 = vmatpush1.msra.mxu0 0.0
        %7171 = vmatprep.subr.mxu0 0.0
        %7172 = vmatpush1.msra.mxu0 0.0
        %7173 = vmatprep.subr.mxu0 0.0
        %7174 = vmatpush1.msra.mxu0 0.0
        %7175 = vmatprep.subr.mxu0 0.0
        %7176 = vmatpush1.msra.mxu0 0.0
        %7177 = vmatprep.subr.mxu0 0.0
        %7178 = vmatpush1.msra.mxu0 0.0
        %7179 = vmatprep.subr.mxu0 0.0
        %7180 = vmatpush1.msra.mxu0 0.0
        %7181 = vmatprep.subr.mxu0 0.0
        %7182 = vmatpush1.msra.mxu0 0.0
        %7183 = vmatprep.mubr.f32.mxu0 0.0
        %7184 = vmatmul.mubr.f32.gmra.mrb[0].mxu0 %v7024
        %v7185 = vpop.f32.mrb[0].mxu0
        %v7186 = vadd.f32 0.0, %v7185
        %v7187 = vpop.f32.mrb[0].mxu0
        %v7188 = vadd.f32 0.0, %v7187
        %7189 = vmatprep.mubr.f32.mxu0 0.0
        %7190 = vmatmul.mubr.f32.gmra.mrb[0].mxu0 %v7027
        %v7191 = vpop.f32.mrb[0].mxu0
        %v7192 = vadd.f32 0.0, %v7191
        %v7193 = vpop.f32.mrb[0].mxu0
        %v7194 = vadd.f32 0.0, %v7193
        %7195 = vmatprep.mubr.f32.mxu0 0.0
        %7196 = vmatmul.mubr.f32.gmra.mrb[0].mxu0 %v7030
        %v7197 = vpop.f32.mrb[0].mxu0
        %v7198 = vadd.f32 0.0, %v7197
        %v7199 = vpop.f32.mrb[0].mxu0
        %v7200 = vadd.f32 0.0, %v7199
        %7201 = vmatprep.mubr.f32.mxu0 0.0
        %7202 = vmatmul.mubr.f32.gmra.mrb[0].mxu0 %v7033
        %v7203 = vpop.f32.mrb[0].mxu0
        %v7204 = vadd.f32 0.0, %v7203
        %v7205 = vpop.f32.mrb[0].mxu0
        %v7206 = vadd.f32 0.0, %v7205
        %7207 = vmatprep.mubr.f32.mxu0 0.0
        %7208 = vmatmul.mubr.f32.gmra.mrb[0].mxu0 %v7036
        %v7209 = vpop.f32.mrb[0].mxu0
        %v7210 = vadd.f32 0.0, %v7209
        %v7211 = vpop.f32.mrb[0].mxu0
        %v7212 = vadd.f32 0.0, %v7211
        %7213 = vmatprep.mubr.f32.mxu0 0.0
        %7214 = vmatmul.mubr.f32.gmra.mrb[0].mxu0 %v7039
        %v7215 = vpop.f32.mrb[0].mxu0
        %v7216 = vadd.f32 0.0, %v7215
        %v7217 = vpop.f32.mrb[0].mxu0
        %v7218 = vadd.f32 0.0, %v7217
        %7219 = vmatprep.mubr.f32.mxu0 0.0
        %7220 = vmatmul.mubr.f32.gmra.mrb[0].mxu0 %v7042
        %v7221 = vpop.f32.mrb[0].mxu0
        %v7222 = vadd.f32 0.0, %v7221
        %v7223 = vpop.f32.mrb[0].mxu0
        %v7224 = vadd.f32 0.0, %v7223
        %7225 = vmatprep.mubr.f32.mxu0 0.0
        %7226 = vmatmul.mubr.f32.gmra.mrb[0].mxu0 %v7045
        %v7227 = vpop.f32.mrb[0].mxu0
        %v7228 = vadd.f32 0.0, %v7227
        %v7229 = vpop.f32.mrb[0].mxu0
        %v7230 = vadd.f32 0.0, %v7229
        %7231 = vmatprep.mubr.f32.mxu0 0.0
        %7232 = vmatmul.mubr.f32.gmra.mrb[0].mxu0 %v7048
        %v7233 = vpop.f32.mrb[0].mxu0
        %v7234 = vadd.f32 0.0, %v7233
        %v7235 = vpop.f32.mrb[0].mxu0
        %v7236 = vadd.f32 0.0, %v7235
        %7237 = vmatprep.mubr.f32.mxu0 0.0
        %7238 = vmatmul.mubr.f32.gmra.mrb[0].mxu0 %v7051
        %v7239 = vpop.f32.mrb[0].mxu0
        %v7240 = vadd.f32 0.0, %v7239
        %v7241 = vpop.f32.mrb[0].mxu0
        %v7242 = vadd.f32 0.0, %v7241
        %7243 = vmatprep.mubr.f32.mxu0 0.0
        %7244 = vmatmul.mubr.f32.gmra.mrb[0].mxu0 %v7054
        %v7245 = vpop.f32.mrb[0].mxu0
        %v7246 = vadd.f32 0.0, %v7245
        %v7247 = vpop.f32.mrb[0].mxu0
        %v7248 = vadd.f32 0.0, %v7247
        %7249 = vmatprep.mubr.f32.mxu0 0.0
        %7250 = vmatmul.mubr.f32.gmra.mrb[0].mxu0 %v7057
        %v7251 = vpop.f32.mrb[0].mxu0
        %v7252 = vadd.f32 0.0, %v7251
        %v7253 = vpop.f32.mrb[0].mxu0
        %v7254 = vadd.f32 0.0, %v7253
        %7255 = vmatprep.mubr.f32.mxu0 0.0
        %7256 = vmatmul.mubr.f32.gmra.mrb[0].mxu0 %v7060
        %v7257 = vpop.f32.mrb[0].mxu0
        %v7258 = vadd.f32 0.0, %v7257
        %v7259 = vpop.f32.mrb[0].mxu0
        %v7260 = vadd.f32 0.0, %v7259
        %7261 = vmatprep.mubr.f32.mxu0 0.0
        %7262 = vmatmul.mubr.f32.gmra.mrb[0].mxu0 %v7063
        %v7263 = vpop.f32.mrb[0].mxu0
        %v7264 = vadd.f32 0.0, %v7263
        %v7265 = vpop.f32.mrb[0].mxu0
        %v7266 = vadd.f32 0.0, %v7265
        %7267 = vmatprep.mubr.f32.mxu0 0.0
        %7268 = vmatmul.mubr.f32.gmra.mrb[0].mxu0 %v7066
        %v7269 = vpop.f32.mrb[0].mxu0
        %v7270 = vadd.f32 0.0, %v7269
        %v7271 = vpop.f32.mrb[0].mxu0
        %v7272 = vadd.f32 0.0, %v7271
        %7273 = vmatprep.mubr.f32.mxu0 0.0
        %7274 = vmatmul.mubr.f32.gmra.mrb[0].mxu0 %v7069
        %v7275 = vpop.f32.mrb[0].mxu0
        %v7276 = vadd.f32 0.0, %v7275
        %v7277 = vpop.f32.mrb[0].mxu0
        %v7278 = vadd.f32 0.0, %v7277
        %7279 = vmatprep.mubr.f32.mxu0 0.0
        %7280 = vmatmul.mubr.f32.gmra.mrb[0].mxu0 %v7072
        %v7281 = vpop.f32.mrb[0].mxu0
        %v7282 = vadd.f32 0.0, %v7281
        %v7283 = vpop.f32.mrb[0].mxu0
        %v7284 = vadd.f32 0.0, %v7283
        %7285 = vmatprep.mubr.f32.mxu0 0.0
        %7286 = vmatmul.mubr.f32.gmra.mrb[0].mxu0 %v7075
        %v7287 = vpop.f32.mrb[0].mxu0
        %v7288 = vadd.f32 0.0, %v7287
        %v7289 = vpop.f32.mrb[0].mxu0
        %v7290 = vadd.f32 0.0, %v7289
        %7291 = vmatprep.mubr.f32.mxu0 0.0
        %7292 = vmatmul.mubr.f32.gmra.mrb[0].mxu0 %v7078
        %v7293 = vpop.f32.mrb[0].mxu0
        %v7294 = vadd.f32 0.0, %v7293
        %v7295 = vpop.f32.mrb[0].mxu0
        %v7296 = vadd.f32 0.0, %v7295
        %7297 = vmatprep.mubr.f32.mxu0 0.0
        %7298 = vmatmul.mubr.f32.gmra.mrb[0].mxu0 %v7081
        %v7299 = vpop.f32.mrb[0].mxu0
        %v7300 = vadd.f32 0.0, %v7299
        %v7301 = vpop.f32.mrb[0].mxu0
        %v7302 = vadd.f32 0.0, %v7301
        %7303 = vmatprep.mubr.f32.mxu0 0.0
        %7304 = vmatmul.mubr.f32.gmra.mrb[0].mxu0 %v7084
        %v7305 = vpop.f32.mrb[0].mxu0
        %v7306 = vadd.f32 0.0, %v7305
        %v7307 = vpop.f32.mrb[0].mxu0
        %v7308 = vadd.f32 0.0, %v7307
        %7309 = vmatprep.mubr.f32.mxu0 0.0
        %7310 = vmatmul.mubr.f32.gmra.mrb[0].mxu0 %v7087
        %v7311 = vpop.f32.mrb[0].mxu0
        %v7312 = vadd.f32 0.0, %v7311
        %v7313 = vpop.f32.mrb[0].mxu0
        %v7314 = vadd.f32 0.0, %v7313
        %7315 = vmatprep.mubr.f32.mxu0 0.0
        %7316 = vmatmul.mubr.f32.gmra.mrb[0].mxu0 %v7090
        %v7317 = vpop.f32.mrb[0].mxu0
        %v7318 = vadd.f32 0.0, %v7317
        %v7319 = vpop.f32.mrb[0].mxu0
        %v7320 = vadd.f32 0.0, %v7319
        %7321 = vmatprep.mubr.f32.mxu0 0.0
        %7322 = vmatmul.mubr.f32.gmra.mrb[0].mxu0 %v7093
        %v7323 = vpop.f32.mrb[0].mxu0
        %v7324 = vadd.f32 0.0, %v7323
        %v7325 = vpop.f32.mrb[0].mxu0
        %v7326 = vadd.f32 0.0, %v7325
        %7327 = vmatprep.mubr.f32.mxu0 0.0
        %7328 = vmatmul.mubr.f32.gmra.mrb[0].mxu0 %v7096
        %v7329 = vpop.f32.mrb[0].mxu0
        %v7330 = vadd.f32 0.0, %v7329
        %v7331 = vpop.f32.mrb[0].mxu0
        %v7332 = vadd.f32 0.0, %v7331
        %7333 = vmatprep.mubr.f32.mxu0 0.0
        %7334 = vmatmul.mubr.f32.gmra.mrb[0].mxu0 %v7099
        %v7335 = vpop.f32.mrb[0].mxu0
        %v7336 = vadd.f32 0.0, %v7335
        %v7337 = vpop.f32.mrb[0].mxu0
        %v7338 = vadd.f32 0.0, %v7337
        %7339 = vmatprep.mubr.f32.mxu0 0.0
        %7340 = vmatmul.mubr.f32.gmra.mrb[0].mxu0 %v7102
        %v7341 = vpop.f32.mrb[0].mxu0
        %v7342 = vadd.f32 0.0, %v7341
        %v7343 = vpop.f32.mrb[0].mxu0
        %v7344 = vadd.f32 0.0, %v7343
        %7345 = vmatprep.mubr.f32.mxu0 0.0
        %7346 = vmatmul.mubr.f32.gmra.mrb[0].mxu0 %v7105
        %v7347 = vpop.f32.mrb[0].mxu0
        %v7348 = vadd.f32 0.0, %v7347
        %v7349 = vpop.f32.mrb[0].mxu0
        %v7350 = vadd.f32 0.0, %v7349
        %7351 = vmatprep.mubr.f32.mxu0 0.0
        %7352 = vmatmul.mubr.f32.gmra.mrb[0].mxu0 %v7108
        %v7353 = vpop.f32.mrb[0].mxu0
        %v7354 = vadd.f32 0.0, %v7353
        %v7355 = vpop.f32.mrb[0].mxu0
        %v7356 = vadd.f32 0.0, %v7355
        %7357 = vmatprep.mubr.f32.mxu0 0.0
        %7358 = vmatmul.mubr.f32.gmra.mrb[0].mxu0 %v7111
        %v7359 = vpop.f32.mrb[0].mxu0
        %v7360 = vadd.f32 0.0, %v7359
        %v7361 = vpop.f32.mrb[0].mxu0
        %v7362 = vadd.f32 0.0, %v7361
        %7363 = vmatprep.mubr.f32.mxu0 0.0
        %7364 = vmatmul.mubr.f32.gmra.mrb[0].mxu0 %v7114
        %v7365 = vpop.f32.mrb[0].mxu0
        %v7366 = vadd.f32 0.0, %v7365
        %v7367 = vpop.f32.mrb[0].mxu0
        %v7368 = vadd.f32 0.0, %v7367
        %7369 = vmatprep.mubr.f32.mxu0 0.0
        %7370 = vmatmul.mubr.f32.gmra.mrb[0].mxu0 %v7117
        %v7371 = vpop.f32.mrb[0].mxu0
        %v7372 = vadd.f32 0.0, %v7371
        %v7373 = vpop.f32.mrb[0].mxu0
        %v7374 = vadd.f32 0.0, %v7373
        %7375 = vdwg.mxu0
        %v7376 = vmax.f32 %v7186, %v7198
        %v7377 = vmax.f32 %v7192, %v7204
        %v7378 = vmax.f32 %v7376, %v7210
        %v7379 = vmax.f32 %v7377, %v7216
        %v7380 = vmax.f32 %v7378, %v7222
        %v7381 = vmax.f32 %v7379, %v7228
        %v7382 = vmax.f32 %v7380, %v7234
        %v7383 = vmax.f32 %v7381, %v7240
        %v7384 = vmax.f32 %v7382, %v7246
        %v7385 = vmax.f32 %v7383, %v7252
        %v7386 = vmax.f32 %v7384, %v7258
        %v7387 = vmax.f32 %v7385, %v7264
        %v7388 = vmax.f32 %v7386, %v7270
        %v7389 = vmax.f32 %v7387, %v7276
        %v7390 = vmax.f32 %v7388, %v7282
        %v7391 = vmax.f32 %v7389, %v7288
        %v7392 = vmax.f32 %v7390, %v7294
        %v7393 = vmax.f32 %v7391, %v7300
        %v7394 = vmax.f32 %v7392, %v7306
        %v7395 = vmax.f32 %v7393, %v7312
        %v7396 = vmax.f32 %v7394, %v7318
        %v7397 = vmax.f32 %v7395, %v7324
        %v7398 = vmax.f32 %v7396, %v7330
        %v7399 = vmax.f32 %v7397, %v7336
        %v7400 = vmax.f32 %v7398, %v7342
        %v7401 = vmax.f32 %v7399, %v7348
        %v7402 = vmax.f32 %v7400, %v7354
        %v7403 = vmax.f32 %v7401, %v7360
        %v7404 = vmax.f32 %v7402, %v7366
        %v7405 = vmax.f32 %v7403, %v7372
        %v7406 = vmax.f32 %v7404, %v7405
        %v7407 = vrot.slane %v7406, 4
        %v7408 = vmax.f32 %v7406, %v7407
        %v7409 = vrot.slane %v7408, 2
        %v7410 = vmax.f32 %v7408, %v7409
        %v7411 = vrot.slane %v7410, 1
        %v7412 = vmax.f32 %v7410, %v7411
        %v7413 = vmax.f32 %v7188, %v7200
        %v7414 = vmax.f32 %v7194, %v7206
        %v7415 = vmax.f32 %v7413, %v7212
        %v7416 = vmax.f32 %v7414, %v7218
        %v7417 = vmax.f32 %v7415, %v7224
        %v7418 = vmax.f32 %v7416, %v7230
        %v7419 = vmax.f32 %v7417, %v7236
        %v7420 = vmax.f32 %v7418, %v7242
        %v7421 = vmax.f32 %v7419, %v7248
        %v7422 = vmax.f32 %v7420, %v7254
        %v7423 = vmax.f32 %v7421, %v7260
        %v7424 = vmax.f32 %v7422, %v7266
        %v7425 = vmax.f32 %v7423, %v7272
        %v7426 = vmax.f32 %v7424, %v7278
        %v7427 = vmax.f32 %v7425, %v7284
        %v7428 = vmax.f32 %v7426, %v7290
        %v7429 = vmax.f32 %v7427, %v7296
        %v7430 = vmax.f32 %v7428, %v7302
        %v7431 = vmax.f32 %v7429, %v7308
        %v7432 = vmax.f32 %v7430, %v7314
        %v7433 = vmax.f32 %v7431, %v7320
        %v7434 = vmax.f32 %v7432, %v7326
        %v7435 = vmax.f32 %v7433, %v7332
        %v7436 = vmax.f32 %v7434, %v7338
        %v7437 = vmax.f32 %v7435, %v7344
        %v7438 = vmax.f32 %v7436, %v7350
        %v7439 = vmax.f32 %v7437, %v7356
        %v7440 = vmax.f32 %v7438, %v7362
        %v7441 = vmax.f32 %v7439, %v7368
        %v7442 = vmax.f32 %v7440, %v7374
        %v7443 = vmax.f32 %v7441, %v7442
        %v7444 = vrot.slane %v7443, 4
        %v7445 = vmax.f32 %v7443, %v7444
        %v7446 = vrot.slane %v7445, 2
        %v7447 = vmax.f32 %v7445, %v7446
        %v7448 = vrot.slane %v7447, 1
        %v7449 = vmax.f32 %v7447, %v7448
        %v7450 = vsub.f32 %v7186, %v7412
        %v7451 = vsub.f32 %v7188, %v7449
        %v7452 = vsub.f32 %v7192, %v7412
        %v7453 = vsub.f32 %v7194, %v7449
        %v7454 = vsub.f32 %v7198, %v7412
        %v7455 = vsub.f32 %v7200, %v7449
        %v7456 = vsub.f32 %v7204, %v7412
        %v7457 = vsub.f32 %v7206, %v7449
        %v7458 = vsub.f32 %v7210, %v7412
        %v7459 = vsub.f32 %v7212, %v7449
        %v7460 = vsub.f32 %v7216, %v7412
        %v7461 = vsub.f32 %v7218, %v7449
        %v7462 = vsub.f32 %v7222, %v7412
        %v7463 = vsub.f32 %v7224, %v7449
        %v7464 = vsub.f32 %v7228, %v7412
        %v7465 = vsub.f32 %v7230, %v7449
        %v7466 = vsub.f32 %v7234, %v7412
        %v7467 = vsub.f32 %v7236, %v7449
        %v7468 = vsub.f32 %v7240, %v7412
        %v7469 = vsub.f32 %v7242, %v7449
        %v7470 = vsub.f32 %v7246, %v7412
        %v7471 = vsub.f32 %v7248, %v7449
        %v7472 = vsub.f32 %v7252, %v7412
        %v7473 = vsub.f32 %v7254, %v7449
        %v7474 = vsub.f32 %v7258, %v7412
        %v7475 = vsub.f32 %v7260, %v7449
        %v7476 = vsub.f32 %v7264, %v7412
        %v7477 = vsub.f32 %v7266, %v7449
        %v7478 = vsub.f32 %v7270, %v7412
        %v7479 = vsub.f32 %v7272, %v7449
        %v7480 = vsub.f32 %v7276, %v7412
        %v7481 = vsub.f32 %v7278, %v7449
        %v7482 = vsub.f32 %v7282, %v7412
        %v7483 = vsub.f32 %v7284, %v7449
        %v7484 = vsub.f32 %v7288, %v7412
        %v7485 = vsub.f32 %v7290, %v7449
        %v7486 = vsub.f32 %v7294, %v7412
        %v7487 = vsub.f32 %v7296, %v7449
        %v7488 = vsub.f32 %v7300, %v7412
        %v7489 = vsub.f32 %v7302, %v7449
        %v7490 = vsub.f32 %v7306, %v7412
        %v7491 = vsub.f32 %v7308, %v7449
        %v7492 = vsub.f32 %v7312, %v7412
        %v7493 = vsub.f32 %v7314, %v7449
        %v7494 = vsub.f32 %v7318, %v7412
        %v7495 = vsub.f32 %v7320, %v7449
        %v7496 = vsub.f32 %v7324, %v7412
        %v7497 = vsub.f32 %v7326, %v7449
        %v7498 = vsub.f32 %v7330, %v7412
        %v7499 = vsub.f32 %v7332, %v7449
        %v7500 = vsub.f32 %v7336, %v7412
        %v7501 = vsub.f32 %v7338, %v7449
        %v7502 = vsub.f32 %v7342, %v7412
        %v7503 = vsub.f32 %v7344, %v7449
        %v7504 = vsub.f32 %v7348, %v7412
        %v7505 = vsub.f32 %v7350, %v7449
        %v7506 = vsub.f32 %v7354, %v7412
        %v7507 = vsub.f32 %v7356, %v7449
        %v7508 = vsub.f32 %v7360, %v7412
        %v7509 = vsub.f32 %v7362, %v7449
        %v7510 = vsub.f32 %v7366, %v7412
        %v7511 = vsub.f32 %v7368, %v7449
        %v7512 = vsub.f32 %v7372, %v7412
        %v7513 = vsub.f32 %v7374, %v7449
        %v7514 = vmul.f32 %v7450, 1.442695
        %v7515 = vpow.pop %v7514
        %v7516 = vmul.f32 %v7451, 1.442695
        %v7517 = vpow.pop %v7516
        %v7518 = vmul.f32 %v7452, 1.442695
        %v7519 = vpow.pop %v7518
        %v7520 = vmul.f32 %v7453, 1.442695
        %v7521 = vpow.pop %v7520
        %v7522 = vmul.f32 %v7454, 1.442695
        %v7523 = vpow.pop %v7522
        %v7524 = vmul.f32 %v7455, 1.442695
        %v7525 = vpow.pop %v7524
        %v7526 = vmul.f32 %v7456, 1.442695
        %v7527 = vpow.pop %v7526
        %v7528 = vmul.f32 %v7457, 1.442695
        %v7529 = vpow.pop %v7528
        %v7530 = vmul.f32 %v7458, 1.442695
        %v7531 = vpow.pop %v7530
        %v7532 = vmul.f32 %v7459, 1.442695
        %v7533 = vpow.pop %v7532
        %v7534 = vmul.f32 %v7460, 1.442695
        %v7535 = vpow.pop %v7534
        %v7536 = vmul.f32 %v7461, 1.442695
        %v7537 = vpow.pop %v7536
        %v7538 = vmul.f32 %v7462, 1.442695
        %v7539 = vpow.pop %v7538
        %v7540 = vmul.f32 %v7463, 1.442695
        %v7541 = vpow.pop %v7540
        %v7542 = vmul.f32 %v7464, 1.442695
        %v7543 = vpow.pop %v7542
        %v7544 = vmul.f32 %v7465, 1.442695
        %v7545 = vpow.pop %v7544
        %v7546 = vmul.f32 %v7466, 1.442695
        %v7547 = vpow.pop %v7546
        %v7548 = vmul.f32 %v7467, 1.442695
        %v7549 = vpow.pop %v7548
        %v7550 = vmul.f32 %v7468, 1.442695
        %v7551 = vpow.pop %v7550
        %v7552 = vmul.f32 %v7469, 1.442695
        %v7553 = vpow.pop %v7552
        %v7554 = vmul.f32 %v7470, 1.442695
        %v7555 = vpow.pop %v7554
        %v7556 = vmul.f32 %v7471, 1.442695
        %v7557 = vpow.pop %v7556
        %v7558 = vmul.f32 %v7472, 1.442695
        %v7559 = vpow.pop %v7558
        %v7560 = vmul.f32 %v7473, 1.442695
        %v7561 = vpow.pop %v7560
        %v7562 = vmul.f32 %v7474, 1.442695
        %v7563 = vpow.pop %v7562
        %v7564 = vmul.f32 %v7475, 1.442695
        %v7565 = vpow.pop %v7564
        %v7566 = vmul.f32 %v7476, 1.442695
        %v7567 = vpow.pop %v7566
        %v7568 = vmul.f32 %v7477, 1.442695
        %v7569 = vpow.pop %v7568
        %v7570 = vmul.f32 %v7478, 1.442695
        %v7571 = vpow.pop %v7570
        %v7572 = vmul.f32 %v7479, 1.442695
        %v7573 = vpow.pop %v7572
        %v7574 = vmul.f32 %v7480, 1.442695
        %v7575 = vpow.pop %v7574
        %v7576 = vmul.f32 %v7481, 1.442695
        %v7577 = vpow.pop %v7576
        %v7578 = vmul.f32 %v7482, 1.442695
        %v7579 = vpow.pop %v7578
        %v7580 = vmul.f32 %v7483, 1.442695
        %v7581 = vpow.pop %v7580
        %v7582 = vmul.f32 %v7484, 1.442695
        %v7583 = vpow.pop %v7582
        %v7584 = vmul.f32 %v7485, 1.442695
        %v7585 = vpow.pop %v7584
        %v7586 = vmul.f32 %v7486, 1.442695
        %v7587 = vpow.pop %v7586
        %v7588 = vmul.f32 %v7487, 1.442695
        %v7589 = vpow.pop %v7588
        %v7590 = vmul.f32 %v7488, 1.442695
        %v7591 = vpow.pop %v7590
        %v7592 = vmul.f32 %v7489, 1.442695
        %v7593 = vpow.pop %v7592
        %v7594 = vmul.f32 %v7490, 1.442695
        %v7595 = vpow.pop %v7594
        %v7596 = vmul.f32 %v7491, 1.442695
        %v7597 = vpow.pop %v7596
        %v7598 = vmul.f32 %v7492, 1.442695
        %v7599 = vpow.pop %v7598
        %v7600 = vmul.f32 %v7493, 1.442695
        %v7601 = vpow.pop %v7600
        %v7602 = vmul.f32 %v7494, 1.442695
        %v7603 = vpow.pop %v7602
        %v7604 = vmul.f32 %v7495, 1.442695
        %v7605 = vpow.pop %v7604
        %v7606 = vmul.f32 %v7496, 1.442695
        %v7607 = vpow.pop %v7606
        %v7608 = vmul.f32 %v7497, 1.442695
        %v7609 = vpow.pop %v7608
        %v7610 = vmul.f32 %v7498, 1.442695
        %v7611 = vpow.pop %v7610
        %v7612 = vmul.f32 %v7499, 1.442695
        %v7613 = vpow.pop %v7612
        %v7614 = vmul.f32 %v7500, 1.442695
        %v7615 = vpow.pop %v7614
        %v7616 = vmul.f32 %v7501, 1.442695
        %v7617 = vpow.pop %v7616
        %v7618 = vmul.f32 %v7502, 1.442695
        %v7619 = vpow.pop %v7618
        %v7620 = vmul.f32 %v7503, 1.442695
        %v7621 = vpow.pop %v7620
        %v7622 = vmul.f32 %v7504, 1.442695
        %v7623 = vpow.pop %v7622
        %v7624 = vmul.f32 %v7505, 1.442695
        %v7625 = vpow.pop %v7624
        %v7626 = vmul.f32 %v7506, 1.442695
        %v7627 = vpow.pop %v7626
        %v7628 = vmul.f32 %v7507, 1.442695
        %v7629 = vpow.pop %v7628
        %v7630 = vmul.f32 %v7508, 1.442695
        %v7631 = vpow.pop %v7630
        %v7632 = vmul.f32 %v7509, 1.442695
        %v7633 = vpow.pop %v7632
        %v7634 = vmul.f32 %v7510, 1.442695
        %v7635 = vpow.pop %v7634
        %v7636 = vmul.f32 %v7511, 1.442695
        %v7637 = vpow.pop %v7636
        %v7638 = vmul.f32 %v7512, 1.442695
        %v7639 = vpow.pop %v7638
        %v7640 = vmul.f32 %v7513, 1.442695
        %v7641 = vpow.pop %v7640
        %v7642 = vadd.f32 %v7515, %v7519
        %v7643 = vadd.f32 %v7642, %v7523
        %v7644 = vadd.f32 %v7643, %v7527
        %v7645 = vadd.f32 %v7644, %v7531
        %v7646 = vadd.f32 %v7645, %v7535
        %v7647 = vadd.f32 %v7646, %v7539
        %v7648 = vadd.f32 %v7647, %v7543
        %v7649 = vadd.f32 %v7648, %v7547
        %v7650 = vadd.f32 %v7649, %v7551
        %v7651 = vadd.f32 %v7650, %v7555
        %v7652 = vadd.f32 %v7651, %v7559
        %v7653 = vadd.f32 %v7652, %v7563
        %v7654 = vadd.f32 %v7653, %v7567
        %v7655 = vadd.f32 %v7654, %v7571
        %v7656 = vadd.f32 %v7655, %v7575
        %v7657 = vadd.f32 %v7656, %v7579
        %v7658 = vadd.f32 %v7657, %v7583
        %v7659 = vadd.f32 %v7658, %v7587
        %v7660 = vadd.f32 %v7659, %v7591
        %v7661 = vadd.f32 %v7660, %v7595
        %v7662 = vadd.f32 %v7661, %v7599
        %v7663 = vadd.f32 %v7662, %v7603
        %v7664 = vadd.f32 %v7663, %v7607
        %v7665 = vadd.f32 %v7664, %v7611
        %v7666 = vadd.f32 %v7665, %v7615
        %v7667 = vadd.f32 %v7666, %v7619
        %v7668 = vadd.f32 %v7667, %v7623
        %v7669 = vadd.f32 %v7668, %v7627
        %v7670 = vadd.f32 %v7669, %v7631
        %v7671 = vadd.f32 %v7670, %v7635
        %v7672 = vadd.f32 %v7671, %v7639
        %v7673 = vrot.slane %v7672, 4
        %v7674 = vadd.f32 %v7672, %v7673
        %v7675 = vrot.slane %v7674, 2
        %v7676 = vadd.f32 %v7674, %v7675
        %v7677 = vrot.slane %v7676, 1
        %v7678 = vadd.f32 %v7676, %v7677
        %v7679 = vadd.f32 %v7517, %v7521
        %v7680 = vadd.f32 %v7679, %v7525
        %v7681 = vadd.f32 %v7680, %v7529
        %v7682 = vadd.f32 %v7681, %v7533
        %v7683 = vadd.f32 %v7682, %v7537
        %v7684 = vadd.f32 %v7683, %v7541
        %v7685 = vadd.f32 %v7684, %v7545
        %v7686 = vadd.f32 %v7685, %v7549
        %v7687 = vadd.f32 %v7686, %v7553
        %v7688 = vadd.f32 %v7687, %v7557
        %v7689 = vadd.f32 %v7688, %v7561
        %v7690 = vadd.f32 %v7689, %v7565
        %v7691 = vadd.f32 %v7690, %v7569
        %v7692 = vadd.f32 %v7691, %v7573
        %v7693 = vadd.f32 %v7692, %v7577
        %v7694 = vadd.f32 %v7693, %v7581
        %v7695 = vadd.f32 %v7694, %v7585
        %v7696 = vadd.f32 %v7695, %v7589
        %v7697 = vadd.f32 %v7696, %v7593
        %v7698 = vadd.f32 %v7697, %v7597
        %v7699 = vadd.f32 %v7698, %v7601
        %v7700 = vadd.f32 %v7699, %v7605
        %v7701 = vadd.f32 %v7700, %v7609
        %v7702 = vadd.f32 %v7701, %v7613
        %v7703 = vadd.f32 %v7702, %v7617
        %v7704 = vadd.f32 %v7703, %v7621
        %v7705 = vadd.f32 %v7704, %v7625
        %v7706 = vadd.f32 %v7705, %v7629
        %v7707 = vadd.f32 %v7706, %v7633
        %v7708 = vadd.f32 %v7707, %v7637
        %v7709 = vadd.f32 %v7708, %v7641
        %v7710 = vrot.slane %v7709, 4
        %v7711 = vadd.f32 %v7709, %v7710
        %v7712 = vrot.slane %v7711, 2
        %v7713 = vadd.f32 %v7711, %v7712
        %v7714 = vrot.slane %v7713, 1
        %v7715 = vadd.f32 %v7713, %v7714
        %7716 = vmatprep.subr.mxu0 %v7517
        %7717 = vmatpush1.msra.mxu0 %v7515
        %7718 = vmatprep.subr.mxu0 %v7521
        %7719 = vmatpush1.msra.mxu0 %v7519
        %7720 = vmatprep.subr.mxu0 %v7525
        %7721 = vmatpush1.msra.mxu0 %v7523
        %7722 = vmatprep.subr.mxu0 %v7529
        %7723 = vmatpush1.msra.mxu0 %v7527
        %7724 = vmatprep.subr.mxu0 %v7533
        %7725 = vmatpush1.msra.mxu0 %v7531
        %7726 = vmatprep.subr.mxu0 %v7537
        %7727 = vmatpush1.msra.mxu0 %v7535
        %7728 = vmatprep.subr.mxu0 %v7541
        %7729 = vmatpush1.msra.mxu0 %v7539
        %7730 = vmatprep.subr.mxu0 %v7545
        %7731 = vmatpush1.msra.mxu0 %v7543
        %7732 = vmatprep.subr.mxu0 %v7549
        %7733 = vmatpush1.msra.mxu0 %v7547
        %7734 = vmatprep.subr.mxu0 %v7553
        %7735 = vmatpush1.msra.mxu0 %v7551
        %7736 = vmatprep.subr.mxu0 %v7557
        %7737 = vmatpush1.msra.mxu0 %v7555
        %7738 = vmatprep.subr.mxu0 %v7561
        %7739 = vmatpush1.msra.mxu0 %v7559
        %7740 = vmatprep.subr.mxu0 %v7565
        %7741 = vmatpush1.msra.mxu0 %v7563
        %7742 = vmatprep.subr.mxu0 %v7569
        %7743 = vmatpush1.msra.mxu0 %v7567
        %7744 = vmatprep.subr.mxu0 %v7573
        %7745 = vmatpush1.msra.mxu0 %v7571
        %7746 = vmatprep.subr.mxu0 %v7577
        %7747 = vmatpush1.msra.mxu0 %v7575
        %7748 = vmatprep.subr.mxu0 %v7581
        %7749 = vmatpush1.msra.mxu0 %v7579
        %7750 = vmatprep.subr.mxu0 %v7585
        %7751 = vmatpush1.msra.mxu0 %v7583
        %7752 = vmatprep.subr.mxu0 %v7589
        %7753 = vmatpush1.msra.mxu0 %v7587
        %7754 = vmatprep.subr.mxu0 %v7593
        %7755 = vmatpush1.msra.mxu0 %v7591
        %7756 = vmatprep.subr.mxu0 %v7597
        %7757 = vmatpush1.msra.mxu0 %v7595
        %7758 = vmatprep.subr.mxu0 %v7601
        %7759 = vmatpush1.msra.mxu0 %v7599
        %7760 = vmatprep.subr.mxu0 %v7605
        %7761 = vmatpush1.msra.mxu0 %v7603
        %7762 = vmatprep.subr.mxu0 %v7609
        %7763 = vmatpush1.msra.mxu0 %v7607
        %7764 = vmatprep.subr.mxu0 %v7613
        %7765 = vmatpush1.msra.mxu0 %v7611
        %7766 = vmatprep.subr.mxu0 %v7617
        %7767 = vmatpush1.msra.mxu0 %v7615
        %7768 = vmatprep.subr.mxu0 %v7621
        %7769 = vmatpush1.msra.mxu0 %v7619
        %7770 = vmatprep.subr.mxu0 %v7625
        %7771 = vmatpush1.msra.mxu0 %v7623
        %7772 = vmatprep.subr.mxu0 %v7629
        %7773 = vmatpush1.msra.mxu0 %v7627
        %7774 = vmatprep.subr.mxu0 %v7633
        %7775 = vmatpush1.msra.mxu0 %v7631
        %7776 = vmatprep.subr.mxu0 %v7637
        %7777 = vmatpush1.msra.mxu0 %v7635
        %7778 = vmatprep.subr.mxu0 %v7641
        %7779 = vmatpush1.msra.mxu0 %v7639
        %7780 = vmatprep.mubr.f32.mxu0 %v803
        %7781 = vmatmul.mubr.f32.gmra.mrb[0].mxu0 %v801
        %v7782 = vpop.f32.mrb[0].mxu0
        %v7783 = vadd.f32 0.0, %v7782
        %v7784 = vpop.f32.mrb[0].mxu0
        %v7785 = vadd.f32 0.0, %v7784
        %7786 = vdwg.mxu0
        %v7787 = vrcp.pop %v7678
        %v7788 = vrcp.pop %v7715
        %v7789 = vmul.f32 %v7783, %v7787
        %v7790 = vmul.f32 %v7785, %v7788
        %v7791 = vld [vmem:[%s6] sm:$0xff]
        %v7792 = vld [vmem:[%s6 + $0x8] sm:$0xff]
        %v7793 = vld [vmem:[%s6 + $0x10] sm:$0xff]
        %v7794 = vld [vmem:[%s6 + $0x18] sm:$0xff]
        %v7795 = vld [vmem:[%s7] sm:$0xff]
        %v7796 = vld [vmem:[%s7 + $0x8] sm:$0xff]
        %v7797 = vld [vmem:[%s7 + $0x10] sm:$0xff]
        %v7798 = vld [vmem:[%s7 + $0x18] sm:$0xff]
        %7800 = vset.pattern.permute.xlu0 0
        %7801 = vperm.xlu0 %7800, %v7795
        %v7802 = vpop.permute.xlu0 %7801
        %7805 = vset.pattern.permute.xlu0 0
        %7806 = vperm.xlu0 %7805, %v7796
        %v7807 = vpop.permute.xlu0 %7806
        %7810 = vset.pattern.permute.xlu0 0
        %7811 = vperm.xlu0 %7810, %v7797
        %v7812 = vpop.permute.xlu0 %7811
        %7815 = vset.pattern.permute.xlu0 0
        %7816 = vperm.xlu0 %7815, %v7798
        %v7817 = vpop.permute.xlu0 %7816
        %v7820 = vsel %vm631, %v7791, 0
        %v7823 = vsel %vm631, %v7792, 0
        %v7826 = vsel %vm631, %v7793, 0
        %v7829 = vsel %vm631, %v7794, 0
        %7831 = vmatprep.subr.mxu0 %v1966
        %7832 = vmatpush1.msra.mxu0 %v1965
        %7833 = vmatprep.subr.mxu0 %v2798
        %7834 = vmatpush1.msra.mxu0 %v2797
        %7835 = vmatprep.subr.mxu0 %v3630
        %7836 = vmatpush1.msra.mxu0 %v3629
        %7837 = vmatprep.subr.mxu0 %v4462
        %7838 = vmatpush1.msra.mxu0 %v4461
        %7839 = vmatprep.subr.mxu0 0.0
        %7840 = vmatpush1.msra.mxu0 0.0
        %7841 = vmatprep.subr.mxu0 0.0
        %7842 = vmatpush1.msra.mxu0 0.0
        %7843 = vmatprep.subr.mxu0 0.0
        %7844 = vmatpush1.msra.mxu0 0.0
        %7845 = vmatprep.subr.mxu0 0.0
        %7846 = vmatpush1.msra.mxu0 0.0
        %7847 = vmatprep.subr.mxu0 0.0
        %7848 = vmatpush1.msra.mxu0 0.0
        %7849 = vmatprep.subr.mxu0 0.0
        %7850 = vmatpush1.msra.mxu0 0.0
        %7851 = vmatprep.subr.mxu0 0.0
        %7852 = vmatpush1.msra.mxu0 0.0
        %7853 = vmatprep.subr.mxu0 0.0
        %7854 = vmatpush1.msra.mxu0 0.0
        %7855 = vmatprep.subr.mxu0 0.0
        %7856 = vmatpush1.msra.mxu0 0.0
        %7857 = vmatprep.subr.mxu0 0.0
        %7858 = vmatpush1.msra.mxu0 0.0
        %7859 = vmatprep.subr.mxu0 0.0
        %7860 = vmatpush1.msra.mxu0 0.0
        %7861 = vmatprep.subr.mxu0 0.0
        %7862 = vmatpush1.msra.mxu0 0.0
        %7863 = vmatprep.subr.mxu0 0.0
        %7864 = vmatpush1.msra.mxu0 0.0
        %7865 = vmatprep.subr.mxu0 0.0
        %7866 = vmatpush1.msra.mxu0 0.0
        %7867 = vmatprep.subr.mxu0 0.0
        %7868 = vmatpush1.msra.mxu0 0.0
        %7869 = vmatprep.subr.mxu0 0.0
        %7870 = vmatpush1.msra.mxu0 0.0
        %7871 = vmatprep.subr.mxu0 0.0
        %7872 = vmatpush1.msra.mxu0 0.0
        %7873 = vmatprep.subr.mxu0 0.0
        %7874 = vmatpush1.msra.mxu0 0.0
        %7875 = vmatprep.subr.mxu0 0.0
        %7876 = vmatpush1.msra.mxu0 0.0
        %7877 = vmatprep.subr.mxu0 0.0
        %7878 = vmatpush1.msra.mxu0 0.0
        %7879 = vmatprep.subr.mxu0 0.0
        %7880 = vmatpush1.msra.mxu0 0.0
        %7881 = vmatprep.subr.mxu0 0.0
        %7882 = vmatpush1.msra.mxu0 0.0
        %7883 = vmatprep.subr.mxu0 0.0
        %7884 = vmatpush1.msra.mxu0 0.0
        %7885 = vmatprep.subr.mxu0 0.0
        %7886 = vmatpush1.msra.mxu0 0.0
        %7887 = vmatprep.subr.mxu0 0.0
        %7888 = vmatpush1.msra.mxu0 0.0
        %7889 = vmatprep.subr.mxu0 0.0
        %7890 = vmatpush1.msra.mxu0 0.0
        %7891 = vmatprep.subr.mxu0 0.0
        %7892 = vmatpush1.msra.mxu0 0.0
        %7893 = vmatprep.subr.mxu0 0.0
        %7894 = vmatpush1.msra.mxu0 0.0
        %7895 = vmatprep.mubr.f32.mxu0 0.0
        %7896 = vmatmul.mubr.f32.gmra.mrb[0].mxu0 %v7820
        %v7897 = vpop.f32.mrb[0].mxu0
        %v7898 = vadd.f32 %v7802, %v7897
        %v7899 = vpop.f32.mrb[0].mxu0
        %v7900 = vadd.f32 %v7802, %v7899
        %7901 = vmatprep.mubr.f32.mxu0 0.0
        %7902 = vmatmul.mubr.f32.gmra.mrb[0].mxu0 %v7823
        %v7903 = vpop.f32.mrb[0].mxu0
        %v7904 = vadd.f32 %v7807, %v7903
        %v7905 = vpop.f32.mrb[0].mxu0
        %v7906 = vadd.f32 %v7807, %v7905
        %7907 = vmatprep.mubr.f32.mxu0 0.0
        %7908 = vmatmul.mubr.f32.gmra.mrb[0].mxu0 %v7826
        %v7909 = vpop.f32.mrb[0].mxu0
        %v7910 = vadd.f32 %v7812, %v7909
        %v7911 = vpop.f32.mrb[0].mxu0
        %v7912 = vadd.f32 %v7812, %v7911
        %7913 = vmatprep.mubr.f32.mxu0 0.0
        %7914 = vmatmul.mubr.f32.gmra.mrb[0].mxu0 %v7829
        %v7915 = vpop.f32.mrb[0].mxu0
        %v7916 = vadd.f32 %v7817, %v7915
        %v7917 = vpop.f32.mrb[0].mxu0
        %v7918 = vadd.f32 %v7817, %v7917
        %7919 = vdwg.mxu0
        %v7920 = vadd.f32 %v7898, %v459
        %v7921 = vadd.f32 %v7900, %v460
        %v7922 = vadd.f32 %v7904, %v461
        %v7923 = vadd.f32 %v7906, %v462
        %v7924 = vadd.f32 %v7910, %v463
        %v7925 = vadd.f32 %v7912, %v464
        %v7926 = vadd.f32 %v7916, %v465
        %v7927 = vadd.f32 %v7918, %v466
        %v7928 = vld [vmem:[%s8] sm:$0xff]
        %v7929 = vld [vmem:[%s8 + $0x8] sm:$0xff]
        %v7930 = vld [vmem:[%s8 + $0x10] sm:$0xff]
        %v7931 = vld [vmem:[%s8 + $0x18] sm:$0xff]
        %v7932 = vld [vmem:[%s9] sm:$0xff]
        %v7933 = vld [vmem:[%s9 + $0x8] sm:$0xff]
        %v7934 = vld [vmem:[%s9 + $0x10] sm:$0xff]
        %v7935 = vld [vmem:[%s9 + $0x18] sm:$0xff]
        %7937 = vset.pattern.permute.xlu0 0
        %7938 = vperm.xlu0 %7937, %v7932
        %v7939 = vpop.permute.xlu0 %7938
        %7942 = vset.pattern.permute.xlu0 0
        %7943 = vperm.xlu0 %7942, %v7933
        %v7944 = vpop.permute.xlu0 %7943
        %7947 = vset.pattern.permute.xlu0 0
        %7948 = vperm.xlu0 %7947, %v7934
        %v7949 = vpop.permute.xlu0 %7948
        %7952 = vset.pattern.permute.xlu0 0
        %7953 = vperm.xlu0 %7952, %v7935
        %v7954 = vpop.permute.xlu0 %7953
        %v7957 = vsel %vm631, %v7928, 0
        %v7960 = vsel %vm631, %v7929, 0
        %v7963 = vsel %vm631, %v7930, 0
        %v7966 = vsel %vm631, %v7931, 0
        %7968 = vmatprep.subr.mxu0 %v5294
        %7969 = vmatpush1.msra.mxu0 %v5293
        %7970 = vmatprep.subr.mxu0 %v6126
        %7971 = vmatpush1.msra.mxu0 %v6125
        %7972 = vmatprep.subr.mxu0 %v6958
        %7973 = vmatpush1.msra.mxu0 %v6957
        %7974 = vmatprep.subr.mxu0 %v7790
        %7975 = vmatpush1.msra.mxu0 %v7789
        %7976 = vmatprep.subr.mxu0 0.0
        %7977 = vmatpush1.msra.mxu0 0.0
        %7978 = vmatprep.subr.mxu0 0.0
        %7979 = vmatpush1.msra.mxu0 0.0
        %7980 = vmatprep.subr.mxu0 0.0
        %7981 = vmatpush1.msra.mxu0 0.0
        %7982 = vmatprep.subr.mxu0 0.0
        %7983 = vmatpush1.msra.mxu0 0.0
        %7984 = vmatprep.subr.mxu0 0.0
        %7985 = vmatpush1.msra.mxu0 0.0
        %7986 = vmatprep.subr.mxu0 0.0
        %7987 = vmatpush1.msra.mxu0 0.0
        %7988 = vmatprep.subr.mxu0 0.0
        %7989 = vmatpush1.msra.mxu0 0.0
        %7990 = vmatprep.subr.mxu0 0.0
        %7991 = vmatpush1.msra.mxu0 0.0
        %7992 = vmatprep.subr.mxu0 0.0
        %7993 = vmatpush1.msra.mxu0 0.0
        %7994 = vmatprep.subr.mxu0 0.0
        %7995 = vmatpush1.msra.mxu0 0.0
        %7996 = vmatprep.subr.mxu0 0.0
        %7997 = vmatpush1.msra.mxu0 0.0
        %7998 = vmatprep.subr.mxu0 0.0
        %7999 = vmatpush1.msra.mxu0 0.0
        %8000 = vmatprep.subr.mxu0 0.0
        %8001 = vmatpush1.msra.mxu0 0.0
        %8002 = vmatprep.subr.mxu0 0.0
        %8003 = vmatpush1.msra.mxu0 0.0
        %8004 = vmatprep.subr.mxu0 0.0
        %8005 = vmatpush1.msra.mxu0 0.0
        %8006 = vmatprep.subr.mxu0 0.0
        %8007 = vmatpush1.msra.mxu0 0.0
        %8008 = vmatprep.subr.mxu0 0.0
        %8009 = vmatpush1.msra.mxu0 0.0
        %8010 = vmatprep.subr.mxu0 0.0
        %8011 = vmatpush1.msra.mxu0 0.0
        %8012 = vmatprep.subr.mxu0 0.0
        %8013 = vmatpush1.msra.mxu0 0.0
        %8014 = vmatprep.subr.mxu0 0.0
        %8015 = vmatpush1.msra.mxu0 0.0
        %8016 = vmatprep.subr.mxu0 0.0
        %8017 = vmatpush1.msra.mxu0 0.0
        %8018 = vmatprep.subr.mxu0 0.0
        %8019 = vmatpush1.msra.mxu0 0.0
        %8020 = vmatprep.subr.mxu0 0.0
        %8021 = vmatpush1.msra.mxu0 0.0
        %8022 = vmatprep.subr.mxu0 0.0
        %8023 = vmatpush1.msra.mxu0 0.0
        %8024 = vmatprep.subr.mxu0 0.0
        %8025 = vmatpush1.msra.mxu0 0.0
        %8026 = vmatprep.subr.mxu0 0.0
        %8027 = vmatpush1.msra.mxu0 0.0
        %8028 = vmatprep.subr.mxu0 0.0
        %8029 = vmatpush1.msra.mxu0 0.0
        %8030 = vmatprep.subr.mxu0 0.0
        %8031 = vmatpush1.msra.mxu0 0.0
        %8032 = vmatprep.mubr.f32.mxu0 0.0
        %8033 = vmatmul.mubr.f32.gmra.mrb[0].mxu0 %v7957
        %v8034 = vpop.f32.mrb[0].mxu0
        %v8035 = vadd.f32 %v7939, %v8034
        %v8036 = vpop.f32.mrb[0].mxu0
        %v8037 = vadd.f32 %v7939, %v8036
        %8038 = vmatprep.mubr.f32.mxu0 0.0
        %8039 = vmatmul.mubr.f32.gmra.mrb[0].mxu0 %v7960
        %v8040 = vpop.f32.mrb[0].mxu0
        %v8041 = vadd.f32 %v7944, %v8040
        %v8042 = vpop.f32.mrb[0].mxu0
        %v8043 = vadd.f32 %v7944, %v8042
        %8044 = vmatprep.mubr.f32.mxu0 0.0
        %8045 = vmatmul.mubr.f32.gmra.mrb[0].mxu0 %v7963
        %v8046 = vpop.f32.mrb[0].mxu0
        %v8047 = vadd.f32 %v7949, %v8046
        %v8048 = vpop.f32.mrb[0].mxu0
        %v8049 = vadd.f32 %v7949, %v8048
        %8050 = vmatprep.mubr.f32.mxu0 0.0
        %8051 = vmatmul.mubr.f32.gmra.mrb[0].mxu0 %v7966
        %v8052 = vpop.f32.mrb[0].mxu0
        %v8053 = vadd.f32 %v7954, %v8052
        %v8054 = vpop.f32.mrb[0].mxu0
        %v8055 = vadd.f32 %v7954, %v8054
        %8056 = vdwg.mxu0
        %v8057 = vadd.f32 %v8035, %v467
        %v8058 = vadd.f32 %v8037, %v468
        %v8059 = vadd.f32 %v8041, %v469
        %v8060 = vadd.f32 %v8043, %v470
        %v8061 = vadd.f32 %v8047, %v471
        %v8062 = vadd.f32 %v8049, %v472
        %v8063 = vadd.f32 %v8053, %v473
        %v8064 = vadd.f32 %v8055, %v474
        %v8065 = vld [vmem:[%s10] sm:$0xff]
        %v8066 = vld [vmem:[%s10 + $0x8] sm:$0xff]
        %v8067 = vld [vmem:[%s10 + $0x10] sm:$0xff]
        %v8068 = vld [vmem:[%s10 + $0x18] sm:$0xff]
        %v8069 = vld [vmem:[%s11] sm:$0xff]
        %v8070 = vld [vmem:[%s11 + $0x8] sm:$0xff]
        %v8071 = vld [vmem:[%s11 + $0x10] sm:$0xff]
        %v8072 = vld [vmem:[%s11 + $0x18] sm:$0xff]
        %v8074 = vsel %vm631, %v8069, 0
        %v8077 = vsel %vm631, %v8070, 0
        %v8080 = vsel %vm631, %v8071, 0
        %v8083 = vsel %vm631, %v8072, 0
        %8085 = vmatprep.subr.mxu0 %v8058
        %8086 = vmatpush1.msra.mxu0 %v8057
        %8087 = vmatprep.subr.mxu0 %v8060
        %8088 = vmatpush1.msra.mxu0 %v8059
        %8089 = vmatprep.subr.mxu0 %v8062
        %8090 = vmatpush1.msra.mxu0 %v8061
        %8091 = vmatprep.subr.mxu0 %v8064
        %8092 = vmatpush1.msra.mxu0 %v8063
        %8093 = vmatprep.subr.mxu0 0.0
        %8094 = vmatpush1.msra.mxu0 0.0
        %8095 = vmatprep.subr.mxu0 0.0
        %8096 = vmatpush1.msra.mxu0 0.0
        %8097 = vmatprep.subr.mxu0 0.0
        %8098 = vmatpush1.msra.mxu0 0.0
        %8099 = vmatprep.subr.mxu0 0.0
        %8100 = vmatpush1.msra.mxu0 0.0
        %8101 = vmatprep.subr.mxu0 0.0
        %8102 = vmatpush1.msra.mxu0 0.0
        %8103 = vmatprep.subr.mxu0 0.0
        %8104 = vmatpush1.msra.mxu0 0.0
        %8105 = vmatprep.subr.mxu0 0.0
        %8106 = vmatpush1.msra.mxu0 0.0
        %8107 = vmatprep.subr.mxu0 0.0
        %8108 = vmatpush1.msra.mxu0 0.0
        %8109 = vmatprep.subr.mxu0 0.0
        %8110 = vmatpush1.msra.mxu0 0.0
        %8111 = vmatprep.subr.mxu0 0.0
        %8112 = vmatpush1.msra.mxu0 0.0
        %8113 = vmatprep.subr.mxu0 0.0
        %8114 = vmatpush1.msra.mxu0 0.0
        %8115 = vmatprep.subr.mxu0 0.0
        %8116 = vmatpush1.msra.mxu0 0.0
        %8117 = vmatprep.subr.mxu0 0.0
        %8118 = vmatpush1.msra.mxu0 0.0
        %8119 = vmatprep.subr.mxu0 0.0
        %8120 = vmatpush1.msra.mxu0 0.0
        %8121 = vmatprep.subr.mxu0 0.0
        %8122 = vmatpush1.msra.mxu0 0.0
        %8123 = vmatprep.subr.mxu0 0.0
        %8124 = vmatpush1.msra.mxu0 0.0
        %8125 = vmatprep.subr.mxu0 0.0
        %8126 = vmatpush1.msra.mxu0 0.0
        %8127 = vmatprep.subr.mxu0 0.0
        %8128 = vmatpush1.msra.mxu0 0.0
        %8129 = vmatprep.subr.mxu0 0.0
        %8130 = vmatpush1.msra.mxu0 0.0
        %8131 = vmatprep.subr.mxu0 0.0
        %8132 = vmatpush1.msra.mxu0 0.0
        %8133 = vmatprep.subr.mxu0 0.0
        %8134 = vmatpush1.msra.mxu0 0.0
        %8135 = vmatprep.subr.mxu0 0.0
        %8136 = vmatpush1.msra.mxu0 0.0
        %8137 = vmatprep.subr.mxu0 0.0
        %8138 = vmatpush1.msra.mxu0 0.0
        %8139 = vmatprep.subr.mxu0 0.0
        %8140 = vmatpush1.msra.mxu0 0.0
        %8141 = vmatprep.subr.mxu0 0.0
        %8142 = vmatpush1.msra.mxu0 0.0
        %8143 = vmatprep.subr.mxu0 0.0
        %8144 = vmatpush1.msra.mxu0 0.0
        %8145 = vmatprep.subr.mxu0 0.0
        %8146 = vmatpush1.msra.mxu0 0.0
        %8147 = vmatprep.subr.mxu0 0.0
        %8148 = vmatpush1.msra.mxu0 0.0
        %8149 = vmatprep.mubr.f32.mxu0 0.0
        %8150 = vmatmul.mubr.f32.gmra.mrb[0].mxu0 %v8074
        %v8151 = vpop.f32.mrb[0].mxu0
        %v8152 = vadd.f32 0.0, %v8151
        %v8153 = vpop.f32.mrb[0].mxu0
        %v8154 = vadd.f32 0.0, %v8153
        %8155 = vmatprep.mubr.f32.mxu0 0.0
        %8156 = vmatmul.mubr.f32.gmra.mrb[0].mxu0 %v8077
        %v8157 = vpop.f32.mrb[0].mxu0
        %v8158 = vadd.f32 0.0, %v8157
        %v8159 = vpop.f32.mrb[0].mxu0
        %v8160 = vadd.f32 0.0, %v8159
        %8161 = vmatprep.mubr.f32.mxu0 0.0
        %8162 = vmatmul.mubr.f32.gmra.mrb[0].mxu0 %v8080
        %v8163 = vpop.f32.mrb[0].mxu0
        %v8164 = vadd.f32 0.0, %v8163
        %v8165 = vpop.f32.mrb[0].mxu0
        %v8166 = vadd.f32 0.0, %v8165
        %8167 = vmatprep.mubr.f32.mxu0 0.0
        %8168 = vmatmul.mubr.f32.gmra.mrb[0].mxu0 %v8083
        %v8169 = vpop.f32.mrb[0].mxu0
        %v8170 = vadd.f32 0.0, %v8169
        %v8171 = vpop.f32.mrb[0].mxu0
        %v8172 = vadd.f32 0.0, %v8171
        %8173 = vdwg.mxu0
        %v8175 = vsel %vm631, %v8065, 0
        %v8178 = vsel %vm631, %v8066, 0
        %v8181 = vsel %vm631, %v8067, 0
        %v8184 = vsel %vm631, %v8068, 0
        %8186 = vmatprep.subr.mxu0 %v7921
        %8187 = vmatpush1.msra.mxu0 %v7920
        %8188 = vmatprep.subr.mxu0 %v7923
        %8189 = vmatpush1.msra.mxu0 %v7922
        %8190 = vmatprep.subr.mxu0 %v7925
        %8191 = vmatpush1.msra.mxu0 %v7924
        %8192 = vmatprep.subr.mxu0 %v7927
        %8193 = vmatpush1.msra.mxu0 %v7926
        %8194 = vmatprep.subr.mxu0 0.0
        %8195 = vmatpush1.msra.mxu0 0.0
        %8196 = vmatprep.subr.mxu0 0.0
        %8197 = vmatpush1.msra.mxu0 0.0
        %8198 = vmatprep.subr.mxu0 0.0
        %8199 = vmatpush1.msra.mxu0 0.0
        %8200 = vmatprep.subr.mxu0 0.0
        %8201 = vmatpush1.msra.mxu0 0.0
        %8202 = vmatprep.subr.mxu0 0.0
        %8203 = vmatpush1.msra.mxu0 0.0
        %8204 = vmatprep.subr.mxu0 0.0
        %8205 = vmatpush1.msra.mxu0 0.0
        %8206 = vmatprep.subr.mxu0 0.0
        %8207 = vmatpush1.msra.mxu0 0.0
        %8208 = vmatprep.subr.mxu0 0.0
        %8209 = vmatpush1.msra.mxu0 0.0
        %8210 = vmatprep.subr.mxu0 0.0
        %8211 = vmatpush1.msra.mxu0 0.0
        %8212 = vmatprep.subr.mxu0 0.0
        %8213 = vmatpush1.msra.mxu0 0.0
        %8214 = vmatprep.subr.mxu0 0.0
        %8215 = vmatpush1.msra.mxu0 0.0
        %8216 = vmatprep.subr.mxu0 0.0
        %8217 = vmatpush1.msra.mxu0 0.0
        %8218 = vmatprep.subr.mxu0 0.0
        %8219 = vmatpush1.msra.mxu0 0.0
        %8220 = vmatprep.subr.mxu0 0.0
        %8221 = vmatpush1.msra.mxu0 0.0
        %8222 = vmatprep.subr.mxu0 0.0
        %8223 = vmatpush1.msra.mxu0 0.0
        %8224 = vmatprep.subr.mxu0 0.0
        %8225 = vmatpush1.msra.mxu0 0.0
        %8226 = vmatprep.subr.mxu0 0.0
        %8227 = vmatpush1.msra.mxu0 0.0
        %8228 = vmatprep.subr.mxu0 0.0
        %8229 = vmatpush1.msra.mxu0 0.0
        %8230 = vmatprep.subr.mxu0 0.0
        %8231 = vmatpush1.msra.mxu0 0.0
        %8232 = vmatprep.subr.mxu0 0.0
        %8233 = vmatpush1.msra.mxu0 0.0
        %8234 = vmatprep.subr.mxu0 0.0
        %8235 = vmatpush1.msra.mxu0 0.0
        %8236 = vmatprep.subr.mxu0 0.0
        %8237 = vmatpush1.msra.mxu0 0.0
        %8238 = vmatprep.subr.mxu0 0.0
        %8239 = vmatpush1.msra.mxu0 0.0
        %8240 = vmatprep.subr.mxu0 0.0
        %8241 = vmatpush1.msra.mxu0 0.0
        %8242 = vmatprep.subr.mxu0 0.0
        %8243 = vmatpush1.msra.mxu0 0.0
        %8244 = vmatprep.subr.mxu0 0.0
        %8245 = vmatpush1.msra.mxu0 0.0
        %8246 = vmatprep.subr.mxu0 0.0
        %8247 = vmatpush1.msra.mxu0 0.0
        %8248 = vmatprep.subr.mxu0 0.0
        %8249 = vmatpush1.msra.mxu0 0.0
        %8250 = vmatprep.mubr.f32.mxu0 0.0
        %8251 = vmatmul.mubr.f32.gmra.mrb[0].mxu0 %v8175
        %v8252 = vpop.f32.mrb[0].mxu0
        %v8253 = vadd.f32 %v8152, %v8252
        %v8254 = vpop.f32.mrb[0].mxu0
        %v8255 = vadd.f32 %v8154, %v8254
        %8256 = vmatprep.mubr.f32.mxu0 0.0
        %8257 = vmatmul.mubr.f32.gmra.mrb[0].mxu0 %v8178
        %v8258 = vpop.f32.mrb[0].mxu0
        %v8259 = vadd.f32 %v8158, %v8258
        %v8260 = vpop.f32.mrb[0].mxu0
        %v8261 = vadd.f32 %v8160, %v8260
        %8262 = vmatprep.mubr.f32.mxu0 0.0
        %8263 = vmatmul.mubr.f32.gmra.mrb[0].mxu0 %v8181
        %v8264 = vpop.f32.mrb[0].mxu0
        %v8265 = vadd.f32 %v8164, %v8264
        %v8266 = vpop.f32.mrb[0].mxu0
        %v8267 = vadd.f32 %v8166, %v8266
        %8268 = vmatprep.mubr.f32.mxu0 0.0
        %8269 = vmatmul.mubr.f32.gmra.mrb[0].mxu0 %v8184
        %v8270 = vpop.f32.mrb[0].mxu0
        %v8271 = vadd.f32 %v8170, %v8270
        %v8272 = vpop.f32.mrb[0].mxu0
        %v8273 = vadd.f32 %v8172, %v8272
        %8274 = vdwg.mxu0
        %v8275 = vld [vmem:[%s12] sm:$0xff]
        %v8276 = vld [vmem:[%s12 + $0x8] sm:$0xff]
        %v8277 = vld [vmem:[%s12 + $0x10] sm:$0xff]
        %v8278 = vld [vmem:[%s12 + $0x18] sm:$0xff]
        %8280 = vset.pattern.permute.xlu0 0
        %8281 = vperm.xlu0 %8280, %v8275
        %v8282 = vpop.permute.xlu0 %8281
        %8285 = vset.pattern.permute.xlu0 0
        %8286 = vperm.xlu0 %8285, %v8276
        %v8287 = vpop.permute.xlu0 %8286
        %8290 = vset.pattern.permute.xlu0 0
        %8291 = vperm.xlu0 %8290, %v8277
        %v8292 = vpop.permute.xlu0 %8291
        %8295 = vset.pattern.permute.xlu0 0
        %8296 = vperm.xlu0 %8295, %v8278
        %v8297 = vpop.permute.xlu0 %8296
        %v8299 = vadd.f32 %v8253, %v8282
        %v8300 = vadd.f32 %v8255, %v8282
        %v8301 = vadd.f32 %v8259, %v8287
        %v8302 = vadd.f32 %v8261, %v8287
        %v8303 = vadd.f32 %v8265, %v8292
        %v8304 = vadd.f32 %v8267, %v8292
        %v8305 = vadd.f32 %v8271, %v8297
        %v8306 = vadd.f32 %v8273, %v8297
        %8307 = vst [vmem:[%s448] sm:$0xff] %v8299
        %8308 = vst [vmem:[%s448 + $0x8] sm:$0xff] %v8300
        %8309 = vst [vmem:[%s448 + $0x10] sm:$0xff] %v8301
        %8310 = vst [vmem:[%s448 + $0x18] sm:$0xff] %v8302
        %8311 = vst [vmem:[%s448 + $0x20] sm:$0xff] %v8303
        %8312 = vst [vmem:[%s448 + $0x28] sm:$0xff] %v8304
        %8313 = vst [vmem:[%s448 + $0x30] sm:$0xff] %v8305
        %8314 = vst [vmem:[%s448 + $0x38] sm:$0xff] %v8306
        %8315 = vst [vmem:[%s448 + $0x40] sm:$0xff] %v459
        %8316 = vst [vmem:[%s448 + $0x48] sm:$0xff] %v460
        %8317 = vst [vmem:[%s448 + $0x50] sm:$0xff] %v461
        %8318 = vst [vmem:[%s448 + $0x58] sm:$0xff] %v462
        %8319 = vst [vmem:[%s448 + $0x60] sm:$0xff] %v463
        %8320 = vst [vmem:[%s448 + $0x68] sm:$0xff] %v464
        %8321 = vst [vmem:[%s448 + $0x70] sm:$0xff] %v465
        %8322 = vst [vmem:[%s448 + $0x78] sm:$0xff] %v466
        %8323 = vst [vmem:[%s448 + $0x80] sm:$0xff] %v467
        %8324 = vst [vmem:[%s448 + $0x88] sm:$0xff] %v468
        %8325 = vst [vmem:[%s448 + $0x90] sm:$0xff] %v469
        %8326 = vst [vmem:[%s448 + $0x98] sm:$0xff] %v470
        %8327 = vst [vmem:[%s448 + $0xa0] sm:$0xff] %v471
        %8328 = vst [vmem:[%s448 + $0xa8] sm:$0xff] %v472
        %8329 = vst [vmem:[%s448 + $0xb0] sm:$0xff] %v473
        %8330 = vst [vmem:[%s448 + $0xb8] sm:$0xff] %v474
        %s8331 = sand.u32 %s318, 1
        %s8332 = scalar_lea.sflag [#allocation3], %s8331
        %s8333 = sand.u32 %s318, 1
        %s8334 = smul.addr %s8333, 192
        %s8335 = scalar_lea.vmem [#allocation2], %s8334
        // Predicated region
        $region73: #{tpu_custom_call.1} parent=71 // pred_check
          %p8336 = pneg %p328
        $region74: #{tpu_custom_call.1} parent=71 // pred_check_branch
          %8338 = sbr.rel (%p8336) target = $region76
        $region75: #{tpu_custom_call.1} parent=71 // pred_region
          %s8340 = ssub.s32 3072, 3072
          %8341 = vsyncadd %s8332, %s8340
          %s8342 = smul.addr %s27, 24
          %s8343 = smul.addr %s8342, 128
          %s8344 = scalar_lea.hbm %s13, %s8343
          %s8345 = sshll.u32 %s8335, 4
          %s8346 = int_to_ptr.vmem [resolvable:$true] %s8345
          %8351 = dma.vmem_to_hbm [thread:$0]  %s8346, 3072, %s8344, %s8332, 256, 256, 16
        $region76: #{tpu_custom_call.1} parent=71 // pred_fallthru
          _
      $region72: #{tpu_custom_call.1} parent=5 // pred_fallthru
        _
      %p8352 = scmp.le.s32.totalorder 2, %s22
      // Predicated region
      $region77: #{tpu_custom_call.1} parent=5 // pred_check
        %p8353 = pneg %p8352
      $region78: #{tpu_custom_call.1} parent=5 // pred_check_branch
        %8355 = sbr.rel (%p8353) target = $region80
      $region79: #{tpu_custom_call.1} parent=5 // pred_region
        %s8356 = ssub.s32 %s22, 2
        // Predicated region
        $region81: #{tpu_custom_call.1} parent=79 // pred_check
          %p8357 = pneg %p334
        $region82: #{tpu_custom_call.1} parent=79 // pred_check_branch
          %8359 = sbr.rel (%p8357) target = $region84
        $region83: #{tpu_custom_call.1} parent=79 // pred_region
          %s8360 = sand.u32 %s319, 1
          %s8361 = scalar_lea.sflag [#allocation3], %s8360
          %s8362 = sand.u32 %s319, 1
          %s8363 = smul.addr %s8362, 192
          %s8364 = scalar_lea.vmem [#allocation2], %s8363
          %8365 = dma.done %s8361, 3072
        $region84: #{tpu_custom_call.1} parent=79 // pred_fallthru
          _
      $region80: #{tpu_custom_call.1} parent=5 // pred_fallthru
        _
    $region6: #{tpu_custom_call.1} parent=1 // loop_footer
      %s26 = sadd.s32 1, %s22
    $region7: #{tpu_custom_call.1} parent=1 // loop_footer_branch
      %21 = sbr.rel target = $region3
    $region8: #{tpu_custom_call.1} parent=1 // loop_exit
      _
    %8366 = vsyncpa [#allocation3], 1
    %s8367 = scalar_lea.sflag [#allocation3], 1
    %8368 = vsyncpa %s8367, 1

</llo_original>
